<compile_context>
chip_gen: v5e
topology: v5e:2x2
jax: 0.10.0
libtpu: 0.0.40
codegen_flags: <defaults>
</compile_context>

<pallas_src>
import functools

import numpy as np

import jax
import jax.numpy as jnp
from jax import lax
from jax.experimental import pallas as pl
from jax.experimental.pallas import tpu as pltpu

EXPANSION = 2  # Bottleneck2D.expansion


def _round_up(x, m):
    return ((x + m - 1) // m) * m


def _pick_preact_dtype():
    # bf16 VPU math only on v6e / v7x (v5e and older have no bf16 VALUs).
    try:
        kind = jax.devices()[0].device_kind.lower()
    except Exception:
        return jnp.float32
    if any(tag in kind for tag in ("v6", "v7", "7x")):
        return jnp.bfloat16
    return jnp.float32


_PREACT_DTYPE = _pick_preact_dtype()


@functools.lru_cache(maxsize=None)
def _conv3x3_masks(h, w, hwp):
    """Static per-tap validity masks (zero-padding semantics) for the in-kernel 3x3."""
    m = np.zeros((9, hwp), np.float32)
    for kh in range(3):
        for kw in range(3):
            row = kh * 3 + kw
            for idx in range(h * w):
                hh, ww = divmod(idx, w)
                sh, sw = hh + kh - 1, ww + kw - 1
                if 0 <= sh < h and 0 <= sw < w:
                    m[row, idx] = 1.0
    return m


# ----------------------------------------------------------------------------
# Fused Bottleneck2D block kernel (one pallas_call per block, one image per step)
# ----------------------------------------------------------------------------

def _bottleneck_kernel(x_ref, w1_ref, w2_ref, w3_ref, aff1_ref, aff2_ref,
                       aff3_ref, b3_ref, mask_ref, *rest, img_w, has_ds,
                       preact_dtype):
    if has_ds:
        wd_ref, bd_ref, o_ref = rest
    else:
        (o_ref,) = rest

    x = x_ref[0]                                    # (Cin, HWp) bf16, spatial on lanes
    hwp = x.shape[-1]

    # pre-activation BN1 + ReLU on the raw input (bf16 on v6e/v7x, f32 on v5e)
    s1 = aff1_ref[:, 0:1].astype(preact_dtype)
    t1 = aff1_ref[:, 1:2].astype(preact_dtype)
    a1 = jnp.maximum(x.astype(preact_dtype) * s1 + t1, 0).astype(jnp.bfloat16)

    # conv1 (1x1); its bias is folded into the BN2 shift; BN2 + ReLU on the f32 acc
    h1 = jnp.dot(w1_ref[...], a1, preferred_element_type=jnp.float32)
    a2 = jnp.maximum(h1 * aff2_ref[:, 0:1] + aff2_ref[:, 1:2], 0.0)   # (planes, HWp) f32

    # conv2 (3x3, pad=1, stride=1): 9 shifted sub-matmuls on the VMEM-resident tile.
    # Shift = pltpu.roll along the lane axis; boundary/zero-pad handled by static masks.
    planes = a2.shape[0]
    masks = mask_ref[...]                           # (9, HWp) f32
    acc2 = jnp.zeros((planes, hwp), jnp.float32)
    for kh in range(3):
        for kw in range(3):
            k = kh * 3 + kw
            s = (kh - 1) * img_w + (kw - 1)         # flat source offset of this tap
            rolled = a2 if s == 0 else pltpu.roll(a2, (-s) % hwp, axis=1)
            tap = jnp.dot(w2_ref[k], rolled.astype(jnp.bfloat16),
                          preferred_element_type=jnp.float32)
            acc2 = acc2 + tap * masks[k:k + 1, :]

    # BN3 + ReLU (conv2 bias folded into the BN3 shift)
    a3 = jnp.maximum(acc2 * aff3_ref[:, 0:1] + aff3_ref[:, 1:2], 0.0)
    a3 = a3.astype(jnp.bfloat16)

    # conv3 (1x1) + bias + residual (optionally 1x1 downsample of the raw input)
    h3 = jnp.dot(w3_ref[...], a3, preferred_element_type=jnp.float32) + b3_ref[...]
    if has_ds:
        res = jnp.dot(wd_ref[...], x, preferred_element_type=jnp.float32) + bd_ref[...]
    else:
        res = x.astype(jnp.float32)
    o_ref[0] = (h3 + res).astype(o_ref.dtype)


def bottleneck_forward(bp, x):
    """x: (N, Cin, H, W) bf16  ->  (N, cout, H, W) bf16, one fused pallas_call."""
    n, cin, h, w = x.shape
    planes, cout = bp["planes"], bp["cout"]
    hw = h * w
    hwp = _round_up(max(hw, 128), 128)              # lane-dense / roll-friendly width
    xr = x.reshape(n, cin, hw)
    if hwp != hw:
        xr = jnp.pad(xr, ((0, 0), (0, 0), (0, hwp - hw)))
    masks = jnp.asarray(_conv3x3_masks(h, w, hwp))
    has_ds = bp["wd"] is not None

    inputs = [xr, bp["w1"], bp["w2"], bp["w3"], bp["aff1"], bp["aff2"],
              bp["aff3"], bp["b3"], masks]
    in_specs = [
        pl.BlockSpec((1, cin, hwp), lambda i: (i, 0, 0)),
        pl.BlockSpec((planes, cin), lambda i: (0, 0)),
        pl.BlockSpec((9, planes, planes), lambda i: (0, 0, 0)),
        pl.BlockSpec((cout, planes), lambda i: (0, 0)),
        pl.BlockSpec((cin, 2), lambda i: (0, 0)),
        pl.BlockSpec((planes, 2), lambda i: (0, 0)),
        pl.BlockSpec((planes, 2), lambda i: (0, 0)),
        pl.BlockSpec((cout, 1), lambda i: (0, 0)),
        pl.BlockSpec((9, hwp), lambda i: (0, 0)),
    ]
    if has_ds:
        inputs += [bp["wd"], bp["bd"]]
        in_specs += [pl.BlockSpec((cout, cin), lambda i: (0, 0)),
                     pl.BlockSpec((cout, 1), lambda i: (0, 0))]

    out = pl.pallas_call(
        functools.partial(_bottleneck_kernel, img_w=w, has_ds=has_ds,
                          preact_dtype=_PREACT_DTYPE),
        out_shape=jax.ShapeDtypeStruct((n, cout, hwp), jnp.bfloat16),
        grid=(n,),                                   # >=2 steps -> both v7x TensorCores
        in_specs=in_specs,
        out_specs=pl.BlockSpec((1, cout, hwp), lambda i: (i, 0, 0)),
        compiler_params=pltpu.CompilerParams(dimension_semantics=("parallel",)),
    )(*inputs)
    if hwp != hw:
        out = out[:, :, :hw]
    return out.reshape(n, cout, h, w)


# ----------------------------------------------------------------------------
# Fused end-of-stack kernel: fc (conv+bn+relu), score head, and (if not last)
# fc_, score_ and the x + fc_ + score_ update, all in one pallas_call.
# ----------------------------------------------------------------------------

def _stack_tail_kernel(*refs, has_next):
    if has_next:
        (y_ref, x_ref, wfc_ref, afffc_ref, wsc_ref, bsc_ref,
         wf2_ref, bf2_ref, ws2_ref, bs2_ref, score_ref, xnew_ref) = refs
    else:
        (y_ref, wfc_ref, afffc_ref, wsc_ref, bsc_ref, score_ref, yfc_ref) = refs

    y = y_ref[0]                                                   # (ch, HW) bf16
    # fc: 1x1 conv -> BN -> ReLU (conv bias folded into BN shift)
    h = jnp.dot(wfc_ref[...], y, preferred_element_type=jnp.float32)
    yfc = jnp.maximum(h * afffc_ref[:, 0:1] + afffc_ref[:, 1:2], 0.0)
    yfc_b = yfc.astype(jnp.bfloat16)
    # score head (1x1 conv)
    score = jnp.dot(wsc_ref[...], yfc_b, preferred_element_type=jnp.float32)
    score = score + bsc_ref[...]
    score_ref[0] = score.astype(score_ref.dtype)
    if has_next:
        fc2 = jnp.dot(wf2_ref[...], yfc_b,
                      preferred_element_type=jnp.float32) + bf2_ref[...]
        sc2 = jnp.dot(ws2_ref[...], score.astype(jnp.bfloat16),
                      preferred_element_type=jnp.float32) + bs2_ref[...]
        xnew_ref[0] = (x_ref[0].astype(jnp.float32) + fc2 + sc2).astype(xnew_ref.dtype)
    else:
        yfc_ref[0] = yfc.astype(yfc_ref.dtype)


def stack_tail_forward(tp, y, x=None):
    n, ch, h, w = y.shape
    hw = h * w
    nc = tp["nc"]
    has_next = tp["has_next"]

    inputs = [y.reshape(n, ch, hw)]
    in_specs = [pl.BlockSpec((1, ch, hw), lambda i: (i, 0, 0))]
    if has_next:
        inputs.append(x.reshape(n, ch, hw))
        in_specs.append(pl.BlockSpec((1, ch, hw), lambda i: (i, 0, 0)))
    inputs += [tp["wfc"], tp["afffc"], tp["wsc"], tp["bsc"]]
    in_specs += [pl.BlockSpec((ch, ch), lambda i: (0, 0)),
                 pl.BlockSpec((ch, 2), lambda i: (0, 0)),
                 pl.BlockSpec((nc, ch), lambda i: (0, 0)),
                 pl.BlockSpec((nc, 1), lambda i: (0, 0))]
    if has_next:
        inputs += [tp["wf2"], tp["bf2"], tp["ws2"], tp["bs2"]]
        in_specs += [pl.BlockSpec((ch, ch), lambda i: (0, 0)),
                     pl.BlockSpec((ch, 1), lambda i: (0, 0)),
                     pl.BlockSpec((ch, nc), lambda i: (0, 0)),
                     pl.BlockSpec((ch, 1), lambda i: (0, 0))]

    second_dtype = jnp.bfloat16 if has_next else jnp.float32
    score, second = pl.pallas_call(
        functools.partial(_stack_tail_kernel, has_next=has_next),
        out_shape=(jax.ShapeDtypeStruct((n, nc, hw), jnp.float32),
                   jax.ShapeDtypeStruct((n, ch, hw), second_dtype)),
        grid=(n,),
        in_specs=in_specs,
        out_specs=(pl.BlockSpec((1, nc, hw), lambda i: (i, 0, 0)),
                   pl.BlockSpec((1, ch, hw), lambda i: (i, 0, 0))),
        compiler_params=pltpu.CompilerParams(dimension_semantics=("parallel",)),
    )(*inputs)
    return score.reshape(n, nc, h, w), second.reshape(n, ch, h, w)


# ----------------------------------------------------------------------------
# Cheap data-movement glue (pooling / nearest-upsample); XLA fuses these.
# ----------------------------------------------------------------------------

def maxpool2x2(x):  # NCHW; assumes even H, W (true for this configuration)
    n, c, h, w = x.shape
    return x.reshape(n, c, h // 2, 2, w // 2, 2).max(axis=(3, 5))


def upsample2x(x):  # F.interpolate(scale_factor=2), default mode='nearest'
    return jnp.repeat(jnp.repeat(x, 2, axis=2), 2, axis=3)


# ----------------------------------------------------------------------------
# Deterministic parameter construction (kernel-ready, BN/bias folded)
# ----------------------------------------------------------------------------

class KeyGen:
    def __init__(self, seed=0):
        self._key = jax.random.PRNGKey(seed)

    def __call__(self):
        self._key, sub = jax.random.split(self._key)
        return sub


def make_conv(kg, cin, cout, k):
    fan_in = cin * k * k
    w = (jax.random.normal(kg(), (cout, cin, k, k), jnp.float32)
         / jnp.sqrt(jnp.float32(fan_in))).astype(jnp.bfloat16)
    b = 0.01 * jax.random.normal(kg(), (cout,), jnp.float32)
    return {"w": w, "b": b}


def make_bn(kg, c, eps=1e-5):
    gamma = 1.0 + 0.1 * jax.random.normal(kg(), (c,), jnp.float32)
    beta = 0.1 * jax.random.normal(kg(), (c,), jnp.float32)
    mean = 0.1 * jax.random.normal(kg(), (c,), jnp.float32)
    var = 1.0 + 0.1 * jnp.abs(jax.random.normal(kg(), (c,), jnp.float32))
    scale = gamma / jnp.sqrt(var + eps)
    shift = beta - mean * scale
    return {"scale": scale, "shift": shift}


def make_block(kg, inplanes, planes, downsample=False):
    # Bottleneck2D: (bn,relu,1x1) -> (bn,relu,3x3) -> (bn,relu,1x1 to planes*2) + res
    cout = planes * EXPANSION
    bn1 = make_bn(kg, inplanes)
    conv1 = make_conv(kg, inplanes, planes, 1)
    bn2 = make_bn(kg, planes)
    conv2 = make_conv(kg, planes, planes, 3)
    bn3 = make_bn(kg, planes)
    conv3 = make_conv(kg, planes, cout, 1)
    ds = make_conv(kg, inplanes, cout, 1) if downsample else None
    return {
        "w1": conv1["w"].reshape(planes, inplanes),
        "w2": jnp.transpose(conv2["w"], (2, 3, 0, 1)).reshape(9, planes, planes),
        "w3": conv3["w"].reshape(cout, planes),
        "aff1": jnp.stack([bn1["scale"], bn1["shift"]], axis=1),
        "aff2": jnp.stack([bn2["scale"],
                           bn2["scale"] * conv1["b"] + bn2["shift"]], axis=1),
        "aff3": jnp.stack([bn3["scale"],
                           bn3["scale"] * conv2["b"] + bn3["shift"]], axis=1),
        "b3": conv3["b"].reshape(cout, 1),
        "wd": ds["w"].reshape(cout, inplanes) if downsample else None,
        "bd": ds["b"].reshape(cout, 1) if downsample else None,
        "planes": planes,
        "cout": cout,
    }


def make_hourglass(kg, planes, depth, num_blocks):
    hg = []
    for i in range(depth):
        n_seq = 4 if i == 0 else 3
        hg.append([[make_block(kg, planes * EXPANSION, planes)
                    for _ in range(num_blocks)] for _ in range(n_seq)])
    return hg


def make_tail(kg, ch, num_classes, has_next):
    fc_conv = make_conv(kg, ch, ch, 1)
    fc_bn = make_bn(kg, ch)
    sc_conv = make_conv(kg, ch, num_classes, 1)
    tp = {
        "wfc": fc_conv["w"].reshape(ch, ch),
        "afffc": jnp.stack([fc_bn["scale"],
                            fc_bn["scale"] * fc_conv["b"] + fc_bn["shift"]], axis=1),
        "wsc": sc_conv["w"].reshape(num_classes, ch),
        "bsc": sc_conv["b"].reshape(num_classes, 1),
        "ch": ch,
        "nc": num_classes,
        "has_next": has_next,
    }
    if has_next:
        f2 = make_conv(kg, ch, ch, 1)
        s2 = make_conv(kg, num_classes, ch, 1)
        tp["wf2"] = f2["w"].reshape(ch, ch)
        tp["bf2"] = f2["b"].reshape(ch, 1)
        tp["ws2"] = s2["w"].reshape(ch, num_classes)
        tp["bs2"] = s2["b"].reshape(ch, 1)
    return tp


def make_hourglass_net(kg, inplanes, num_feats, depth, num_stacks, num_blocks,
                       num_classes):
    state = {"inplanes": inplanes}
    p = {}
    p["conv1"] = make_conv(kg, 3, inplanes, 7)
    p["bn1"] = make_bn(kg, inplanes)

    def make_residual(planes, blocks):
        layers = []
        ds = state["inplanes"] != planes * EXPANSION
        layers.append(make_block(kg, state["inplanes"], planes, downsample=ds))
        state["inplanes"] = planes * EXPANSION
        for _ in range(1, blocks):
            layers.append(make_block(kg, state["inplanes"], planes))
        return layers

    p["layer1"] = make_residual(inplanes, 1)
    p["layer2"] = make_residual(state["inplanes"], 1)  # mirrors self.inplanes mutation
    p["layer3"] = make_residual(num_feats, 1)
    ch = num_feats * EXPANSION
    p["hg"], p["res"], p["tail"] = [], [], []
    for i in range(num_stacks):
        p["hg"].append(make_hourglass(kg, num_feats, depth, num_blocks))
        p["res"].append(make_residual(num_feats, num_blocks))
        p["tail"].append(make_tail(kg, ch, num_classes, has_next=i < num_stacks - 1))
    p["meta"] = {"depth": depth, "num_stacks": num_stacks}
    return p


# ----------------------------------------------------------------------------
# Forward pass (mirrors the PyTorch module; NCHW end to end)
# ----------------------------------------------------------------------------

def run_blocks(blocks, x):
    for bp in blocks:
        x = bottleneck_forward(bp, x)
    return x


def hourglass_forward(hg, n, x):
    up1 = run_blocks(hg[n - 1][0], x)
    low1 = maxpool2x2(x)
    low1 = run_blocks(hg[n - 1][1], low1)
    if n > 1:
        low2 = hourglass_forward(hg, n - 1, low1)
    else:
        low2 = run_blocks(hg[n - 1][3], low1)
    low3 = run_blocks(hg[n - 1][2], low2)
    # nearest-upsample + skip add in plain XLA (broadcast-add fusion, no 4x tensor)
    return up1 + upsample2x(low3)


def stem_forward(p, x):
    # TODO(synk): 7x7/stride-2 stem left to lax.conv_general_dilated (per perf review);
    # eval-mode BN + conv bias folded into the conv, ReLU fused by XLA.
    w = p["conv1"]["w"].astype(jnp.float32) * p["bn1"]["scale"][:, None, None, None]
    b = p["bn1"]["scale"] * p["conv1"]["b"] + p["bn1"]["shift"]
    y = lax.conv_general_dilated(x.astype(jnp.float32), w, window_strides=(2, 2),
                                 padding=((3, 3), (3, 3)),
                                 dimension_numbers=("NCHW", "OIHW", "NCHW"))
    y = jnp.maximum(y + b[None, :, None, None], 0.0)
    return y.astype(jnp.bfloat16)


def hourglass_net_forward(p, x_nchw):
    depth = p["meta"]["depth"]
    num_stacks = p["meta"]["num_stacks"]

    x = stem_forward(p, x_nchw)          # conv1 -> bn1 -> relu
    x = run_blocks(p["layer1"], x)
    x = maxpool2x2(x)
    x = run_blocks(p["layer2"], x)
    x = run_blocks(p["layer3"], x)

    outs = []
    y_feat = None
    for i in range(num_stacks):
        y = hourglass_forward(p["hg"][i], depth, x)
        y = run_blocks(p["res"][i], y)
        if i < num_stacks - 1:
            # one fused kernel: fc, score, fc_, score_, and x = x + fc_ + score_
            score, x = stack_tail_forward(p["tail"][i], y, x)
        else:
            # one fused kernel: fc and score (y_feat = fc output, returned by the net)
            score, y_feat = stack_tail_forward(p["tail"][i], y, None)
        outs.append(score)

    return outs[::-1], y_feat


# ----------------------------------------------------------------------------
# Main
# ----------------------------------------------------------------------------

if __name__ == "__main__":
    # Small synthetic configuration consistent with the module's constructor.
    inplanes, num_feats = 4, 8
    depth, num_stacks, num_blocks, num_classes = 2, 2, 1, 5

    kg = KeyGen(0)
    params = make_hourglass_net(
        kg, inplanes, num_feats, depth, num_stacks, num_blocks, num_classes
    )

    x = jax.random.normal(jax.random.PRNGKey(0), (2, 3, 32, 32), jnp.float32)

    fwd = jax.jit(lambda inp: hourglass_net_forward(params, inp))
    scores, feat = fwd(x)
    jax.block_until_ready((scores, feat))

    # Spatial trace: 32 --conv1(s2)--> 16 --maxpool--> 8; hourglass returns 8x8.
    assert len(scores) == num_stacks
    assert scores[0].shape == (2, num_classes, 8, 8), scores[0].shape
    assert feat.shape == (2, num_feats * EXPANSION, 8, 8), feat.shape
    assert all(bool(jnp.all(jnp.isfinite(s))) for s in scores)
    assert bool(jnp.all(jnp.isfinite(feat)))
    print("KERNEL_OK")
</pallas_src>

<mosaic_0001>
module attributes {stable_mosaic.version = 11 : i64} {
  func.func @_bottleneck_kernel(%arg0: i32, %arg1: memref<1x4x256xbf16, #tpu.memory_space<vmem>>, %arg2: memref<4x4xbf16, #tpu.memory_space<vmem>>, %arg3: memref<9x4x4xbf16, #tpu.memory_space<vmem>>, %arg4: memref<8x4xbf16, #tpu.memory_space<vmem>>, %arg5: memref<4x2xf32, #tpu.memory_space<vmem>>, %arg6: memref<4x2xf32, #tpu.memory_space<vmem>>, %arg7: memref<4x2xf32, #tpu.memory_space<vmem>>, %arg8: memref<8x1xf32, #tpu.memory_space<vmem>>, %arg9: memref<9x256xf32, #tpu.memory_space<vmem>>, %arg10: memref<8x4xbf16, #tpu.memory_space<vmem>>, %arg11: memref<8x1xf32, #tpu.memory_space<vmem>>, %arg12: memref<1x8x256xbf16, #tpu.memory_space<vmem>>) attributes {dimension_semantics = [#tpu.dimension_semantics<parallel>], iteration_bounds = array<i64: 2>, scalar_prefetch = 0 : i64, scratch_operands = 0 : i64, tpu.core_type = #tpu.core_type<tc>, window_params = [{transform_indices = @transform_0, window_bounds = array<i64: 1, 4, 256>}, {pipeline_mode = #tpu.pipeline_mode<synchronous>, transform_indices = @transform_1, window_bounds = array<i64: 4, 4>}, {pipeline_mode = #tpu.pipeline_mode<synchronous>, transform_indices = @transform_2, window_bounds = array<i64: 9, 4, 4>}, {pipeline_mode = #tpu.pipeline_mode<synchronous>, transform_indices = @transform_3, window_bounds = array<i64: 8, 4>}, {pipeline_mode = #tpu.pipeline_mode<synchronous>, transform_indices = @transform_4, window_bounds = array<i64: 4, 2>}, {pipeline_mode = #tpu.pipeline_mode<synchronous>, transform_indices = @transform_5, window_bounds = array<i64: 4, 2>}, {pipeline_mode = #tpu.pipeline_mode<synchronous>, transform_indices = @transform_6, window_bounds = array<i64: 4, 2>}, {pipeline_mode = #tpu.pipeline_mode<synchronous>, transform_indices = @transform_7, window_bounds = array<i64: 8, 1>}, {pipeline_mode = #tpu.pipeline_mode<synchronous>, transform_indices = @transform_8, window_bounds = array<i64: 9, 256>}, {pipeline_mode = #tpu.pipeline_mode<synchronous>, transform_indices = @transform_9, window_bounds = array<i64: 8, 4>}, {pipeline_mode = #tpu.pipeline_mode<synchronous>, transform_indices = @transform_10, window_bounds = array<i64: 8, 1>}, {transform_indices = @transform_11, window_bounds = array<i64: 1, 8, 256>}]} {
    %c0 = arith.constant 0 : index
    %c0_0 = arith.constant 0 : index
    %c0_1 = arith.constant 0 : index
    %0 = vector.load %arg1[%c0, %c0_0, %c0_1] : memref<1x4x256xbf16, #tpu.memory_space<vmem>>, vector<1x4x256xbf16>
    %1 = vector.shape_cast %0 : vector<1x4x256xbf16> to vector<4x256xbf16>
    %c0_2 = arith.constant 0 : index
    %c0_3 = arith.constant 0 : index
    %2 = vector.load %arg5[%c0_2, %c0_3] : memref<4x2xf32, #tpu.memory_space<vmem>>, vector<4x1xf32>
    %c0_4 = arith.constant 0 : index
    %c1 = arith.constant 1 : index
    %3 = vector.load %arg5[%c0_4, %c1] : memref<4x2xf32, #tpu.memory_space<vmem>>, vector<4x1xf32>
    %4 = arith.extf %1 : vector<4x256xbf16> to vector<4x256xf32>
    %5 = vector.broadcast %2 : vector<4x1xf32> to vector<4x256xf32>
    %6 = arith.mulf %4, %5 : vector<4x256xf32>
    %7 = vector.broadcast %3 : vector<4x1xf32> to vector<4x256xf32>
    %8 = arith.addf %6, %7 : vector<4x256xf32>
    %cst = arith.constant 0.000000e+00 : f32
    %9 = vector.broadcast %cst : f32 to vector<4x256xf32>
    %10 = arith.maximumf %8, %9 : vector<4x256xf32>
    %11 = arith.truncf %10 : vector<4x256xf32> to vector<4x256xbf16>
    %c0_5 = arith.constant 0 : index
    %c0_6 = arith.constant 0 : index
    %12 = vector.load %arg2[%c0_5, %c0_6] : memref<4x4xbf16, #tpu.memory_space<vmem>>, vector<4x4xbf16>
    %cst_7 = arith.constant dense<0.000000e+00> : vector<4x256xf32>
    %13 = tpu.matmul %12, %11, %cst_7 {dimension_numbers = #tpu.dot_dimension_numbers<[1], [0], [0], [1], [0, 0, 1, 1], [], []>} : vector<4x4xbf16>, vector<4x256xbf16>, vector<4x256xf32> -> vector<4x256xf32>
    %c0_8 = arith.constant 0 : index
    %c0_9 = arith.constant 0 : index
    %14 = vector.load %arg6[%c0_8, %c0_9] : memref<4x2xf32, #tpu.memory_space<vmem>>, vector<4x1xf32>
    %15 = vector.broadcast %14 : vector<4x1xf32> to vector<4x256xf32>
    %16 = arith.mulf %13, %15 : vector<4x256xf32>
    %c0_10 = arith.constant 0 : index
    %c1_11 = arith.constant 1 : index
    %17 = vector.load %arg6[%c0_10, %c1_11] : memref<4x2xf32, #tpu.memory_space<vmem>>, vector<4x1xf32>
    %18 = vector.broadcast %17 : vector<4x1xf32> to vector<4x256xf32>
    %19 = arith.addf %16, %18 : vector<4x256xf32>
    %cst_12 = arith.constant 0.000000e+00 : f32
    %20 = vector.broadcast %cst_12 : f32 to vector<4x256xf32>
    %21 = arith.maximumf %19, %20 : vector<4x256xf32>
    %c0_13 = arith.constant 0 : index
    %c0_14 = arith.constant 0 : index
    %22 = vector.load %arg9[%c0_13, %c0_14] : memref<9x256xf32, #tpu.memory_space<vmem>>, vector<9x256xf32>
    %cst_15 = arith.constant 0.000000e+00 : f32
    %23 = vector.broadcast %cst_15 : f32 to vector<4x256xf32>
    %c17_i32 = arith.constant 17 : i32
    %24 = tpu.dynamic_rotate %21 by %c17_i32 dim 1 : vector<4x256xf32>, i32 -> vector<4x256xf32>
    %c0_16 = arith.constant 0 : index
    %c0_17 = arith.constant 0 : index
    %c0_18 = arith.constant 0 : index
    %25 = vector.load %arg3[%c0_16, %c0_17, %c0_18] : memref<9x4x4xbf16, #tpu.memory_space<vmem>>, vector<1x4x4xbf16>
    %26 = vector.shape_cast %25 : vector<1x4x4xbf16> to vector<4x4xbf16>
    %27 = arith.truncf %24 : vector<4x256xf32> to vector<4x256xbf16>
    %cst_19 = arith.constant dense<0.000000e+00> : vector<4x256xf32>
    %28 = tpu.matmul %26, %27, %cst_19 {dimension_numbers = #tpu.dot_dimension_numbers<[1], [0], [0], [1], [0, 0, 1, 1], [], []>} : vector<4x4xbf16>, vector<4x256xbf16>, vector<4x256xf32> -> vector<4x256xf32>
    %29 = vector.extract_strided_slice %22 {offsets = [0, 0], sizes = [1, 256], strides = [1, 1]} : vector<9x256xf32> to vector<1x256xf32>
    %30 = vector.broadcast %29 : vector<1x256xf32> to vector<4x256xf32>
    %31 = arith.mulf %28, %30 : vector<4x256xf32>
    %32 = arith.addf %23, %31 : vector<4x256xf32>
    %c16_i32 = arith.constant 16 : i32
    %33 = tpu.dynamic_rotate %21 by %c16_i32 dim 1 : vector<4x256xf32>, i32 -> vector<4x256xf32>
    %c1_20 = arith.constant 1 : index
    %c0_21 = arith.constant 0 : index
    %c0_22 = arith.constant 0 : index
    %34 = vector.load %arg3[%c1_20, %c0_21, %c0_22] : memref<9x4x4xbf16, #tpu.memory_space<vmem>>, vector<1x4x4xbf16>
    %35 = vector.shape_cast %34 : vector<1x4x4xbf16> to vector<4x4xbf16>
    %36 = arith.truncf %33 : vector<4x256xf32> to vector<4x256xbf16>
    %cst_23 = arith.constant dense<0.000000e+00> : vector<4x256xf32>
    %37 = tpu.matmul %35, %36, %cst_23 {dimension_numbers = #tpu.dot_dimension_numbers<[1], [0], [0], [1], [0, 0, 1, 1], [], []>} : vector<4x4xbf16>, vector<4x256xbf16>, vector<4x256xf32> -> vector<4x256xf32>
    %38 = vector.extract_strided_slice %22 {offsets = [1, 0], sizes = [1, 256], strides = [1, 1]} : vector<9x256xf32> to vector<1x256xf32>
    %39 = vector.broadcast %38 : vector<1x256xf32> to vector<4x256xf32>
    %40 = arith.mulf %37, %39 : vector<4x256xf32>
    %41 = arith.addf %32, %40 : vector<4x256xf32>
    %c15_i32 = arith.constant 15 : i32
    %42 = tpu.dynamic_rotate %21 by %c15_i32 dim 1 : vector<4x256xf32>, i32 -> vector<4x256xf32>
    %c2 = arith.constant 2 : index
    %c0_24 = arith.constant 0 : index
    %c0_25 = arith.constant 0 : index
    %43 = vector.load %arg3[%c2, %c0_24, %c0_25] : memref<9x4x4xbf16, #tpu.memory_space<vmem>>, vector<1x4x4xbf16>
    %44 = vector.shape_cast %43 : vector<1x4x4xbf16> to vector<4x4xbf16>
    %45 = arith.truncf %42 : vector<4x256xf32> to vector<4x256xbf16>
    %cst_26 = arith.constant dense<0.000000e+00> : vector<4x256xf32>
    %46 = tpu.matmul %44, %45, %cst_26 {dimension_numbers = #tpu.dot_dimension_numbers<[1], [0], [0], [1], [0, 0, 1, 1], [], []>} : vector<4x4xbf16>, vector<4x256xbf16>, vector<4x256xf32> -> vector<4x256xf32>
    %47 = vector.extract_strided_slice %22 {offsets = [2, 0], sizes = [1, 256], strides = [1, 1]} : vector<9x256xf32> to vector<1x256xf32>
    %48 = vector.broadcast %47 : vector<1x256xf32> to vector<4x256xf32>
    %49 = arith.mulf %46, %48 : vector<4x256xf32>
    %50 = arith.addf %41, %49 : vector<4x256xf32>
    %c1_i32 = arith.constant 1 : i32
    %51 = tpu.dynamic_rotate %21 by %c1_i32 dim 1 : vector<4x256xf32>, i32 -> vector<4x256xf32>
    %c3 = arith.constant 3 : index
    %c0_27 = arith.constant 0 : index
    %c0_28 = arith.constant 0 : index
    %52 = vector.load %arg3[%c3, %c0_27, %c0_28] : memref<9x4x4xbf16, #tpu.memory_space<vmem>>, vector<1x4x4xbf16>
    %53 = vector.shape_cast %52 : vector<1x4x4xbf16> to vector<4x4xbf16>
    %54 = arith.truncf %51 : vector<4x256xf32> to vector<4x256xbf16>
    %cst_29 = arith.constant dense<0.000000e+00> : vector<4x256xf32>
    %55 = tpu.matmul %53, %54, %cst_29 {dimension_numbers = #tpu.dot_dimension_numbers<[1], [0], [0], [1], [0, 0, 1, 1], [], []>} : vector<4x4xbf16>, vector<4x256xbf16>, vector<4x256xf32> -> vector<4x256xf32>
    %56 = vector.extract_strided_slice %22 {offsets = [3, 0], sizes = [1, 256], strides = [1, 1]} : vector<9x256xf32> to vector<1x256xf32>
    %57 = vector.broadcast %56 : vector<1x256xf32> to vector<4x256xf32>
    %58 = arith.mulf %55, %57 : vector<4x256xf32>
    %59 = arith.addf %50, %58 : vector<4x256xf32>
    %c4 = arith.constant 4 : index
    %c0_30 = arith.constant 0 : index
    %c0_31 = arith.constant 0 : index
    %60 = vector.load %arg3[%c4, %c0_30, %c0_31] : memref<9x4x4xbf16, #tpu.memory_space<vmem>>, vector<1x4x4xbf16>
    %61 = vector.shape_cast %60 : vector<1x4x4xbf16> to vector<4x4xbf16>
    %62 = arith.truncf %21 : vector<4x256xf32> to vector<4x256xbf16>
    %cst_32 = arith.constant dense<0.000000e+00> : vector<4x256xf32>
    %63 = tpu.matmul %61, %62, %cst_32 {dimension_numbers = #tpu.dot_dimension_numbers<[1], [0], [0], [1], [0, 0, 1, 1], [], []>} : vector<4x4xbf16>, vector<4x256xbf16>, vector<4x256xf32> -> vector<4x256xf32>
    %64 = vector.extract_strided_slice %22 {offsets = [4, 0], sizes = [1, 256], strides = [1, 1]} : vector<9x256xf32> to vector<1x256xf32>
    %65 = vector.broadcast %64 : vector<1x256xf32> to vector<4x256xf32>
    %66 = arith.mulf %63, %65 : vector<4x256xf32>
    %67 = arith.addf %59, %66 : vector<4x256xf32>
    %c255_i32 = arith.constant 255 : i32
    %68 = tpu.dynamic_rotate %21 by %c255_i32 dim 1 : vector<4x256xf32>, i32 -> vector<4x256xf32>
    %c5 = arith.constant 5 : index
    %c0_33 = arith.constant 0 : index
    %c0_34 = arith.constant 0 : index
    %69 = vector.load %arg3[%c5, %c0_33, %c0_34] : memref<9x4x4xbf16, #tpu.memory_space<vmem>>, vector<1x4x4xbf16>
    %70 = vector.shape_cast %69 : vector<1x4x4xbf16> to vector<4x4xbf16>
    %71 = arith.truncf %68 : vector<4x256xf32> to vector<4x256xbf16>
    %cst_35 = arith.constant dense<0.000000e+00> : vector<4x256xf32>
    %72 = tpu.matmul %70, %71, %cst_35 {dimension_numbers = #tpu.dot_dimension_numbers<[1], [0], [0], [1], [0, 0, 1, 1], [], []>} : vector<4x4xbf16>, vector<4x256xbf16>, vector<4x256xf32> -> vector<4x256xf32>
    %73 = vector.extract_strided_slice %22 {offsets = [5, 0], sizes = [1, 256], strides = [1, 1]} : vector<9x256xf32> to vector<1x256xf32>
    %74 = vector.broadcast %73 : vector<1x256xf32> to vector<4x256xf32>
    %75 = arith.mulf %72, %74 : vector<4x256xf32>
    %76 = arith.addf %67, %75 : vector<4x256xf32>
    %c241_i32 = arith.constant 241 : i32
    %77 = tpu.dynamic_rotate %21 by %c241_i32 dim 1 : vector<4x256xf32>, i32 -> vector<4x256xf32>
    %c6 = arith.constant 6 : index
    %c0_36 = arith.constant 0 : index
    %c0_37 = arith.constant 0 : index
    %78 = vector.load %arg3[%c6, %c0_36, %c0_37] : memref<9x4x4xbf16, #tpu.memory_space<vmem>>, vector<1x4x4xbf16>
    %79 = vector.shape_cast %78 : vector<1x4x4xbf16> to vector<4x4xbf16>
    %80 = arith.truncf %77 : vector<4x256xf32> to vector<4x256xbf16>
    %cst_38 = arith.constant dense<0.000000e+00> : vector<4x256xf32>
    %81 = tpu.matmul %79, %80, %cst_38 {dimension_numbers = #tpu.dot_dimension_numbers<[1], [0], [0], [1], [0, 0, 1, 1], [], []>} : vector<4x4xbf16>, vector<4x256xbf16>, vector<4x256xf32> -> vector<4x256xf32>
    %82 = vector.extract_strided_slice %22 {offsets = [6, 0], sizes = [1, 256], strides = [1, 1]} : vector<9x256xf32> to vector<1x256xf32>
    %83 = vector.broadcast %82 : vector<1x256xf32> to vector<4x256xf32>
    %84 = arith.mulf %81, %83 : vector<4x256xf32>
    %85 = arith.addf %76, %84 : vector<4x256xf32>
    %c240_i32 = arith.constant 240 : i32
    %86 = tpu.dynamic_rotate %21 by %c240_i32 dim 1 : vector<4x256xf32>, i32 -> vector<4x256xf32>
    %c7 = arith.constant 7 : index
    %c0_39 = arith.constant 0 : index
    %c0_40 = arith.constant 0 : index
    %87 = vector.load %arg3[%c7, %c0_39, %c0_40] : memref<9x4x4xbf16, #tpu.memory_space<vmem>>, vector<1x4x4xbf16>
    %88 = vector.shape_cast %87 : vector<1x4x4xbf16> to vector<4x4xbf16>
    %89 = arith.truncf %86 : vector<4x256xf32> to vector<4x256xbf16>
    %cst_41 = arith.constant dense<0.000000e+00> : vector<4x256xf32>
    %90 = tpu.matmul %88, %89, %cst_41 {dimension_numbers = #tpu.dot_dimension_numbers<[1], [0], [0], [1], [0, 0, 1, 1], [], []>} : vector<4x4xbf16>, vector<4x256xbf16>, vector<4x256xf32> -> vector<4x256xf32>
    %91 = vector.extract_strided_slice %22 {offsets = [7, 0], sizes = [1, 256], strides = [1, 1]} : vector<9x256xf32> to vector<1x256xf32>
    %92 = vector.broadcast %91 : vector<1x256xf32> to vector<4x256xf32>
    %93 = arith.mulf %90, %92 : vector<4x256xf32>
    %94 = arith.addf %85, %93 : vector<4x256xf32>
    %c239_i32 = arith.constant 239 : i32
    %95 = tpu.dynamic_rotate %21 by %c239_i32 dim 1 : vector<4x256xf32>, i32 -> vector<4x256xf32>
    %c8 = arith.constant 8 : index
    %c0_42 = arith.constant 0 : index
    %c0_43 = arith.constant 0 : index
    %96 = vector.load %arg3[%c8, %c0_42, %c0_43] : memref<9x4x4xbf16, #tpu.memory_space<vmem>>, vector<1x4x4xbf16>
    %97 = vector.shape_cast %96 : vector<1x4x4xbf16> to vector<4x4xbf16>
    %98 = arith.truncf %95 : vector<4x256xf32> to vector<4x256xbf16>
    %cst_44 = arith.constant dense<0.000000e+00> : vector<4x256xf32>
    %99 = tpu.matmul %97, %98, %cst_44 {dimension_numbers = #tpu.dot_dimension_numbers<[1], [0], [0], [1], [0, 0, 1, 1], [], []>} : vector<4x4xbf16>, vector<4x256xbf16>, vector<4x256xf32> -> vector<4x256xf32>
    %100 = vector.extract_strided_slice %22 {offsets = [8, 0], sizes = [1, 256], strides = [1, 1]} : vector<9x256xf32> to vector<1x256xf32>
    %101 = vector.broadcast %100 : vector<1x256xf32> to vector<4x256xf32>
    %102 = arith.mulf %99, %101 : vector<4x256xf32>
    %103 = arith.addf %94, %102 : vector<4x256xf32>
    %c0_45 = arith.constant 0 : index
    %c0_46 = arith.constant 0 : index
    %104 = vector.load %arg7[%c0_45, %c0_46] : memref<4x2xf32, #tpu.memory_space<vmem>>, vector<4x1xf32>
    %105 = vector.broadcast %104 : vector<4x1xf32> to vector<4x256xf32>
    %106 = arith.mulf %103, %105 : vector<4x256xf32>
    %c0_47 = arith.constant 0 : index
    %c1_48 = arith.constant 1 : index
    %107 = vector.load %arg7[%c0_47, %c1_48] : memref<4x2xf32, #tpu.memory_space<vmem>>, vector<4x1xf32>
    %108 = vector.broadcast %107 : vector<4x1xf32> to vector<4x256xf32>
    %109 = arith.addf %106, %108 : vector<4x256xf32>
    %cst_49 = arith.constant 0.000000e+00 : f32
    %110 = vector.broadcast %cst_49 : f32 to vector<4x256xf32>
    %111 = arith.maximumf %109, %110 : vector<4x256xf32>
    %112 = arith.truncf %111 : vector<4x256xf32> to vector<4x256xbf16>
    %c0_50 = arith.constant 0 : index
    %c0_51 = arith.constant 0 : index
    %113 = vector.load %arg4[%c0_50, %c0_51] : memref<8x4xbf16, #tpu.memory_space<vmem>>, vector<8x4xbf16>
    %cst_52 = arith.constant dense<0.000000e+00> : vector<8x256xf32>
    %114 = tpu.matmul %113, %112, %cst_52 {dimension_numbers = #tpu.dot_dimension_numbers<[1], [0], [0], [1], [0, 0, 1, 1], [], []>} : vector<8x4xbf16>, vector<4x256xbf16>, vector<8x256xf32> -> vector<8x256xf32>
    %c0_53 = arith.constant 0 : index
    %c0_54 = arith.constant 0 : index
    %115 = vector.load %arg8[%c0_53, %c0_54] : memref<8x1xf32, #tpu.memory_space<vmem>>, vector<8x1xf32>
    %116 = vector.broadcast %115 : vector<8x1xf32> to vector<8x256xf32>
    %117 = arith.addf %114, %116 : vector<8x256xf32>
    %c0_55 = arith.constant 0 : index
    %c0_56 = arith.constant 0 : index
    %118 = vector.load %arg10[%c0_55, %c0_56] : memref<8x4xbf16, #tpu.memory_space<vmem>>, vector<8x4xbf16>
    %cst_57 = arith.constant dense<0.000000e+00> : vector<8x256xf32>
    %119 = tpu.matmul %118, %1, %cst_57 {dimension_numbers = #tpu.dot_dimension_numbers<[1], [0], [0], [1], [0, 0, 1, 1], [], []>} : vector<8x4xbf16>, vector<4x256xbf16>, vector<8x256xf32> -> vector<8x256xf32>
    %c0_58 = arith.constant 0 : index
    %c0_59 = arith.constant 0 : index
    %120 = vector.load %arg11[%c0_58, %c0_59] : memref<8x1xf32, #tpu.memory_space<vmem>>, vector<8x1xf32>
    %121 = vector.broadcast %120 : vector<8x1xf32> to vector<8x256xf32>
    %122 = arith.addf %119, %121 : vector<8x256xf32>
    %123 = arith.addf %117, %122 : vector<8x256xf32>
    %124 = arith.truncf %123 : vector<8x256xf32> to vector<8x256xbf16>
    %c0_60 = arith.constant 0 : index
    %c0_61 = arith.constant 0 : index
    %c0_62 = arith.constant 0 : index
    %125 = vector.load %arg12[%c0_60, %c0_61, %c0_62] : memref<1x8x256xbf16, #tpu.memory_space<vmem>>, vector<1x8x256xbf16>
    %126 = vector.shape_cast %125 : vector<1x8x256xbf16> to vector<8x256xbf16>
    %127 = vector.shape_cast %124 : vector<8x256xbf16> to vector<1x8x256xbf16>
    tpu.vector_store %arg12[%c0_60, %c0_61, %c0_62], %127 {strides = array<i32>} : memref<1x8x256xbf16, #tpu.memory_space<vmem>>, vector<1x8x256xbf16>,
    return
  }
  func.func @transform_0(%arg0: i32) -> (i32, i32, i32) {
    %c0_i32 = arith.constant 0 : i32
    %c0_i32_0 = arith.constant 0 : i32
    %c0_i32_1 = arith.constant 0 : i32
    return %arg0, %c0_i32, %c0_i32_0 : i32, i32, i32
  }
  func.func @transform_1(%arg0: i32) -> (i32, i32) {
    %c0_i32 = arith.constant 0 : i32
    %c0_i32_0 = arith.constant 0 : i32
    %c0_i32_1 = arith.constant 0 : i32
    return %c0_i32, %c0_i32_0 : i32, i32
  }
  func.func @transform_2(%arg0: i32) -> (i32, i32, i32) {
    %c0_i32 = arith.constant 0 : i32
    %c0_i32_0 = arith.constant 0 : i32
    %c0_i32_1 = arith.constant 0 : i32
    %c0_i32_2 = arith.constant 0 : i32
    return %c0_i32, %c0_i32_0, %c0_i32_1 : i32, i32, i32
  }
  func.func @transform_3(%arg0: i32) -> (i32, i32) {
    %c0_i32 = arith.constant 0 : i32
    %c0_i32_0 = arith.constant 0 : i32
    %c0_i32_1 = arith.constant 0 : i32
    return %c0_i32, %c0_i32_0 : i32, i32
  }
  func.func @transform_4(%arg0: i32) -> (i32, i32) {
    %c0_i32 = arith.constant 0 : i32
    %c0_i32_0 = arith.constant 0 : i32
    %c0_i32_1 = arith.constant 0 : i32
    return %c0_i32, %c0_i32_0 : i32, i32
  }
  func.func @transform_5(%arg0: i32) -> (i32, i32) {
    %c0_i32 = arith.constant 0 : i32
    %c0_i32_0 = arith.constant 0 : i32
    %c0_i32_1 = arith.constant 0 : i32
    return %c0_i32, %c0_i32_0 : i32, i32
  }
  func.func @transform_6(%arg0: i32) -> (i32, i32) {
    %c0_i32 = arith.constant 0 : i32
    %c0_i32_0 = arith.constant 0 : i32
    %c0_i32_1 = arith.constant 0 : i32
    return %c0_i32, %c0_i32_0 : i32, i32
  }
  func.func @transform_7(%arg0: i32) -> (i32, i32) {
    %c0_i32 = arith.constant 0 : i32
    %c0_i32_0 = arith.constant 0 : i32
    %c0_i32_1 = arith.constant 0 : i32
    return %c0_i32, %c0_i32_0 : i32, i32
  }
  func.func @transform_8(%arg0: i32) -> (i32, i32) {
    %c0_i32 = arith.constant 0 : i32
    %c0_i32_0 = arith.constant 0 : i32
    %c0_i32_1 = arith.constant 0 : i32
    return %c0_i32, %c0_i32_0 : i32, i32
  }
  func.func @transform_9(%arg0: i32) -> (i32, i32) {
    %c0_i32 = arith.constant 0 : i32
    %c0_i32_0 = arith.constant 0 : i32
    %c0_i32_1 = arith.constant 0 : i32
    return %c0_i32, %c0_i32_0 : i32, i32
  }
  func.func @transform_10(%arg0: i32) -> (i32, i32) {
    %c0_i32 = arith.constant 0 : i32
    %c0_i32_0 = arith.constant 0 : i32
    %c0_i32_1 = arith.constant 0 : i32
    return %c0_i32, %c0_i32_0 : i32, i32
  }
  func.func @transform_11(%arg0: i32) -> (i32, i32, i32) {
    %c0_i32 = arith.constant 0 : i32
    %c0_i32_0 = arith.constant 0 : i32
    %c0_i32_1 = arith.constant 0 : i32
    return %arg0, %c0_i32, %c0_i32_0 : i32, i32, i32
  }
}

module attributes {stable_mosaic.version = 11 : i64} {
  func.func @_bottleneck_kernel(%arg0: i32, %arg1: memref<1x8x128xbf16, #tpu.memory_space<vmem>>, %arg2: memref<8x8xbf16, #tpu.memory_space<vmem>>, %arg3: memref<9x8x8xbf16, #tpu.memory_space<vmem>>, %arg4: memref<16x8xbf16, #tpu.memory_space<vmem>>, %arg5: memref<8x2xf32, #tpu.memory_space<vmem>>, %arg6: memref<8x2xf32, #tpu.memory_space<vmem>>, %arg7: memref<8x2xf32, #tpu.memory_space<vmem>>, %arg8: memref<16x1xf32, #tpu.memory_space<vmem>>, %arg9: memref<9x128xf32, #tpu.memory_space<vmem>>, %arg10: memref<16x8xbf16, #tpu.memory_space<vmem>>, %arg11: memref<16x1xf32, #tpu.memory_space<vmem>>, %arg12: memref<1x16x128xbf16, #tpu.memory_space<vmem>>) attributes {dimension_semantics = [#tpu.dimension_semantics<parallel>], iteration_bounds = array<i64: 2>, scalar_prefetch = 0 : i64, scratch_operands = 0 : i64, tpu.core_type = #tpu.core_type<tc>, window_params = [{transform_indices = @transform_0, window_bounds = array<i64: 1, 8, 128>}, {pipeline_mode = #tpu.pipeline_mode<synchronous>, transform_indices = @transform_1, window_bounds = array<i64: 8, 8>}, {pipeline_mode = #tpu.pipeline_mode<synchronous>, transform_indices = @transform_2, window_bounds = array<i64: 9, 8, 8>}, {pipeline_mode = #tpu.pipeline_mode<synchronous>, transform_indices = @transform_3, window_bounds = array<i64: 16, 8>}, {pipeline_mode = #tpu.pipeline_mode<synchronous>, transform_indices = @transform_4, window_bounds = array<i64: 8, 2>}, {pipeline_mode = #tpu.pipeline_mode<synchronous>, transform_indices = @transform_5, window_bounds = array<i64: 8, 2>}, {pipeline_mode = #tpu.pipeline_mode<synchronous>, transform_indices = @transform_6, window_bounds = array<i64: 8, 2>}, {pipeline_mode = #tpu.pipeline_mode<synchronous>, transform_indices = @transform_7, window_bounds = array<i64: 16, 1>}, {pipeline_mode = #tpu.pipeline_mode<synchronous>, transform_indices = @transform_8, window_bounds = array<i64: 9, 128>}, {pipeline_mode = #tpu.pipeline_mode<synchronous>, transform_indices = @transform_9, window_bounds = array<i64: 16, 8>}, {pipeline_mode = #tpu.pipeline_mode<synchronous>, transform_indices = @transform_10, window_bounds = array<i64: 16, 1>}, {transform_indices = @transform_11, window_bounds = array<i64: 1, 16, 128>}]} {
    %c0 = arith.constant 0 : index
    %c0_0 = arith.constant 0 : index
    %c0_1 = arith.constant 0 : index
    %0 = vector.load %arg1[%c0, %c0_0, %c0_1] : memref<1x8x128xbf16, #tpu.memory_space<vmem>>, vector<1x8x128xbf16>
    %1 = vector.shape_cast %0 : vector<1x8x128xbf16> to vector<8x128xbf16>
    %c0_2 = arith.constant 0 : index
    %c0_3 = arith.constant 0 : index
    %2 = vector.load %arg5[%c0_2, %c0_3] : memref<8x2xf32, #tpu.memory_space<vmem>>, vector<8x1xf32>
    %c0_4 = arith.constant 0 : index
    %c1 = arith.constant 1 : index
    %3 = vector.load %arg5[%c0_4, %c1] : memref<8x2xf32, #tpu.memory_space<vmem>>, vector<8x1xf32>
    %4 = arith.extf %1 : vector<8x128xbf16> to vector<8x128xf32>
    %5 = vector.broadcast %2 : vector<8x1xf32> to vector<8x128xf32>
    %6 = arith.mulf %4, %5 : vector<8x128xf32>
    %7 = vector.broadcast %3 : vector<8x1xf32> to vector<8x128xf32>
    %8 = arith.addf %6, %7 : vector<8x128xf32>
    %cst = arith.constant 0.000000e+00 : f32
    %9 = vector.broadcast %cst : f32 to vector<8x128xf32>
    %10 = arith.maximumf %8, %9 : vector<8x128xf32>
    %11 = arith.truncf %10 : vector<8x128xf32> to vector<8x128xbf16>
    %c0_5 = arith.constant 0 : index
    %c0_6 = arith.constant 0 : index
    %12 = vector.load %arg2[%c0_5, %c0_6] : memref<8x8xbf16, #tpu.memory_space<vmem>>, vector<8x8xbf16>
    %cst_7 = arith.constant dense<0.000000e+00> : vector<8x128xf32>
    %13 = tpu.matmul %12, %11, %cst_7 {dimension_numbers = #tpu.dot_dimension_numbers<[1], [0], [0], [1], [0, 0, 1, 1], [], []>} : vector<8x8xbf16>, vector<8x128xbf16>, vector<8x128xf32> -> vector<8x128xf32>
    %c0_8 = arith.constant 0 : index
    %c0_9 = arith.constant 0 : index
    %14 = vector.load %arg6[%c0_8, %c0_9] : memref<8x2xf32, #tpu.memory_space<vmem>>, vector<8x1xf32>
    %15 = vector.broadcast %14 : vector<8x1xf32> to vector<8x128xf32>
    %16 = arith.mulf %13, %15 : vector<8x128xf32>
    %c0_10 = arith.constant 0 : index
    %c1_11 = arith.constant 1 : index
    %17 = vector.load %arg6[%c0_10, %c1_11] : memref<8x2xf32, #tpu.memory_space<vmem>>, vector<8x1xf32>
    %18 = vector.broadcast %17 : vector<8x1xf32> to vector<8x128xf32>
    %19 = arith.addf %16, %18 : vector<8x128xf32>
    %cst_12 = arith.constant 0.000000e+00 : f32
    %20 = vector.broadcast %cst_12 : f32 to vector<8x128xf32>
    %21 = arith.maximumf %19, %20 : vector<8x128xf32>
    %c0_13 = arith.constant 0 : index
    %c0_14 = arith.constant 0 : index
    %22 = vector.load %arg9[%c0_13, %c0_14] : memref<9x128xf32, #tpu.memory_space<vmem>>, vector<9x128xf32>
    %cst_15 = arith.constant 0.000000e+00 : f32
    %23 = vector.broadcast %cst_15 : f32 to vector<8x128xf32>
    %c9_i32 = arith.constant 9 : i32
    %24 = tpu.dynamic_rotate %21 by %c9_i32 dim 1 : vector<8x128xf32>, i32 -> vector<8x128xf32>
    %c0_16 = arith.constant 0 : index
    %c0_17 = arith.constant 0 : index
    %c0_18 = arith.constant 0 : index
    %25 = vector.load %arg3[%c0_16, %c0_17, %c0_18] : memref<9x8x8xbf16, #tpu.memory_space<vmem>>, vector<1x8x8xbf16>
    %26 = vector.shape_cast %25 : vector<1x8x8xbf16> to vector<8x8xbf16>
    %27 = arith.truncf %24 : vector<8x128xf32> to vector<8x128xbf16>
    %cst_19 = arith.constant dense<0.000000e+00> : vector<8x128xf32>
    %28 = tpu.matmul %26, %27, %cst_19 {dimension_numbers = #tpu.dot_dimension_numbers<[1], [0], [0], [1], [0, 0, 1, 1], [], []>} : vector<8x8xbf16>, vector<8x128xbf16>, vector<8x128xf32> -> vector<8x128xf32>
    %29 = vector.extract_strided_slice %22 {offsets = [0, 0], sizes = [1, 128], strides = [1, 1]} : vector<9x128xf32> to vector<1x128xf32>
    %30 = vector.broadcast %29 : vector<1x128xf32> to vector<8x128xf32>
    %31 = arith.mulf %28, %30 : vector<8x128xf32>
    %32 = arith.addf %23, %31 : vector<8x128xf32>
    %c8_i32 = arith.constant 8 : i32
    %33 = tpu.dynamic_rotate %21 by %c8_i32 dim 1 : vector<8x128xf32>, i32 -> vector<8x128xf32>
    %c1_20 = arith.constant 1 : index
    %c0_21 = arith.constant 0 : index
    %c0_22 = arith.constant 0 : index
    %34 = vector.load %arg3[%c1_20, %c0_21, %c0_22] : memref<9x8x8xbf16, #tpu.memory_space<vmem>>, vector<1x8x8xbf16>
    %35 = vector.shape_cast %34 : vector<1x8x8xbf16> to vector<8x8xbf16>
    %36 = arith.truncf %33 : vector<8x128xf32> to vector<8x128xbf16>
    %cst_23 = arith.constant dense<0.000000e+00> : vector<8x128xf32>
    %37 = tpu.matmul %35, %36, %cst_23 {dimension_numbers = #tpu.dot_dimension_numbers<[1], [0], [0], [1], [0, 0, 1, 1], [], []>} : vector<8x8xbf16>, vector<8x128xbf16>, vector<8x128xf32> -> vector<8x128xf32>
    %38 = vector.extract_strided_slice %22 {offsets = [1, 0], sizes = [1, 128], strides = [1, 1]} : vector<9x128xf32> to vector<1x128xf32>
    %39 = vector.broadcast %38 : vector<1x128xf32> to vector<8x128xf32>
    %40 = arith.mulf %37, %39 : vector<8x128xf32>
    %41 = arith.addf %32, %40 : vector<8x128xf32>
    %c7_i32 = arith.constant 7 : i32
    %42 = tpu.dynamic_rotate %21 by %c7_i32 dim 1 : vector<8x128xf32>, i32 -> vector<8x128xf32>
    %c2 = arith.constant 2 : index
    %c0_24 = arith.constant 0 : index
    %c0_25 = arith.constant 0 : index
    %43 = vector.load %arg3[%c2, %c0_24, %c0_25] : memref<9x8x8xbf16, #tpu.memory_space<vmem>>, vector<1x8x8xbf16>
    %44 = vector.shape_cast %43 : vector<1x8x8xbf16> to vector<8x8xbf16>
    %45 = arith.truncf %42 : vector<8x128xf32> to vector<8x128xbf16>
    %cst_26 = arith.constant dense<0.000000e+00> : vector<8x128xf32>
    %46 = tpu.matmul %44, %45, %cst_26 {dimension_numbers = #tpu.dot_dimension_numbers<[1], [0], [0], [1], [0, 0, 1, 1], [], []>} : vector<8x8xbf16>, vector<8x128xbf16>, vector<8x128xf32> -> vector<8x128xf32>
    %47 = vector.extract_strided_slice %22 {offsets = [2, 0], sizes = [1, 128], strides = [1, 1]} : vector<9x128xf32> to vector<1x128xf32>
    %48 = vector.broadcast %47 : vector<1x128xf32> to vector<8x128xf32>
    %49 = arith.mulf %46, %48 : vector<8x128xf32>
    %50 = arith.addf %41, %49 : vector<8x128xf32>
    %c1_i32 = arith.constant 1 : i32
    %51 = tpu.dynamic_rotate %21 by %c1_i32 dim 1 : vector<8x128xf32>, i32 -> vector<8x128xf32>
    %c3 = arith.constant 3 : index
    %c0_27 = arith.constant 0 : index
    %c0_28 = arith.constant 0 : index
    %52 = vector.load %arg3[%c3, %c0_27, %c0_28] : memref<9x8x8xbf16, #tpu.memory_space<vmem>>, vector<1x8x8xbf16>
    %53 = vector.shape_cast %52 : vector<1x8x8xbf16> to vector<8x8xbf16>
    %54 = arith.truncf %51 : vector<8x128xf32> to vector<8x128xbf16>
    %cst_29 = arith.constant dense<0.000000e+00> : vector<8x128xf32>
    %55 = tpu.matmul %53, %54, %cst_29 {dimension_numbers = #tpu.dot_dimension_numbers<[1], [0], [0], [1], [0, 0, 1, 1], [], []>} : vector<8x8xbf16>, vector<8x128xbf16>, vector<8x128xf32> -> vector<8x128xf32>
    %56 = vector.extract_strided_slice %22 {offsets = [3, 0], sizes = [1, 128], strides = [1, 1]} : vector<9x128xf32> to vector<1x128xf32>
    %57 = vector.broadcast %56 : vector<1x128xf32> to vector<8x128xf32>
    %58 = arith.mulf %55, %57 : vector<8x128xf32>
    %59 = arith.addf %50, %58 : vector<8x128xf32>
    %c4 = arith.constant 4 : index
    %c0_30 = arith.constant 0 : index
    %c0_31 = arith.constant 0 : index
    %60 = vector.load %arg3[%c4, %c0_30, %c0_31] : memref<9x8x8xbf16, #tpu.memory_space<vmem>>, vector<1x8x8xbf16>
    %61 = vector.shape_cast %60 : vector<1x8x8xbf16> to vector<8x8xbf16>
    %62 = arith.truncf %21 : vector<8x128xf32> to vector<8x128xbf16>
    %cst_32 = arith.constant dense<0.000000e+00> : vector<8x128xf32>
    %63 = tpu.matmul %61, %62, %cst_32 {dimension_numbers = #tpu.dot_dimension_numbers<[1], [0], [0], [1], [0, 0, 1, 1], [], []>} : vector<8x8xbf16>, vector<8x128xbf16>, vector<8x128xf32> -> vector<8x128xf32>
    %64 = vector.extract_strided_slice %22 {offsets = [4, 0], sizes = [1, 128], strides = [1, 1]} : vector<9x128xf32> to vector<1x128xf32>
    %65 = vector.broadcast %64 : vector<1x128xf32> to vector<8x128xf32>
    %66 = arith.mulf %63, %65 : vector<8x128xf32>
    %67 = arith.addf %59, %66 : vector<8x128xf32>
    %c127_i32 = arith.constant 127 : i32
    %68 = tpu.dynamic_rotate %21 by %c127_i32 dim 1 : vector<8x128xf32>, i32 -> vector<8x128xf32>
    %c5 = arith.constant 5 : index
    %c0_33 = arith.constant 0 : index
    %c0_34 = arith.constant 0 : index
    %69 = vector.load %arg3[%c5, %c0_33, %c0_34] : memref<9x8x8xbf16, #tpu.memory_space<vmem>>, vector<1x8x8xbf16>
    %70 = vector.shape_cast %69 : vector<1x8x8xbf16> to vector<8x8xbf16>
    %71 = arith.truncf %68 : vector<8x128xf32> to vector<8x128xbf16>
    %cst_35 = arith.constant dense<0.000000e+00> : vector<8x128xf32>
    %72 = tpu.matmul %70, %71, %cst_35 {dimension_numbers = #tpu.dot_dimension_numbers<[1], [0], [0], [1], [0, 0, 1, 1], [], []>} : vector<8x8xbf16>, vector<8x128xbf16>, vector<8x128xf32> -> vector<8x128xf32>
    %73 = vector.extract_strided_slice %22 {offsets = [5, 0], sizes = [1, 128], strides = [1, 1]} : vector<9x128xf32> to vector<1x128xf32>
    %74 = vector.broadcast %73 : vector<1x128xf32> to vector<8x128xf32>
    %75 = arith.mulf %72, %74 : vector<8x128xf32>
    %76 = arith.addf %67, %75 : vector<8x128xf32>
    %c121_i32 = arith.constant 121 : i32
    %77 = tpu.dynamic_rotate %21 by %c121_i32 dim 1 : vector<8x128xf32>, i32 -> vector<8x128xf32>
    %c6 = arith.constant 6 : index
    %c0_36 = arith.constant 0 : index
    %c0_37 = arith.constant 0 : index
    %78 = vector.load %arg3[%c6, %c0_36, %c0_37] : memref<9x8x8xbf16, #tpu.memory_space<vmem>>, vector<1x8x8xbf16>
    %79 = vector.shape_cast %78 : vector<1x8x8xbf16> to vector<8x8xbf16>
    %80 = arith.truncf %77 : vector<8x128xf32> to vector<8x128xbf16>
    %cst_38 = arith.constant dense<0.000000e+00> : vector<8x128xf32>
    %81 = tpu.matmul %79, %80, %cst_38 {dimension_numbers = #tpu.dot_dimension_numbers<[1], [0], [0], [1], [0, 0, 1, 1], [], []>} : vector<8x8xbf16>, vector<8x128xbf16>, vector<8x128xf32> -> vector<8x128xf32>
    %82 = vector.extract_strided_slice %22 {offsets = [6, 0], sizes = [1, 128], strides = [1, 1]} : vector<9x128xf32> to vector<1x128xf32>
    %83 = vector.broadcast %82 : vector<1x128xf32> to vector<8x128xf32>
    %84 = arith.mulf %81, %83 : vector<8x128xf32>
    %85 = arith.addf %76, %84 : vector<8x128xf32>
    %c120_i32 = arith.constant 120 : i32
    %86 = tpu.dynamic_rotate %21 by %c120_i32 dim 1 : vector<8x128xf32>, i32 -> vector<8x128xf32>
    %c7 = arith.constant 7 : index
    %c0_39 = arith.constant 0 : index
    %c0_40 = arith.constant 0 : index
    %87 = vector.load %arg3[%c7, %c0_39, %c0_40] : memref<9x8x8xbf16, #tpu.memory_space<vmem>>, vector<1x8x8xbf16>
    %88 = vector.shape_cast %87 : vector<1x8x8xbf16> to vector<8x8xbf16>
    %89 = arith.truncf %86 : vector<8x128xf32> to vector<8x128xbf16>
    %cst_41 = arith.constant dense<0.000000e+00> : vector<8x128xf32>
    %90 = tpu.matmul %88, %89, %cst_41 {dimension_numbers = #tpu.dot_dimension_numbers<[1], [0], [0], [1], [0, 0, 1, 1], [], []>} : vector<8x8xbf16>, vector<8x128xbf16>, vector<8x128xf32> -> vector<8x128xf32>
    %91 = vector.extract_strided_slice %22 {offsets = [7, 0], sizes = [1, 128], strides = [1, 1]} : vector<9x128xf32> to vector<1x128xf32>
    %92 = vector.broadcast %91 : vector<1x128xf32> to vector<8x128xf32>
    %93 = arith.mulf %90, %92 : vector<8x128xf32>
    %94 = arith.addf %85, %93 : vector<8x128xf32>
    %c119_i32 = arith.constant 119 : i32
    %95 = tpu.dynamic_rotate %21 by %c119_i32 dim 1 : vector<8x128xf32>, i32 -> vector<8x128xf32>
    %c8 = arith.constant 8 : index
    %c0_42 = arith.constant 0 : index
    %c0_43 = arith.constant 0 : index
    %96 = vector.load %arg3[%c8, %c0_42, %c0_43] : memref<9x8x8xbf16, #tpu.memory_space<vmem>>, vector<1x8x8xbf16>
    %97 = vector.shape_cast %96 : vector<1x8x8xbf16> to vector<8x8xbf16>
    %98 = arith.truncf %95 : vector<8x128xf32> to vector<8x128xbf16>
    %cst_44 = arith.constant dense<0.000000e+00> : vector<8x128xf32>
    %99 = tpu.matmul %97, %98, %cst_44 {dimension_numbers = #tpu.dot_dimension_numbers<[1], [0], [0], [1], [0, 0, 1, 1], [], []>} : vector<8x8xbf16>, vector<8x128xbf16>, vector<8x128xf32> -> vector<8x128xf32>
    %100 = vector.extract_strided_slice %22 {offsets = [8, 0], sizes = [1, 128], strides = [1, 1]} : vector<9x128xf32> to vector<1x128xf32>
    %101 = vector.broadcast %100 : vector<1x128xf32> to vector<8x128xf32>
    %102 = arith.mulf %99, %101 : vector<8x128xf32>
    %103 = arith.addf %94, %102 : vector<8x128xf32>
    %c0_45 = arith.constant 0 : index
    %c0_46 = arith.constant 0 : index
    %104 = vector.load %arg7[%c0_45, %c0_46] : memref<8x2xf32, #tpu.memory_space<vmem>>, vector<8x1xf32>
    %105 = vector.broadcast %104 : vector<8x1xf32> to vector<8x128xf32>
    %106 = arith.mulf %103, %105 : vector<8x128xf32>
    %c0_47 = arith.constant 0 : index
    %c1_48 = arith.constant 1 : index
    %107 = vector.load %arg7[%c0_47, %c1_48] : memref<8x2xf32, #tpu.memory_space<vmem>>, vector<8x1xf32>
    %108 = vector.broadcast %107 : vector<8x1xf32> to vector<8x128xf32>
    %109 = arith.addf %106, %108 : vector<8x128xf32>
    %cst_49 = arith.constant 0.000000e+00 : f32
    %110 = vector.broadcast %cst_49 : f32 to vector<8x128xf32>
    %111 = arith.maximumf %109, %110 : vector<8x128xf32>
    %112 = arith.truncf %111 : vector<8x128xf32> to vector<8x128xbf16>
    %c0_50 = arith.constant 0 : index
    %c0_51 = arith.constant 0 : index
    %113 = vector.load %arg4[%c0_50, %c0_51] : memref<16x8xbf16, #tpu.memory_space<vmem>>, vector<16x8xbf16>
    %cst_52 = arith.constant dense<0.000000e+00> : vector<16x128xf32>
    %114 = tpu.matmul %113, %112, %cst_52 {dimension_numbers = #tpu.dot_dimension_numbers<[1], [0], [0], [1], [0, 0, 1, 1], [], []>} : vector<16x8xbf16>, vector<8x128xbf16>, vector<16x128xf32> -> vector<16x128xf32>
    %c0_53 = arith.constant 0 : index
    %c0_54 = arith.constant 0 : index
    %115 = vector.load %arg8[%c0_53, %c0_54] : memref<16x1xf32, #tpu.memory_space<vmem>>, vector<16x1xf32>
    %116 = vector.broadcast %115 : vector<16x1xf32> to vector<16x128xf32>
    %117 = arith.addf %114, %116 : vector<16x128xf32>
    %c0_55 = arith.constant 0 : index
    %c0_56 = arith.constant 0 : index
    %118 = vector.load %arg10[%c0_55, %c0_56] : memref<16x8xbf16, #tpu.memory_space<vmem>>, vector<16x8xbf16>
    %cst_57 = arith.constant dense<0.000000e+00> : vector<16x128xf32>
    %119 = tpu.matmul %118, %1, %cst_57 {dimension_numbers = #tpu.dot_dimension_numbers<[1], [0], [0], [1], [0, 0, 1, 1], [], []>} : vector<16x8xbf16>, vector<8x128xbf16>, vector<16x128xf32> -> vector<16x128xf32>
    %c0_58 = arith.constant 0 : index
    %c0_59 = arith.constant 0 : index
    %120 = vector.load %arg11[%c0_58, %c0_59] : memref<16x1xf32, #tpu.memory_space<vmem>>, vector<16x1xf32>
    %121 = vector.broadcast %120 : vector<16x1xf32> to vector<16x128xf32>
    %122 = arith.addf %119, %121 : vector<16x128xf32>
    %123 = arith.addf %117, %122 : vector<16x128xf32>
    %124 = arith.truncf %123 : vector<16x128xf32> to vector<16x128xbf16>
    %c0_60 = arith.constant 0 : index
    %c0_61 = arith.constant 0 : index
    %c0_62 = arith.constant 0 : index
    %125 = vector.load %arg12[%c0_60, %c0_61, %c0_62] : memref<1x16x128xbf16, #tpu.memory_space<vmem>>, vector<1x16x128xbf16>
    %126 = vector.shape_cast %125 : vector<1x16x128xbf16> to vector<16x128xbf16>
    %127 = vector.shape_cast %124 : vector<16x128xbf16> to vector<1x16x128xbf16>
    tpu.vector_store %arg12[%c0_60, %c0_61, %c0_62], %127 {strides = array<i32>} : memref<1x16x128xbf16, #tpu.memory_space<vmem>>, vector<1x16x128xbf16>,
    return
  }
  func.func @transform_0(%arg0: i32) -> (i32, i32, i32) {
    %c0_i32 = arith.constant 0 : i32
    %c0_i32_0 = arith.constant 0 : i32
    %c0_i32_1 = arith.constant 0 : i32
    return %arg0, %c0_i32, %c0_i32_0 : i32, i32, i32
  }
  func.func @transform_1(%arg0: i32) -> (i32, i32) {
    %c0_i32 = arith.constant 0 : i32
    %c0_i32_0 = arith.constant 0 : i32
    %c0_i32_1 = arith.constant 0 : i32
    return %c0_i32, %c0_i32_0 : i32, i32
  }
  func.func @transform_2(%arg0: i32) -> (i32, i32, i32) {
    %c0_i32 = arith.constant 0 : i32
    %c0_i32_0 = arith.constant 0 : i32
    %c0_i32_1 = arith.constant 0 : i32
    %c0_i32_2 = arith.constant 0 : i32
    return %c0_i32, %c0_i32_0, %c0_i32_1 : i32, i32, i32
  }
  func.func @transform_3(%arg0: i32) -> (i32, i32) {
    %c0_i32 = arith.constant 0 : i32
    %c0_i32_0 = arith.constant 0 : i32
    %c0_i32_1 = arith.constant 0 : i32
    return %c0_i32, %c0_i32_0 : i32, i32
  }
  func.func @transform_4(%arg0: i32) -> (i32, i32) {
    %c0_i32 = arith.constant 0 : i32
    %c0_i32_0 = arith.constant 0 : i32
    %c0_i32_1 = arith.constant 0 : i32
    return %c0_i32, %c0_i32_0 : i32, i32
  }
  func.func @transform_5(%arg0: i32) -> (i32, i32) {
    %c0_i32 = arith.constant 0 : i32
    %c0_i32_0 = arith.constant 0 : i32
    %c0_i32_1 = arith.constant 0 : i32
    return %c0_i32, %c0_i32_0 : i32, i32
  }
  func.func @transform_6(%arg0: i32) -> (i32, i32) {
    %c0_i32 = arith.constant 0 : i32
    %c0_i32_0 = arith.constant 0 : i32
    %c0_i32_1 = arith.constant 0 : i32
    return %c0_i32, %c0_i32_0 : i32, i32
  }
  func.func @transform_7(%arg0: i32) -> (i32, i32) {
    %c0_i32 = arith.constant 0 : i32
    %c0_i32_0 = arith.constant 0 : i32
    %c0_i32_1 = arith.constant 0 : i32
    return %c0_i32, %c0_i32_0 : i32, i32
  }
  func.func @transform_8(%arg0: i32) -> (i32, i32) {
    %c0_i32 = arith.constant 0 : i32
    %c0_i32_0 = arith.constant 0 : i32
    %c0_i32_1 = arith.constant 0 : i32
    return %c0_i32, %c0_i32_0 : i32, i32
  }
  func.func @transform_9(%arg0: i32) -> (i32, i32) {
    %c0_i32 = arith.constant 0 : i32
    %c0_i32_0 = arith.constant 0 : i32
    %c0_i32_1 = arith.constant 0 : i32
    return %c0_i32, %c0_i32_0 : i32, i32
  }
  func.func @transform_10(%arg0: i32) -> (i32, i32) {
    %c0_i32 = arith.constant 0 : i32
    %c0_i32_0 = arith.constant 0 : i32
    %c0_i32_1 = arith.constant 0 : i32
    return %c0_i32, %c0_i32_0 : i32, i32
  }
  func.func @transform_11(%arg0: i32) -> (i32, i32, i32) {
    %c0_i32 = arith.constant 0 : i32
    %c0_i32_0 = arith.constant 0 : i32
    %c0_i32_1 = arith.constant 0 : i32
    return %arg0, %c0_i32, %c0_i32_0 : i32, i32, i32
  }
}

module attributes {stable_mosaic.version = 11 : i64} {
  func.func @_bottleneck_kernel(%arg0: i32, %arg1: memref<1x16x128xbf16, #tpu.memory_space<vmem>>, %arg2: memref<8x16xbf16, #tpu.memory_space<vmem>>, %arg3: memref<9x8x8xbf16, #tpu.memory_space<vmem>>, %arg4: memref<16x8xbf16, #tpu.memory_space<vmem>>, %arg5: memref<16x2xf32, #tpu.memory_space<vmem>>, %arg6: memref<8x2xf32, #tpu.memory_space<vmem>>, %arg7: memref<8x2xf32, #tpu.memory_space<vmem>>, %arg8: memref<16x1xf32, #tpu.memory_space<vmem>>, %arg9: memref<9x128xf32, #tpu.memory_space<vmem>>, %arg10: memref<1x16x128xbf16, #tpu.memory_space<vmem>>) attributes {dimension_semantics = [#tpu.dimension_semantics<parallel>], iteration_bounds = array<i64: 2>, scalar_prefetch = 0 : i64, scratch_operands = 0 : i64, tpu.core_type = #tpu.core_type<tc>, window_params = [{transform_indices = @transform_0, window_bounds = array<i64: 1, 16, 128>}, {pipeline_mode = #tpu.pipeline_mode<synchronous>, transform_indices = @transform_1, window_bounds = array<i64: 8, 16>}, {pipeline_mode = #tpu.pipeline_mode<synchronous>, transform_indices = @transform_2, window_bounds = array<i64: 9, 8, 8>}, {pipeline_mode = #tpu.pipeline_mode<synchronous>, transform_indices = @transform_3, window_bounds = array<i64: 16, 8>}, {pipeline_mode = #tpu.pipeline_mode<synchronous>, transform_indices = @transform_4, window_bounds = array<i64: 16, 2>}, {pipeline_mode = #tpu.pipeline_mode<synchronous>, transform_indices = @transform_5, window_bounds = array<i64: 8, 2>}, {pipeline_mode = #tpu.pipeline_mode<synchronous>, transform_indices = @transform_6, window_bounds = array<i64: 8, 2>}, {pipeline_mode = #tpu.pipeline_mode<synchronous>, transform_indices = @transform_7, window_bounds = array<i64: 16, 1>}, {pipeline_mode = #tpu.pipeline_mode<synchronous>, transform_indices = @transform_8, window_bounds = array<i64: 9, 128>}, {transform_indices = @transform_9, window_bounds = array<i64: 1, 16, 128>}]} {
    %c0 = arith.constant 0 : index
    %c0_0 = arith.constant 0 : index
    %c0_1 = arith.constant 0 : index
    %0 = vector.load %arg1[%c0, %c0_0, %c0_1] : memref<1x16x128xbf16, #tpu.memory_space<vmem>>, vector<1x16x128xbf16>
    %1 = vector.shape_cast %0 : vector<1x16x128xbf16> to vector<16x128xbf16>
    %c0_2 = arith.constant 0 : index
    %c0_3 = arith.constant 0 : index
    %2 = vector.load %arg5[%c0_2, %c0_3] : memref<16x2xf32, #tpu.memory_space<vmem>>, vector<16x1xf32>
    %c0_4 = arith.constant 0 : index
    %c1 = arith.constant 1 : index
    %3 = vector.load %arg5[%c0_4, %c1] : memref<16x2xf32, #tpu.memory_space<vmem>>, vector<16x1xf32>
    %4 = arith.extf %1 : vector<16x128xbf16> to vector<16x128xf32>
    %5 = vector.broadcast %2 : vector<16x1xf32> to vector<16x128xf32>
    %6 = arith.mulf %4, %5 : vector<16x128xf32>
    %7 = vector.broadcast %3 : vector<16x1xf32> to vector<16x128xf32>
    %8 = arith.addf %6, %7 : vector<16x128xf32>
    %cst = arith.constant 0.000000e+00 : f32
    %9 = vector.broadcast %cst : f32 to vector<16x128xf32>
    %10 = arith.maximumf %8, %9 : vector<16x128xf32>
    %11 = arith.truncf %10 : vector<16x128xf32> to vector<16x128xbf16>
    %c0_5 = arith.constant 0 : index
    %c0_6 = arith.constant 0 : index
    %12 = vector.load %arg2[%c0_5, %c0_6] : memref<8x16xbf16, #tpu.memory_space<vmem>>, vector<8x16xbf16>
    %cst_7 = arith.constant dense<0.000000e+00> : vector<8x128xf32>
    %13 = tpu.matmul %12, %11, %cst_7 {dimension_numbers = #tpu.dot_dimension_numbers<[1], [0], [0], [1], [0, 0, 1, 1], [], []>} : vector<8x16xbf16>, vector<16x128xbf16>, vector<8x128xf32> -> vector<8x128xf32>
    %c0_8 = arith.constant 0 : index
    %c0_9 = arith.constant 0 : index
    %14 = vector.load %arg6[%c0_8, %c0_9] : memref<8x2xf32, #tpu.memory_space<vmem>>, vector<8x1xf32>
    %15 = vector.broadcast %14 : vector<8x1xf32> to vector<8x128xf32>
    %16 = arith.mulf %13, %15 : vector<8x128xf32>
    %c0_10 = arith.constant 0 : index
    %c1_11 = arith.constant 1 : index
    %17 = vector.load %arg6[%c0_10, %c1_11] : memref<8x2xf32, #tpu.memory_space<vmem>>, vector<8x1xf32>
    %18 = vector.broadcast %17 : vector<8x1xf32> to vector<8x128xf32>
    %19 = arith.addf %16, %18 : vector<8x128xf32>
    %cst_12 = arith.constant 0.000000e+00 : f32
    %20 = vector.broadcast %cst_12 : f32 to vector<8x128xf32>
    %21 = arith.maximumf %19, %20 : vector<8x128xf32>
    %c0_13 = arith.constant 0 : index
    %c0_14 = arith.constant 0 : index
    %22 = vector.load %arg9[%c0_13, %c0_14] : memref<9x128xf32, #tpu.memory_space<vmem>>, vector<9x128xf32>
    %cst_15 = arith.constant 0.000000e+00 : f32
    %23 = vector.broadcast %cst_15 : f32 to vector<8x128xf32>
    %c9_i32 = arith.constant 9 : i32
    %24 = tpu.dynamic_rotate %21 by %c9_i32 dim 1 : vector<8x128xf32>, i32 -> vector<8x128xf32>
    %c0_16 = arith.constant 0 : index
    %c0_17 = arith.constant 0 : index
    %c0_18 = arith.constant 0 : index
    %25 = vector.load %arg3[%c0_16, %c0_17, %c0_18] : memref<9x8x8xbf16, #tpu.memory_space<vmem>>, vector<1x8x8xbf16>
    %26 = vector.shape_cast %25 : vector<1x8x8xbf16> to vector<8x8xbf16>
    %27 = arith.truncf %24 : vector<8x128xf32> to vector<8x128xbf16>
    %cst_19 = arith.constant dense<0.000000e+00> : vector<8x128xf32>
    %28 = tpu.matmul %26, %27, %cst_19 {dimension_numbers = #tpu.dot_dimension_numbers<[1], [0], [0], [1], [0, 0, 1, 1], [], []>} : vector<8x8xbf16>, vector<8x128xbf16>, vector<8x128xf32> -> vector<8x128xf32>
    %29 = vector.extract_strided_slice %22 {offsets = [0, 0], sizes = [1, 128], strides = [1, 1]} : vector<9x128xf32> to vector<1x128xf32>
    %30 = vector.broadcast %29 : vector<1x128xf32> to vector<8x128xf32>
    %31 = arith.mulf %28, %30 : vector<8x128xf32>
    %32 = arith.addf %23, %31 : vector<8x128xf32>
    %c8_i32 = arith.constant 8 : i32
    %33 = tpu.dynamic_rotate %21 by %c8_i32 dim 1 : vector<8x128xf32>, i32 -> vector<8x128xf32>
    %c1_20 = arith.constant 1 : index
    %c0_21 = arith.constant 0 : index
    %c0_22 = arith.constant 0 : index
    %34 = vector.load %arg3[%c1_20, %c0_21, %c0_22] : memref<9x8x8xbf16, #tpu.memory_space<vmem>>, vector<1x8x8xbf16>
    %35 = vector.shape_cast %34 : vector<1x8x8xbf16> to vector<8x8xbf16>
    %36 = arith.truncf %33 : vector<8x128xf32> to vector<8x128xbf16>
    %cst_23 = arith.constant dense<0.000000e+00> : vector<8x128xf32>
    %37 = tpu.matmul %35, %36, %cst_23 {dimension_numbers = #tpu.dot_dimension_numbers<[1], [0], [0], [1], [0, 0, 1, 1], [], []>} : vector<8x8xbf16>, vector<8x128xbf16>, vector<8x128xf32> -> vector<8x128xf32>
    %38 = vector.extract_strided_slice %22 {offsets = [1, 0], sizes = [1, 128], strides = [1, 1]} : vector<9x128xf32> to vector<1x128xf32>
    %39 = vector.broadcast %38 : vector<1x128xf32> to vector<8x128xf32>
    %40 = arith.mulf %37, %39 : vector<8x128xf32>
    %41 = arith.addf %32, %40 : vector<8x128xf32>
    %c7_i32 = arith.constant 7 : i32
    %42 = tpu.dynamic_rotate %21 by %c7_i32 dim 1 : vector<8x128xf32>, i32 -> vector<8x128xf32>
    %c2 = arith.constant 2 : index
    %c0_24 = arith.constant 0 : index
    %c0_25 = arith.constant 0 : index
    %43 = vector.load %arg3[%c2, %c0_24, %c0_25] : memref<9x8x8xbf16, #tpu.memory_space<vmem>>, vector<1x8x8xbf16>
    %44 = vector.shape_cast %43 : vector<1x8x8xbf16> to vector<8x8xbf16>
    %45 = arith.truncf %42 : vector<8x128xf32> to vector<8x128xbf16>
    %cst_26 = arith.constant dense<0.000000e+00> : vector<8x128xf32>
    %46 = tpu.matmul %44, %45, %cst_26 {dimension_numbers = #tpu.dot_dimension_numbers<[1], [0], [0], [1], [0, 0, 1, 1], [], []>} : vector<8x8xbf16>, vector<8x128xbf16>, vector<8x128xf32> -> vector<8x128xf32>
    %47 = vector.extract_strided_slice %22 {offsets = [2, 0], sizes = [1, 128], strides = [1, 1]} : vector<9x128xf32> to vector<1x128xf32>
    %48 = vector.broadcast %47 : vector<1x128xf32> to vector<8x128xf32>
    %49 = arith.mulf %46, %48 : vector<8x128xf32>
    %50 = arith.addf %41, %49 : vector<8x128xf32>
    %c1_i32 = arith.constant 1 : i32
    %51 = tpu.dynamic_rotate %21 by %c1_i32 dim 1 : vector<8x128xf32>, i32 -> vector<8x128xf32>
    %c3 = arith.constant 3 : index
    %c0_27 = arith.constant 0 : index
    %c0_28 = arith.constant 0 : index
    %52 = vector.load %arg3[%c3, %c0_27, %c0_28] : memref<9x8x8xbf16, #tpu.memory_space<vmem>>, vector<1x8x8xbf16>
    %53 = vector.shape_cast %52 : vector<1x8x8xbf16> to vector<8x8xbf16>
    %54 = arith.truncf %51 : vector<8x128xf32> to vector<8x128xbf16>
    %cst_29 = arith.constant dense<0.000000e+00> : vector<8x128xf32>
    %55 = tpu.matmul %53, %54, %cst_29 {dimension_numbers = #tpu.dot_dimension_numbers<[1], [0], [0], [1], [0, 0, 1, 1], [], []>} : vector<8x8xbf16>, vector<8x128xbf16>, vector<8x128xf32> -> vector<8x128xf32>
    %56 = vector.extract_strided_slice %22 {offsets = [3, 0], sizes = [1, 128], strides = [1, 1]} : vector<9x128xf32> to vector<1x128xf32>
    %57 = vector.broadcast %56 : vector<1x128xf32> to vector<8x128xf32>
    %58 = arith.mulf %55, %57 : vector<8x128xf32>
    %59 = arith.addf %50, %58 : vector<8x128xf32>
    %c4 = arith.constant 4 : index
    %c0_30 = arith.constant 0 : index
    %c0_31 = arith.constant 0 : index
    %60 = vector.load %arg3[%c4, %c0_30, %c0_31] : memref<9x8x8xbf16, #tpu.memory_space<vmem>>, vector<1x8x8xbf16>
    %61 = vector.shape_cast %60 : vector<1x8x8xbf16> to vector<8x8xbf16>
    %62 = arith.truncf %21 : vector<8x128xf32> to vector<8x128xbf16>
    %cst_32 = arith.constant dense<0.000000e+00> : vector<8x128xf32>
    %63 = tpu.matmul %61, %62, %cst_32 {dimension_numbers = #tpu.dot_dimension_numbers<[1], [0], [0], [1], [0, 0, 1, 1], [], []>} : vector<8x8xbf16>, vector<8x128xbf16>, vector<8x128xf32> -> vector<8x128xf32>
    %64 = vector.extract_strided_slice %22 {offsets = [4, 0], sizes = [1, 128], strides = [1, 1]} : vector<9x128xf32> to vector<1x128xf32>
    %65 = vector.broadcast %64 : vector<1x128xf32> to vector<8x128xf32>
    %66 = arith.mulf %63, %65 : vector<8x128xf32>
    %67 = arith.addf %59, %66 : vector<8x128xf32>
    %c127_i32 = arith.constant 127 : i32
    %68 = tpu.dynamic_rotate %21 by %c127_i32 dim 1 : vector<8x128xf32>, i32 -> vector<8x128xf32>
    %c5 = arith.constant 5 : index
    %c0_33 = arith.constant 0 : index
    %c0_34 = arith.constant 0 : index
    %69 = vector.load %arg3[%c5, %c0_33, %c0_34] : memref<9x8x8xbf16, #tpu.memory_space<vmem>>, vector<1x8x8xbf16>
    %70 = vector.shape_cast %69 : vector<1x8x8xbf16> to vector<8x8xbf16>
    %71 = arith.truncf %68 : vector<8x128xf32> to vector<8x128xbf16>
    %cst_35 = arith.constant dense<0.000000e+00> : vector<8x128xf32>
    %72 = tpu.matmul %70, %71, %cst_35 {dimension_numbers = #tpu.dot_dimension_numbers<[1], [0], [0], [1], [0, 0, 1, 1], [], []>} : vector<8x8xbf16>, vector<8x128xbf16>, vector<8x128xf32> -> vector<8x128xf32>
    %73 = vector.extract_strided_slice %22 {offsets = [5, 0], sizes = [1, 128], strides = [1, 1]} : vector<9x128xf32> to vector<1x128xf32>
    %74 = vector.broadcast %73 : vector<1x128xf32> to vector<8x128xf32>
    %75 = arith.mulf %72, %74 : vector<8x128xf32>
    %76 = arith.addf %67, %75 : vector<8x128xf32>
    %c121_i32 = arith.constant 121 : i32
    %77 = tpu.dynamic_rotate %21 by %c121_i32 dim 1 : vector<8x128xf32>, i32 -> vector<8x128xf32>
    %c6 = arith.constant 6 : index
    %c0_36 = arith.constant 0 : index
    %c0_37 = arith.constant 0 : index
    %78 = vector.load %arg3[%c6, %c0_36, %c0_37] : memref<9x8x8xbf16, #tpu.memory_space<vmem>>, vector<1x8x8xbf16>
    %79 = vector.shape_cast %78 : vector<1x8x8xbf16> to vector<8x8xbf16>
    %80 = arith.truncf %77 : vector<8x128xf32> to vector<8x128xbf16>
    %cst_38 = arith.constant dense<0.000000e+00> : vector<8x128xf32>
    %81 = tpu.matmul %79, %80, %cst_38 {dimension_numbers = #tpu.dot_dimension_numbers<[1], [0], [0], [1], [0, 0, 1, 1], [], []>} : vector<8x8xbf16>, vector<8x128xbf16>, vector<8x128xf32> -> vector<8x128xf32>
    %82 = vector.extract_strided_slice %22 {offsets = [6, 0], sizes = [1, 128], strides = [1, 1]} : vector<9x128xf32> to vector<1x128xf32>
    %83 = vector.broadcast %82 : vector<1x128xf32> to vector<8x128xf32>
    %84 = arith.mulf %81, %83 : vector<8x128xf32>
    %85 = arith.addf %76, %84 : vector<8x128xf32>
    %c120_i32 = arith.constant 120 : i32
    %86 = tpu.dynamic_rotate %21 by %c120_i32 dim 1 : vector<8x128xf32>, i32 -> vector<8x128xf32>
    %c7 = arith.constant 7 : index
    %c0_39 = arith.constant 0 : index
    %c0_40 = arith.constant 0 : index
    %87 = vector.load %arg3[%c7, %c0_39, %c0_40] : memref<9x8x8xbf16, #tpu.memory_space<vmem>>, vector<1x8x8xbf16>
    %88 = vector.shape_cast %87 : vector<1x8x8xbf16> to vector<8x8xbf16>
    %89 = arith.truncf %86 : vector<8x128xf32> to vector<8x128xbf16>
    %cst_41 = arith.constant dense<0.000000e+00> : vector<8x128xf32>
    %90 = tpu.matmul %88, %89, %cst_41 {dimension_numbers = #tpu.dot_dimension_numbers<[1], [0], [0], [1], [0, 0, 1, 1], [], []>} : vector<8x8xbf16>, vector<8x128xbf16>, vector<8x128xf32> -> vector<8x128xf32>
    %91 = vector.extract_strided_slice %22 {offsets = [7, 0], sizes = [1, 128], strides = [1, 1]} : vector<9x128xf32> to vector<1x128xf32>
    %92 = vector.broadcast %91 : vector<1x128xf32> to vector<8x128xf32>
    %93 = arith.mulf %90, %92 : vector<8x128xf32>
    %94 = arith.addf %85, %93 : vector<8x128xf32>
    %c119_i32 = arith.constant 119 : i32
    %95 = tpu.dynamic_rotate %21 by %c119_i32 dim 1 : vector<8x128xf32>, i32 -> vector<8x128xf32>
    %c8 = arith.constant 8 : index
    %c0_42 = arith.constant 0 : index
    %c0_43 = arith.constant 0 : index
    %96 = vector.load %arg3[%c8, %c0_42, %c0_43] : memref<9x8x8xbf16, #tpu.memory_space<vmem>>, vector<1x8x8xbf16>
    %97 = vector.shape_cast %96 : vector<1x8x8xbf16> to vector<8x8xbf16>
    %98 = arith.truncf %95 : vector<8x128xf32> to vector<8x128xbf16>
    %cst_44 = arith.constant dense<0.000000e+00> : vector<8x128xf32>
    %99 = tpu.matmul %97, %98, %cst_44 {dimension_numbers = #tpu.dot_dimension_numbers<[1], [0], [0], [1], [0, 0, 1, 1], [], []>} : vector<8x8xbf16>, vector<8x128xbf16>, vector<8x128xf32> -> vector<8x128xf32>
    %100 = vector.extract_strided_slice %22 {offsets = [8, 0], sizes = [1, 128], strides = [1, 1]} : vector<9x128xf32> to vector<1x128xf32>
    %101 = vector.broadcast %100 : vector<1x128xf32> to vector<8x128xf32>
    %102 = arith.mulf %99, %101 : vector<8x128xf32>
    %103 = arith.addf %94, %102 : vector<8x128xf32>
    %c0_45 = arith.constant 0 : index
    %c0_46 = arith.constant 0 : index
    %104 = vector.load %arg7[%c0_45, %c0_46] : memref<8x2xf32, #tpu.memory_space<vmem>>, vector<8x1xf32>
    %105 = vector.broadcast %104 : vector<8x1xf32> to vector<8x128xf32>
    %106 = arith.mulf %103, %105 : vector<8x128xf32>
    %c0_47 = arith.constant 0 : index
    %c1_48 = arith.constant 1 : index
    %107 = vector.load %arg7[%c0_47, %c1_48] : memref<8x2xf32, #tpu.memory_space<vmem>>, vector<8x1xf32>
    %108 = vector.broadcast %107 : vector<8x1xf32> to vector<8x128xf32>
    %109 = arith.addf %106, %108 : vector<8x128xf32>
    %cst_49 = arith.constant 0.000000e+00 : f32
    %110 = vector.broadcast %cst_49 : f32 to vector<8x128xf32>
    %111 = arith.maximumf %109, %110 : vector<8x128xf32>
    %112 = arith.truncf %111 : vector<8x128xf32> to vector<8x128xbf16>
    %c0_50 = arith.constant 0 : index
    %c0_51 = arith.constant 0 : index
    %113 = vector.load %arg4[%c0_50, %c0_51] : memref<16x8xbf16, #tpu.memory_space<vmem>>, vector<16x8xbf16>
    %cst_52 = arith.constant dense<0.000000e+00> : vector<16x128xf32>
    %114 = tpu.matmul %113, %112, %cst_52 {dimension_numbers = #tpu.dot_dimension_numbers<[1], [0], [0], [1], [0, 0, 1, 1], [], []>} : vector<16x8xbf16>, vector<8x128xbf16>, vector<16x128xf32> -> vector<16x128xf32>
    %c0_53 = arith.constant 0 : index
    %c0_54 = arith.constant 0 : index
    %115 = vector.load %arg8[%c0_53, %c0_54] : memref<16x1xf32, #tpu.memory_space<vmem>>, vector<16x1xf32>
    %116 = vector.broadcast %115 : vector<16x1xf32> to vector<16x128xf32>
    %117 = arith.addf %114, %116 : vector<16x128xf32>
    %118 = arith.extf %1 : vector<16x128xbf16> to vector<16x128xf32>
    %119 = arith.addf %117, %118 : vector<16x128xf32>
    %120 = arith.truncf %119 : vector<16x128xf32> to vector<16x128xbf16>
    %c0_55 = arith.constant 0 : index
    %c0_56 = arith.constant 0 : index
    %c0_57 = arith.constant 0 : index
    %121 = vector.load %arg10[%c0_55, %c0_56, %c0_57] : memref<1x16x128xbf16, #tpu.memory_space<vmem>>, vector<1x16x128xbf16>
    %122 = vector.shape_cast %121 : vector<1x16x128xbf16> to vector<16x128xbf16>
    %123 = vector.shape_cast %120 : vector<16x128xbf16> to vector<1x16x128xbf16>
    tpu.vector_store %arg10[%c0_55, %c0_56, %c0_57], %123 {strides = array<i32>} : memref<1x16x128xbf16, #tpu.memory_space<vmem>>, vector<1x16x128xbf16>,
    return
  }
  func.func @transform_0(%arg0: i32) -> (i32, i32, i32) {
    %c0_i32 = arith.constant 0 : i32
    %c0_i32_0 = arith.constant 0 : i32
    %c0_i32_1 = arith.constant 0 : i32
    return %arg0, %c0_i32, %c0_i32_0 : i32, i32, i32
  }
  func.func @transform_1(%arg0: i32) -> (i32, i32) {
    %c0_i32 = arith.constant 0 : i32
    %c0_i32_0 = arith.constant 0 : i32
    %c0_i32_1 = arith.constant 0 : i32
    return %c0_i32, %c0_i32_0 : i32, i32
  }
  func.func @transform_2(%arg0: i32) -> (i32, i32, i32) {
    %c0_i32 = arith.constant 0 : i32
    %c0_i32_0 = arith.constant 0 : i32
    %c0_i32_1 = arith.constant 0 : i32
    %c0_i32_2 = arith.constant 0 : i32
    return %c0_i32, %c0_i32_0, %c0_i32_1 : i32, i32, i32
  }
  func.func @transform_3(%arg0: i32) -> (i32, i32) {
    %c0_i32 = arith.constant 0 : i32
    %c0_i32_0 = arith.constant 0 : i32
    %c0_i32_1 = arith.constant 0 : i32
    return %c0_i32, %c0_i32_0 : i32, i32
  }
  func.func @transform_4(%arg0: i32) -> (i32, i32) {
    %c0_i32 = arith.constant 0 : i32
    %c0_i32_0 = arith.constant 0 : i32
    %c0_i32_1 = arith.constant 0 : i32
    return %c0_i32, %c0_i32_0 : i32, i32
  }
  func.func @transform_5(%arg0: i32) -> (i32, i32) {
    %c0_i32 = arith.constant 0 : i32
    %c0_i32_0 = arith.constant 0 : i32
    %c0_i32_1 = arith.constant 0 : i32
    return %c0_i32, %c0_i32_0 : i32, i32
  }
  func.func @transform_6(%arg0: i32) -> (i32, i32) {
    %c0_i32 = arith.constant 0 : i32
    %c0_i32_0 = arith.constant 0 : i32
    %c0_i32_1 = arith.constant 0 : i32
    return %c0_i32, %c0_i32_0 : i32, i32
  }
  func.func @transform_7(%arg0: i32) -> (i32, i32) {
    %c0_i32 = arith.constant 0 : i32
    %c0_i32_0 = arith.constant 0 : i32
    %c0_i32_1 = arith.constant 0 : i32
    return %c0_i32, %c0_i32_0 : i32, i32
  }
  func.func @transform_8(%arg0: i32) -> (i32, i32) {
    %c0_i32 = arith.constant 0 : i32
    %c0_i32_0 = arith.constant 0 : i32
    %c0_i32_1 = arith.constant 0 : i32
    return %c0_i32, %c0_i32_0 : i32, i32
  }
  func.func @transform_9(%arg0: i32) -> (i32, i32, i32) {
    %c0_i32 = arith.constant 0 : i32
    %c0_i32_0 = arith.constant 0 : i32
    %c0_i32_1 = arith.constant 0 : i32
    return %arg0, %c0_i32, %c0_i32_0 : i32, i32, i32
  }
}

module attributes {stable_mosaic.version = 11 : i64} {
  func.func @_bottleneck_kernel(%arg0: i32, %arg1: memref<1x16x128xbf16, #tpu.memory_space<vmem>>, %arg2: memref<8x16xbf16, #tpu.memory_space<vmem>>, %arg3: memref<9x8x8xbf16, #tpu.memory_space<vmem>>, %arg4: memref<16x8xbf16, #tpu.memory_space<vmem>>, %arg5: memref<16x2xf32, #tpu.memory_space<vmem>>, %arg6: memref<8x2xf32, #tpu.memory_space<vmem>>, %arg7: memref<8x2xf32, #tpu.memory_space<vmem>>, %arg8: memref<16x1xf32, #tpu.memory_space<vmem>>, %arg9: memref<9x128xf32, #tpu.memory_space<vmem>>, %arg10: memref<1x16x128xbf16, #tpu.memory_space<vmem>>) attributes {dimension_semantics = [#tpu.dimension_semantics<parallel>], iteration_bounds = array<i64: 2>, scalar_prefetch = 0 : i64, scratch_operands = 0 : i64, tpu.core_type = #tpu.core_type<tc>, window_params = [{transform_indices = @transform_0, window_bounds = array<i64: 1, 16, 128>}, {pipeline_mode = #tpu.pipeline_mode<synchronous>, transform_indices = @transform_1, window_bounds = array<i64: 8, 16>}, {pipeline_mode = #tpu.pipeline_mode<synchronous>, transform_indices = @transform_2, window_bounds = array<i64: 9, 8, 8>}, {pipeline_mode = #tpu.pipeline_mode<synchronous>, transform_indices = @transform_3, window_bounds = array<i64: 16, 8>}, {pipeline_mode = #tpu.pipeline_mode<synchronous>, transform_indices = @transform_4, window_bounds = array<i64: 16, 2>}, {pipeline_mode = #tpu.pipeline_mode<synchronous>, transform_indices = @transform_5, window_bounds = array<i64: 8, 2>}, {pipeline_mode = #tpu.pipeline_mode<synchronous>, transform_indices = @transform_6, window_bounds = array<i64: 8, 2>}, {pipeline_mode = #tpu.pipeline_mode<synchronous>, transform_indices = @transform_7, window_bounds = array<i64: 16, 1>}, {pipeline_mode = #tpu.pipeline_mode<synchronous>, transform_indices = @transform_8, window_bounds = array<i64: 9, 128>}, {transform_indices = @transform_9, window_bounds = array<i64: 1, 16, 128>}]} {
    %c0 = arith.constant 0 : index
    %c0_0 = arith.constant 0 : index
    %c0_1 = arith.constant 0 : index
    %0 = vector.load %arg1[%c0, %c0_0, %c0_1] : memref<1x16x128xbf16, #tpu.memory_space<vmem>>, vector<1x16x128xbf16>
    %1 = vector.shape_cast %0 : vector<1x16x128xbf16> to vector<16x128xbf16>
    %c0_2 = arith.constant 0 : index
    %c0_3 = arith.constant 0 : index
    %2 = vector.load %arg5[%c0_2, %c0_3] : memref<16x2xf32, #tpu.memory_space<vmem>>, vector<16x1xf32>
    %c0_4 = arith.constant 0 : index
    %c1 = arith.constant 1 : index
    %3 = vector.load %arg5[%c0_4, %c1] : memref<16x2xf32, #tpu.memory_space<vmem>>, vector<16x1xf32>
    %4 = arith.extf %1 : vector<16x128xbf16> to vector<16x128xf32>
    %5 = vector.broadcast %2 : vector<16x1xf32> to vector<16x128xf32>
    %6 = arith.mulf %4, %5 : vector<16x128xf32>
    %7 = vector.broadcast %3 : vector<16x1xf32> to vector<16x128xf32>
    %8 = arith.addf %6, %7 : vector<16x128xf32>
    %cst = arith.constant 0.000000e+00 : f32
    %9 = vector.broadcast %cst : f32 to vector<16x128xf32>
    %10 = arith.maximumf %8, %9 : vector<16x128xf32>
    %11 = arith.truncf %10 : vector<16x128xf32> to vector<16x128xbf16>
    %c0_5 = arith.constant 0 : index
    %c0_6 = arith.constant 0 : index
    %12 = vector.load %arg2[%c0_5, %c0_6] : memref<8x16xbf16, #tpu.memory_space<vmem>>, vector<8x16xbf16>
    %cst_7 = arith.constant dense<0.000000e+00> : vector<8x128xf32>
    %13 = tpu.matmul %12, %11, %cst_7 {dimension_numbers = #tpu.dot_dimension_numbers<[1], [0], [0], [1], [0, 0, 1, 1], [], []>} : vector<8x16xbf16>, vector<16x128xbf16>, vector<8x128xf32> -> vector<8x128xf32>
    %c0_8 = arith.constant 0 : index
    %c0_9 = arith.constant 0 : index
    %14 = vector.load %arg6[%c0_8, %c0_9] : memref<8x2xf32, #tpu.memory_space<vmem>>, vector<8x1xf32>
    %15 = vector.broadcast %14 : vector<8x1xf32> to vector<8x128xf32>
    %16 = arith.mulf %13, %15 : vector<8x128xf32>
    %c0_10 = arith.constant 0 : index
    %c1_11 = arith.constant 1 : index
    %17 = vector.load %arg6[%c0_10, %c1_11] : memref<8x2xf32, #tpu.memory_space<vmem>>, vector<8x1xf32>
    %18 = vector.broadcast %17 : vector<8x1xf32> to vector<8x128xf32>
    %19 = arith.addf %16, %18 : vector<8x128xf32>
    %cst_12 = arith.constant 0.000000e+00 : f32
    %20 = vector.broadcast %cst_12 : f32 to vector<8x128xf32>
    %21 = arith.maximumf %19, %20 : vector<8x128xf32>
    %c0_13 = arith.constant 0 : index
    %c0_14 = arith.constant 0 : index
    %22 = vector.load %arg9[%c0_13, %c0_14] : memref<9x128xf32, #tpu.memory_space<vmem>>, vector<9x128xf32>
    %cst_15 = arith.constant 0.000000e+00 : f32
    %23 = vector.broadcast %cst_15 : f32 to vector<8x128xf32>
    %c5_i32 = arith.constant 5 : i32
    %24 = tpu.dynamic_rotate %21 by %c5_i32 dim 1 : vector<8x128xf32>, i32 -> vector<8x128xf32>
    %c0_16 = arith.constant 0 : index
    %c0_17 = arith.constant 0 : index
    %c0_18 = arith.constant 0 : index
    %25 = vector.load %arg3[%c0_16, %c0_17, %c0_18] : memref<9x8x8xbf16, #tpu.memory_space<vmem>>, vector<1x8x8xbf16>
    %26 = vector.shape_cast %25 : vector<1x8x8xbf16> to vector<8x8xbf16>
    %27 = arith.truncf %24 : vector<8x128xf32> to vector<8x128xbf16>
    %cst_19 = arith.constant dense<0.000000e+00> : vector<8x128xf32>
    %28 = tpu.matmul %26, %27, %cst_19 {dimension_numbers = #tpu.dot_dimension_numbers<[1], [0], [0], [1], [0, 0, 1, 1], [], []>} : vector<8x8xbf16>, vector<8x128xbf16>, vector<8x128xf32> -> vector<8x128xf32>
    %29 = vector.extract_strided_slice %22 {offsets = [0, 0], sizes = [1, 128], strides = [1, 1]} : vector<9x128xf32> to vector<1x128xf32>
    %30 = vector.broadcast %29 : vector<1x128xf32> to vector<8x128xf32>
    %31 = arith.mulf %28, %30 : vector<8x128xf32>
    %32 = arith.addf %23, %31 : vector<8x128xf32>
    %c4_i32 = arith.constant 4 : i32
    %33 = tpu.dynamic_rotate %21 by %c4_i32 dim 1 : vector<8x128xf32>, i32 -> vector<8x128xf32>
    %c1_20 = arith.constant 1 : index
    %c0_21 = arith.constant 0 : index
    %c0_22 = arith.constant 0 : index
    %34 = vector.load %arg3[%c1_20, %c0_21, %c0_22] : memref<9x8x8xbf16, #tpu.memory_space<vmem>>, vector<1x8x8xbf16>
    %35 = vector.shape_cast %34 : vector<1x8x8xbf16> to vector<8x8xbf16>
    %36 = arith.truncf %33 : vector<8x128xf32> to vector<8x128xbf16>
    %cst_23 = arith.constant dense<0.000000e+00> : vector<8x128xf32>
    %37 = tpu.matmul %35, %36, %cst_23 {dimension_numbers = #tpu.dot_dimension_numbers<[1], [0], [0], [1], [0, 0, 1, 1], [], []>} : vector<8x8xbf16>, vector<8x128xbf16>, vector<8x128xf32> -> vector<8x128xf32>
    %38 = vector.extract_strided_slice %22 {offsets = [1, 0], sizes = [1, 128], strides = [1, 1]} : vector<9x128xf32> to vector<1x128xf32>
    %39 = vector.broadcast %38 : vector<1x128xf32> to vector<8x128xf32>
    %40 = arith.mulf %37, %39 : vector<8x128xf32>
    %41 = arith.addf %32, %40 : vector<8x128xf32>
    %c3_i32 = arith.constant 3 : i32
    %42 = tpu.dynamic_rotate %21 by %c3_i32 dim 1 : vector<8x128xf32>, i32 -> vector<8x128xf32>
    %c2 = arith.constant 2 : index
    %c0_24 = arith.constant 0 : index
    %c0_25 = arith.constant 0 : index
    %43 = vector.load %arg3[%c2, %c0_24, %c0_25] : memref<9x8x8xbf16, #tpu.memory_space<vmem>>, vector<1x8x8xbf16>
    %44 = vector.shape_cast %43 : vector<1x8x8xbf16> to vector<8x8xbf16>
    %45 = arith.truncf %42 : vector<8x128xf32> to vector<8x128xbf16>
    %cst_26 = arith.constant dense<0.000000e+00> : vector<8x128xf32>
    %46 = tpu.matmul %44, %45, %cst_26 {dimension_numbers = #tpu.dot_dimension_numbers<[1], [0], [0], [1], [0, 0, 1, 1], [], []>} : vector<8x8xbf16>, vector<8x128xbf16>, vector<8x128xf32> -> vector<8x128xf32>
    %47 = vector.extract_strided_slice %22 {offsets = [2, 0], sizes = [1, 128], strides = [1, 1]} : vector<9x128xf32> to vector<1x128xf32>
    %48 = vector.broadcast %47 : vector<1x128xf32> to vector<8x128xf32>
    %49 = arith.mulf %46, %48 : vector<8x128xf32>
    %50 = arith.addf %41, %49 : vector<8x128xf32>
    %c1_i32 = arith.constant 1 : i32
    %51 = tpu.dynamic_rotate %21 by %c1_i32 dim 1 : vector<8x128xf32>, i32 -> vector<8x128xf32>
    %c3 = arith.constant 3 : index
    %c0_27 = arith.constant 0 : index
    %c0_28 = arith.constant 0 : index
    %52 = vector.load %arg3[%c3, %c0_27, %c0_28] : memref<9x8x8xbf16, #tpu.memory_space<vmem>>, vector<1x8x8xbf16>
    %53 = vector.shape_cast %52 : vector<1x8x8xbf16> to vector<8x8xbf16>
    %54 = arith.truncf %51 : vector<8x128xf32> to vector<8x128xbf16>
    %cst_29 = arith.constant dense<0.000000e+00> : vector<8x128xf32>
    %55 = tpu.matmul %53, %54, %cst_29 {dimension_numbers = #tpu.dot_dimension_numbers<[1], [0], [0], [1], [0, 0, 1, 1], [], []>} : vector<8x8xbf16>, vector<8x128xbf16>, vector<8x128xf32> -> vector<8x128xf32>
    %56 = vector.extract_strided_slice %22 {offsets = [3, 0], sizes = [1, 128], strides = [1, 1]} : vector<9x128xf32> to vector<1x128xf32>
    %57 = vector.broadcast %56 : vector<1x128xf32> to vector<8x128xf32>
    %58 = arith.mulf %55, %57 : vector<8x128xf32>
    %59 = arith.addf %50, %58 : vector<8x128xf32>
    %c4 = arith.constant 4 : index
    %c0_30 = arith.constant 0 : index
    %c0_31 = arith.constant 0 : index
    %60 = vector.load %arg3[%c4, %c0_30, %c0_31] : memref<9x8x8xbf16, #tpu.memory_space<vmem>>, vector<1x8x8xbf16>
    %61 = vector.shape_cast %60 : vector<1x8x8xbf16> to vector<8x8xbf16>
    %62 = arith.truncf %21 : vector<8x128xf32> to vector<8x128xbf16>
    %cst_32 = arith.constant dense<0.000000e+00> : vector<8x128xf32>
    %63 = tpu.matmul %61, %62, %cst_32 {dimension_numbers = #tpu.dot_dimension_numbers<[1], [0], [0], [1], [0, 0, 1, 1], [], []>} : vector<8x8xbf16>, vector<8x128xbf16>, vector<8x128xf32> -> vector<8x128xf32>
    %64 = vector.extract_strided_slice %22 {offsets = [4, 0], sizes = [1, 128], strides = [1, 1]} : vector<9x128xf32> to vector<1x128xf32>
    %65 = vector.broadcast %64 : vector<1x128xf32> to vector<8x128xf32>
    %66 = arith.mulf %63, %65 : vector<8x128xf32>
    %67 = arith.addf %59, %66 : vector<8x128xf32>
    %c127_i32 = arith.constant 127 : i32
    %68 = tpu.dynamic_rotate %21 by %c127_i32 dim 1 : vector<8x128xf32>, i32 -> vector<8x128xf32>
    %c5 = arith.constant 5 : index
    %c0_33 = arith.constant 0 : index
    %c0_34 = arith.constant 0 : index
    %69 = vector.load %arg3[%c5, %c0_33, %c0_34] : memref<9x8x8xbf16, #tpu.memory_space<vmem>>, vector<1x8x8xbf16>
    %70 = vector.shape_cast %69 : vector<1x8x8xbf16> to vector<8x8xbf16>
    %71 = arith.truncf %68 : vector<8x128xf32> to vector<8x128xbf16>
    %cst_35 = arith.constant dense<0.000000e+00> : vector<8x128xf32>
    %72 = tpu.matmul %70, %71, %cst_35 {dimension_numbers = #tpu.dot_dimension_numbers<[1], [0], [0], [1], [0, 0, 1, 1], [], []>} : vector<8x8xbf16>, vector<8x128xbf16>, vector<8x128xf32> -> vector<8x128xf32>
    %73 = vector.extract_strided_slice %22 {offsets = [5, 0], sizes = [1, 128], strides = [1, 1]} : vector<9x128xf32> to vector<1x128xf32>
    %74 = vector.broadcast %73 : vector<1x128xf32> to vector<8x128xf32>
    %75 = arith.mulf %72, %74 : vector<8x128xf32>
    %76 = arith.addf %67, %75 : vector<8x128xf32>
    %c125_i32 = arith.constant 125 : i32
    %77 = tpu.dynamic_rotate %21 by %c125_i32 dim 1 : vector<8x128xf32>, i32 -> vector<8x128xf32>
    %c6 = arith.constant 6 : index
    %c0_36 = arith.constant 0 : index
    %c0_37 = arith.constant 0 : index
    %78 = vector.load %arg3[%c6, %c0_36, %c0_37] : memref<9x8x8xbf16, #tpu.memory_space<vmem>>, vector<1x8x8xbf16>
    %79 = vector.shape_cast %78 : vector<1x8x8xbf16> to vector<8x8xbf16>
    %80 = arith.truncf %77 : vector<8x128xf32> to vector<8x128xbf16>
    %cst_38 = arith.constant dense<0.000000e+00> : vector<8x128xf32>
    %81 = tpu.matmul %79, %80, %cst_38 {dimension_numbers = #tpu.dot_dimension_numbers<[1], [0], [0], [1], [0, 0, 1, 1], [], []>} : vector<8x8xbf16>, vector<8x128xbf16>, vector<8x128xf32> -> vector<8x128xf32>
    %82 = vector.extract_strided_slice %22 {offsets = [6, 0], sizes = [1, 128], strides = [1, 1]} : vector<9x128xf32> to vector<1x128xf32>
    %83 = vector.broadcast %82 : vector<1x128xf32> to vector<8x128xf32>
    %84 = arith.mulf %81, %83 : vector<8x128xf32>
    %85 = arith.addf %76, %84 : vector<8x128xf32>
    %c124_i32 = arith.constant 124 : i32
    %86 = tpu.dynamic_rotate %21 by %c124_i32 dim 1 : vector<8x128xf32>, i32 -> vector<8x128xf32>
    %c7 = arith.constant 7 : index
    %c0_39 = arith.constant 0 : index
    %c0_40 = arith.constant 0 : index
    %87 = vector.load %arg3[%c7, %c0_39, %c0_40] : memref<9x8x8xbf16, #tpu.memory_space<vmem>>, vector<1x8x8xbf16>
    %88 = vector.shape_cast %87 : vector<1x8x8xbf16> to vector<8x8xbf16>
    %89 = arith.truncf %86 : vector<8x128xf32> to vector<8x128xbf16>
    %cst_41 = arith.constant dense<0.000000e+00> : vector<8x128xf32>
    %90 = tpu.matmul %88, %89, %cst_41 {dimension_numbers = #tpu.dot_dimension_numbers<[1], [0], [0], [1], [0, 0, 1, 1], [], []>} : vector<8x8xbf16>, vector<8x128xbf16>, vector<8x128xf32> -> vector<8x128xf32>
    %91 = vector.extract_strided_slice %22 {offsets = [7, 0], sizes = [1, 128], strides = [1, 1]} : vector<9x128xf32> to vector<1x128xf32>
    %92 = vector.broadcast %91 : vector<1x128xf32> to vector<8x128xf32>
    %93 = arith.mulf %90, %92 : vector<8x128xf32>
    %94 = arith.addf %85, %93 : vector<8x128xf32>
    %c123_i32 = arith.constant 123 : i32
    %95 = tpu.dynamic_rotate %21 by %c123_i32 dim 1 : vector<8x128xf32>, i32 -> vector<8x128xf32>
    %c8 = arith.constant 8 : index
    %c0_42 = arith.constant 0 : index
    %c0_43 = arith.constant 0 : index
    %96 = vector.load %arg3[%c8, %c0_42, %c0_43] : memref<9x8x8xbf16, #tpu.memory_space<vmem>>, vector<1x8x8xbf16>
    %97 = vector.shape_cast %96 : vector<1x8x8xbf16> to vector<8x8xbf16>
    %98 = arith.truncf %95 : vector<8x128xf32> to vector<8x128xbf16>
    %cst_44 = arith.constant dense<0.000000e+00> : vector<8x128xf32>
    %99 = tpu.matmul %97, %98, %cst_44 {dimension_numbers = #tpu.dot_dimension_numbers<[1], [0], [0], [1], [0, 0, 1, 1], [], []>} : vector<8x8xbf16>, vector<8x128xbf16>, vector<8x128xf32> -> vector<8x128xf32>
    %100 = vector.extract_strided_slice %22 {offsets = [8, 0], sizes = [1, 128], strides = [1, 1]} : vector<9x128xf32> to vector<1x128xf32>
    %101 = vector.broadcast %100 : vector<1x128xf32> to vector<8x128xf32>
    %102 = arith.mulf %99, %101 : vector<8x128xf32>
    %103 = arith.addf %94, %102 : vector<8x128xf32>
    %c0_45 = arith.constant 0 : index
    %c0_46 = arith.constant 0 : index
    %104 = vector.load %arg7[%c0_45, %c0_46] : memref<8x2xf32, #tpu.memory_space<vmem>>, vector<8x1xf32>
    %105 = vector.broadcast %104 : vector<8x1xf32> to vector<8x128xf32>
    %106 = arith.mulf %103, %105 : vector<8x128xf32>
    %c0_47 = arith.constant 0 : index
    %c1_48 = arith.constant 1 : index
    %107 = vector.load %arg7[%c0_47, %c1_48] : memref<8x2xf32, #tpu.memory_space<vmem>>, vector<8x1xf32>
    %108 = vector.broadcast %107 : vector<8x1xf32> to vector<8x128xf32>
    %109 = arith.addf %106, %108 : vector<8x128xf32>
    %cst_49 = arith.constant 0.000000e+00 : f32
    %110 = vector.broadcast %cst_49 : f32 to vector<8x128xf32>
    %111 = arith.maximumf %109, %110 : vector<8x128xf32>
    %112 = arith.truncf %111 : vector<8x128xf32> to vector<8x128xbf16>
    %c0_50 = arith.constant 0 : index
    %c0_51 = arith.constant 0 : index
    %113 = vector.load %arg4[%c0_50, %c0_51] : memref<16x8xbf16, #tpu.memory_space<vmem>>, vector<16x8xbf16>
    %cst_52 = arith.constant dense<0.000000e+00> : vector<16x128xf32>
    %114 = tpu.matmul %113, %112, %cst_52 {dimension_numbers = #tpu.dot_dimension_numbers<[1], [0], [0], [1], [0, 0, 1, 1], [], []>} : vector<16x8xbf16>, vector<8x128xbf16>, vector<16x128xf32> -> vector<16x128xf32>
    %c0_53 = arith.constant 0 : index
    %c0_54 = arith.constant 0 : index
    %115 = vector.load %arg8[%c0_53, %c0_54] : memref<16x1xf32, #tpu.memory_space<vmem>>, vector<16x1xf32>
    %116 = vector.broadcast %115 : vector<16x1xf32> to vector<16x128xf32>
    %117 = arith.addf %114, %116 : vector<16x128xf32>
    %118 = arith.extf %1 : vector<16x128xbf16> to vector<16x128xf32>
    %119 = arith.addf %117, %118 : vector<16x128xf32>
    %120 = arith.truncf %119 : vector<16x128xf32> to vector<16x128xbf16>
    %c0_55 = arith.constant 0 : index
    %c0_56 = arith.constant 0 : index
    %c0_57 = arith.constant 0 : index
    %121 = vector.load %arg10[%c0_55, %c0_56, %c0_57] : memref<1x16x128xbf16, #tpu.memory_space<vmem>>, vector<1x16x128xbf16>
    %122 = vector.shape_cast %121 : vector<1x16x128xbf16> to vector<16x128xbf16>
    %123 = vector.shape_cast %120 : vector<16x128xbf16> to vector<1x16x128xbf16>
    tpu.vector_store %arg10[%c0_55, %c0_56, %c0_57], %123 {strides = array<i32>} : memref<1x16x128xbf16, #tpu.memory_space<vmem>>, vector<1x16x128xbf16>,
    return
  }
  func.func @transform_0(%arg0: i32) -> (i32, i32, i32) {
    %c0_i32 = arith.constant 0 : i32
    %c0_i32_0 = arith.constant 0 : i32
    %c0_i32_1 = arith.constant 0 : i32
    return %arg0, %c0_i32, %c0_i32_0 : i32, i32, i32
  }
  func.func @transform_1(%arg0: i32) -> (i32, i32) {
    %c0_i32 = arith.constant 0 : i32
    %c0_i32_0 = arith.constant 0 : i32
    %c0_i32_1 = arith.constant 0 : i32
    return %c0_i32, %c0_i32_0 : i32, i32
  }
  func.func @transform_2(%arg0: i32) -> (i32, i32, i32) {
    %c0_i32 = arith.constant 0 : i32
    %c0_i32_0 = arith.constant 0 : i32
    %c0_i32_1 = arith.constant 0 : i32
    %c0_i32_2 = arith.constant 0 : i32
    return %c0_i32, %c0_i32_0, %c0_i32_1 : i32, i32, i32
  }
  func.func @transform_3(%arg0: i32) -> (i32, i32) {
    %c0_i32 = arith.constant 0 : i32
    %c0_i32_0 = arith.constant 0 : i32
    %c0_i32_1 = arith.constant 0 : i32
    return %c0_i32, %c0_i32_0 : i32, i32
  }
  func.func @transform_4(%arg0: i32) -> (i32, i32) {
    %c0_i32 = arith.constant 0 : i32
    %c0_i32_0 = arith.constant 0 : i32
    %c0_i32_1 = arith.constant 0 : i32
    return %c0_i32, %c0_i32_0 : i32, i32
  }
  func.func @transform_5(%arg0: i32) -> (i32, i32) {
    %c0_i32 = arith.constant 0 : i32
    %c0_i32_0 = arith.constant 0 : i32
    %c0_i32_1 = arith.constant 0 : i32
    return %c0_i32, %c0_i32_0 : i32, i32
  }
  func.func @transform_6(%arg0: i32) -> (i32, i32) {
    %c0_i32 = arith.constant 0 : i32
    %c0_i32_0 = arith.constant 0 : i32
    %c0_i32_1 = arith.constant 0 : i32
    return %c0_i32, %c0_i32_0 : i32, i32
  }
  func.func @transform_7(%arg0: i32) -> (i32, i32) {
    %c0_i32 = arith.constant 0 : i32
    %c0_i32_0 = arith.constant 0 : i32
    %c0_i32_1 = arith.constant 0 : i32
    return %c0_i32, %c0_i32_0 : i32, i32
  }
  func.func @transform_8(%arg0: i32) -> (i32, i32) {
    %c0_i32 = arith.constant 0 : i32
    %c0_i32_0 = arith.constant 0 : i32
    %c0_i32_1 = arith.constant 0 : i32
    return %c0_i32, %c0_i32_0 : i32, i32
  }
  func.func @transform_9(%arg0: i32) -> (i32, i32, i32) {
    %c0_i32 = arith.constant 0 : i32
    %c0_i32_0 = arith.constant 0 : i32
    %c0_i32_1 = arith.constant 0 : i32
    return %arg0, %c0_i32, %c0_i32_0 : i32, i32, i32
  }
}

module attributes {stable_mosaic.version = 11 : i64} {
  func.func @_bottleneck_kernel(%arg0: i32, %arg1: memref<1x16x128xbf16, #tpu.memory_space<vmem>>, %arg2: memref<8x16xbf16, #tpu.memory_space<vmem>>, %arg3: memref<9x8x8xbf16, #tpu.memory_space<vmem>>, %arg4: memref<16x8xbf16, #tpu.memory_space<vmem>>, %arg5: memref<16x2xf32, #tpu.memory_space<vmem>>, %arg6: memref<8x2xf32, #tpu.memory_space<vmem>>, %arg7: memref<8x2xf32, #tpu.memory_space<vmem>>, %arg8: memref<16x1xf32, #tpu.memory_space<vmem>>, %arg9: memref<9x128xf32, #tpu.memory_space<vmem>>, %arg10: memref<1x16x128xbf16, #tpu.memory_space<vmem>>) attributes {dimension_semantics = [#tpu.dimension_semantics<parallel>], iteration_bounds = array<i64: 2>, scalar_prefetch = 0 : i64, scratch_operands = 0 : i64, tpu.core_type = #tpu.core_type<tc>, window_params = [{transform_indices = @transform_0, window_bounds = array<i64: 1, 16, 128>}, {pipeline_mode = #tpu.pipeline_mode<synchronous>, transform_indices = @transform_1, window_bounds = array<i64: 8, 16>}, {pipeline_mode = #tpu.pipeline_mode<synchronous>, transform_indices = @transform_2, window_bounds = array<i64: 9, 8, 8>}, {pipeline_mode = #tpu.pipeline_mode<synchronous>, transform_indices = @transform_3, window_bounds = array<i64: 16, 8>}, {pipeline_mode = #tpu.pipeline_mode<synchronous>, transform_indices = @transform_4, window_bounds = array<i64: 16, 2>}, {pipeline_mode = #tpu.pipeline_mode<synchronous>, transform_indices = @transform_5, window_bounds = array<i64: 8, 2>}, {pipeline_mode = #tpu.pipeline_mode<synchronous>, transform_indices = @transform_6, window_bounds = array<i64: 8, 2>}, {pipeline_mode = #tpu.pipeline_mode<synchronous>, transform_indices = @transform_7, window_bounds = array<i64: 16, 1>}, {pipeline_mode = #tpu.pipeline_mode<synchronous>, transform_indices = @transform_8, window_bounds = array<i64: 9, 128>}, {transform_indices = @transform_9, window_bounds = array<i64: 1, 16, 128>}]} {
    %c0 = arith.constant 0 : index
    %c0_0 = arith.constant 0 : index
    %c0_1 = arith.constant 0 : index
    %0 = vector.load %arg1[%c0, %c0_0, %c0_1] : memref<1x16x128xbf16, #tpu.memory_space<vmem>>, vector<1x16x128xbf16>
    %1 = vector.shape_cast %0 : vector<1x16x128xbf16> to vector<16x128xbf16>
    %c0_2 = arith.constant 0 : index
    %c0_3 = arith.constant 0 : index
    %2 = vector.load %arg5[%c0_2, %c0_3] : memref<16x2xf32, #tpu.memory_space<vmem>>, vector<16x1xf32>
    %c0_4 = arith.constant 0 : index
    %c1 = arith.constant 1 : index
    %3 = vector.load %arg5[%c0_4, %c1] : memref<16x2xf32, #tpu.memory_space<vmem>>, vector<16x1xf32>
    %4 = arith.extf %1 : vector<16x128xbf16> to vector<16x128xf32>
    %5 = vector.broadcast %2 : vector<16x1xf32> to vector<16x128xf32>
    %6 = arith.mulf %4, %5 : vector<16x128xf32>
    %7 = vector.broadcast %3 : vector<16x1xf32> to vector<16x128xf32>
    %8 = arith.addf %6, %7 : vector<16x128xf32>
    %cst = arith.constant 0.000000e+00 : f32
    %9 = vector.broadcast %cst : f32 to vector<16x128xf32>
    %10 = arith.maximumf %8, %9 : vector<16x128xf32>
    %11 = arith.truncf %10 : vector<16x128xf32> to vector<16x128xbf16>
    %c0_5 = arith.constant 0 : index
    %c0_6 = arith.constant 0 : index
    %12 = vector.load %arg2[%c0_5, %c0_6] : memref<8x16xbf16, #tpu.memory_space<vmem>>, vector<8x16xbf16>
    %cst_7 = arith.constant dense<0.000000e+00> : vector<8x128xf32>
    %13 = tpu.matmul %12, %11, %cst_7 {dimension_numbers = #tpu.dot_dimension_numbers<[1], [0], [0], [1], [0, 0, 1, 1], [], []>} : vector<8x16xbf16>, vector<16x128xbf16>, vector<8x128xf32> -> vector<8x128xf32>
    %c0_8 = arith.constant 0 : index
    %c0_9 = arith.constant 0 : index
    %14 = vector.load %arg6[%c0_8, %c0_9] : memref<8x2xf32, #tpu.memory_space<vmem>>, vector<8x1xf32>
    %15 = vector.broadcast %14 : vector<8x1xf32> to vector<8x128xf32>
    %16 = arith.mulf %13, %15 : vector<8x128xf32>
    %c0_10 = arith.constant 0 : index
    %c1_11 = arith.constant 1 : index
    %17 = vector.load %arg6[%c0_10, %c1_11] : memref<8x2xf32, #tpu.memory_space<vmem>>, vector<8x1xf32>
    %18 = vector.broadcast %17 : vector<8x1xf32> to vector<8x128xf32>
    %19 = arith.addf %16, %18 : vector<8x128xf32>
    %cst_12 = arith.constant 0.000000e+00 : f32
    %20 = vector.broadcast %cst_12 : f32 to vector<8x128xf32>
    %21 = arith.maximumf %19, %20 : vector<8x128xf32>
    %c0_13 = arith.constant 0 : index
    %c0_14 = arith.constant 0 : index
    %22 = vector.load %arg9[%c0_13, %c0_14] : memref<9x128xf32, #tpu.memory_space<vmem>>, vector<9x128xf32>
    %cst_15 = arith.constant 0.000000e+00 : f32
    %23 = vector.broadcast %cst_15 : f32 to vector<8x128xf32>
    %c3_i32 = arith.constant 3 : i32
    %24 = tpu.dynamic_rotate %21 by %c3_i32 dim 1 : vector<8x128xf32>, i32 -> vector<8x128xf32>
    %c0_16 = arith.constant 0 : index
    %c0_17 = arith.constant 0 : index
    %c0_18 = arith.constant 0 : index
    %25 = vector.load %arg3[%c0_16, %c0_17, %c0_18] : memref<9x8x8xbf16, #tpu.memory_space<vmem>>, vector<1x8x8xbf16>
    %26 = vector.shape_cast %25 : vector<1x8x8xbf16> to vector<8x8xbf16>
    %27 = arith.truncf %24 : vector<8x128xf32> to vector<8x128xbf16>
    %cst_19 = arith.constant dense<0.000000e+00> : vector<8x128xf32>
    %28 = tpu.matmul %26, %27, %cst_19 {dimension_numbers = #tpu.dot_dimension_numbers<[1], [0], [0], [1], [0, 0, 1, 1], [], []>} : vector<8x8xbf16>, vector<8x128xbf16>, vector<8x128xf32> -> vector<8x128xf32>
    %29 = vector.extract_strided_slice %22 {offsets = [0, 0], sizes = [1, 128], strides = [1, 1]} : vector<9x128xf32> to vector<1x128xf32>
    %30 = vector.broadcast %29 : vector<1x128xf32> to vector<8x128xf32>
    %31 = arith.mulf %28, %30 : vector<8x128xf32>
    %32 = arith.addf %23, %31 : vector<8x128xf32>
    %c2_i32 = arith.constant 2 : i32
    %33 = tpu.dynamic_rotate %21 by %c2_i32 dim 1 : vector<8x128xf32>, i32 -> vector<8x128xf32>
    %c1_20 = arith.constant 1 : index
    %c0_21 = arith.constant 0 : index
    %c0_22 = arith.constant 0 : index
    %34 = vector.load %arg3[%c1_20, %c0_21, %c0_22] : memref<9x8x8xbf16, #tpu.memory_space<vmem>>, vector<1x8x8xbf16>
    %35 = vector.shape_cast %34 : vector<1x8x8xbf16> to vector<8x8xbf16>
    %36 = arith.truncf %33 : vector<8x128xf32> to vector<8x128xbf16>
    %cst_23 = arith.constant dense<0.000000e+00> : vector<8x128xf32>
    %37 = tpu.matmul %35, %36, %cst_23 {dimension_numbers = #tpu.dot_dimension_numbers<[1], [0], [0], [1], [0, 0, 1, 1], [], []>} : vector<8x8xbf16>, vector<8x128xbf16>, vector<8x128xf32> -> vector<8x128xf32>
    %38 = vector.extract_strided_slice %22 {offsets = [1, 0], sizes = [1, 128], strides = [1, 1]} : vector<9x128xf32> to vector<1x128xf32>
    %39 = vector.broadcast %38 : vector<1x128xf32> to vector<8x128xf32>
    %40 = arith.mulf %37, %39 : vector<8x128xf32>
    %41 = arith.addf %32, %40 : vector<8x128xf32>
    %c1_i32 = arith.constant 1 : i32
    %42 = tpu.dynamic_rotate %21 by %c1_i32 dim 1 : vector<8x128xf32>, i32 -> vector<8x128xf32>
    %c2 = arith.constant 2 : index
    %c0_24 = arith.constant 0 : index
    %c0_25 = arith.constant 0 : index
    %43 = vector.load %arg3[%c2, %c0_24, %c0_25] : memref<9x8x8xbf16, #tpu.memory_space<vmem>>, vector<1x8x8xbf16>
    %44 = vector.shape_cast %43 : vector<1x8x8xbf16> to vector<8x8xbf16>
    %45 = arith.truncf %42 : vector<8x128xf32> to vector<8x128xbf16>
    %cst_26 = arith.constant dense<0.000000e+00> : vector<8x128xf32>
    %46 = tpu.matmul %44, %45, %cst_26 {dimension_numbers = #tpu.dot_dimension_numbers<[1], [0], [0], [1], [0, 0, 1, 1], [], []>} : vector<8x8xbf16>, vector<8x128xbf16>, vector<8x128xf32> -> vector<8x128xf32>
    %47 = vector.extract_strided_slice %22 {offsets = [2, 0], sizes = [1, 128], strides = [1, 1]} : vector<9x128xf32> to vector<1x128xf32>
    %48 = vector.broadcast %47 : vector<1x128xf32> to vector<8x128xf32>
    %49 = arith.mulf %46, %48 : vector<8x128xf32>
    %50 = arith.addf %41, %49 : vector<8x128xf32>
    %c1_i32_27 = arith.constant 1 : i32
    %51 = tpu.dynamic_rotate %21 by %c1_i32_27 dim 1 : vector<8x128xf32>, i32 -> vector<8x128xf32>
    %c3 = arith.constant 3 : index
    %c0_28 = arith.constant 0 : index
    %c0_29 = arith.constant 0 : index
    %52 = vector.load %arg3[%c3, %c0_28, %c0_29] : memref<9x8x8xbf16, #tpu.memory_space<vmem>>, vector<1x8x8xbf16>
    %53 = vector.shape_cast %52 : vector<1x8x8xbf16> to vector<8x8xbf16>
    %54 = arith.truncf %51 : vector<8x128xf32> to vector<8x128xbf16>
    %cst_30 = arith.constant dense<0.000000e+00> : vector<8x128xf32>
    %55 = tpu.matmul %53, %54, %cst_30 {dimension_numbers = #tpu.dot_dimension_numbers<[1], [0], [0], [1], [0, 0, 1, 1], [], []>} : vector<8x8xbf16>, vector<8x128xbf16>, vector<8x128xf32> -> vector<8x128xf32>
    %56 = vector.extract_strided_slice %22 {offsets = [3, 0], sizes = [1, 128], strides = [1, 1]} : vector<9x128xf32> to vector<1x128xf32>
    %57 = vector.broadcast %56 : vector<1x128xf32> to vector<8x128xf32>
    %58 = arith.mulf %55, %57 : vector<8x128xf32>
    %59 = arith.addf %50, %58 : vector<8x128xf32>
    %c4 = arith.constant 4 : index
    %c0_31 = arith.constant 0 : index
    %c0_32 = arith.constant 0 : index
    %60 = vector.load %arg3[%c4, %c0_31, %c0_32] : memref<9x8x8xbf16, #tpu.memory_space<vmem>>, vector<1x8x8xbf16>
    %61 = vector.shape_cast %60 : vector<1x8x8xbf16> to vector<8x8xbf16>
    %62 = arith.truncf %21 : vector<8x128xf32> to vector<8x128xbf16>
    %cst_33 = arith.constant dense<0.000000e+00> : vector<8x128xf32>
    %63 = tpu.matmul %61, %62, %cst_33 {dimension_numbers = #tpu.dot_dimension_numbers<[1], [0], [0], [1], [0, 0, 1, 1], [], []>} : vector<8x8xbf16>, vector<8x128xbf16>, vector<8x128xf32> -> vector<8x128xf32>
    %64 = vector.extract_strided_slice %22 {offsets = [4, 0], sizes = [1, 128], strides = [1, 1]} : vector<9x128xf32> to vector<1x128xf32>
    %65 = vector.broadcast %64 : vector<1x128xf32> to vector<8x128xf32>
    %66 = arith.mulf %63, %65 : vector<8x128xf32>
    %67 = arith.addf %59, %66 : vector<8x128xf32>
    %c127_i32 = arith.constant 127 : i32
    %68 = tpu.dynamic_rotate %21 by %c127_i32 dim 1 : vector<8x128xf32>, i32 -> vector<8x128xf32>
    %c5 = arith.constant 5 : index
    %c0_34 = arith.constant 0 : index
    %c0_35 = arith.constant 0 : index
    %69 = vector.load %arg3[%c5, %c0_34, %c0_35] : memref<9x8x8xbf16, #tpu.memory_space<vmem>>, vector<1x8x8xbf16>
    %70 = vector.shape_cast %69 : vector<1x8x8xbf16> to vector<8x8xbf16>
    %71 = arith.truncf %68 : vector<8x128xf32> to vector<8x128xbf16>
    %cst_36 = arith.constant dense<0.000000e+00> : vector<8x128xf32>
    %72 = tpu.matmul %70, %71, %cst_36 {dimension_numbers = #tpu.dot_dimension_numbers<[1], [0], [0], [1], [0, 0, 1, 1], [], []>} : vector<8x8xbf16>, vector<8x128xbf16>, vector<8x128xf32> -> vector<8x128xf32>
    %73 = vector.extract_strided_slice %22 {offsets = [5, 0], sizes = [1, 128], strides = [1, 1]} : vector<9x128xf32> to vector<1x128xf32>
    %74 = vector.broadcast %73 : vector<1x128xf32> to vector<8x128xf32>
    %75 = arith.mulf %72, %74 : vector<8x128xf32>
    %76 = arith.addf %67, %75 : vector<8x128xf32>
    %c127_i32_37 = arith.constant 127 : i32
    %77 = tpu.dynamic_rotate %21 by %c127_i32_37 dim 1 : vector<8x128xf32>, i32 -> vector<8x128xf32>
    %c6 = arith.constant 6 : index
    %c0_38 = arith.constant 0 : index
    %c0_39 = arith.constant 0 : index
    %78 = vector.load %arg3[%c6, %c0_38, %c0_39] : memref<9x8x8xbf16, #tpu.memory_space<vmem>>, vector<1x8x8xbf16>
    %79 = vector.shape_cast %78 : vector<1x8x8xbf16> to vector<8x8xbf16>
    %80 = arith.truncf %77 : vector<8x128xf32> to vector<8x128xbf16>
    %cst_40 = arith.constant dense<0.000000e+00> : vector<8x128xf32>
    %81 = tpu.matmul %79, %80, %cst_40 {dimension_numbers = #tpu.dot_dimension_numbers<[1], [0], [0], [1], [0, 0, 1, 1], [], []>} : vector<8x8xbf16>, vector<8x128xbf16>, vector<8x128xf32> -> vector<8x128xf32>
    %82 = vector.extract_strided_slice %22 {offsets = [6, 0], sizes = [1, 128], strides = [1, 1]} : vector<9x128xf32> to vector<1x128xf32>
    %83 = vector.broadcast %82 : vector<1x128xf32> to vector<8x128xf32>
    %84 = arith.mulf %81, %83 : vector<8x128xf32>
    %85 = arith.addf %76, %84 : vector<8x128xf32>
    %c126_i32 = arith.constant 126 : i32
    %86 = tpu.dynamic_rotate %21 by %c126_i32 dim 1 : vector<8x128xf32>, i32 -> vector<8x128xf32>
    %c7 = arith.constant 7 : index
    %c0_41 = arith.constant 0 : index
    %c0_42 = arith.constant 0 : index
    %87 = vector.load %arg3[%c7, %c0_41, %c0_42] : memref<9x8x8xbf16, #tpu.memory_space<vmem>>, vector<1x8x8xbf16>
    %88 = vector.shape_cast %87 : vector<1x8x8xbf16> to vector<8x8xbf16>
    %89 = arith.truncf %86 : vector<8x128xf32> to vector<8x128xbf16>
    %cst_43 = arith.constant dense<0.000000e+00> : vector<8x128xf32>
    %90 = tpu.matmul %88, %89, %cst_43 {dimension_numbers = #tpu.dot_dimension_numbers<[1], [0], [0], [1], [0, 0, 1, 1], [], []>} : vector<8x8xbf16>, vector<8x128xbf16>, vector<8x128xf32> -> vector<8x128xf32>
    %91 = vector.extract_strided_slice %22 {offsets = [7, 0], sizes = [1, 128], strides = [1, 1]} : vector<9x128xf32> to vector<1x128xf32>
    %92 = vector.broadcast %91 : vector<1x128xf32> to vector<8x128xf32>
    %93 = arith.mulf %90, %92 : vector<8x128xf32>
    %94 = arith.addf %85, %93 : vector<8x128xf32>
    %c125_i32 = arith.constant 125 : i32
    %95 = tpu.dynamic_rotate %21 by %c125_i32 dim 1 : vector<8x128xf32>, i32 -> vector<8x128xf32>
    %c8 = arith.constant 8 : index
    %c0_44 = arith.constant 0 : index
    %c0_45 = arith.constant 0 : index
    %96 = vector.load %arg3[%c8, %c0_44, %c0_45] : memref<9x8x8xbf16, #tpu.memory_space<vmem>>, vector<1x8x8xbf16>
    %97 = vector.shape_cast %96 : vector<1x8x8xbf16> to vector<8x8xbf16>
    %98 = arith.truncf %95 : vector<8x128xf32> to vector<8x128xbf16>
    %cst_46 = arith.constant dense<0.000000e+00> : vector<8x128xf32>
    %99 = tpu.matmul %97, %98, %cst_46 {dimension_numbers = #tpu.dot_dimension_numbers<[1], [0], [0], [1], [0, 0, 1, 1], [], []>} : vector<8x8xbf16>, vector<8x128xbf16>, vector<8x128xf32> -> vector<8x128xf32>
    %100 = vector.extract_strided_slice %22 {offsets = [8, 0], sizes = [1, 128], strides = [1, 1]} : vector<9x128xf32> to vector<1x128xf32>
    %101 = vector.broadcast %100 : vector<1x128xf32> to vector<8x128xf32>
    %102 = arith.mulf %99, %101 : vector<8x128xf32>
    %103 = arith.addf %94, %102 : vector<8x128xf32>
    %c0_47 = arith.constant 0 : index
    %c0_48 = arith.constant 0 : index
    %104 = vector.load %arg7[%c0_47, %c0_48] : memref<8x2xf32, #tpu.memory_space<vmem>>, vector<8x1xf32>
    %105 = vector.broadcast %104 : vector<8x1xf32> to vector<8x128xf32>
    %106 = arith.mulf %103, %105 : vector<8x128xf32>
    %c0_49 = arith.constant 0 : index
    %c1_50 = arith.constant 1 : index
    %107 = vector.load %arg7[%c0_49, %c1_50] : memref<8x2xf32, #tpu.memory_space<vmem>>, vector<8x1xf32>
    %108 = vector.broadcast %107 : vector<8x1xf32> to vector<8x128xf32>
    %109 = arith.addf %106, %108 : vector<8x128xf32>
    %cst_51 = arith.constant 0.000000e+00 : f32
    %110 = vector.broadcast %cst_51 : f32 to vector<8x128xf32>
    %111 = arith.maximumf %109, %110 : vector<8x128xf32>
    %112 = arith.truncf %111 : vector<8x128xf32> to vector<8x128xbf16>
    %c0_52 = arith.constant 0 : index
    %c0_53 = arith.constant 0 : index
    %113 = vector.load %arg4[%c0_52, %c0_53] : memref<16x8xbf16, #tpu.memory_space<vmem>>, vector<16x8xbf16>
    %cst_54 = arith.constant dense<0.000000e+00> : vector<16x128xf32>
    %114 = tpu.matmul %113, %112, %cst_54 {dimension_numbers = #tpu.dot_dimension_numbers<[1], [0], [0], [1], [0, 0, 1, 1], [], []>} : vector<16x8xbf16>, vector<8x128xbf16>, vector<16x128xf32> -> vector<16x128xf32>
    %c0_55 = arith.constant 0 : index
    %c0_56 = arith.constant 0 : index
    %115 = vector.load %arg8[%c0_55, %c0_56] : memref<16x1xf32, #tpu.memory_space<vmem>>, vector<16x1xf32>
    %116 = vector.broadcast %115 : vector<16x1xf32> to vector<16x128xf32>
    %117 = arith.addf %114, %116 : vector<16x128xf32>
    %118 = arith.extf %1 : vector<16x128xbf16> to vector<16x128xf32>
    %119 = arith.addf %117, %118 : vector<16x128xf32>
    %120 = arith.truncf %119 : vector<16x128xf32> to vector<16x128xbf16>
    %c0_57 = arith.constant 0 : index
    %c0_58 = arith.constant 0 : index
    %c0_59 = arith.constant 0 : index
    %121 = vector.load %arg10[%c0_57, %c0_58, %c0_59] : memref<1x16x128xbf16, #tpu.memory_space<vmem>>, vector<1x16x128xbf16>
    %122 = vector.shape_cast %121 : vector<1x16x128xbf16> to vector<16x128xbf16>
    %123 = vector.shape_cast %120 : vector<16x128xbf16> to vector<1x16x128xbf16>
    tpu.vector_store %arg10[%c0_57, %c0_58, %c0_59], %123 {strides = array<i32>} : memref<1x16x128xbf16, #tpu.memory_space<vmem>>, vector<1x16x128xbf16>,
    return
  }
  func.func @transform_0(%arg0: i32) -> (i32, i32, i32) {
    %c0_i32 = arith.constant 0 : i32
    %c0_i32_0 = arith.constant 0 : i32
    %c0_i32_1 = arith.constant 0 : i32
    return %arg0, %c0_i32, %c0_i32_0 : i32, i32, i32
  }
  func.func @transform_1(%arg0: i32) -> (i32, i32) {
    %c0_i32 = arith.constant 0 : i32
    %c0_i32_0 = arith.constant 0 : i32
    %c0_i32_1 = arith.constant 0 : i32
    return %c0_i32, %c0_i32_0 : i32, i32
  }
  func.func @transform_2(%arg0: i32) -> (i32, i32, i32) {
    %c0_i32 = arith.constant 0 : i32
    %c0_i32_0 = arith.constant 0 : i32
    %c0_i32_1 = arith.constant 0 : i32
    %c0_i32_2 = arith.constant 0 : i32
    return %c0_i32, %c0_i32_0, %c0_i32_1 : i32, i32, i32
  }
  func.func @transform_3(%arg0: i32) -> (i32, i32) {
    %c0_i32 = arith.constant 0 : i32
    %c0_i32_0 = arith.constant 0 : i32
    %c0_i32_1 = arith.constant 0 : i32
    return %c0_i32, %c0_i32_0 : i32, i32
  }
  func.func @transform_4(%arg0: i32) -> (i32, i32) {
    %c0_i32 = arith.constant 0 : i32
    %c0_i32_0 = arith.constant 0 : i32
    %c0_i32_1 = arith.constant 0 : i32
    return %c0_i32, %c0_i32_0 : i32, i32
  }
  func.func @transform_5(%arg0: i32) -> (i32, i32) {
    %c0_i32 = arith.constant 0 : i32
    %c0_i32_0 = arith.constant 0 : i32
    %c0_i32_1 = arith.constant 0 : i32
    return %c0_i32, %c0_i32_0 : i32, i32
  }
  func.func @transform_6(%arg0: i32) -> (i32, i32) {
    %c0_i32 = arith.constant 0 : i32
    %c0_i32_0 = arith.constant 0 : i32
    %c0_i32_1 = arith.constant 0 : i32
    return %c0_i32, %c0_i32_0 : i32, i32
  }
  func.func @transform_7(%arg0: i32) -> (i32, i32) {
    %c0_i32 = arith.constant 0 : i32
    %c0_i32_0 = arith.constant 0 : i32
    %c0_i32_1 = arith.constant 0 : i32
    return %c0_i32, %c0_i32_0 : i32, i32
  }
  func.func @transform_8(%arg0: i32) -> (i32, i32) {
    %c0_i32 = arith.constant 0 : i32
    %c0_i32_0 = arith.constant 0 : i32
    %c0_i32_1 = arith.constant 0 : i32
    return %c0_i32, %c0_i32_0 : i32, i32
  }
  func.func @transform_9(%arg0: i32) -> (i32, i32, i32) {
    %c0_i32 = arith.constant 0 : i32
    %c0_i32_0 = arith.constant 0 : i32
    %c0_i32_1 = arith.constant 0 : i32
    return %arg0, %c0_i32, %c0_i32_0 : i32, i32, i32
  }
}

module attributes {stable_mosaic.version = 11 : i64} {
  func.func @_bottleneck_kernel(%arg0: i32, %arg1: memref<1x16x128xbf16, #tpu.memory_space<vmem>>, %arg2: memref<8x16xbf16, #tpu.memory_space<vmem>>, %arg3: memref<9x8x8xbf16, #tpu.memory_space<vmem>>, %arg4: memref<16x8xbf16, #tpu.memory_space<vmem>>, %arg5: memref<16x2xf32, #tpu.memory_space<vmem>>, %arg6: memref<8x2xf32, #tpu.memory_space<vmem>>, %arg7: memref<8x2xf32, #tpu.memory_space<vmem>>, %arg8: memref<16x1xf32, #tpu.memory_space<vmem>>, %arg9: memref<9x128xf32, #tpu.memory_space<vmem>>, %arg10: memref<1x16x128xbf16, #tpu.memory_space<vmem>>) attributes {dimension_semantics = [#tpu.dimension_semantics<parallel>], iteration_bounds = array<i64: 2>, scalar_prefetch = 0 : i64, scratch_operands = 0 : i64, tpu.core_type = #tpu.core_type<tc>, window_params = [{transform_indices = @transform_0, window_bounds = array<i64: 1, 16, 128>}, {pipeline_mode = #tpu.pipeline_mode<synchronous>, transform_indices = @transform_1, window_bounds = array<i64: 8, 16>}, {pipeline_mode = #tpu.pipeline_mode<synchronous>, transform_indices = @transform_2, window_bounds = array<i64: 9, 8, 8>}, {pipeline_mode = #tpu.pipeline_mode<synchronous>, transform_indices = @transform_3, window_bounds = array<i64: 16, 8>}, {pipeline_mode = #tpu.pipeline_mode<synchronous>, transform_indices = @transform_4, window_bounds = array<i64: 16, 2>}, {pipeline_mode = #tpu.pipeline_mode<synchronous>, transform_indices = @transform_5, window_bounds = array<i64: 8, 2>}, {pipeline_mode = #tpu.pipeline_mode<synchronous>, transform_indices = @transform_6, window_bounds = array<i64: 8, 2>}, {pipeline_mode = #tpu.pipeline_mode<synchronous>, transform_indices = @transform_7, window_bounds = array<i64: 16, 1>}, {pipeline_mode = #tpu.pipeline_mode<synchronous>, transform_indices = @transform_8, window_bounds = array<i64: 9, 128>}, {transform_indices = @transform_9, window_bounds = array<i64: 1, 16, 128>}]} {
    %c0 = arith.constant 0 : index
    %c0_0 = arith.constant 0 : index
    %c0_1 = arith.constant 0 : index
    %0 = vector.load %arg1[%c0, %c0_0, %c0_1] : memref<1x16x128xbf16, #tpu.memory_space<vmem>>, vector<1x16x128xbf16>
    %1 = vector.shape_cast %0 : vector<1x16x128xbf16> to vector<16x128xbf16>
    %c0_2 = arith.constant 0 : index
    %c0_3 = arith.constant 0 : index
    %2 = vector.load %arg5[%c0_2, %c0_3] : memref<16x2xf32, #tpu.memory_space<vmem>>, vector<16x1xf32>
    %c0_4 = arith.constant 0 : index
    %c1 = arith.constant 1 : index
    %3 = vector.load %arg5[%c0_4, %c1] : memref<16x2xf32, #tpu.memory_space<vmem>>, vector<16x1xf32>
    %4 = arith.extf %1 : vector<16x128xbf16> to vector<16x128xf32>
    %5 = vector.broadcast %2 : vector<16x1xf32> to vector<16x128xf32>
    %6 = arith.mulf %4, %5 : vector<16x128xf32>
    %7 = vector.broadcast %3 : vector<16x1xf32> to vector<16x128xf32>
    %8 = arith.addf %6, %7 : vector<16x128xf32>
    %cst = arith.constant 0.000000e+00 : f32
    %9 = vector.broadcast %cst : f32 to vector<16x128xf32>
    %10 = arith.maximumf %8, %9 : vector<16x128xf32>
    %11 = arith.truncf %10 : vector<16x128xf32> to vector<16x128xbf16>
    %c0_5 = arith.constant 0 : index
    %c0_6 = arith.constant 0 : index
    %12 = vector.load %arg2[%c0_5, %c0_6] : memref<8x16xbf16, #tpu.memory_space<vmem>>, vector<8x16xbf16>
    %cst_7 = arith.constant dense<0.000000e+00> : vector<8x128xf32>
    %13 = tpu.matmul %12, %11, %cst_7 {dimension_numbers = #tpu.dot_dimension_numbers<[1], [0], [0], [1], [0, 0, 1, 1], [], []>} : vector<8x16xbf16>, vector<16x128xbf16>, vector<8x128xf32> -> vector<8x128xf32>
    %c0_8 = arith.constant 0 : index
    %c0_9 = arith.constant 0 : index
    %14 = vector.load %arg6[%c0_8, %c0_9] : memref<8x2xf32, #tpu.memory_space<vmem>>, vector<8x1xf32>
    %15 = vector.broadcast %14 : vector<8x1xf32> to vector<8x128xf32>
    %16 = arith.mulf %13, %15 : vector<8x128xf32>
    %c0_10 = arith.constant 0 : index
    %c1_11 = arith.constant 1 : index
    %17 = vector.load %arg6[%c0_10, %c1_11] : memref<8x2xf32, #tpu.memory_space<vmem>>, vector<8x1xf32>
    %18 = vector.broadcast %17 : vector<8x1xf32> to vector<8x128xf32>
    %19 = arith.addf %16, %18 : vector<8x128xf32>
    %cst_12 = arith.constant 0.000000e+00 : f32
    %20 = vector.broadcast %cst_12 : f32 to vector<8x128xf32>
    %21 = arith.maximumf %19, %20 : vector<8x128xf32>
    %c0_13 = arith.constant 0 : index
    %c0_14 = arith.constant 0 : index
    %22 = vector.load %arg9[%c0_13, %c0_14] : memref<9x128xf32, #tpu.memory_space<vmem>>, vector<9x128xf32>
    %cst_15 = arith.constant 0.000000e+00 : f32
    %23 = vector.broadcast %cst_15 : f32 to vector<8x128xf32>
    %c5_i32 = arith.constant 5 : i32
    %24 = tpu.dynamic_rotate %21 by %c5_i32 dim 1 : vector<8x128xf32>, i32 -> vector<8x128xf32>
    %c0_16 = arith.constant 0 : index
    %c0_17 = arith.constant 0 : index
    %c0_18 = arith.constant 0 : index
    %25 = vector.load %arg3[%c0_16, %c0_17, %c0_18] : memref<9x8x8xbf16, #tpu.memory_space<vmem>>, vector<1x8x8xbf16>
    %26 = vector.shape_cast %25 : vector<1x8x8xbf16> to vector<8x8xbf16>
    %27 = arith.truncf %24 : vector<8x128xf32> to vector<8x128xbf16>
    %cst_19 = arith.constant dense<0.000000e+00> : vector<8x128xf32>
    %28 = tpu.matmul %26, %27, %cst_19 {dimension_numbers = #tpu.dot_dimension_numbers<[1], [0], [0], [1], [0, 0, 1, 1], [], []>} : vector<8x8xbf16>, vector<8x128xbf16>, vector<8x128xf32> -> vector<8x128xf32>
    %29 = vector.extract_strided_slice %22 {offsets = [0, 0], sizes = [1, 128], strides = [1, 1]} : vector<9x128xf32> to vector<1x128xf32>
    %30 = vector.broadcast %29 : vector<1x128xf32> to vector<8x128xf32>
    %31 = arith.mulf %28, %30 : vector<8x128xf32>
    %32 = arith.addf %23, %31 : vector<8x128xf32>
    %c4_i32 = arith.constant 4 : i32
    %33 = tpu.dynamic_rotate %21 by %c4_i32 dim 1 : vector<8x128xf32>, i32 -> vector<8x128xf32>
    %c1_20 = arith.constant 1 : index
    %c0_21 = arith.constant 0 : index
    %c0_22 = arith.constant 0 : index
    %34 = vector.load %arg3[%c1_20, %c0_21, %c0_22] : memref<9x8x8xbf16, #tpu.memory_space<vmem>>, vector<1x8x8xbf16>
    %35 = vector.shape_cast %34 : vector<1x8x8xbf16> to vector<8x8xbf16>
    %36 = arith.truncf %33 : vector<8x128xf32> to vector<8x128xbf16>
    %cst_23 = arith.constant dense<0.000000e+00> : vector<8x128xf32>
    %37 = tpu.matmul %35, %36, %cst_23 {dimension_numbers = #tpu.dot_dimension_numbers<[1], [0], [0], [1], [0, 0, 1, 1], [], []>} : vector<8x8xbf16>, vector<8x128xbf16>, vector<8x128xf32> -> vector<8x128xf32>
    %38 = vector.extract_strided_slice %22 {offsets = [1, 0], sizes = [1, 128], strides = [1, 1]} : vector<9x128xf32> to vector<1x128xf32>
    %39 = vector.broadcast %38 : vector<1x128xf32> to vector<8x128xf32>
    %40 = arith.mulf %37, %39 : vector<8x128xf32>
    %41 = arith.addf %32, %40 : vector<8x128xf32>
    %c3_i32 = arith.constant 3 : i32
    %42 = tpu.dynamic_rotate %21 by %c3_i32 dim 1 : vector<8x128xf32>, i32 -> vector<8x128xf32>
    %c2 = arith.constant 2 : index
    %c0_24 = arith.constant 0 : index
    %c0_25 = arith.constant 0 : index
    %43 = vector.load %arg3[%c2, %c0_24, %c0_25] : memref<9x8x8xbf16, #tpu.memory_space<vmem>>, vector<1x8x8xbf16>
    %44 = vector.shape_cast %43 : vector<1x8x8xbf16> to vector<8x8xbf16>
    %45 = arith.truncf %42 : vector<8x128xf32> to vector<8x128xbf16>
    %cst_26 = arith.constant dense<0.000000e+00> : vector<8x128xf32>
    %46 = tpu.matmul %44, %45, %cst_26 {dimension_numbers = #tpu.dot_dimension_numbers<[1], [0], [0], [1], [0, 0, 1, 1], [], []>} : vector<8x8xbf16>, vector<8x128xbf16>, vector<8x128xf32> -> vector<8x128xf32>
    %47 = vector.extract_strided_slice %22 {offsets = [2, 0], sizes = [1, 128], strides = [1, 1]} : vector<9x128xf32> to vector<1x128xf32>
    %48 = vector.broadcast %47 : vector<1x128xf32> to vector<8x128xf32>
    %49 = arith.mulf %46, %48 : vector<8x128xf32>
    %50 = arith.addf %41, %49 : vector<8x128xf32>
    %c1_i32 = arith.constant 1 : i32
    %51 = tpu.dynamic_rotate %21 by %c1_i32 dim 1 : vector<8x128xf32>, i32 -> vector<8x128xf32>
    %c3 = arith.constant 3 : index
    %c0_27 = arith.constant 0 : index
    %c0_28 = arith.constant 0 : index
    %52 = vector.load %arg3[%c3, %c0_27, %c0_28] : memref<9x8x8xbf16, #tpu.memory_space<vmem>>, vector<1x8x8xbf16>
    %53 = vector.shape_cast %52 : vector<1x8x8xbf16> to vector<8x8xbf16>
    %54 = arith.truncf %51 : vector<8x128xf32> to vector<8x128xbf16>
    %cst_29 = arith.constant dense<0.000000e+00> : vector<8x128xf32>
    %55 = tpu.matmul %53, %54, %cst_29 {dimension_numbers = #tpu.dot_dimension_numbers<[1], [0], [0], [1], [0, 0, 1, 1], [], []>} : vector<8x8xbf16>, vector<8x128xbf16>, vector<8x128xf32> -> vector<8x128xf32>
    %56 = vector.extract_strided_slice %22 {offsets = [3, 0], sizes = [1, 128], strides = [1, 1]} : vector<9x128xf32> to vector<1x128xf32>
    %57 = vector.broadcast %56 : vector<1x128xf32> to vector<8x128xf32>
    %58 = arith.mulf %55, %57 : vector<8x128xf32>
    %59 = arith.addf %50, %58 : vector<8x128xf32>
    %c4 = arith.constant 4 : index
    %c0_30 = arith.constant 0 : index
    %c0_31 = arith.constant 0 : index
    %60 = vector.load %arg3[%c4, %c0_30, %c0_31] : memref<9x8x8xbf16, #tpu.memory_space<vmem>>, vector<1x8x8xbf16>
    %61 = vector.shape_cast %60 : vector<1x8x8xbf16> to vector<8x8xbf16>
    %62 = arith.truncf %21 : vector<8x128xf32> to vector<8x128xbf16>
    %cst_32 = arith.constant dense<0.000000e+00> : vector<8x128xf32>
    %63 = tpu.matmul %61, %62, %cst_32 {dimension_numbers = #tpu.dot_dimension_numbers<[1], [0], [0], [1], [0, 0, 1, 1], [], []>} : vector<8x8xbf16>, vector<8x128xbf16>, vector<8x128xf32> -> vector<8x128xf32>
    %64 = vector.extract_strided_slice %22 {offsets = [4, 0], sizes = [1, 128], strides = [1, 1]} : vector<9x128xf32> to vector<1x128xf32>
    %65 = vector.broadcast %64 : vector<1x128xf32> to vector<8x128xf32>
    %66 = arith.mulf %63, %65 : vector<8x128xf32>
    %67 = arith.addf %59, %66 : vector<8x128xf32>
    %c127_i32 = arith.constant 127 : i32
    %68 = tpu.dynamic_rotate %21 by %c127_i32 dim 1 : vector<8x128xf32>, i32 -> vector<8x128xf32>
    %c5 = arith.constant 5 : index
    %c0_33 = arith.constant 0 : index
    %c0_34 = arith.constant 0 : index
    %69 = vector.load %arg3[%c5, %c0_33, %c0_34] : memref<9x8x8xbf16, #tpu.memory_space<vmem>>, vector<1x8x8xbf16>
    %70 = vector.shape_cast %69 : vector<1x8x8xbf16> to vector<8x8xbf16>
    %71 = arith.truncf %68 : vector<8x128xf32> to vector<8x128xbf16>
    %cst_35 = arith.constant dense<0.000000e+00> : vector<8x128xf32>
    %72 = tpu.matmul %70, %71, %cst_35 {dimension_numbers = #tpu.dot_dimension_numbers<[1], [0], [0], [1], [0, 0, 1, 1], [], []>} : vector<8x8xbf16>, vector<8x128xbf16>, vector<8x128xf32> -> vector<8x128xf32>
    %73 = vector.extract_strided_slice %22 {offsets = [5, 0], sizes = [1, 128], strides = [1, 1]} : vector<9x128xf32> to vector<1x128xf32>
    %74 = vector.broadcast %73 : vector<1x128xf32> to vector<8x128xf32>
    %75 = arith.mulf %72, %74 : vector<8x128xf32>
    %76 = arith.addf %67, %75 : vector<8x128xf32>
    %c125_i32 = arith.constant 125 : i32
    %77 = tpu.dynamic_rotate %21 by %c125_i32 dim 1 : vector<8x128xf32>, i32 -> vector<8x128xf32>
    %c6 = arith.constant 6 : index
    %c0_36 = arith.constant 0 : index
    %c0_37 = arith.constant 0 : index
    %78 = vector.load %arg3[%c6, %c0_36, %c0_37] : memref<9x8x8xbf16, #tpu.memory_space<vmem>>, vector<1x8x8xbf16>
    %79 = vector.shape_cast %78 : vector<1x8x8xbf16> to vector<8x8xbf16>
    %80 = arith.truncf %77 : vector<8x128xf32> to vector<8x128xbf16>
    %cst_38 = arith.constant dense<0.000000e+00> : vector<8x128xf32>
    %81 = tpu.matmul %79, %80, %cst_38 {dimension_numbers = #tpu.dot_dimension_numbers<[1], [0], [0], [1], [0, 0, 1, 1], [], []>} : vector<8x8xbf16>, vector<8x128xbf16>, vector<8x128xf32> -> vector<8x128xf32>
    %82 = vector.extract_strided_slice %22 {offsets = [6, 0], sizes = [1, 128], strides = [1, 1]} : vector<9x128xf32> to vector<1x128xf32>
    %83 = vector.broadcast %82 : vector<1x128xf32> to vector<8x128xf32>
    %84 = arith.mulf %81, %83 : vector<8x128xf32>
    %85 = arith.addf %76, %84 : vector<8x128xf32>
    %c124_i32 = arith.constant 124 : i32
    %86 = tpu.dynamic_rotate %21 by %c124_i32 dim 1 : vector<8x128xf32>, i32 -> vector<8x128xf32>
    %c7 = arith.constant 7 : index
    %c0_39 = arith.constant 0 : index
    %c0_40 = arith.constant 0 : index
    %87 = vector.load %arg3[%c7, %c0_39, %c0_40] : memref<9x8x8xbf16, #tpu.memory_space<vmem>>, vector<1x8x8xbf16>
    %88 = vector.shape_cast %87 : vector<1x8x8xbf16> to vector<8x8xbf16>
    %89 = arith.truncf %86 : vector<8x128xf32> to vector<8x128xbf16>
    %cst_41 = arith.constant dense<0.000000e+00> : vector<8x128xf32>
    %90 = tpu.matmul %88, %89, %cst_41 {dimension_numbers = #tpu.dot_dimension_numbers<[1], [0], [0], [1], [0, 0, 1, 1], [], []>} : vector<8x8xbf16>, vector<8x128xbf16>, vector<8x128xf32> -> vector<8x128xf32>
    %91 = vector.extract_strided_slice %22 {offsets = [7, 0], sizes = [1, 128], strides = [1, 1]} : vector<9x128xf32> to vector<1x128xf32>
    %92 = vector.broadcast %91 : vector<1x128xf32> to vector<8x128xf32>
    %93 = arith.mulf %90, %92 : vector<8x128xf32>
    %94 = arith.addf %85, %93 : vector<8x128xf32>
    %c123_i32 = arith.constant 123 : i32
    %95 = tpu.dynamic_rotate %21 by %c123_i32 dim 1 : vector<8x128xf32>, i32 -> vector<8x128xf32>
    %c8 = arith.constant 8 : index
    %c0_42 = arith.constant 0 : index
    %c0_43 = arith.constant 0 : index
    %96 = vector.load %arg3[%c8, %c0_42, %c0_43] : memref<9x8x8xbf16, #tpu.memory_space<vmem>>, vector<1x8x8xbf16>
    %97 = vector.shape_cast %96 : vector<1x8x8xbf16> to vector<8x8xbf16>
    %98 = arith.truncf %95 : vector<8x128xf32> to vector<8x128xbf16>
    %cst_44 = arith.constant dense<0.000000e+00> : vector<8x128xf32>
    %99 = tpu.matmul %97, %98, %cst_44 {dimension_numbers = #tpu.dot_dimension_numbers<[1], [0], [0], [1], [0, 0, 1, 1], [], []>} : vector<8x8xbf16>, vector<8x128xbf16>, vector<8x128xf32> -> vector<8x128xf32>
    %100 = vector.extract_strided_slice %22 {offsets = [8, 0], sizes = [1, 128], strides = [1, 1]} : vector<9x128xf32> to vector<1x128xf32>
    %101 = vector.broadcast %100 : vector<1x128xf32> to vector<8x128xf32>
    %102 = arith.mulf %99, %101 : vector<8x128xf32>
    %103 = arith.addf %94, %102 : vector<8x128xf32>
    %c0_45 = arith.constant 0 : index
    %c0_46 = arith.constant 0 : index
    %104 = vector.load %arg7[%c0_45, %c0_46] : memref<8x2xf32, #tpu.memory_space<vmem>>, vector<8x1xf32>
    %105 = vector.broadcast %104 : vector<8x1xf32> to vector<8x128xf32>
    %106 = arith.mulf %103, %105 : vector<8x128xf32>
    %c0_47 = arith.constant 0 : index
    %c1_48 = arith.constant 1 : index
    %107 = vector.load %arg7[%c0_47, %c1_48] : memref<8x2xf32, #tpu.memory_space<vmem>>, vector<8x1xf32>
    %108 = vector.broadcast %107 : vector<8x1xf32> to vector<8x128xf32>
    %109 = arith.addf %106, %108 : vector<8x128xf32>
    %cst_49 = arith.constant 0.000000e+00 : f32
    %110 = vector.broadcast %cst_49 : f32 to vector<8x128xf32>
    %111 = arith.maximumf %109, %110 : vector<8x128xf32>
    %112 = arith.truncf %111 : vector<8x128xf32> to vector<8x128xbf16>
    %c0_50 = arith.constant 0 : index
    %c0_51 = arith.constant 0 : index
    %113 = vector.load %arg4[%c0_50, %c0_51] : memref<16x8xbf16, #tpu.memory_space<vmem>>, vector<16x8xbf16>
    %cst_52 = arith.constant dense<0.000000e+00> : vector<16x128xf32>
    %114 = tpu.matmul %113, %112, %cst_52 {dimension_numbers = #tpu.dot_dimension_numbers<[1], [0], [0], [1], [0, 0, 1, 1], [], []>} : vector<16x8xbf16>, vector<8x128xbf16>, vector<16x128xf32> -> vector<16x128xf32>
    %c0_53 = arith.constant 0 : index
    %c0_54 = arith.constant 0 : index
    %115 = vector.load %arg8[%c0_53, %c0_54] : memref<16x1xf32, #tpu.memory_space<vmem>>, vector<16x1xf32>
    %116 = vector.broadcast %115 : vector<16x1xf32> to vector<16x128xf32>
    %117 = arith.addf %114, %116 : vector<16x128xf32>
    %118 = arith.extf %1 : vector<16x128xbf16> to vector<16x128xf32>
    %119 = arith.addf %117, %118 : vector<16x128xf32>
    %120 = arith.truncf %119 : vector<16x128xf32> to vector<16x128xbf16>
    %c0_55 = arith.constant 0 : index
    %c0_56 = arith.constant 0 : index
    %c0_57 = arith.constant 0 : index
    %121 = vector.load %arg10[%c0_55, %c0_56, %c0_57] : memref<1x16x128xbf16, #tpu.memory_space<vmem>>, vector<1x16x128xbf16>
    %122 = vector.shape_cast %121 : vector<1x16x128xbf16> to vector<16x128xbf16>
    %123 = vector.shape_cast %120 : vector<16x128xbf16> to vector<1x16x128xbf16>
    tpu.vector_store %arg10[%c0_55, %c0_56, %c0_57], %123 {strides = array<i32>} : memref<1x16x128xbf16, #tpu.memory_space<vmem>>, vector<1x16x128xbf16>,
    return
  }
  func.func @transform_0(%arg0: i32) -> (i32, i32, i32) {
    %c0_i32 = arith.constant 0 : i32
    %c0_i32_0 = arith.constant 0 : i32
    %c0_i32_1 = arith.constant 0 : i32
    return %arg0, %c0_i32, %c0_i32_0 : i32, i32, i32
  }
  func.func @transform_1(%arg0: i32) -> (i32, i32) {
    %c0_i32 = arith.constant 0 : i32
    %c0_i32_0 = arith.constant 0 : i32
    %c0_i32_1 = arith.constant 0 : i32
    return %c0_i32, %c0_i32_0 : i32, i32
  }
  func.func @transform_2(%arg0: i32) -> (i32, i32, i32) {
    %c0_i32 = arith.constant 0 : i32
    %c0_i32_0 = arith.constant 0 : i32
    %c0_i32_1 = arith.constant 0 : i32
    %c0_i32_2 = arith.constant 0 : i32
    return %c0_i32, %c0_i32_0, %c0_i32_1 : i32, i32, i32
  }
  func.func @transform_3(%arg0: i32) -> (i32, i32) {
    %c0_i32 = arith.constant 0 : i32
    %c0_i32_0 = arith.constant 0 : i32
    %c0_i32_1 = arith.constant 0 : i32
    return %c0_i32, %c0_i32_0 : i32, i32
  }
  func.func @transform_4(%arg0: i32) -> (i32, i32) {
    %c0_i32 = arith.constant 0 : i32
    %c0_i32_0 = arith.constant 0 : i32
    %c0_i32_1 = arith.constant 0 : i32
    return %c0_i32, %c0_i32_0 : i32, i32
  }
  func.func @transform_5(%arg0: i32) -> (i32, i32) {
    %c0_i32 = arith.constant 0 : i32
    %c0_i32_0 = arith.constant 0 : i32
    %c0_i32_1 = arith.constant 0 : i32
    return %c0_i32, %c0_i32_0 : i32, i32
  }
  func.func @transform_6(%arg0: i32) -> (i32, i32) {
    %c0_i32 = arith.constant 0 : i32
    %c0_i32_0 = arith.constant 0 : i32
    %c0_i32_1 = arith.constant 0 : i32
    return %c0_i32, %c0_i32_0 : i32, i32
  }
  func.func @transform_7(%arg0: i32) -> (i32, i32) {
    %c0_i32 = arith.constant 0 : i32
    %c0_i32_0 = arith.constant 0 : i32
    %c0_i32_1 = arith.constant 0 : i32
    return %c0_i32, %c0_i32_0 : i32, i32
  }
  func.func @transform_8(%arg0: i32) -> (i32, i32) {
    %c0_i32 = arith.constant 0 : i32
    %c0_i32_0 = arith.constant 0 : i32
    %c0_i32_1 = arith.constant 0 : i32
    return %c0_i32, %c0_i32_0 : i32, i32
  }
  func.func @transform_9(%arg0: i32) -> (i32, i32, i32) {
    %c0_i32 = arith.constant 0 : i32
    %c0_i32_0 = arith.constant 0 : i32
    %c0_i32_1 = arith.constant 0 : i32
    return %arg0, %c0_i32, %c0_i32_0 : i32, i32, i32
  }
}

module attributes {stable_mosaic.version = 11 : i64} {
  func.func @_stack_tail_kernel(%arg0: i32, %arg1: memref<1x16x64xbf16, #tpu.memory_space<vmem>>, %arg2: memref<1x16x64xbf16, #tpu.memory_space<vmem>>, %arg3: memref<16x16xbf16, #tpu.memory_space<vmem>>, %arg4: memref<16x2xf32, #tpu.memory_space<vmem>>, %arg5: memref<5x16xbf16, #tpu.memory_space<vmem>>, %arg6: memref<5x1xf32, #tpu.memory_space<vmem>>, %arg7: memref<16x16xbf16, #tpu.memory_space<vmem>>, %arg8: memref<16x1xf32, #tpu.memory_space<vmem>>, %arg9: memref<16x5xbf16, #tpu.memory_space<vmem>>, %arg10: memref<16x1xf32, #tpu.memory_space<vmem>>, %arg11: memref<1x5x64xf32, #tpu.memory_space<vmem>>, %arg12: memref<1x16x64xbf16, #tpu.memory_space<vmem>>) attributes {dimension_semantics = [#tpu.dimension_semantics<parallel>], iteration_bounds = array<i64: 2>, scalar_prefetch = 0 : i64, scratch_operands = 0 : i64, tpu.core_type = #tpu.core_type<tc>, window_params = [{transform_indices = @transform_0, window_bounds = array<i64: 1, 16, 64>}, {transform_indices = @transform_1, window_bounds = array<i64: 1, 16, 64>}, {pipeline_mode = #tpu.pipeline_mode<synchronous>, transform_indices = @transform_2, window_bounds = array<i64: 16, 16>}, {pipeline_mode = #tpu.pipeline_mode<synchronous>, transform_indices = @transform_3, window_bounds = array<i64: 16, 2>}, {pipeline_mode = #tpu.pipeline_mode<synchronous>, transform_indices = @transform_4, window_bounds = array<i64: 5, 16>}, {pipeline_mode = #tpu.pipeline_mode<synchronous>, transform_indices = @transform_5, window_bounds = array<i64: 5, 1>}, {pipeline_mode = #tpu.pipeline_mode<synchronous>, transform_indices = @transform_6, window_bounds = array<i64: 16, 16>}, {pipeline_mode = #tpu.pipeline_mode<synchronous>, transform_indices = @transform_7, window_bounds = array<i64: 16, 1>}, {pipeline_mode = #tpu.pipeline_mode<synchronous>, transform_indices = @transform_8, window_bounds = array<i64: 16, 5>}, {pipeline_mode = #tpu.pipeline_mode<synchronous>, transform_indices = @transform_9, window_bounds = array<i64: 16, 1>}, {transform_indices = @transform_10, window_bounds = array<i64: 1, 5, 64>}, {transform_indices = @transform_11, window_bounds = array<i64: 1, 16, 64>}]} {
    %c0 = arith.constant 0 : index
    %c0_0 = arith.constant 0 : index
    %c0_1 = arith.constant 0 : index
    %0 = vector.load %arg1[%c0, %c0_0, %c0_1] : memref<1x16x64xbf16, #tpu.memory_space<vmem>>, vector<1x16x64xbf16>
    %1 = vector.shape_cast %0 : vector<1x16x64xbf16> to vector<16x64xbf16>
    %c0_2 = arith.constant 0 : index
    %c0_3 = arith.constant 0 : index
    %2 = vector.load %arg3[%c0_2, %c0_3] : memref<16x16xbf16, #tpu.memory_space<vmem>>, vector<16x16xbf16>
    %cst = arith.constant dense<0.000000e+00> : vector<16x64xf32>
    %3 = tpu.matmul %2, %1, %cst {dimension_numbers = #tpu.dot_dimension_numbers<[1], [0], [0], [1], [0, 0, 1, 1], [], []>} : vector<16x16xbf16>, vector<16x64xbf16>, vector<16x64xf32> -> vector<16x64xf32>
    %c0_4 = arith.constant 0 : index
    %c0_5 = arith.constant 0 : index
    %4 = vector.load %arg4[%c0_4, %c0_5] : memref<16x2xf32, #tpu.memory_space<vmem>>, vector<16x1xf32>
    %5 = vector.broadcast %4 : vector<16x1xf32> to vector<16x64xf32>
    %6 = arith.mulf %3, %5 : vector<16x64xf32>
    %c0_6 = arith.constant 0 : index
    %c1 = arith.constant 1 : index
    %7 = vector.load %arg4[%c0_6, %c1] : memref<16x2xf32, #tpu.memory_space<vmem>>, vector<16x1xf32>
    %8 = vector.broadcast %7 : vector<16x1xf32> to vector<16x64xf32>
    %9 = arith.addf %6, %8 : vector<16x64xf32>
    %cst_7 = arith.constant 0.000000e+00 : f32
    %10 = vector.broadcast %cst_7 : f32 to vector<16x64xf32>
    %11 = arith.maximumf %9, %10 : vector<16x64xf32>
    %12 = arith.truncf %11 : vector<16x64xf32> to vector<16x64xbf16>
    %c0_8 = arith.constant 0 : index
    %c0_9 = arith.constant 0 : index
    %13 = vector.load %arg5[%c0_8, %c0_9] : memref<5x16xbf16, #tpu.memory_space<vmem>>, vector<5x16xbf16>
    %cst_10 = arith.constant dense<0.000000e+00> : vector<5x64xf32>
    %14 = tpu.matmul %13, %12, %cst_10 {dimension_numbers = #tpu.dot_dimension_numbers<[1], [0], [0], [1], [0, 0, 1, 1], [], []>} : vector<5x16xbf16>, vector<16x64xbf16>, vector<5x64xf32> -> vector<5x64xf32>
    %c0_11 = arith.constant 0 : index
    %c0_12 = arith.constant 0 : index
    %15 = vector.load %arg6[%c0_11, %c0_12] : memref<5x1xf32, #tpu.memory_space<vmem>>, vector<5x1xf32>
    %16 = vector.broadcast %15 : vector<5x1xf32> to vector<5x64xf32>
    %17 = arith.addf %14, %16 : vector<5x64xf32>
    %c0_13 = arith.constant 0 : index
    %c0_14 = arith.constant 0 : index
    %c0_15 = arith.constant 0 : index
    %18 = vector.load %arg11[%c0_13, %c0_14, %c0_15] : memref<1x5x64xf32, #tpu.memory_space<vmem>>, vector<1x5x64xf32>
    %19 = vector.shape_cast %18 : vector<1x5x64xf32> to vector<5x64xf32>
    %20 = vector.shape_cast %17 : vector<5x64xf32> to vector<1x5x64xf32>
    tpu.vector_store %arg11[%c0_13, %c0_14, %c0_15], %20 {strides = array<i32>} : memref<1x5x64xf32, #tpu.memory_space<vmem>>, vector<1x5x64xf32>,
    %c0_16 = arith.constant 0 : index
    %c0_17 = arith.constant 0 : index
    %21 = vector.load %arg7[%c0_16, %c0_17] : memref<16x16xbf16, #tpu.memory_space<vmem>>, vector<16x16xbf16>
    %cst_18 = arith.constant dense<0.000000e+00> : vector<16x64xf32>
    %22 = tpu.matmul %21, %12, %cst_18 {dimension_numbers = #tpu.dot_dimension_numbers<[1], [0], [0], [1], [0, 0, 1, 1], [], []>} : vector<16x16xbf16>, vector<16x64xbf16>, vector<16x64xf32> -> vector<16x64xf32>
    %c0_19 = arith.constant 0 : index
    %c0_20 = arith.constant 0 : index
    %23 = vector.load %arg8[%c0_19, %c0_20] : memref<16x1xf32, #tpu.memory_space<vmem>>, vector<16x1xf32>
    %24 = vector.broadcast %23 : vector<16x1xf32> to vector<16x64xf32>
    %25 = arith.addf %22, %24 : vector<16x64xf32>
    %c0_21 = arith.constant 0 : index
    %c0_22 = arith.constant 0 : index
    %26 = vector.load %arg9[%c0_21, %c0_22] : memref<16x5xbf16, #tpu.memory_space<vmem>>, vector<16x5xbf16>
    %27 = arith.truncf %17 : vector<5x64xf32> to vector<5x64xbf16>
    %cst_23 = arith.constant dense<0.000000e+00> : vector<16x64xf32>
    %28 = tpu.matmul %26, %27, %cst_23 {dimension_numbers = #tpu.dot_dimension_numbers<[1], [0], [0], [1], [0, 0, 1, 1], [], []>} : vector<16x5xbf16>, vector<5x64xbf16>, vector<16x64xf32> -> vector<16x64xf32>
    %c0_24 = arith.constant 0 : index
    %c0_25 = arith.constant 0 : index
    %29 = vector.load %arg10[%c0_24, %c0_25] : memref<16x1xf32, #tpu.memory_space<vmem>>, vector<16x1xf32>
    %30 = vector.broadcast %29 : vector<16x1xf32> to vector<16x64xf32>
    %31 = arith.addf %28, %30 : vector<16x64xf32>
    %c0_26 = arith.constant 0 : index
    %c0_27 = arith.constant 0 : index
    %c0_28 = arith.constant 0 : index
    %32 = vector.load %arg2[%c0_26, %c0_27, %c0_28] : memref<1x16x64xbf16, #tpu.memory_space<vmem>>, vector<1x16x64xbf16>
    %33 = vector.shape_cast %32 : vector<1x16x64xbf16> to vector<16x64xbf16>
    %34 = arith.extf %33 : vector<16x64xbf16> to vector<16x64xf32>
    %35 = arith.addf %34, %25 : vector<16x64xf32>
    %36 = arith.addf %35, %31 : vector<16x64xf32>
    %37 = arith.truncf %36 : vector<16x64xf32> to vector<16x64xbf16>
    %c0_29 = arith.constant 0 : index
    %c0_30 = arith.constant 0 : index
    %c0_31 = arith.constant 0 : index
    %38 = vector.load %arg12[%c0_29, %c0_30, %c0_31] : memref<1x16x64xbf16, #tpu.memory_space<vmem>>, vector<1x16x64xbf16>
    %39 = vector.shape_cast %38 : vector<1x16x64xbf16> to vector<16x64xbf16>
    %40 = vector.shape_cast %37 : vector<16x64xbf16> to vector<1x16x64xbf16>
    tpu.vector_store %arg12[%c0_29, %c0_30, %c0_31], %40 {strides = array<i32>} : memref<1x16x64xbf16, #tpu.memory_space<vmem>>, vector<1x16x64xbf16>,
    return
  }
  func.func @transform_0(%arg0: i32) -> (i32, i32, i32) {
    %c0_i32 = arith.constant 0 : i32
    %c0_i32_0 = arith.constant 0 : i32
    %c0_i32_1 = arith.constant 0 : i32
    return %arg0, %c0_i32, %c0_i32_0 : i32, i32, i32
  }
  func.func @transform_1(%arg0: i32) -> (i32, i32, i32) {
    %c0_i32 = arith.constant 0 : i32
    %c0_i32_0 = arith.constant 0 : i32
    %c0_i32_1 = arith.constant 0 : i32
    return %arg0, %c0_i32, %c0_i32_0 : i32, i32, i32
  }
  func.func @transform_2(%arg0: i32) -> (i32, i32) {
    %c0_i32 = arith.constant 0 : i32
    %c0_i32_0 = arith.constant 0 : i32
    %c0_i32_1 = arith.constant 0 : i32
    return %c0_i32, %c0_i32_0 : i32, i32
  }
  func.func @transform_3(%arg0: i32) -> (i32, i32) {
    %c0_i32 = arith.constant 0 : i32
    %c0_i32_0 = arith.constant 0 : i32
    %c0_i32_1 = arith.constant 0 : i32
    return %c0_i32, %c0_i32_0 : i32, i32
  }
  func.func @transform_4(%arg0: i32) -> (i32, i32) {
    %c0_i32 = arith.constant 0 : i32
    %c0_i32_0 = arith.constant 0 : i32
    %c0_i32_1 = arith.constant 0 : i32
    return %c0_i32, %c0_i32_0 : i32, i32
  }
  func.func @transform_5(%arg0: i32) -> (i32, i32) {
    %c0_i32 = arith.constant 0 : i32
    %c0_i32_0 = arith.constant 0 : i32
    %c0_i32_1 = arith.constant 0 : i32
    return %c0_i32, %c0_i32_0 : i32, i32
  }
  func.func @transform_6(%arg0: i32) -> (i32, i32) {
    %c0_i32 = arith.constant 0 : i32
    %c0_i32_0 = arith.constant 0 : i32
    %c0_i32_1 = arith.constant 0 : i32
    return %c0_i32, %c0_i32_0 : i32, i32
  }
  func.func @transform_7(%arg0: i32) -> (i32, i32) {
    %c0_i32 = arith.constant 0 : i32
    %c0_i32_0 = arith.constant 0 : i32
    %c0_i32_1 = arith.constant 0 : i32
    return %c0_i32, %c0_i32_0 : i32, i32
  }
  func.func @transform_8(%arg0: i32) -> (i32, i32) {
    %c0_i32 = arith.constant 0 : i32
    %c0_i32_0 = arith.constant 0 : i32
    %c0_i32_1 = arith.constant 0 : i32
    return %c0_i32, %c0_i32_0 : i32, i32
  }
  func.func @transform_9(%arg0: i32) -> (i32, i32) {
    %c0_i32 = arith.constant 0 : i32
    %c0_i32_0 = arith.constant 0 : i32
    %c0_i32_1 = arith.constant 0 : i32
    return %c0_i32, %c0_i32_0 : i32, i32
  }
  func.func @transform_10(%arg0: i32) -> (i32, i32, i32) {
    %c0_i32 = arith.constant 0 : i32
    %c0_i32_0 = arith.constant 0 : i32
    %c0_i32_1 = arith.constant 0 : i32
    return %arg0, %c0_i32, %c0_i32_0 : i32, i32, i32
  }
  func.func @transform_11(%arg0: i32) -> (i32, i32, i32) {
    %c0_i32 = arith.constant 0 : i32
    %c0_i32_0 = arith.constant 0 : i32
    %c0_i32_1 = arith.constant 0 : i32
    return %arg0, %c0_i32, %c0_i32_0 : i32, i32, i32
  }
}

module attributes {stable_mosaic.version = 11 : i64} {
  func.func @_bottleneck_kernel(%arg0: i32, %arg1: memref<1x16x128xbf16, #tpu.memory_space<vmem>>, %arg2: memref<8x16xbf16, #tpu.memory_space<vmem>>, %arg3: memref<9x8x8xbf16, #tpu.memory_space<vmem>>, %arg4: memref<16x8xbf16, #tpu.memory_space<vmem>>, %arg5: memref<16x2xf32, #tpu.memory_space<vmem>>, %arg6: memref<8x2xf32, #tpu.memory_space<vmem>>, %arg7: memref<8x2xf32, #tpu.memory_space<vmem>>, %arg8: memref<16x1xf32, #tpu.memory_space<vmem>>, %arg9: memref<9x128xf32, #tpu.memory_space<vmem>>, %arg10: memref<1x16x128xbf16, #tpu.memory_space<vmem>>) attributes {dimension_semantics = [#tpu.dimension_semantics<parallel>], iteration_bounds = array<i64: 2>, scalar_prefetch = 0 : i64, scratch_operands = 0 : i64, tpu.core_type = #tpu.core_type<tc>, window_params = [{transform_indices = @transform_0, window_bounds = array<i64: 1, 16, 128>}, {pipeline_mode = #tpu.pipeline_mode<synchronous>, transform_indices = @transform_1, window_bounds = array<i64: 8, 16>}, {pipeline_mode = #tpu.pipeline_mode<synchronous>, transform_indices = @transform_2, window_bounds = array<i64: 9, 8, 8>}, {pipeline_mode = #tpu.pipeline_mode<synchronous>, transform_indices = @transform_3, window_bounds = array<i64: 16, 8>}, {pipeline_mode = #tpu.pipeline_mode<synchronous>, transform_indices = @transform_4, window_bounds = array<i64: 16, 2>}, {pipeline_mode = #tpu.pipeline_mode<synchronous>, transform_indices = @transform_5, window_bounds = array<i64: 8, 2>}, {pipeline_mode = #tpu.pipeline_mode<synchronous>, transform_indices = @transform_6, window_bounds = array<i64: 8, 2>}, {pipeline_mode = #tpu.pipeline_mode<synchronous>, transform_indices = @transform_7, window_bounds = array<i64: 16, 1>}, {pipeline_mode = #tpu.pipeline_mode<synchronous>, transform_indices = @transform_8, window_bounds = array<i64: 9, 128>}, {transform_indices = @transform_9, window_bounds = array<i64: 1, 16, 128>}]} {
    %c0 = arith.constant 0 : index
    %c0_0 = arith.constant 0 : index
    %c0_1 = arith.constant 0 : index
    %0 = vector.load %arg1[%c0, %c0_0, %c0_1] : memref<1x16x128xbf16, #tpu.memory_space<vmem>>, vector<1x16x128xbf16>
    %1 = vector.shape_cast %0 : vector<1x16x128xbf16> to vector<16x128xbf16>
    %c0_2 = arith.constant 0 : index
    %c0_3 = arith.constant 0 : index
    %2 = vector.load %arg5[%c0_2, %c0_3] : memref<16x2xf32, #tpu.memory_space<vmem>>, vector<16x1xf32>
    %c0_4 = arith.constant 0 : index
    %c1 = arith.constant 1 : index
    %3 = vector.load %arg5[%c0_4, %c1] : memref<16x2xf32, #tpu.memory_space<vmem>>, vector<16x1xf32>
    %4 = arith.extf %1 : vector<16x128xbf16> to vector<16x128xf32>
    %5 = vector.broadcast %2 : vector<16x1xf32> to vector<16x128xf32>
    %6 = arith.mulf %4, %5 : vector<16x128xf32>
    %7 = vector.broadcast %3 : vector<16x1xf32> to vector<16x128xf32>
    %8 = arith.addf %6, %7 : vector<16x128xf32>
    %cst = arith.constant 0.000000e+00 : f32
    %9 = vector.broadcast %cst : f32 to vector<16x128xf32>
    %10 = arith.maximumf %8, %9 : vector<16x128xf32>
    %11 = arith.truncf %10 : vector<16x128xf32> to vector<16x128xbf16>
    %c0_5 = arith.constant 0 : index
    %c0_6 = arith.constant 0 : index
    %12 = vector.load %arg2[%c0_5, %c0_6] : memref<8x16xbf16, #tpu.memory_space<vmem>>, vector<8x16xbf16>
    %cst_7 = arith.constant dense<0.000000e+00> : vector<8x128xf32>
    %13 = tpu.matmul %12, %11, %cst_7 {dimension_numbers = #tpu.dot_dimension_numbers<[1], [0], [0], [1], [0, 0, 1, 1], [], []>} : vector<8x16xbf16>, vector<16x128xbf16>, vector<8x128xf32> -> vector<8x128xf32>
    %c0_8 = arith.constant 0 : index
    %c0_9 = arith.constant 0 : index
    %14 = vector.load %arg6[%c0_8, %c0_9] : memref<8x2xf32, #tpu.memory_space<vmem>>, vector<8x1xf32>
    %15 = vector.broadcast %14 : vector<8x1xf32> to vector<8x128xf32>
    %16 = arith.mulf %13, %15 : vector<8x128xf32>
    %c0_10 = arith.constant 0 : index
    %c1_11 = arith.constant 1 : index
    %17 = vector.load %arg6[%c0_10, %c1_11] : memref<8x2xf32, #tpu.memory_space<vmem>>, vector<8x1xf32>
    %18 = vector.broadcast %17 : vector<8x1xf32> to vector<8x128xf32>
    %19 = arith.addf %16, %18 : vector<8x128xf32>
    %cst_12 = arith.constant 0.000000e+00 : f32
    %20 = vector.broadcast %cst_12 : f32 to vector<8x128xf32>
    %21 = arith.maximumf %19, %20 : vector<8x128xf32>
    %c0_13 = arith.constant 0 : index
    %c0_14 = arith.constant 0 : index
    %22 = vector.load %arg9[%c0_13, %c0_14] : memref<9x128xf32, #tpu.memory_space<vmem>>, vector<9x128xf32>
    %cst_15 = arith.constant 0.000000e+00 : f32
    %23 = vector.broadcast %cst_15 : f32 to vector<8x128xf32>
    %c3_i32 = arith.constant 3 : i32
    %24 = tpu.dynamic_rotate %21 by %c3_i32 dim 1 : vector<8x128xf32>, i32 -> vector<8x128xf32>
    %c0_16 = arith.constant 0 : index
    %c0_17 = arith.constant 0 : index
    %c0_18 = arith.constant 0 : index
    %25 = vector.load %arg3[%c0_16, %c0_17, %c0_18] : memref<9x8x8xbf16, #tpu.memory_space<vmem>>, vector<1x8x8xbf16>
    %26 = vector.shape_cast %25 : vector<1x8x8xbf16> to vector<8x8xbf16>
    %27 = arith.truncf %24 : vector<8x128xf32> to vector<8x128xbf16>
    %cst_19 = arith.constant dense<0.000000e+00> : vector<8x128xf32>
    %28 = tpu.matmul %26, %27, %cst_19 {dimension_numbers = #tpu.dot_dimension_numbers<[1], [0], [0], [1], [0, 0, 1, 1], [], []>} : vector<8x8xbf16>, vector<8x128xbf16>, vector<8x128xf32> -> vector<8x128xf32>
    %29 = vector.extract_strided_slice %22 {offsets = [0, 0], sizes = [1, 128], strides = [1, 1]} : vector<9x128xf32> to vector<1x128xf32>
    %30 = vector.broadcast %29 : vector<1x128xf32> to vector<8x128xf32>
    %31 = arith.mulf %28, %30 : vector<8x128xf32>
    %32 = arith.addf %23, %31 : vector<8x128xf32>
    %c2_i32 = arith.constant 2 : i32
    %33 = tpu.dynamic_rotate %21 by %c2_i32 dim 1 : vector<8x128xf32>, i32 -> vector<8x128xf32>
    %c1_20 = arith.constant 1 : index
    %c0_21 = arith.constant 0 : index
    %c0_22 = arith.constant 0 : index
    %34 = vector.load %arg3[%c1_20, %c0_21, %c0_22] : memref<9x8x8xbf16, #tpu.memory_space<vmem>>, vector<1x8x8xbf16>
    %35 = vector.shape_cast %34 : vector<1x8x8xbf16> to vector<8x8xbf16>
    %36 = arith.truncf %33 : vector<8x128xf32> to vector<8x128xbf16>
    %cst_23 = arith.constant dense<0.000000e+00> : vector<8x128xf32>
    %37 = tpu.matmul %35, %36, %cst_23 {dimension_numbers = #tpu.dot_dimension_numbers<[1], [0], [0], [1], [0, 0, 1, 1], [], []>} : vector<8x8xbf16>, vector<8x128xbf16>, vector<8x128xf32> -> vector<8x128xf32>
    %38 = vector.extract_strided_slice %22 {offsets = [1, 0], sizes = [1, 128], strides = [1, 1]} : vector<9x128xf32> to vector<1x128xf32>
    %39 = vector.broadcast %38 : vector<1x128xf32> to vector<8x128xf32>
    %40 = arith.mulf %37, %39 : vector<8x128xf32>
    %41 = arith.addf %32, %40 : vector<8x128xf32>
    %c1_i32 = arith.constant 1 : i32
    %42 = tpu.dynamic_rotate %21 by %c1_i32 dim 1 : vector<8x128xf32>, i32 -> vector<8x128xf32>
    %c2 = arith.constant 2 : index
    %c0_24 = arith.constant 0 : index
    %c0_25 = arith.constant 0 : index
    %43 = vector.load %arg3[%c2, %c0_24, %c0_25] : memref<9x8x8xbf16, #tpu.memory_space<vmem>>, vector<1x8x8xbf16>
    %44 = vector.shape_cast %43 : vector<1x8x8xbf16> to vector<8x8xbf16>
    %45 = arith.truncf %42 : vector<8x128xf32> to vector<8x128xbf16>
    %cst_26 = arith.constant dense<0.000000e+00> : vector<8x128xf32>
    %46 = tpu.matmul %44, %45, %cst_26 {dimension_numbers = #tpu.dot_dimension_numbers<[1], [0], [0], [1], [0, 0, 1, 1], [], []>} : vector<8x8xbf16>, vector<8x128xbf16>, vector<8x128xf32> -> vector<8x128xf32>
    %47 = vector.extract_strided_slice %22 {offsets = [2, 0], sizes = [1, 128], strides = [1, 1]} : vector<9x128xf32> to vector<1x128xf32>
    %48 = vector.broadcast %47 : vector<1x128xf32> to vector<8x128xf32>
    %49 = arith.mulf %46, %48 : vector<8x128xf32>
    %50 = arith.addf %41, %49 : vector<8x128xf32>
    %c1_i32_27 = arith.constant 1 : i32
    %51 = tpu.dynamic_rotate %21 by %c1_i32_27 dim 1 : vector<8x128xf32>, i32 -> vector<8x128xf32>
    %c3 = arith.constant 3 : index
    %c0_28 = arith.constant 0 : index
    %c0_29 = arith.constant 0 : index
    %52 = vector.load %arg3[%c3, %c0_28, %c0_29] : memref<9x8x8xbf16, #tpu.memory_space<vmem>>, vector<1x8x8xbf16>
    %53 = vector.shape_cast %52 : vector<1x8x8xbf16> to vector<8x8xbf16>
    %54 = arith.truncf %51 : vector<8x128xf32> to vector<8x128xbf16>
    %cst_30 = arith.constant dense<0.000000e+00> : vector<8x128xf32>
    %55 = tpu.matmul %53, %54, %cst_30 {dimension_numbers = #tpu.dot_dimension_numbers<[1], [0], [0], [1], [0, 0, 1, 1], [], []>} : vector<8x8xbf16>, vector<8x128xbf16>, vector<8x128xf32> -> vector<8x128xf32>
    %56 = vector.extract_strided_slice %22 {offsets = [3, 0], sizes = [1, 128], strides = [1, 1]} : vector<9x128xf32> to vector<1x128xf32>
    %57 = vector.broadcast %56 : vector<1x128xf32> to vector<8x128xf32>
    %58 = arith.mulf %55, %57 : vector<8x128xf32>
    %59 = arith.addf %50, %58 : vector<8x128xf32>
    %c4 = arith.constant 4 : index
    %c0_31 = arith.constant 0 : index
    %c0_32 = arith.constant 0 : index
    %60 = vector.load %arg3[%c4, %c0_31, %c0_32] : memref<9x8x8xbf16, #tpu.memory_space<vmem>>, vector<1x8x8xbf16>
    %61 = vector.shape_cast %60 : vector<1x8x8xbf16> to vector<8x8xbf16>
    %62 = arith.truncf %21 : vector<8x128xf32> to vector<8x128xbf16>
    %cst_33 = arith.constant dense<0.000000e+00> : vector<8x128xf32>
    %63 = tpu.matmul %61, %62, %cst_33 {dimension_numbers = #tpu.dot_dimension_numbers<[1], [0], [0], [1], [0, 0, 1, 1], [], []>} : vector<8x8xbf16>, vector<8x128xbf16>, vector<8x128xf32> -> vector<8x128xf32>
    %64 = vector.extract_strided_slice %22 {offsets = [4, 0], sizes = [1, 128], strides = [1, 1]} : vector<9x128xf32> to vector<1x128xf32>
    %65 = vector.broadcast %64 : vector<1x128xf32> to vector<8x128xf32>
    %66 = arith.mulf %63, %65 : vector<8x128xf32>
    %67 = arith.addf %59, %66 : vector<8x128xf32>
    %c127_i32 = arith.constant 127 : i32
    %68 = tpu.dynamic_rotate %21 by %c127_i32 dim 1 : vector<8x128xf32>, i32 -> vector<8x128xf32>
    %c5 = arith.constant 5 : index
    %c0_34 = arith.constant 0 : index
    %c0_35 = arith.constant 0 : index
    %69 = vector.load %arg3[%c5, %c0_34, %c0_35] : memref<9x8x8xbf16, #tpu.memory_space<vmem>>, vector<1x8x8xbf16>
    %70 = vector.shape_cast %69 : vector<1x8x8xbf16> to vector<8x8xbf16>
    %71 = arith.truncf %68 : vector<8x128xf32> to vector<8x128xbf16>
    %cst_36 = arith.constant dense<0.000000e+00> : vector<8x128xf32>
    %72 = tpu.matmul %70, %71, %cst_36 {dimension_numbers = #tpu.dot_dimension_numbers<[1], [0], [0], [1], [0, 0, 1, 1], [], []>} : vector<8x8xbf16>, vector<8x128xbf16>, vector<8x128xf32> -> vector<8x128xf32>
    %73 = vector.extract_strided_slice %22 {offsets = [5, 0], sizes = [1, 128], strides = [1, 1]} : vector<9x128xf32> to vector<1x128xf32>
    %74 = vector.broadcast %73 : vector<1x128xf32> to vector<8x128xf32>
    %75 = arith.mulf %72, %74 : vector<8x128xf32>
    %76 = arith.addf %67, %75 : vector<8x128xf32>
    %c127_i32_37 = arith.constant 127 : i32
    %77 = tpu.dynamic_rotate %21 by %c127_i32_37 dim 1 : vector<8x128xf32>, i32 -> vector<8x128xf32>
    %c6 = arith.constant 6 : index
    %c0_38 = arith.constant 0 : index
    %c0_39 = arith.constant 0 : index
    %78 = vector.load %arg3[%c6, %c0_38, %c0_39] : memref<9x8x8xbf16, #tpu.memory_space<vmem>>, vector<1x8x8xbf16>
    %79 = vector.shape_cast %78 : vector<1x8x8xbf16> to vector<8x8xbf16>
    %80 = arith.truncf %77 : vector<8x128xf32> to vector<8x128xbf16>
    %cst_40 = arith.constant dense<0.000000e+00> : vector<8x128xf32>
    %81 = tpu.matmul %79, %80, %cst_40 {dimension_numbers = #tpu.dot_dimension_numbers<[1], [0], [0], [1], [0, 0, 1, 1], [], []>} : vector<8x8xbf16>, vector<8x128xbf16>, vector<8x128xf32> -> vector<8x128xf32>
    %82 = vector.extract_strided_slice %22 {offsets = [6, 0], sizes = [1, 128], strides = [1, 1]} : vector<9x128xf32> to vector<1x128xf32>
    %83 = vector.broadcast %82 : vector<1x128xf32> to vector<8x128xf32>
    %84 = arith.mulf %81, %83 : vector<8x128xf32>
    %85 = arith.addf %76, %84 : vector<8x128xf32>
    %c126_i32 = arith.constant 126 : i32
    %86 = tpu.dynamic_rotate %21 by %c126_i32 dim 1 : vector<8x128xf32>, i32 -> vector<8x128xf32>
    %c7 = arith.constant 7 : index
    %c0_41 = arith.constant 0 : index
    %c0_42 = arith.constant 0 : index
    %87 = vector.load %arg3[%c7, %c0_41, %c0_42] : memref<9x8x8xbf16, #tpu.memory_space<vmem>>, vector<1x8x8xbf16>
    %88 = vector.shape_cast %87 : vector<1x8x8xbf16> to vector<8x8xbf16>
    %89 = arith.truncf %86 : vector<8x128xf32> to vector<8x128xbf16>
    %cst_43 = arith.constant dense<0.000000e+00> : vector<8x128xf32>
    %90 = tpu.matmul %88, %89, %cst_43 {dimension_numbers = #tpu.dot_dimension_numbers<[1], [0], [0], [1], [0, 0, 1, 1], [], []>} : vector<8x8xbf16>, vector<8x128xbf16>, vector<8x128xf32> -> vector<8x128xf32>
    %91 = vector.extract_strided_slice %22 {offsets = [7, 0], sizes = [1, 128], strides = [1, 1]} : vector<9x128xf32> to vector<1x128xf32>
    %92 = vector.broadcast %91 : vector<1x128xf32> to vector<8x128xf32>
    %93 = arith.mulf %90, %92 : vector<8x128xf32>
    %94 = arith.addf %85, %93 : vector<8x128xf32>
    %c125_i32 = arith.constant 125 : i32
    %95 = tpu.dynamic_rotate %21 by %c125_i32 dim 1 : vector<8x128xf32>, i32 -> vector<8x128xf32>
    %c8 = arith.constant 8 : index
    %c0_44 = arith.constant 0 : index
    %c0_45 = arith.constant 0 : index
    %96 = vector.load %arg3[%c8, %c0_44, %c0_45] : memref<9x8x8xbf16, #tpu.memory_space<vmem>>, vector<1x8x8xbf16>
    %97 = vector.shape_cast %96 : vector<1x8x8xbf16> to vector<8x8xbf16>
    %98 = arith.truncf %95 : vector<8x128xf32> to vector<8x128xbf16>
    %cst_46 = arith.constant dense<0.000000e+00> : vector<8x128xf32>
    %99 = tpu.matmul %97, %98, %cst_46 {dimension_numbers = #tpu.dot_dimension_numbers<[1], [0], [0], [1], [0, 0, 1, 1], [], []>} : vector<8x8xbf16>, vector<8x128xbf16>, vector<8x128xf32> -> vector<8x128xf32>
    %100 = vector.extract_strided_slice %22 {offsets = [8, 0], sizes = [1, 128], strides = [1, 1]} : vector<9x128xf32> to vector<1x128xf32>
    %101 = vector.broadcast %100 : vector<1x128xf32> to vector<8x128xf32>
    %102 = arith.mulf %99, %101 : vector<8x128xf32>
    %103 = arith.addf %94, %102 : vector<8x128xf32>
    %c0_47 = arith.constant 0 : index
    %c0_48 = arith.constant 0 : index
    %104 = vector.load %arg7[%c0_47, %c0_48] : memref<8x2xf32, #tpu.memory_space<vmem>>, vector<8x1xf32>
    %105 = vector.broadcast %104 : vector<8x1xf32> to vector<8x128xf32>
    %106 = arith.mulf %103, %105 : vector<8x128xf32>
    %c0_49 = arith.constant 0 : index
    %c1_50 = arith.constant 1 : index
    %107 = vector.load %arg7[%c0_49, %c1_50] : memref<8x2xf32, #tpu.memory_space<vmem>>, vector<8x1xf32>
    %108 = vector.broadcast %107 : vector<8x1xf32> to vector<8x128xf32>
    %109 = arith.addf %106, %108 : vector<8x128xf32>
    %cst_51 = arith.constant 0.000000e+00 : f32
    %110 = vector.broadcast %cst_51 : f32 to vector<8x128xf32>
    %111 = arith.maximumf %109, %110 : vector<8x128xf32>
    %112 = arith.truncf %111 : vector<8x128xf32> to vector<8x128xbf16>
    %c0_52 = arith.constant 0 : index
    %c0_53 = arith.constant 0 : index
    %113 = vector.load %arg4[%c0_52, %c0_53] : memref<16x8xbf16, #tpu.memory_space<vmem>>, vector<16x8xbf16>
    %cst_54 = arith.constant dense<0.000000e+00> : vector<16x128xf32>
    %114 = tpu.matmul %113, %112, %cst_54 {dimension_numbers = #tpu.dot_dimension_numbers<[1], [0], [0], [1], [0, 0, 1, 1], [], []>} : vector<16x8xbf16>, vector<8x128xbf16>, vector<16x128xf32> -> vector<16x128xf32>
    %c0_55 = arith.constant 0 : index
    %c0_56 = arith.constant 0 : index
    %115 = vector.load %arg8[%c0_55, %c0_56] : memref<16x1xf32, #tpu.memory_space<vmem>>, vector<16x1xf32>
    %116 = vector.broadcast %115 : vector<16x1xf32> to vector<16x128xf32>
    %117 = arith.addf %114, %116 : vector<16x128xf32>
    %118 = arith.extf %1 : vector<16x128xbf16> to vector<16x128xf32>
    %119 = arith.addf %117, %118 : vector<16x128xf32>
    %120 = arith.truncf %119 : vector<16x128xf32> to vector<16x128xbf16>
    %c0_57 = arith.constant 0 : index
    %c0_58 = arith.constant 0 : index
    %c0_59 = arith.constant 0 : index
    %121 = vector.load %arg10[%c0_57, %c0_58, %c0_59] : memref<1x16x128xbf16, #tpu.memory_space<vmem>>, vector<1x16x128xbf16>
    %122 = vector.shape_cast %121 : vector<1x16x128xbf16> to vector<16x128xbf16>
    %123 = vector.shape_cast %120 : vector<16x128xbf16> to vector<1x16x128xbf16>
    tpu.vector_store %arg10[%c0_57, %c0_58, %c0_59], %123 {strides = array<i32>} : memref<1x16x128xbf16, #tpu.memory_space<vmem>>, vector<1x16x128xbf16>,
    return
  }
  func.func @transform_0(%arg0: i32) -> (i32, i32, i32) {
    %c0_i32 = arith.constant 0 : i32
    %c0_i32_0 = arith.constant 0 : i32
    %c0_i32_1 = arith.constant 0 : i32
    return %arg0, %c0_i32, %c0_i32_0 : i32, i32, i32
  }
  func.func @transform_1(%arg0: i32) -> (i32, i32) {
    %c0_i32 = arith.constant 0 : i32
    %c0_i32_0 = arith.constant 0 : i32
    %c0_i32_1 = arith.constant 0 : i32
    return %c0_i32, %c0_i32_0 : i32, i32
  }
  func.func @transform_2(%arg0: i32) -> (i32, i32, i32) {
    %c0_i32 = arith.constant 0 : i32
    %c0_i32_0 = arith.constant 0 : i32
    %c0_i32_1 = arith.constant 0 : i32
    %c0_i32_2 = arith.constant 0 : i32
    return %c0_i32, %c0_i32_0, %c0_i32_1 : i32, i32, i32
  }
  func.func @transform_3(%arg0: i32) -> (i32, i32) {
    %c0_i32 = arith.constant 0 : i32
    %c0_i32_0 = arith.constant 0 : i32
    %c0_i32_1 = arith.constant 0 : i32
    return %c0_i32, %c0_i32_0 : i32, i32
  }
  func.func @transform_4(%arg0: i32) -> (i32, i32) {
    %c0_i32 = arith.constant 0 : i32
    %c0_i32_0 = arith.constant 0 : i32
    %c0_i32_1 = arith.constant 0 : i32
    return %c0_i32, %c0_i32_0 : i32, i32
  }
  func.func @transform_5(%arg0: i32) -> (i32, i32) {
    %c0_i32 = arith.constant 0 : i32
    %c0_i32_0 = arith.constant 0 : i32
    %c0_i32_1 = arith.constant 0 : i32
    return %c0_i32, %c0_i32_0 : i32, i32
  }
  func.func @transform_6(%arg0: i32) -> (i32, i32) {
    %c0_i32 = arith.constant 0 : i32
    %c0_i32_0 = arith.constant 0 : i32
    %c0_i32_1 = arith.constant 0 : i32
    return %c0_i32, %c0_i32_0 : i32, i32
  }
  func.func @transform_7(%arg0: i32) -> (i32, i32) {
    %c0_i32 = arith.constant 0 : i32
    %c0_i32_0 = arith.constant 0 : i32
    %c0_i32_1 = arith.constant 0 : i32
    return %c0_i32, %c0_i32_0 : i32, i32
  }
  func.func @transform_8(%arg0: i32) -> (i32, i32) {
    %c0_i32 = arith.constant 0 : i32
    %c0_i32_0 = arith.constant 0 : i32
    %c0_i32_1 = arith.constant 0 : i32
    return %c0_i32, %c0_i32_0 : i32, i32
  }
  func.func @transform_9(%arg0: i32) -> (i32, i32, i32) {
    %c0_i32 = arith.constant 0 : i32
    %c0_i32_0 = arith.constant 0 : i32
    %c0_i32_1 = arith.constant 0 : i32
    return %arg0, %c0_i32, %c0_i32_0 : i32, i32, i32
  }
}

module attributes {stable_mosaic.version = 11 : i64} {
  func.func @_stack_tail_kernel(%arg0: i32, %arg1: memref<1x16x64xbf16, #tpu.memory_space<vmem>>, %arg2: memref<16x16xbf16, #tpu.memory_space<vmem>>, %arg3: memref<16x2xf32, #tpu.memory_space<vmem>>, %arg4: memref<5x16xbf16, #tpu.memory_space<vmem>>, %arg5: memref<5x1xf32, #tpu.memory_space<vmem>>, %arg6: memref<1x5x64xf32, #tpu.memory_space<vmem>>, %arg7: memref<1x16x64xf32, #tpu.memory_space<vmem>>) attributes {dimension_semantics = [#tpu.dimension_semantics<parallel>], iteration_bounds = array<i64: 2>, scalar_prefetch = 0 : i64, scratch_operands = 0 : i64, tpu.core_type = #tpu.core_type<tc>, window_params = [{transform_indices = @transform_0, window_bounds = array<i64: 1, 16, 64>}, {pipeline_mode = #tpu.pipeline_mode<synchronous>, transform_indices = @transform_1, window_bounds = array<i64: 16, 16>}, {pipeline_mode = #tpu.pipeline_mode<synchronous>, transform_indices = @transform_2, window_bounds = array<i64: 16, 2>}, {pipeline_mode = #tpu.pipeline_mode<synchronous>, transform_indices = @transform_3, window_bounds = array<i64: 5, 16>}, {pipeline_mode = #tpu.pipeline_mode<synchronous>, transform_indices = @transform_4, window_bounds = array<i64: 5, 1>}, {transform_indices = @transform_5, window_bounds = array<i64: 1, 5, 64>}, {transform_indices = @transform_6, window_bounds = array<i64: 1, 16, 64>}]} {
    %c0 = arith.constant 0 : index
    %c0_0 = arith.constant 0 : index
    %c0_1 = arith.constant 0 : index
    %0 = vector.load %arg1[%c0, %c0_0, %c0_1] : memref<1x16x64xbf16, #tpu.memory_space<vmem>>, vector<1x16x64xbf16>
    %1 = vector.shape_cast %0 : vector<1x16x64xbf16> to vector<16x64xbf16>
    %c0_2 = arith.constant 0 : index
    %c0_3 = arith.constant 0 : index
    %2 = vector.load %arg2[%c0_2, %c0_3] : memref<16x16xbf16, #tpu.memory_space<vmem>>, vector<16x16xbf16>
    %cst = arith.constant dense<0.000000e+00> : vector<16x64xf32>
    %3 = tpu.matmul %2, %1, %cst {dimension_numbers = #tpu.dot_dimension_numbers<[1], [0], [0], [1], [0, 0, 1, 1], [], []>} : vector<16x16xbf16>, vector<16x64xbf16>, vector<16x64xf32> -> vector<16x64xf32>
    %c0_4 = arith.constant 0 : index
    %c0_5 = arith.constant 0 : index
    %4 = vector.load %arg3[%c0_4, %c0_5] : memref<16x2xf32, #tpu.memory_space<vmem>>, vector<16x1xf32>
    %5 = vector.broadcast %4 : vector<16x1xf32> to vector<16x64xf32>
    %6 = arith.mulf %3, %5 : vector<16x64xf32>
    %c0_6 = arith.constant 0 : index
    %c1 = arith.constant 1 : index
    %7 = vector.load %arg3[%c0_6, %c1] : memref<16x2xf32, #tpu.memory_space<vmem>>, vector<16x1xf32>
    %8 = vector.broadcast %7 : vector<16x1xf32> to vector<16x64xf32>
    %9 = arith.addf %6, %8 : vector<16x64xf32>
    %cst_7 = arith.constant 0.000000e+00 : f32
    %10 = vector.broadcast %cst_7 : f32 to vector<16x64xf32>
    %11 = arith.maximumf %9, %10 : vector<16x64xf32>
    %12 = arith.truncf %11 : vector<16x64xf32> to vector<16x64xbf16>
    %c0_8 = arith.constant 0 : index
    %c0_9 = arith.constant 0 : index
    %13 = vector.load %arg4[%c0_8, %c0_9] : memref<5x16xbf16, #tpu.memory_space<vmem>>, vector<5x16xbf16>
    %cst_10 = arith.constant dense<0.000000e+00> : vector<5x64xf32>
    %14 = tpu.matmul %13, %12, %cst_10 {dimension_numbers = #tpu.dot_dimension_numbers<[1], [0], [0], [1], [0, 0, 1, 1], [], []>} : vector<5x16xbf16>, vector<16x64xbf16>, vector<5x64xf32> -> vector<5x64xf32>
    %c0_11 = arith.constant 0 : index
    %c0_12 = arith.constant 0 : index
    %15 = vector.load %arg5[%c0_11, %c0_12] : memref<5x1xf32, #tpu.memory_space<vmem>>, vector<5x1xf32>
    %16 = vector.broadcast %15 : vector<5x1xf32> to vector<5x64xf32>
    %17 = arith.addf %14, %16 : vector<5x64xf32>
    %c0_13 = arith.constant 0 : index
    %c0_14 = arith.constant 0 : index
    %c0_15 = arith.constant 0 : index
    %18 = vector.load %arg6[%c0_13, %c0_14, %c0_15] : memref<1x5x64xf32, #tpu.memory_space<vmem>>, vector<1x5x64xf32>
    %19 = vector.shape_cast %18 : vector<1x5x64xf32> to vector<5x64xf32>
    %20 = vector.shape_cast %17 : vector<5x64xf32> to vector<1x5x64xf32>
    tpu.vector_store %arg6[%c0_13, %c0_14, %c0_15], %20 {strides = array<i32>} : memref<1x5x64xf32, #tpu.memory_space<vmem>>, vector<1x5x64xf32>,
    %c0_16 = arith.constant 0 : index
    %c0_17 = arith.constant 0 : index
    %c0_18 = arith.constant 0 : index
    %21 = vector.load %arg7[%c0_16, %c0_17, %c0_18] : memref<1x16x64xf32, #tpu.memory_space<vmem>>, vector<1x16x64xf32>
    %22 = vector.shape_cast %21 : vector<1x16x64xf32> to vector<16x64xf32>
    %23 = vector.shape_cast %11 : vector<16x64xf32> to vector<1x16x64xf32>
    tpu.vector_store %arg7[%c0_16, %c0_17, %c0_18], %23 {strides = array<i32>} : memref<1x16x64xf32, #tpu.memory_space<vmem>>, vector<1x16x64xf32>,
    return
  }
  func.func @transform_0(%arg0: i32) -> (i32, i32, i32) {
    %c0_i32 = arith.constant 0 : i32
    %c0_i32_0 = arith.constant 0 : i32
    %c0_i32_1 = arith.constant 0 : i32
    return %arg0, %c0_i32, %c0_i32_0 : i32, i32, i32
  }
  func.func @transform_1(%arg0: i32) -> (i32, i32) {
    %c0_i32 = arith.constant 0 : i32
    %c0_i32_0 = arith.constant 0 : i32
    %c0_i32_1 = arith.constant 0 : i32
    return %c0_i32, %c0_i32_0 : i32, i32
  }
  func.func @transform_2(%arg0: i32) -> (i32, i32) {
    %c0_i32 = arith.constant 0 : i32
    %c0_i32_0 = arith.constant 0 : i32
    %c0_i32_1 = arith.constant 0 : i32
    return %c0_i32, %c0_i32_0 : i32, i32
  }
  func.func @transform_3(%arg0: i32) -> (i32, i32) {
    %c0_i32 = arith.constant 0 : i32
    %c0_i32_0 = arith.constant 0 : i32
    %c0_i32_1 = arith.constant 0 : i32
    return %c0_i32, %c0_i32_0 : i32, i32
  }
  func.func @transform_4(%arg0: i32) -> (i32, i32) {
    %c0_i32 = arith.constant 0 : i32
    %c0_i32_0 = arith.constant 0 : i32
    %c0_i32_1 = arith.constant 0 : i32
    return %c0_i32, %c0_i32_0 : i32, i32
  }
  func.func @transform_5(%arg0: i32) -> (i32, i32, i32) {
    %c0_i32 = arith.constant 0 : i32
    %c0_i32_0 = arith.constant 0 : i32
    %c0_i32_1 = arith.constant 0 : i32
    return %arg0, %c0_i32, %c0_i32_0 : i32, i32, i32
  }
  func.func @transform_6(%arg0: i32) -> (i32, i32, i32) {
    %c0_i32 = arith.constant 0 : i32
    %c0_i32_0 = arith.constant 0 : i32
    %c0_i32_1 = arith.constant 0 : i32
    return %arg0, %c0_i32, %c0_i32_0 : i32, i32, i32
  }
}

</mosaic_0001>

<llo_original>
// kernel: _lambda_.22
$region0: #{_lambda_.22}
  #allocation0 [shape = 'u32[]', space=smem, size = 0x4, offset = 0x4, fixed_abs, tag = 'smem constant byte address 0x4 - core index']
  #allocation1 [shape = 'u32[72,128]{1,0:T(1,128)}', space=vmem, size = 0x9000, scoped, tag = 'internal scratch']
  %s0 = inlined_call_operand.vmem [shape: bf16[2,8,128], index: 0, kind: input, shape index: {}]
  %s1 = inlined_call_operand.vmem [shape: bf16[8,8], index: 1, kind: input, shape index: {}]
  %s2 = inlined_call_operand.vmem [shape: bf16[9,8,8], index: 2, kind: input, shape index: {}]
  %s3 = inlined_call_operand.vmem [shape: bf16[16,8], index: 3, kind: input, shape index: {}]
  %s4 = inlined_call_operand.vmem [shape: f32[8,2], index: 4, kind: input, shape index: {}]
  %s5 = inlined_call_operand.vmem [shape: f32[8,2], index: 5, kind: input, shape index: {}]
  %s6 = inlined_call_operand.vmem [shape: f32[8,2], index: 6, kind: input, shape index: {}]
  %s7 = inlined_call_operand.vmem [shape: f32[16,1], index: 7, kind: input, shape index: {}]
  %s8 = inlined_call_operand.vmem [shape: f32[9,128], index: 8, kind: input, shape index: {}]
  %s9 = inlined_call_operand.vmem [shape: bf16[16,8], index: 9, kind: input, shape index: {}]
  %s10 = inlined_call_operand.vmem [shape: f32[16,1], index: 10, kind: input, shape index: {}]
  %s11 = inlined_call_operand.vmem [shape: bf16[2,16,128], index: 11, kind: output, shape index: {}]
  %s12 = sld [smem:[#allocation0]]
  $region77: #{_lambda_.22} parent=0
    _
  %s14 = ssub.s32 1, %s12
  %s15 = scalar_select 0, %s14, %s12
  loop: start=0, step=1, limit=4
  $region2: #{_lambda_.22} parent=0 // loop_pre_header
    _
  $region3: #{_lambda_.22} parent=0 // loop_header
    %s17 = sphi 0, %s21
    %p18 = scmp.ge.s32.totalorder %s17, 4
    %s27 = sphi 0, %s29
    %s30 = sphi 0, %s27
    %s31 = sphi 0, %s30
    %s47 = sphi 0, %s31
    %s51 = sphi 0, %s51
    %s53 = sphi 0, %s51
    %s54 = sphi 0, %s53
    %s68 = sphi 0, %s54
    %s72 = sphi 0, %s72
    %s74 = sphi 0, %s72
    %s75 = sphi 0, %s74
    %s89 = sphi 0, %s75
    %s93 = sphi 0, %s93
    %s95 = sphi 0, %s93
    %s96 = sphi 0, %s95
    %s110 = sphi 0, %s96
    %s114 = sphi 0, %s114
    %s116 = sphi 0, %s114
    %s117 = sphi 0, %s116
    %s131 = sphi 0, %s117
    %s135 = sphi 0, %s135
    %s137 = sphi 0, %s135
    %s138 = sphi 0, %s137
    %s152 = sphi 0, %s138
    %s156 = sphi 0, %s156
    %s158 = sphi 0, %s156
    %s159 = sphi 0, %s158
    %s173 = sphi 0, %s159
    %s177 = sphi 0, %s177
    %s179 = sphi 0, %s177
    %s180 = sphi 0, %s179
    %s194 = sphi 0, %s180
    %s198 = sphi 0, %s198
    %s200 = sphi 0, %s198
    %s201 = sphi 0, %s200
    %s215 = sphi 0, %s201
    %s219 = sphi 0, %s219
    %s221 = sphi 0, %s219
    %s222 = sphi 0, %s221
    %s236 = sphi 0, %s222
    %s240 = sphi 0, %s240
    %s242 = sphi 0, %s240
    %s243 = sphi 0, %s242
    %s257 = sphi 0, %s243
    %s263 = sphi 0, %s265
    %s266 = sphi 0, %s263
    %s267 = sphi 0, %s266
    %s283 = sphi 0, %s267
  $region4: #{_lambda_.22} parent=0 // loop_header_branch
    %20 = sbr.rel (%p18) target = $region8
  $region5: #{_lambda_.22} parent=0 // loop_body
    %s22 = ssub.s32 %s17, 1
    %s23 = ssub.s32 %s17, 2
    %s24 = sadd.s32 %s17, 1
    %s25 = ssub.s32 %s17, %s24
    %p26 = scmp.eq.s32.totalorder %s25, 0
    %s28 = sadd.s32 %s27, 1
    %s29 = scalar_select %p26, %s27, %s28
    %p32 = pneg %p26
    %p33 = scmp.eq.s32.totalorder %s17, 1
    %p34 = por %p32, %p33
    %p35 = scmp.ne.s32.totalorder %s27, %s30
    %p36 = scmp.eq.s32.totalorder %s17, 0
    %p37 = por %p35, %p36
    %p38 = scmp.ne.s32.totalorder %s27, %s30
    %p39 = scmp.eq.s32.totalorder %s22, 1
    %p40 = por %p38, %p39
    %p41 = scmp.ne.s32.totalorder %s30, %s31
    %p42 = scmp.eq.s32.totalorder %s22, 0
    %p43 = por %p41, %p42
    %p44 = scmp.ne.s32.totalorder %s30, %s31
    %p45 = scmp.eq.s32.totalorder %s23, 1
    %p46 = por %p44, %p45
    %p48 = scmp.ne.s32.totalorder %s31, %s47
    %p49 = scmp.eq.s32.totalorder %s23, 0
    %p50 = por %p48, %p49
    %s52 = sadd.s32 %s51, 1
    %p55 = scmp.eq.s32.totalorder %s17, 1
    %p56 = scmp.ne.s32.totalorder %s51, %s53
    %p57 = scmp.eq.s32.totalorder %s17, 0
    %p58 = por %p56, %p57
    %p59 = scmp.ne.s32.totalorder %s51, %s53
    %p60 = scmp.eq.s32.totalorder %s22, 1
    %p61 = por %p59, %p60
    %p62 = scmp.ne.s32.totalorder %s53, %s54
    %p63 = scmp.eq.s32.totalorder %s22, 0
    %p64 = por %p62, %p63
    %p65 = scmp.ne.s32.totalorder %s53, %s54
    %p66 = scmp.eq.s32.totalorder %s23, 1
    %p67 = por %p65, %p66
    %p69 = scmp.ne.s32.totalorder %s54, %s68
    %p70 = scmp.eq.s32.totalorder %s23, 0
    %p71 = por %p69, %p70
    %s73 = sadd.s32 %s72, 1
    %p76 = scmp.eq.s32.totalorder %s17, 1
    %p77 = scmp.ne.s32.totalorder %s72, %s74
    %p78 = scmp.eq.s32.totalorder %s17, 0
    %p79 = por %p77, %p78
    %p80 = scmp.ne.s32.totalorder %s72, %s74
    %p81 = scmp.eq.s32.totalorder %s22, 1
    %p82 = por %p80, %p81
    %p83 = scmp.ne.s32.totalorder %s74, %s75
    %p84 = scmp.eq.s32.totalorder %s22, 0
    %p85 = por %p83, %p84
    %p86 = scmp.ne.s32.totalorder %s74, %s75
    %p87 = scmp.eq.s32.totalorder %s23, 1
    %p88 = por %p86, %p87
    %p90 = scmp.ne.s32.totalorder %s75, %s89
    %p91 = scmp.eq.s32.totalorder %s23, 0
    %p92 = por %p90, %p91
    %s94 = sadd.s32 %s93, 1
    %p97 = scmp.eq.s32.totalorder %s17, 1
    %p98 = scmp.ne.s32.totalorder %s93, %s95
    %p99 = scmp.eq.s32.totalorder %s17, 0
    %p100 = por %p98, %p99
    %p101 = scmp.ne.s32.totalorder %s93, %s95
    %p102 = scmp.eq.s32.totalorder %s22, 1
    %p103 = por %p101, %p102
    %p104 = scmp.ne.s32.totalorder %s95, %s96
    %p105 = scmp.eq.s32.totalorder %s22, 0
    %p106 = por %p104, %p105
    %p107 = scmp.ne.s32.totalorder %s95, %s96
    %p108 = scmp.eq.s32.totalorder %s23, 1
    %p109 = por %p107, %p108
    %p111 = scmp.ne.s32.totalorder %s96, %s110
    %p112 = scmp.eq.s32.totalorder %s23, 0
    %p113 = por %p111, %p112
    %s115 = sadd.s32 %s114, 1
    %p118 = scmp.eq.s32.totalorder %s17, 1
    %p119 = scmp.ne.s32.totalorder %s114, %s116
    %p120 = scmp.eq.s32.totalorder %s17, 0
    %p121 = por %p119, %p120
    %p122 = scmp.ne.s32.totalorder %s114, %s116
    %p123 = scmp.eq.s32.totalorder %s22, 1
    %p124 = por %p122, %p123
    %p125 = scmp.ne.s32.totalorder %s116, %s117
    %p126 = scmp.eq.s32.totalorder %s22, 0
    %p127 = por %p125, %p126
    %p128 = scmp.ne.s32.totalorder %s116, %s117
    %p129 = scmp.eq.s32.totalorder %s23, 1
    %p130 = por %p128, %p129
    %p132 = scmp.ne.s32.totalorder %s117, %s131
    %p133 = scmp.eq.s32.totalorder %s23, 0
    %p134 = por %p132, %p133
    %s136 = sadd.s32 %s135, 1
    %p139 = scmp.eq.s32.totalorder %s17, 1
    %p140 = scmp.ne.s32.totalorder %s135, %s137
    %p141 = scmp.eq.s32.totalorder %s17, 0
    %p142 = por %p140, %p141
    %p143 = scmp.ne.s32.totalorder %s135, %s137
    %p144 = scmp.eq.s32.totalorder %s22, 1
    %p145 = por %p143, %p144
    %p146 = scmp.ne.s32.totalorder %s137, %s138
    %p147 = scmp.eq.s32.totalorder %s22, 0
    %p148 = por %p146, %p147
    %p149 = scmp.ne.s32.totalorder %s137, %s138
    %p150 = scmp.eq.s32.totalorder %s23, 1
    %p151 = por %p149, %p150
    %p153 = scmp.ne.s32.totalorder %s138, %s152
    %p154 = scmp.eq.s32.totalorder %s23, 0
    %p155 = por %p153, %p154
    %s157 = sadd.s32 %s156, 1
    %p160 = scmp.eq.s32.totalorder %s17, 1
    %p161 = scmp.ne.s32.totalorder %s156, %s158
    %p162 = scmp.eq.s32.totalorder %s17, 0
    %p163 = por %p161, %p162
    %p164 = scmp.ne.s32.totalorder %s156, %s158
    %p165 = scmp.eq.s32.totalorder %s22, 1
    %p166 = por %p164, %p165
    %p167 = scmp.ne.s32.totalorder %s158, %s159
    %p168 = scmp.eq.s32.totalorder %s22, 0
    %p169 = por %p167, %p168
    %p170 = scmp.ne.s32.totalorder %s158, %s159
    %p171 = scmp.eq.s32.totalorder %s23, 1
    %p172 = por %p170, %p171
    %p174 = scmp.ne.s32.totalorder %s159, %s173
    %p175 = scmp.eq.s32.totalorder %s23, 0
    %p176 = por %p174, %p175
    %s178 = sadd.s32 %s177, 1
    %p181 = scmp.eq.s32.totalorder %s17, 1
    %p182 = scmp.ne.s32.totalorder %s177, %s179
    %p183 = scmp.eq.s32.totalorder %s17, 0
    %p184 = por %p182, %p183
    %p185 = scmp.ne.s32.totalorder %s177, %s179
    %p186 = scmp.eq.s32.totalorder %s22, 1
    %p187 = por %p185, %p186
    %p188 = scmp.ne.s32.totalorder %s179, %s180
    %p189 = scmp.eq.s32.totalorder %s22, 0
    %p190 = por %p188, %p189
    %p191 = scmp.ne.s32.totalorder %s179, %s180
    %p192 = scmp.eq.s32.totalorder %s23, 1
    %p193 = por %p191, %p192
    %p195 = scmp.ne.s32.totalorder %s180, %s194
    %p196 = scmp.eq.s32.totalorder %s23, 0
    %p197 = por %p195, %p196
    %s199 = sadd.s32 %s198, 1
    %p202 = scmp.eq.s32.totalorder %s17, 1
    %p203 = scmp.ne.s32.totalorder %s198, %s200
    %p204 = scmp.eq.s32.totalorder %s17, 0
    %p205 = por %p203, %p204
    %p206 = scmp.ne.s32.totalorder %s198, %s200
    %p207 = scmp.eq.s32.totalorder %s22, 1
    %p208 = por %p206, %p207
    %p209 = scmp.ne.s32.totalorder %s200, %s201
    %p210 = scmp.eq.s32.totalorder %s22, 0
    %p211 = por %p209, %p210
    %p212 = scmp.ne.s32.totalorder %s200, %s201
    %p213 = scmp.eq.s32.totalorder %s23, 1
    %p214 = por %p212, %p213
    %p216 = scmp.ne.s32.totalorder %s201, %s215
    %p217 = scmp.eq.s32.totalorder %s23, 0
    %p218 = por %p216, %p217
    %s220 = sadd.s32 %s219, 1
    %p223 = scmp.eq.s32.totalorder %s17, 1
    %p224 = scmp.ne.s32.totalorder %s219, %s221
    %p225 = scmp.eq.s32.totalorder %s17, 0
    %p226 = por %p224, %p225
    %p227 = scmp.ne.s32.totalorder %s219, %s221
    %p228 = scmp.eq.s32.totalorder %s22, 1
    %p229 = por %p227, %p228
    %p230 = scmp.ne.s32.totalorder %s221, %s222
    %p231 = scmp.eq.s32.totalorder %s22, 0
    %p232 = por %p230, %p231
    %p233 = scmp.ne.s32.totalorder %s221, %s222
    %p234 = scmp.eq.s32.totalorder %s23, 1
    %p235 = por %p233, %p234
    %p237 = scmp.ne.s32.totalorder %s222, %s236
    %p238 = scmp.eq.s32.totalorder %s23, 0
    %p239 = por %p237, %p238
    %s241 = sadd.s32 %s240, 1
    %p244 = scmp.eq.s32.totalorder %s17, 1
    %p245 = scmp.ne.s32.totalorder %s240, %s242
    %p246 = scmp.eq.s32.totalorder %s17, 0
    %p247 = por %p245, %p246
    %p248 = scmp.ne.s32.totalorder %s240, %s242
    %p249 = scmp.eq.s32.totalorder %s22, 1
    %p250 = por %p248, %p249
    %p251 = scmp.ne.s32.totalorder %s242, %s243
    %p252 = scmp.eq.s32.totalorder %s22, 0
    %p253 = por %p251, %p252
    %p254 = scmp.ne.s32.totalorder %s242, %s243
    %p255 = scmp.eq.s32.totalorder %s23, 1
    %p256 = por %p254, %p255
    %p258 = scmp.ne.s32.totalorder %s243, %s257
    %p259 = scmp.eq.s32.totalorder %s23, 0
    %p260 = por %p258, %p259
    %s261 = ssub.s32 %s17, %s24
    %p262 = scmp.eq.s32.totalorder %s261, 0
    %s264 = sadd.s32 %s263, 1
    %s265 = scalar_select %p262, %s263, %s264
    %p268 = pneg %p262
    %p269 = scmp.eq.s32.totalorder %s17, 1
    %p270 = por %p268, %p269
    %p271 = scmp.ne.s32.totalorder %s263, %s266
    %p272 = scmp.eq.s32.totalorder %s17, 0
    %p273 = por %p271, %p272
    %p274 = scmp.ne.s32.totalorder %s263, %s266
    %p275 = scmp.eq.s32.totalorder %s22, 1
    %p276 = por %p274, %p275
    %p277 = scmp.ne.s32.totalorder %s266, %s267
    %p278 = scmp.eq.s32.totalorder %s22, 0
    %p279 = por %p277, %p278
    %p280 = scmp.ne.s32.totalorder %s266, %s267
    %p281 = scmp.eq.s32.totalorder %s23, 1
    %p282 = por %p280, %p281
    %p284 = scmp.ne.s32.totalorder %s267, %s283
    %p285 = scmp.eq.s32.totalorder %s23, 0
    %p286 = por %p284, %p285
    %p287 = scmp.le.s32.totalorder 1, %s17
    %p288 = scmp.lt.s32.totalorder %s17, 3
    %p289 = pnand %p287, %p288
    %p290 = pneg %p289
    // Predicated region
    $region9: #{_lambda_.22} parent=5 // pred_check
      _
    $region10: #{_lambda_.22} parent=5 // pred_check_branch
      %292 = sbr.rel (%p289) target = $region12
    $region11: #{_lambda_.22} parent=5 // pred_region
      %s293 = ssub.s32 %s17, 1
      // Predicated region
      $region13: #{_lambda_.22} parent=11 // pred_check
        %p294 = pneg %p64
      $region14: #{_lambda_.22} parent=11 // pred_check_branch
        %296 = sbr.rel (%p294) target = $region16
      $region15: #{_lambda_.22} parent=11 // pred_region
        _
      $region16: #{_lambda_.22} parent=11 // pred_fallthru
        _
      // Predicated region
      $region17: #{_lambda_.22} parent=11 // pred_check
        %p297 = pneg %p85
      $region18: #{_lambda_.22} parent=11 // pred_check_branch
        %299 = sbr.rel (%p297) target = $region20
      $region19: #{_lambda_.22} parent=11 // pred_region
        _
      $region20: #{_lambda_.22} parent=11 // pred_fallthru
        _
      // Predicated region
      $region21: #{_lambda_.22} parent=11 // pred_check
        %p300 = pneg %p106
      $region22: #{_lambda_.22} parent=11 // pred_check_branch
        %302 = sbr.rel (%p300) target = $region24
      $region23: #{_lambda_.22} parent=11 // pred_region
        _
      $region24: #{_lambda_.22} parent=11 // pred_fallthru
        _
      // Predicated region
      $region25: #{_lambda_.22} parent=11 // pred_check
        %p303 = pneg %p127
      $region26: #{_lambda_.22} parent=11 // pred_check_branch
        %305 = sbr.rel (%p303) target = $region28
      $region27: #{_lambda_.22} parent=11 // pred_region
        _
      $region28: #{_lambda_.22} parent=11 // pred_fallthru
        _
      // Predicated region
      $region29: #{_lambda_.22} parent=11 // pred_check
        %p306 = pneg %p148
      $region30: #{_lambda_.22} parent=11 // pred_check_branch
        %308 = sbr.rel (%p306) target = $region32
      $region31: #{_lambda_.22} parent=11 // pred_region
        _
      $region32: #{_lambda_.22} parent=11 // pred_fallthru
        _
      // Predicated region
      $region33: #{_lambda_.22} parent=11 // pred_check
        %p309 = pneg %p169
      $region34: #{_lambda_.22} parent=11 // pred_check_branch
        %311 = sbr.rel (%p309) target = $region36
      $region35: #{_lambda_.22} parent=11 // pred_region
        _
      $region36: #{_lambda_.22} parent=11 // pred_fallthru
        _
      // Predicated region
      $region37: #{_lambda_.22} parent=11 // pred_check
        %p312 = pneg %p190
      $region38: #{_lambda_.22} parent=11 // pred_check_branch
        %314 = sbr.rel (%p312) target = $region40
      $region39: #{_lambda_.22} parent=11 // pred_region
        _
      $region40: #{_lambda_.22} parent=11 // pred_fallthru
        _
      // Predicated region
      $region41: #{_lambda_.22} parent=11 // pred_check
        %p315 = pneg %p211
      $region42: #{_lambda_.22} parent=11 // pred_check_branch
        %317 = sbr.rel (%p315) target = $region44
      $region43: #{_lambda_.22} parent=11 // pred_region
        _
      $region44: #{_lambda_.22} parent=11 // pred_fallthru
        _
      // Predicated region
      $region45: #{_lambda_.22} parent=11 // pred_check
        %p318 = pneg %p232
      $region46: #{_lambda_.22} parent=11 // pred_check_branch
        %320 = sbr.rel (%p318) target = $region48
      $region47: #{_lambda_.22} parent=11 // pred_region
        _
      $region48: #{_lambda_.22} parent=11 // pred_fallthru
        _
      // Predicated region
      $region49: #{_lambda_.22} parent=11 // pred_check
        %p321 = pneg %p253
      $region50: #{_lambda_.22} parent=11 // pred_check_branch
        %323 = sbr.rel (%p321) target = $region52
      $region51: #{_lambda_.22} parent=11 // pred_region
        _
      $region52: #{_lambda_.22} parent=11 // pred_fallthru
        _
    $region12: #{_lambda_.22} parent=5 // pred_fallthru
      _
    %p324 = scmp.lt.s32.totalorder %s17, 2
    // Predicated region
    $region53: #{_lambda_.22} parent=5 // pred_check
      %p325 = pneg %p324
    $region54: #{_lambda_.22} parent=5 // pred_check_branch
      %327 = sbr.rel (%p325) target = $region56
    $region55: #{_lambda_.22} parent=5 // pred_region
      // Predicated region
      $region57: #{_lambda_.22} parent=55 // pred_check
        %p328 = pneg %p37
      $region58: #{_lambda_.22} parent=55 // pred_check_branch
        %330 = sbr.rel (%p328) target = $region60
      $region59: #{_lambda_.22} parent=55 // pred_region
        %p331 = scmp.lt.s32.totalorder %s17, 1
        %s332 = scalar_select %p331, %s17, 1
        %s333 = smul.addr %s332, 4
        %s334 = scalar_lea.vmem %s0, %s333
      $region60: #{_lambda_.22} parent=55 // pred_fallthru
        _
    $region56: #{_lambda_.22} parent=5 // pred_fallthru
      _
    %p335 = scmp.le.s32.totalorder 1, %s17
    %p336 = scmp.lt.s32.totalorder %s17, 3
    %p337 = pnand %p335, %p336
    %p338 = pneg %p337
    // Predicated region
    $region61: #{_lambda_.22} parent=5 // pred_check
      _
    $region62: #{_lambda_.22} parent=5 // pred_check_branch
      %340 = sbr.rel (%p337) target = $region64
    $region63: #{_lambda_.22} parent=5 // pred_region
      %s341 = ssub.s32 %s17, 1
      %p342 = scmp.lt.s32.totalorder %s22, 1
      %s343 = scalar_select %p342, %s22, 1
      %s344 = smul.addr %s343, 4
      %s345 = scalar_lea.vmem %s0, %s344
      %p346 = pneg %p43
      %p347 = pneg %p40
      %p348 = pneg %p64
      %p349 = pneg %p61
      %p350 = pneg %p85
      %p351 = pneg %p82
      %p352 = pneg %p106
      %p353 = pneg %p103
      %p354 = pneg %p127
      %p355 = pneg %p124
      %p356 = pneg %p148
      %p357 = pneg %p145
      %p358 = pneg %p169
      %p359 = pneg %p166
      %p360 = pneg %p190
      %p361 = pneg %p187
      %p362 = pneg %p211
      %p363 = pneg %p208
      %p364 = pneg %p232
      %p365 = pneg %p229
      %p366 = pneg %p253
      %p367 = pneg %p250
      %p368 = pneg %p279
      %p369 = pneg %p276
      %p370 = scmp.lt.s32.totalorder %s22, 1
      %s371 = scalar_select %p370, %s22, 1
      %s372 = smul.addr %s371, 2
      %s373 = smul.addr %s372, 4
      %s374 = scalar_lea.vmem %s11, %s373
      %p375 = scmp.lt.s32.totalorder %s22, 1
      %s376 = scalar_select %p375, %s22, 1
      %s377 = smul.addr %s376, 4
      %s378 = scalar_lea.vmem %s0, %s377
      %p379 = scmp.lt.s32.totalorder %s22, 1
      %s380 = scalar_select %p379, %s22, 1
      %s381 = smul.addr %s380, 2
      %s382 = smul.addr %s381, 4
      %s383 = scalar_lea.vmem %s11, %s382
      %v385 = vld [vmem:[%s378] sm:$0xf]
      %v386 = vld [vmem:[%s4] sm:$0xff]
      %v387 = vunpack.c.l.bf16 %v385
      %389 = vset.pattern.permute.xlu0 0
      %390 = vperm.xlu0 %389, %v386
      %v391 = vpop.permute.xlu0 %390
      %v393 = vmul.f32 %v387, %v391
      %394 = vset.pattern.permute.xlu0 1
      %395 = vperm.xlu0 %394, %v386
      %v396 = vpop.permute.xlu0 %395
      %v398 = vadd.f32 %v393, %v396
      %v399 = vmax.f32 %v398, 0.0
      %v400 = vpack.c.bf16 %v399, %v399
      %v401 = vld [vmem:[%s1] sm:$0xf]
      %vm402 = vcmask 64512
      %v404 = vsel %vm402, %v401, 0
      %vm406 = vcmask 1043456
      %v408 = vsel %vm406, %v400, 0
      %410 = vmatpush.bf16.msra.mxu0 0
      %411 = vmatpush.bf16.msra.mxu0 0
      %412 = vmatpush.bf16.msra.mxu0 0
      %413 = vmatpush.bf16.msra.mxu0 0
      %414 = vmatpush.bf16.msra.mxu0 0
      %415 = vmatpush.bf16.msra.mxu0 0
      %416 = vmatpush.bf16.msra.mxu0 0
      %417 = vmatpush.bf16.msra.mxu0 %v408
      %418 = vmatmul.bf16.gmra.mxu0 %v404
      %v419 = vpop.f32.mrf.mxu0
      %v420 = vadd.f32 0.0, %v419
      %v421 = vpop.f32.mrf.mxu0
      %422 = vdwg.mxu0
      %v423 = vld [vmem:[%s5] sm:$0xff]
      %425 = vset.pattern.permute.xlu0 0
      %426 = vperm.xlu0 %425, %v423
      %v427 = vpop.permute.xlu0 %426
      %v429 = vmul.f32 %v420, %v427
      %430 = vset.pattern.permute.xlu0 1
      %431 = vperm.xlu0 %430, %v423
      %v432 = vpop.permute.xlu0 %431
      %v434 = vadd.f32 %v429, %v432
      %v435 = vmax.f32 %v434, 0.0
      %v436 = vld [vmem:[%s8] sm:$0xff]
      %v437 = vld [vmem:[%s8 + $0x8] sm:$0x1]
      %438 = vrot.lane.b32.xlu0 %v435, 9
      %v439 = vpop.permute.xlu0 %438
      %v440 = vld [vmem:[%s2] sm:$0xf]
      %v441 = vpack.c.bf16 %v439, %v439
      %v443 = vsel %vm402, %v440, 0
      %v446 = vsel %vm406, %v441, 0
      %448 = vmatpush.bf16.msra.mxu0 0
      %449 = vmatpush.bf16.msra.mxu0 0
      %450 = vmatpush.bf16.msra.mxu0 0
      %451 = vmatpush.bf16.msra.mxu0 0
      %452 = vmatpush.bf16.msra.mxu0 0
      %453 = vmatpush.bf16.msra.mxu0 0
      %454 = vmatpush.bf16.msra.mxu0 0
      %455 = vmatpush.bf16.msra.mxu0 %v446
      %456 = vmatmul.bf16.gmra.mxu0 %v443
      %v457 = vpop.f32.mrf.mxu0
      %v458 = vadd.f32 0.0, %v457
      %v459 = vpop.f32.mrf.mxu0
      %460 = vdwg.mxu0
      %v461 = vperm.slane %v436, 0
      %v462 = vmul.f32 %v458, %v461
      %v463 = vadd.f32 %v462, 0.0
      %464 = vrot.lane.b32.xlu0 %v435, 8
      %v465 = vpop.permute.xlu0 %464
      %s466 = scalar_lea.vmem %s2, 4
      %v467 = vld [vmem:[%s466] sm:$0xf]
      %v468 = vpack.c.bf16 %v465, %v465
      %v470 = vsel %vm402, %v467, 0
      %v473 = vsel %vm406, %v468, 0
      %475 = vmatpush.bf16.msra.mxu0 0
      %476 = vmatpush.bf16.msra.mxu0 0
      %477 = vmatpush.bf16.msra.mxu0 0
      %478 = vmatpush.bf16.msra.mxu0 0
      %479 = vmatpush.bf16.msra.mxu0 0
      %480 = vmatpush.bf16.msra.mxu0 0
      %481 = vmatpush.bf16.msra.mxu0 0
      %482 = vmatpush.bf16.msra.mxu0 %v473
      %483 = vmatmul.bf16.gmra.mxu0 %v470
      %v484 = vpop.f32.mrf.mxu0
      %v485 = vadd.f32 0.0, %v484
      %v486 = vpop.f32.mrf.mxu0
      %487 = vdwg.mxu0
      %v488 = vperm.slane %v436, 1
      %v489 = vmul.f32 %v485, %v488
      %v490 = vadd.f32 %v463, %v489
      %491 = vrot.lane.b32.xlu0 %v435, 7
      %v492 = vpop.permute.xlu0 %491
      %s493 = scalar_lea.vmem %s2, 8
      %v494 = vld [vmem:[%s493] sm:$0xf]
      %v495 = vpack.c.bf16 %v492, %v492
      %v497 = vsel %vm402, %v494, 0
      %v500 = vsel %vm406, %v495, 0
      %502 = vmatpush.bf16.msra.mxu0 0
      %503 = vmatpush.bf16.msra.mxu0 0
      %504 = vmatpush.bf16.msra.mxu0 0
      %505 = vmatpush.bf16.msra.mxu0 0
      %506 = vmatpush.bf16.msra.mxu0 0
      %507 = vmatpush.bf16.msra.mxu0 0
      %508 = vmatpush.bf16.msra.mxu0 0
      %509 = vmatpush.bf16.msra.mxu0 %v500
      %510 = vmatmul.bf16.gmra.mxu0 %v497
      %v511 = vpop.f32.mrf.mxu0
      %v512 = vadd.f32 0.0, %v511
      %v513 = vpop.f32.mrf.mxu0
      %514 = vdwg.mxu0
      %v515 = vperm.slane %v436, 2
      %v516 = vmul.f32 %v512, %v515
      %v517 = vadd.f32 %v490, %v516
      %518 = vrot.lane.b32.xlu0 %v435, 1
      %v519 = vpop.permute.xlu0 %518
      %s520 = scalar_lea.vmem %s2, 12
      %v521 = vld [vmem:[%s520] sm:$0xf]
      %v522 = vpack.c.bf16 %v519, %v519
      %v524 = vsel %vm402, %v521, 0
      %v527 = vsel %vm406, %v522, 0
      %529 = vmatpush.bf16.msra.mxu0 0
      %530 = vmatpush.bf16.msra.mxu0 0
      %531 = vmatpush.bf16.msra.mxu0 0
      %532 = vmatpush.bf16.msra.mxu0 0
      %533 = vmatpush.bf16.msra.mxu0 0
      %534 = vmatpush.bf16.msra.mxu0 0
      %535 = vmatpush.bf16.msra.mxu0 0
      %536 = vmatpush.bf16.msra.mxu0 %v527
      %537 = vmatmul.bf16.gmra.mxu0 %v524
      %v538 = vpop.f32.mrf.mxu0
      %v539 = vadd.f32 0.0, %v538
      %v540 = vpop.f32.mrf.mxu0
      %541 = vdwg.mxu0
      %v542 = vperm.slane %v436, 3
      %v543 = vmul.f32 %v539, %v542
      %v544 = vadd.f32 %v517, %v543
      %s545 = scalar_lea.vmem %s2, 16
      %v546 = vld [vmem:[%s545] sm:$0xf]
      %v547 = vpack.c.bf16 %v435, %v435
      %v549 = vsel %vm402, %v546, 0
      %v552 = vsel %vm406, %v547, 0
      %554 = vmatpush.bf16.msra.mxu0 0
      %555 = vmatpush.bf16.msra.mxu0 0
      %556 = vmatpush.bf16.msra.mxu0 0
      %557 = vmatpush.bf16.msra.mxu0 0
      %558 = vmatpush.bf16.msra.mxu0 0
      %559 = vmatpush.bf16.msra.mxu0 0
      %560 = vmatpush.bf16.msra.mxu0 0
      %561 = vmatpush.bf16.msra.mxu0 %v552
      %562 = vmatmul.bf16.gmra.mxu0 %v549
      %v563 = vpop.f32.mrf.mxu0
      %v564 = vadd.f32 0.0, %v563
      %v565 = vpop.f32.mrf.mxu0
      %566 = vdwg.mxu0
      %v567 = vperm.slane %v436, 4
      %v568 = vmul.f32 %v564, %v567
      %v569 = vadd.f32 %v544, %v568
      %570 = vrot.lane.b32.xlu0 %v435, 127
      %v571 = vpop.permute.xlu0 %570
      %s572 = scalar_lea.vmem %s2, 20
      %v573 = vld [vmem:[%s572] sm:$0xf]
      %v574 = vpack.c.bf16 %v571, %v571
      %v576 = vsel %vm402, %v573, 0
      %v579 = vsel %vm406, %v574, 0
      %581 = vmatpush.bf16.msra.mxu0 0
      %582 = vmatpush.bf16.msra.mxu0 0
      %583 = vmatpush.bf16.msra.mxu0 0
      %584 = vmatpush.bf16.msra.mxu0 0
      %585 = vmatpush.bf16.msra.mxu0 0
      %586 = vmatpush.bf16.msra.mxu0 0
      %587 = vmatpush.bf16.msra.mxu0 0
      %588 = vmatpush.bf16.msra.mxu0 %v579
      %589 = vmatmul.bf16.gmra.mxu0 %v576
      %v590 = vpop.f32.mrf.mxu0
      %v591 = vadd.f32 0.0, %v590
      %v592 = vpop.f32.mrf.mxu0
      %593 = vdwg.mxu0
      %v594 = vperm.slane %v436, 5
      %v595 = vmul.f32 %v591, %v594
      %v596 = vadd.f32 %v569, %v595
      %597 = vrot.lane.b32.xlu0 %v435, 121
      %v598 = vpop.permute.xlu0 %597
      %s599 = scalar_lea.vmem %s2, 24
      %v600 = vld [vmem:[%s599] sm:$0xf]
      %v601 = vpack.c.bf16 %v598, %v598
      %v603 = vsel %vm402, %v600, 0
      %v606 = vsel %vm406, %v601, 0
      %608 = vmatpush.bf16.msra.mxu0 0
      %609 = vmatpush.bf16.msra.mxu0 0
      %610 = vmatpush.bf16.msra.mxu0 0
      %611 = vmatpush.bf16.msra.mxu0 0
      %612 = vmatpush.bf16.msra.mxu0 0
      %613 = vmatpush.bf16.msra.mxu0 0
      %614 = vmatpush.bf16.msra.mxu0 0
      %615 = vmatpush.bf16.msra.mxu0 %v606
      %616 = vmatmul.bf16.gmra.mxu0 %v603
      %v617 = vpop.f32.mrf.mxu0
      %v618 = vadd.f32 0.0, %v617
      %v619 = vpop.f32.mrf.mxu0
      %620 = vdwg.mxu0
      %v621 = vperm.slane %v436, 6
      %v622 = vmul.f32 %v618, %v621
      %v623 = vadd.f32 %v596, %v622
      %624 = vrot.lane.b32.xlu0 %v435, 120
      %v625 = vpop.permute.xlu0 %624
      %s626 = scalar_lea.vmem %s2, 28
      %v627 = vld [vmem:[%s626] sm:$0xf]
      %v628 = vpack.c.bf16 %v625, %v625
      %v630 = vsel %vm402, %v627, 0
      %v633 = vsel %vm406, %v628, 0
      %635 = vmatpush.bf16.msra.mxu0 0
      %636 = vmatpush.bf16.msra.mxu0 0
      %637 = vmatpush.bf16.msra.mxu0 0
      %638 = vmatpush.bf16.msra.mxu0 0
      %639 = vmatpush.bf16.msra.mxu0 0
      %640 = vmatpush.bf16.msra.mxu0 0
      %641 = vmatpush.bf16.msra.mxu0 0
      %642 = vmatpush.bf16.msra.mxu0 %v633
      %643 = vmatmul.bf16.gmra.mxu0 %v630
      %v644 = vpop.f32.mrf.mxu0
      %v645 = vadd.f32 0.0, %v644
      %v646 = vpop.f32.mrf.mxu0
      %647 = vdwg.mxu0
      %v648 = vperm.slane %v436, 7
      %v649 = vmul.f32 %v645, %v648
      %v650 = vadd.f32 %v623, %v649
      %651 = vrot.lane.b32.xlu0 %v435, 119
      %v652 = vpop.permute.xlu0 %651
      %s653 = scalar_lea.vmem %s2, 32
      %v654 = vld [vmem:[%s653] sm:$0xf]
      %v655 = vpack.c.bf16 %v652, %v652
      %v657 = vsel %vm402, %v654, 0
      %v660 = vsel %vm406, %v655, 0
      %662 = vmatpush.bf16.msra.mxu0 0
      %663 = vmatpush.bf16.msra.mxu0 0
      %664 = vmatpush.bf16.msra.mxu0 0
      %665 = vmatpush.bf16.msra.mxu0 0
      %666 = vmatpush.bf16.msra.mxu0 0
      %667 = vmatpush.bf16.msra.mxu0 0
      %668 = vmatpush.bf16.msra.mxu0 0
      %669 = vmatpush.bf16.msra.mxu0 %v660
      %670 = vmatmul.bf16.gmra.mxu0 %v657
      %v671 = vpop.f32.mrf.mxu0
      %v672 = vadd.f32 0.0, %v671
      %v673 = vpop.f32.mrf.mxu0
      %674 = vdwg.mxu0
      %v675 = vperm.slane %v437, 0
      %v676 = vmul.f32 %v672, %v675
      %v677 = vadd.f32 %v650, %v676
      %v678 = vld [vmem:[%s6] sm:$0xff]
      %680 = vset.pattern.permute.xlu0 0
      %681 = vperm.xlu0 %680, %v678
      %v682 = vpop.permute.xlu0 %681
      %v684 = vmul.f32 %v677, %v682
      %685 = vset.pattern.permute.xlu0 1
      %686 = vperm.xlu0 %685, %v678
      %v687 = vpop.permute.xlu0 %686
      %v689 = vadd.f32 %v684, %v687
      %v690 = vmax.f32 %v689, 0.0
      %v691 = vpack.c.bf16 %v690, %v690
      %v692 = vld [vmem:[%s3] sm:$0xf]
      %v693 = vld [vmem:[%s3 + $0x4] sm:$0xf]
      %v694 = vld [vmem:[%s7] sm:$0xff]
      %v695 = vld [vmem:[%s7 + $0x8] sm:$0xff]
      %697 = vset.pattern.permute.xlu0 0
      %698 = vperm.xlu0 %697, %v694
      %v699 = vpop.permute.xlu0 %698
      %702 = vset.pattern.permute.xlu0 0
      %703 = vperm.xlu0 %702, %v695
      %v704 = vpop.permute.xlu0 %703
      %v708 = vunpack.c.l.b16 %v692
      %v709 = vunpack.c.l.b16 %v693
      %v710 = vpack.c.b16 %v709, %v708
      %v712 = vsel %vm402, %v710, 0
      %v715 = vsel %vm406, %v691, 0
      %717 = vmatpush.bf16.msra.mxu0 0
      %718 = vmatpush.bf16.msra.mxu0 0
      %719 = vmatpush.bf16.msra.mxu0 0
      %720 = vmatpush.bf16.msra.mxu0 0
      %721 = vmatpush.bf16.msra.mxu0 0
      %722 = vmatpush.bf16.msra.mxu0 0
      %723 = vmatpush.bf16.msra.mxu0 0
      %724 = vmatpush.bf16.msra.mxu0 %v715
      %725 = vmatmul.bf16.gmra.mxu0 %v712
      %v726 = vpop.f32.mrf.mxu0
      %v727 = vadd.f32 %v699, %v726
      %v728 = vpop.f32.mrf.mxu0
      %v729 = vadd.f32 %v704, %v728
      %730 = vdwg.mxu0
      %v731 = vld [vmem:[%s9] sm:$0xf]
      %v732 = vld [vmem:[%s9 + $0x4] sm:$0xf]
      %v733 = vld [vmem:[%s10] sm:$0xff]
      %v734 = vld [vmem:[%s10 + $0x8] sm:$0xff]
      %736 = vset.pattern.permute.xlu0 0
      %737 = vperm.xlu0 %736, %v733
      %v738 = vpop.permute.xlu0 %737
      %741 = vset.pattern.permute.xlu0 0
      %742 = vperm.xlu0 %741, %v734
      %v743 = vpop.permute.xlu0 %742
      %v747 = vunpack.c.l.b16 %v731
      %v748 = vunpack.c.l.b16 %v732
      %v749 = vpack.c.b16 %v748, %v747
      %v751 = vsel %vm402, %v749, 0
      %v754 = vsel %vm406, %v385, 0
      %756 = vmatpush.bf16.msra.mxu0 0
      %757 = vmatpush.bf16.msra.mxu0 0
      %758 = vmatpush.bf16.msra.mxu0 0
      %759 = vmatpush.bf16.msra.mxu0 0
      %760 = vmatpush.bf16.msra.mxu0 0
      %761 = vmatpush.bf16.msra.mxu0 0
      %762 = vmatpush.bf16.msra.mxu0 0
      %763 = vmatpush.bf16.msra.mxu0 %v754
      %764 = vmatmul.bf16.gmra.mxu0 %v751
      %v765 = vpop.f32.mrf.mxu0
      %v766 = vadd.f32 %v738, %v765
      %v767 = vpop.f32.mrf.mxu0
      %v768 = vadd.f32 %v743, %v767
      %769 = vdwg.mxu0
      %v770 = vadd.f32 %v727, %v766
      %v771 = vadd.f32 %v729, %v768
      %v772 = vpack.c.bf16 %v770, %v770
      %v773 = vpack.c.bf16 %v771, %v771
      %774 = vst [vmem:[%s383] sm:$0xf] %v772
      %775 = vst [vmem:[%s383 + $0x4] sm:$0xf] %v773
      %p776 = scmp.lt.s32.totalorder %s22, 1
      %s777 = scalar_select %p776, %s22, 1
      %s778 = smul.addr %s777, 2
      %s779 = smul.addr %s778, 4
      %s780 = scalar_lea.vmem %s11, %s779
      // Predicated region
      $region65: #{_lambda_.22} parent=63 // pred_check
        %p781 = pneg %p276
      $region66: #{_lambda_.22} parent=63 // pred_check_branch
        %783 = sbr.rel (%p781) target = $region68
      $region67: #{_lambda_.22} parent=63 // pred_region
        _
      $region68: #{_lambda_.22} parent=63 // pred_fallthru
        _
    $region64: #{_lambda_.22} parent=5 // pred_fallthru
      _
    %p784 = scmp.le.s32.totalorder 2, %s17
    // Predicated region
    $region69: #{_lambda_.22} parent=5 // pred_check
      %p785 = pneg %p784
    $region70: #{_lambda_.22} parent=5 // pred_check_branch
      %787 = sbr.rel (%p785) target = $region72
    $region71: #{_lambda_.22} parent=5 // pred_region
      %s788 = ssub.s32 %s17, 2
      // Predicated region
      $region73: #{_lambda_.22} parent=71 // pred_check
        %p789 = pneg %p282
      $region74: #{_lambda_.22} parent=71 // pred_check_branch
        %791 = sbr.rel (%p789) target = $region76
      $region75: #{_lambda_.22} parent=71 // pred_region
        %p792 = scmp.lt.s32.totalorder %s23, 1
        %s793 = scalar_select %p792, %s23, 1
        %s794 = smul.addr %s793, 2
        %s795 = smul.addr %s794, 4
        %s796 = scalar_lea.vmem %s11, %s795
      $region76: #{_lambda_.22} parent=71 // pred_fallthru
        _
    $region72: #{_lambda_.22} parent=5 // pred_fallthru
      _
  $region6: #{_lambda_.22} parent=0 // loop_footer
    %s21 = sadd.s32 1, %s17
  $region7: #{_lambda_.22} parent=0 // loop_footer_branch
    %16 = sbr.rel target = $region3
  $region8: #{_lambda_.22} parent=0 // loop_exit
    _

// kernel: _lambda_.21
$region0: #{_lambda_.21}
  #allocation0 [shape = 'u32[]', space=smem, size = 0x4, offset = 0x4, fixed_abs, tag = 'smem constant byte address 0x4 - core index']
  #allocation1 [shape = 'u32[72,128]{1,0:T(1,128)}', space=vmem, size = 0x9000, scoped, tag = 'internal scratch']
  %s0 = inlined_call_operand.vmem [shape: bf16[2,4,256], index: 0, kind: input, shape index: {}]
  %s1 = inlined_call_operand.vmem [shape: bf16[4,4], index: 1, kind: input, shape index: {}]
  %s2 = inlined_call_operand.vmem [shape: bf16[9,4,4], index: 2, kind: input, shape index: {}]
  %s3 = inlined_call_operand.vmem [shape: bf16[8,4], index: 3, kind: input, shape index: {}]
  %s4 = inlined_call_operand.vmem [shape: f32[4,2], index: 4, kind: input, shape index: {}]
  %s5 = inlined_call_operand.vmem [shape: f32[4,2], index: 5, kind: input, shape index: {}]
  %s6 = inlined_call_operand.vmem [shape: f32[4,2], index: 6, kind: input, shape index: {}]
  %s7 = inlined_call_operand.vmem [shape: f32[8,1], index: 7, kind: input, shape index: {}]
  %s8 = inlined_call_operand.vmem [shape: f32[9,256], index: 8, kind: input, shape index: {}]
  %s9 = inlined_call_operand.vmem [shape: bf16[8,4], index: 9, kind: input, shape index: {}]
  %s10 = inlined_call_operand.vmem [shape: f32[8,1], index: 10, kind: input, shape index: {}]
  %s11 = inlined_call_operand.vmem [shape: bf16[2,8,256], index: 11, kind: output, shape index: {}]
  %s12 = sld [smem:[#allocation0]]
  $region77: #{_lambda_.21} parent=0
    _
  %s14 = ssub.s32 1, %s12
  %s15 = scalar_select 0, %s14, %s12
  loop: start=0, step=1, limit=4
  $region2: #{_lambda_.21} parent=0 // loop_pre_header
    _
  $region3: #{_lambda_.21} parent=0 // loop_header
    %s17 = sphi 0, %s21
    %p18 = scmp.ge.s32.totalorder %s17, 4
    %s27 = sphi 0, %s29
    %s30 = sphi 0, %s27
    %s31 = sphi 0, %s30
    %s47 = sphi 0, %s31
    %s51 = sphi 0, %s51
    %s53 = sphi 0, %s51
    %s54 = sphi 0, %s53
    %s68 = sphi 0, %s54
    %s72 = sphi 0, %s72
    %s74 = sphi 0, %s72
    %s75 = sphi 0, %s74
    %s89 = sphi 0, %s75
    %s93 = sphi 0, %s93
    %s95 = sphi 0, %s93
    %s96 = sphi 0, %s95
    %s110 = sphi 0, %s96
    %s114 = sphi 0, %s114
    %s116 = sphi 0, %s114
    %s117 = sphi 0, %s116
    %s131 = sphi 0, %s117
    %s135 = sphi 0, %s135
    %s137 = sphi 0, %s135
    %s138 = sphi 0, %s137
    %s152 = sphi 0, %s138
    %s156 = sphi 0, %s156
    %s158 = sphi 0, %s156
    %s159 = sphi 0, %s158
    %s173 = sphi 0, %s159
    %s177 = sphi 0, %s177
    %s179 = sphi 0, %s177
    %s180 = sphi 0, %s179
    %s194 = sphi 0, %s180
    %s198 = sphi 0, %s198
    %s200 = sphi 0, %s198
    %s201 = sphi 0, %s200
    %s215 = sphi 0, %s201
    %s219 = sphi 0, %s219
    %s221 = sphi 0, %s219
    %s222 = sphi 0, %s221
    %s236 = sphi 0, %s222
    %s240 = sphi 0, %s240
    %s242 = sphi 0, %s240
    %s243 = sphi 0, %s242
    %s257 = sphi 0, %s243
    %s263 = sphi 0, %s265
    %s266 = sphi 0, %s263
    %s267 = sphi 0, %s266
    %s283 = sphi 0, %s267
  $region4: #{_lambda_.21} parent=0 // loop_header_branch
    %20 = sbr.rel (%p18) target = $region8
  $region5: #{_lambda_.21} parent=0 // loop_body
    %s22 = ssub.s32 %s17, 1
    %s23 = ssub.s32 %s17, 2
    %s24 = sadd.s32 %s17, 1
    %s25 = ssub.s32 %s17, %s24
    %p26 = scmp.eq.s32.totalorder %s25, 0
    %s28 = sadd.s32 %s27, 1
    %s29 = scalar_select %p26, %s27, %s28
    %p32 = pneg %p26
    %p33 = scmp.eq.s32.totalorder %s17, 1
    %p34 = por %p32, %p33
    %p35 = scmp.ne.s32.totalorder %s27, %s30
    %p36 = scmp.eq.s32.totalorder %s17, 0
    %p37 = por %p35, %p36
    %p38 = scmp.ne.s32.totalorder %s27, %s30
    %p39 = scmp.eq.s32.totalorder %s22, 1
    %p40 = por %p38, %p39
    %p41 = scmp.ne.s32.totalorder %s30, %s31
    %p42 = scmp.eq.s32.totalorder %s22, 0
    %p43 = por %p41, %p42
    %p44 = scmp.ne.s32.totalorder %s30, %s31
    %p45 = scmp.eq.s32.totalorder %s23, 1
    %p46 = por %p44, %p45
    %p48 = scmp.ne.s32.totalorder %s31, %s47
    %p49 = scmp.eq.s32.totalorder %s23, 0
    %p50 = por %p48, %p49
    %s52 = sadd.s32 %s51, 1
    %p55 = scmp.eq.s32.totalorder %s17, 1
    %p56 = scmp.ne.s32.totalorder %s51, %s53
    %p57 = scmp.eq.s32.totalorder %s17, 0
    %p58 = por %p56, %p57
    %p59 = scmp.ne.s32.totalorder %s51, %s53
    %p60 = scmp.eq.s32.totalorder %s22, 1
    %p61 = por %p59, %p60
    %p62 = scmp.ne.s32.totalorder %s53, %s54
    %p63 = scmp.eq.s32.totalorder %s22, 0
    %p64 = por %p62, %p63
    %p65 = scmp.ne.s32.totalorder %s53, %s54
    %p66 = scmp.eq.s32.totalorder %s23, 1
    %p67 = por %p65, %p66
    %p69 = scmp.ne.s32.totalorder %s54, %s68
    %p70 = scmp.eq.s32.totalorder %s23, 0
    %p71 = por %p69, %p70
    %s73 = sadd.s32 %s72, 1
    %p76 = scmp.eq.s32.totalorder %s17, 1
    %p77 = scmp.ne.s32.totalorder %s72, %s74
    %p78 = scmp.eq.s32.totalorder %s17, 0
    %p79 = por %p77, %p78
    %p80 = scmp.ne.s32.totalorder %s72, %s74
    %p81 = scmp.eq.s32.totalorder %s22, 1
    %p82 = por %p80, %p81
    %p83 = scmp.ne.s32.totalorder %s74, %s75
    %p84 = scmp.eq.s32.totalorder %s22, 0
    %p85 = por %p83, %p84
    %p86 = scmp.ne.s32.totalorder %s74, %s75
    %p87 = scmp.eq.s32.totalorder %s23, 1
    %p88 = por %p86, %p87
    %p90 = scmp.ne.s32.totalorder %s75, %s89
    %p91 = scmp.eq.s32.totalorder %s23, 0
    %p92 = por %p90, %p91
    %s94 = sadd.s32 %s93, 1
    %p97 = scmp.eq.s32.totalorder %s17, 1
    %p98 = scmp.ne.s32.totalorder %s93, %s95
    %p99 = scmp.eq.s32.totalorder %s17, 0
    %p100 = por %p98, %p99
    %p101 = scmp.ne.s32.totalorder %s93, %s95
    %p102 = scmp.eq.s32.totalorder %s22, 1
    %p103 = por %p101, %p102
    %p104 = scmp.ne.s32.totalorder %s95, %s96
    %p105 = scmp.eq.s32.totalorder %s22, 0
    %p106 = por %p104, %p105
    %p107 = scmp.ne.s32.totalorder %s95, %s96
    %p108 = scmp.eq.s32.totalorder %s23, 1
    %p109 = por %p107, %p108
    %p111 = scmp.ne.s32.totalorder %s96, %s110
    %p112 = scmp.eq.s32.totalorder %s23, 0
    %p113 = por %p111, %p112
    %s115 = sadd.s32 %s114, 1
    %p118 = scmp.eq.s32.totalorder %s17, 1
    %p119 = scmp.ne.s32.totalorder %s114, %s116
    %p120 = scmp.eq.s32.totalorder %s17, 0
    %p121 = por %p119, %p120
    %p122 = scmp.ne.s32.totalorder %s114, %s116
    %p123 = scmp.eq.s32.totalorder %s22, 1
    %p124 = por %p122, %p123
    %p125 = scmp.ne.s32.totalorder %s116, %s117
    %p126 = scmp.eq.s32.totalorder %s22, 0
    %p127 = por %p125, %p126
    %p128 = scmp.ne.s32.totalorder %s116, %s117
    %p129 = scmp.eq.s32.totalorder %s23, 1
    %p130 = por %p128, %p129
    %p132 = scmp.ne.s32.totalorder %s117, %s131
    %p133 = scmp.eq.s32.totalorder %s23, 0
    %p134 = por %p132, %p133
    %s136 = sadd.s32 %s135, 1
    %p139 = scmp.eq.s32.totalorder %s17, 1
    %p140 = scmp.ne.s32.totalorder %s135, %s137
    %p141 = scmp.eq.s32.totalorder %s17, 0
    %p142 = por %p140, %p141
    %p143 = scmp.ne.s32.totalorder %s135, %s137
    %p144 = scmp.eq.s32.totalorder %s22, 1
    %p145 = por %p143, %p144
    %p146 = scmp.ne.s32.totalorder %s137, %s138
    %p147 = scmp.eq.s32.totalorder %s22, 0
    %p148 = por %p146, %p147
    %p149 = scmp.ne.s32.totalorder %s137, %s138
    %p150 = scmp.eq.s32.totalorder %s23, 1
    %p151 = por %p149, %p150
    %p153 = scmp.ne.s32.totalorder %s138, %s152
    %p154 = scmp.eq.s32.totalorder %s23, 0
    %p155 = por %p153, %p154
    %s157 = sadd.s32 %s156, 1
    %p160 = scmp.eq.s32.totalorder %s17, 1
    %p161 = scmp.ne.s32.totalorder %s156, %s158
    %p162 = scmp.eq.s32.totalorder %s17, 0
    %p163 = por %p161, %p162
    %p164 = scmp.ne.s32.totalorder %s156, %s158
    %p165 = scmp.eq.s32.totalorder %s22, 1
    %p166 = por %p164, %p165
    %p167 = scmp.ne.s32.totalorder %s158, %s159
    %p168 = scmp.eq.s32.totalorder %s22, 0
    %p169 = por %p167, %p168
    %p170 = scmp.ne.s32.totalorder %s158, %s159
    %p171 = scmp.eq.s32.totalorder %s23, 1
    %p172 = por %p170, %p171
    %p174 = scmp.ne.s32.totalorder %s159, %s173
    %p175 = scmp.eq.s32.totalorder %s23, 0
    %p176 = por %p174, %p175
    %s178 = sadd.s32 %s177, 1
    %p181 = scmp.eq.s32.totalorder %s17, 1
    %p182 = scmp.ne.s32.totalorder %s177, %s179
    %p183 = scmp.eq.s32.totalorder %s17, 0
    %p184 = por %p182, %p183
    %p185 = scmp.ne.s32.totalorder %s177, %s179
    %p186 = scmp.eq.s32.totalorder %s22, 1
    %p187 = por %p185, %p186
    %p188 = scmp.ne.s32.totalorder %s179, %s180
    %p189 = scmp.eq.s32.totalorder %s22, 0
    %p190 = por %p188, %p189
    %p191 = scmp.ne.s32.totalorder %s179, %s180
    %p192 = scmp.eq.s32.totalorder %s23, 1
    %p193 = por %p191, %p192
    %p195 = scmp.ne.s32.totalorder %s180, %s194
    %p196 = scmp.eq.s32.totalorder %s23, 0
    %p197 = por %p195, %p196
    %s199 = sadd.s32 %s198, 1
    %p202 = scmp.eq.s32.totalorder %s17, 1
    %p203 = scmp.ne.s32.totalorder %s198, %s200
    %p204 = scmp.eq.s32.totalorder %s17, 0
    %p205 = por %p203, %p204
    %p206 = scmp.ne.s32.totalorder %s198, %s200
    %p207 = scmp.eq.s32.totalorder %s22, 1
    %p208 = por %p206, %p207
    %p209 = scmp.ne.s32.totalorder %s200, %s201
    %p210 = scmp.eq.s32.totalorder %s22, 0
    %p211 = por %p209, %p210
    %p212 = scmp.ne.s32.totalorder %s200, %s201
    %p213 = scmp.eq.s32.totalorder %s23, 1
    %p214 = por %p212, %p213
    %p216 = scmp.ne.s32.totalorder %s201, %s215
    %p217 = scmp.eq.s32.totalorder %s23, 0
    %p218 = por %p216, %p217
    %s220 = sadd.s32 %s219, 1
    %p223 = scmp.eq.s32.totalorder %s17, 1
    %p224 = scmp.ne.s32.totalorder %s219, %s221
    %p225 = scmp.eq.s32.totalorder %s17, 0
    %p226 = por %p224, %p225
    %p227 = scmp.ne.s32.totalorder %s219, %s221
    %p228 = scmp.eq.s32.totalorder %s22, 1
    %p229 = por %p227, %p228
    %p230 = scmp.ne.s32.totalorder %s221, %s222
    %p231 = scmp.eq.s32.totalorder %s22, 0
    %p232 = por %p230, %p231
    %p233 = scmp.ne.s32.totalorder %s221, %s222
    %p234 = scmp.eq.s32.totalorder %s23, 1
    %p235 = por %p233, %p234
    %p237 = scmp.ne.s32.totalorder %s222, %s236
    %p238 = scmp.eq.s32.totalorder %s23, 0
    %p239 = por %p237, %p238
    %s241 = sadd.s32 %s240, 1
    %p244 = scmp.eq.s32.totalorder %s17, 1
    %p245 = scmp.ne.s32.totalorder %s240, %s242
    %p246 = scmp.eq.s32.totalorder %s17, 0
    %p247 = por %p245, %p246
    %p248 = scmp.ne.s32.totalorder %s240, %s242
    %p249 = scmp.eq.s32.totalorder %s22, 1
    %p250 = por %p248, %p249
    %p251 = scmp.ne.s32.totalorder %s242, %s243
    %p252 = scmp.eq.s32.totalorder %s22, 0
    %p253 = por %p251, %p252
    %p254 = scmp.ne.s32.totalorder %s242, %s243
    %p255 = scmp.eq.s32.totalorder %s23, 1
    %p256 = por %p254, %p255
    %p258 = scmp.ne.s32.totalorder %s243, %s257
    %p259 = scmp.eq.s32.totalorder %s23, 0
    %p260 = por %p258, %p259
    %s261 = ssub.s32 %s17, %s24
    %p262 = scmp.eq.s32.totalorder %s261, 0
    %s264 = sadd.s32 %s263, 1
    %s265 = scalar_select %p262, %s263, %s264
    %p268 = pneg %p262
    %p269 = scmp.eq.s32.totalorder %s17, 1
    %p270 = por %p268, %p269
    %p271 = scmp.ne.s32.totalorder %s263, %s266
    %p272 = scmp.eq.s32.totalorder %s17, 0
    %p273 = por %p271, %p272
    %p274 = scmp.ne.s32.totalorder %s263, %s266
    %p275 = scmp.eq.s32.totalorder %s22, 1
    %p276 = por %p274, %p275
    %p277 = scmp.ne.s32.totalorder %s266, %s267
    %p278 = scmp.eq.s32.totalorder %s22, 0
    %p279 = por %p277, %p278
    %p280 = scmp.ne.s32.totalorder %s266, %s267
    %p281 = scmp.eq.s32.totalorder %s23, 1
    %p282 = por %p280, %p281
    %p284 = scmp.ne.s32.totalorder %s267, %s283
    %p285 = scmp.eq.s32.totalorder %s23, 0
    %p286 = por %p284, %p285
    %p287 = scmp.le.s32.totalorder 1, %s17
    %p288 = scmp.lt.s32.totalorder %s17, 3
    %p289 = pnand %p287, %p288
    %p290 = pneg %p289
    // Predicated region
    $region9: #{_lambda_.21} parent=5 // pred_check
      _
    $region10: #{_lambda_.21} parent=5 // pred_check_branch
      %292 = sbr.rel (%p289) target = $region12
    $region11: #{_lambda_.21} parent=5 // pred_region
      %s293 = ssub.s32 %s17, 1
      // Predicated region
      $region13: #{_lambda_.21} parent=11 // pred_check
        %p294 = pneg %p64
      $region14: #{_lambda_.21} parent=11 // pred_check_branch
        %296 = sbr.rel (%p294) target = $region16
      $region15: #{_lambda_.21} parent=11 // pred_region
        _
      $region16: #{_lambda_.21} parent=11 // pred_fallthru
        _
      // Predicated region
      $region17: #{_lambda_.21} parent=11 // pred_check
        %p297 = pneg %p85
      $region18: #{_lambda_.21} parent=11 // pred_check_branch
        %299 = sbr.rel (%p297) target = $region20
      $region19: #{_lambda_.21} parent=11 // pred_region
        _
      $region20: #{_lambda_.21} parent=11 // pred_fallthru
        _
      // Predicated region
      $region21: #{_lambda_.21} parent=11 // pred_check
        %p300 = pneg %p106
      $region22: #{_lambda_.21} parent=11 // pred_check_branch
        %302 = sbr.rel (%p300) target = $region24
      $region23: #{_lambda_.21} parent=11 // pred_region
        _
      $region24: #{_lambda_.21} parent=11 // pred_fallthru
        _
      // Predicated region
      $region25: #{_lambda_.21} parent=11 // pred_check
        %p303 = pneg %p127
      $region26: #{_lambda_.21} parent=11 // pred_check_branch
        %305 = sbr.rel (%p303) target = $region28
      $region27: #{_lambda_.21} parent=11 // pred_region
        _
      $region28: #{_lambda_.21} parent=11 // pred_fallthru
        _
      // Predicated region
      $region29: #{_lambda_.21} parent=11 // pred_check
        %p306 = pneg %p148
      $region30: #{_lambda_.21} parent=11 // pred_check_branch
        %308 = sbr.rel (%p306) target = $region32
      $region31: #{_lambda_.21} parent=11 // pred_region
        _
      $region32: #{_lambda_.21} parent=11 // pred_fallthru
        _
      // Predicated region
      $region33: #{_lambda_.21} parent=11 // pred_check
        %p309 = pneg %p169
      $region34: #{_lambda_.21} parent=11 // pred_check_branch
        %311 = sbr.rel (%p309) target = $region36
      $region35: #{_lambda_.21} parent=11 // pred_region
        _
      $region36: #{_lambda_.21} parent=11 // pred_fallthru
        _
      // Predicated region
      $region37: #{_lambda_.21} parent=11 // pred_check
        %p312 = pneg %p190
      $region38: #{_lambda_.21} parent=11 // pred_check_branch
        %314 = sbr.rel (%p312) target = $region40
      $region39: #{_lambda_.21} parent=11 // pred_region
        _
      $region40: #{_lambda_.21} parent=11 // pred_fallthru
        _
      // Predicated region
      $region41: #{_lambda_.21} parent=11 // pred_check
        %p315 = pneg %p211
      $region42: #{_lambda_.21} parent=11 // pred_check_branch
        %317 = sbr.rel (%p315) target = $region44
      $region43: #{_lambda_.21} parent=11 // pred_region
        _
      $region44: #{_lambda_.21} parent=11 // pred_fallthru
        _
      // Predicated region
      $region45: #{_lambda_.21} parent=11 // pred_check
        %p318 = pneg %p232
      $region46: #{_lambda_.21} parent=11 // pred_check_branch
        %320 = sbr.rel (%p318) target = $region48
      $region47: #{_lambda_.21} parent=11 // pred_region
        _
      $region48: #{_lambda_.21} parent=11 // pred_fallthru
        _
      // Predicated region
      $region49: #{_lambda_.21} parent=11 // pred_check
        %p321 = pneg %p253
      $region50: #{_lambda_.21} parent=11 // pred_check_branch
        %323 = sbr.rel (%p321) target = $region52
      $region51: #{_lambda_.21} parent=11 // pred_region
        _
      $region52: #{_lambda_.21} parent=11 // pred_fallthru
        _
    $region12: #{_lambda_.21} parent=5 // pred_fallthru
      _
    %p324 = scmp.lt.s32.totalorder %s17, 2
    // Predicated region
    $region53: #{_lambda_.21} parent=5 // pred_check
      %p325 = pneg %p324
    $region54: #{_lambda_.21} parent=5 // pred_check_branch
      %327 = sbr.rel (%p325) target = $region56
    $region55: #{_lambda_.21} parent=5 // pred_region
      // Predicated region
      $region57: #{_lambda_.21} parent=55 // pred_check
        %p328 = pneg %p37
      $region58: #{_lambda_.21} parent=55 // pred_check_branch
        %330 = sbr.rel (%p328) target = $region60
      $region59: #{_lambda_.21} parent=55 // pred_region
        %p331 = scmp.lt.s32.totalorder %s17, 1
        %s332 = scalar_select %p331, %s17, 1
        %s333 = smul.addr %s332, 2
        %s334 = smul.addr %s333, 2
        %s335 = scalar_lea.vmem %s0, %s334
      $region60: #{_lambda_.21} parent=55 // pred_fallthru
        _
    $region56: #{_lambda_.21} parent=5 // pred_fallthru
      _
    %p336 = scmp.le.s32.totalorder 1, %s17
    %p337 = scmp.lt.s32.totalorder %s17, 3
    %p338 = pnand %p336, %p337
    %p339 = pneg %p338
    // Predicated region
    $region61: #{_lambda_.21} parent=5 // pred_check
      _
    $region62: #{_lambda_.21} parent=5 // pred_check_branch
      %341 = sbr.rel (%p338) target = $region64
    $region63: #{_lambda_.21} parent=5 // pred_region
      %s342 = ssub.s32 %s17, 1
      %p343 = scmp.lt.s32.totalorder %s22, 1
      %s344 = scalar_select %p343, %s22, 1
      %s345 = smul.addr %s344, 2
      %s346 = smul.addr %s345, 2
      %s347 = scalar_lea.vmem %s0, %s346
      %p348 = pneg %p43
      %p349 = pneg %p40
      %p350 = pneg %p64
      %p351 = pneg %p61
      %p352 = pneg %p85
      %p353 = pneg %p82
      %p354 = pneg %p106
      %p355 = pneg %p103
      %p356 = pneg %p127
      %p357 = pneg %p124
      %p358 = pneg %p148
      %p359 = pneg %p145
      %p360 = pneg %p169
      %p361 = pneg %p166
      %p362 = pneg %p190
      %p363 = pneg %p187
      %p364 = pneg %p211
      %p365 = pneg %p208
      %p366 = pneg %p232
      %p367 = pneg %p229
      %p368 = pneg %p253
      %p369 = pneg %p250
      %p370 = pneg %p279
      %p371 = pneg %p276
      %p372 = scmp.lt.s32.totalorder %s22, 1
      %s373 = scalar_select %p372, %s22, 1
      %s374 = smul.addr %s373, 2
      %s375 = smul.addr %s374, 4
      %s376 = scalar_lea.vmem %s11, %s375
      %p377 = scmp.lt.s32.totalorder %s22, 1
      %s378 = scalar_select %p377, %s22, 1
      %s379 = smul.addr %s378, 2
      %s380 = smul.addr %s379, 2
      %s381 = scalar_lea.vmem %s0, %s380
      %p382 = scmp.lt.s32.totalorder %s22, 1
      %s383 = scalar_select %p382, %s22, 1
      %s384 = smul.addr %s383, 2
      %s385 = smul.addr %s384, 4
      %s386 = scalar_lea.vmem %s11, %s385
      %v388 = vld [vmem:[%s381] sm:$0xf]
      %v389 = vld [vmem:[%s4] sm:$0xf]
      %v390 = vunpack.c.l.bf16 %v388
      %392 = vset.pattern.permute.xlu0 0
      %393 = vperm.xlu0 %392, %v389
      %v394 = vpop.permute.xlu0 %393
      %v396 = vunpack.c.l.s4 839922192
      %v397 = vunpack.c.0.s8 %v396
      %v398 = vperm.slane %v394, %v397
      %v400 = vmul.f32 %v390, %v398
      %401 = vset.pattern.permute.xlu0 1
      %402 = vperm.xlu0 %401, %v389
      %v403 = vpop.permute.xlu0 %402
      %v405 = vunpack.c.l.s4 839922192
      %v406 = vunpack.c.0.s8 %v405
      %v407 = vperm.slane %v403, %v406
      %v409 = vadd.f32 %v400, %v407
      %v410 = vmax.f32 %v409, 0.0
      %412 = vst [vmem:[#allocation1] ss:$2 sm:$0xff] %v410
      %v413 = vld.sshfl [vmem:[#allocation1] sm:$0xff pattern:$0x75316420]
      %v414 = vld.sshfl [vmem:[#allocation1 + $0x8] sm:$0xff pattern:$0x75316420]
      %v417 = vpack.c.bf16 %v413, %v413
      %v418 = vpack.c.bf16 %v414, %v414
      %v419 = vld [vmem:[%s1] sm:$0x3]
      %vm420 = vcmask 31744
      %v422 = vsel %vm420, %v419, 0
      %vm424 = vcmask 1041408
      %v426 = vsel %vm424, %v417, 0
      %v429 = vsel %vm424, %v418, 0
      %431 = vmatpush.bf16.msra.mxu0 0
      %432 = vmatpush.bf16.msra.mxu0 0
      %433 = vmatpush.bf16.msra.mxu0 0
      %434 = vmatpush.bf16.msra.mxu0 0
      %435 = vmatpush.bf16.msra.mxu0 0
      %436 = vmatpush.bf16.msra.mxu0 0
      %437 = vmatpush.bf16.msra.mxu0 0
      %438 = vmatpush.bf16.msra.mxu0 %v426
      %439 = vmatmul.bf16.gmra.mxu0 %v422
      %v440 = vpop.f32.mrf.mxu0
      %v441 = vadd.f32 0.0, %v440
      %v442 = vpop.f32.mrf.mxu0
      %443 = vdwg.mxu0
      %444 = vmatpush.bf16.msra.mxu0 0
      %445 = vmatpush.bf16.msra.mxu0 0
      %446 = vmatpush.bf16.msra.mxu0 0
      %447 = vmatpush.bf16.msra.mxu0 0
      %448 = vmatpush.bf16.msra.mxu0 0
      %449 = vmatpush.bf16.msra.mxu0 0
      %450 = vmatpush.bf16.msra.mxu0 0
      %451 = vmatpush.bf16.msra.mxu0 %v429
      %452 = vmatmul.bf16.gmra.mxu0 %v422
      %v453 = vpop.f32.mrf.mxu0
      %v454 = vadd.f32 0.0, %v453
      %v455 = vpop.f32.mrf.mxu0
      %456 = vdwg.mxu0
      %v457 = vld [vmem:[%s5] sm:$0xf]
      %459 = vset.pattern.permute.xlu0 0
      %460 = vperm.xlu0 %459, %v457
      %v461 = vpop.permute.xlu0 %460
      %v463 = vmul.f32 %v441, %v461
      %v464 = vmul.f32 %v454, %v461
      %465 = vset.pattern.permute.xlu0 1
      %466 = vperm.xlu0 %465, %v457
      %v467 = vpop.permute.xlu0 %466
      %v469 = vadd.f32 %v463, %v467
      %v470 = vadd.f32 %v464, %v467
      %v471 = vmax.f32 %v469, 0.0
      %v472 = vmax.f32 %v470, 0.0
      %v473 = vld [vmem:[%s8] sm:$0xff]
      %v474 = vld [vmem:[%s8 + $0x8] sm:$0xff]
      %v475 = vld [vmem:[%s8 + $0x10] sm:$0x1]
      %v476 = vld [vmem:[%s8 + $0x18] sm:$0x1]
      %477 = vrot.lane.b32.xlu0 %v471, 17
      %v478 = vpop.permute.xlu0 %477
      %479 = vrot.lane.b32.xlu0 %v472, 17
      %v480 = vpop.permute.xlu0 %479
      %v481 = vlaneseq
      %v482 = vand.u32 %v481, 127
      %vm483 = vcmp.lt.s32.totalorder %v482, 17
      %v484 = vsel %vm483, %v478, %v480
      %v485 = vsel %vm483, %v480, %v478
      %v486 = vld [vmem:[%s2] sm:$0x3]
      %v487 = vpack.c.bf16 %v485, %v485
      %v488 = vpack.c.bf16 %v484, %v484
      %v490 = vsel %vm420, %v486, 0
      %v493 = vsel %vm424, %v487, 0
      %v496 = vsel %vm424, %v488, 0
      %498 = vmatpush.bf16.msra.mxu0 0
      %499 = vmatpush.bf16.msra.mxu0 0
      %500 = vmatpush.bf16.msra.mxu0 0
      %501 = vmatpush.bf16.msra.mxu0 0
      %502 = vmatpush.bf16.msra.mxu0 0
      %503 = vmatpush.bf16.msra.mxu0 0
      %504 = vmatpush.bf16.msra.mxu0 0
      %505 = vmatpush.bf16.msra.mxu0 %v493
      %506 = vmatmul.bf16.gmra.mxu0 %v490
      %v507 = vpop.f32.mrf.mxu0
      %v508 = vadd.f32 0.0, %v507
      %v509 = vpop.f32.mrf.mxu0
      %510 = vdwg.mxu0
      %511 = vmatpush.bf16.msra.mxu0 0
      %512 = vmatpush.bf16.msra.mxu0 0
      %513 = vmatpush.bf16.msra.mxu0 0
      %514 = vmatpush.bf16.msra.mxu0 0
      %515 = vmatpush.bf16.msra.mxu0 0
      %516 = vmatpush.bf16.msra.mxu0 0
      %517 = vmatpush.bf16.msra.mxu0 0
      %518 = vmatpush.bf16.msra.mxu0 %v496
      %519 = vmatmul.bf16.gmra.mxu0 %v490
      %v520 = vpop.f32.mrf.mxu0
      %v521 = vadd.f32 0.0, %v520
      %v522 = vpop.f32.mrf.mxu0
      %523 = vdwg.mxu0
      %v524 = vperm.slane %v473, 0
      %v525 = vperm.slane %v474, 0
      %v526 = vmul.f32 %v508, %v524
      %v527 = vmul.f32 %v521, %v525
      %v528 = vadd.f32 %v526, 0.0
      %v529 = vadd.f32 %v527, 0.0
      %530 = vrot.lane.b32.xlu0 %v471, 16
      %v531 = vpop.permute.xlu0 %530
      %532 = vrot.lane.b32.xlu0 %v472, 16
      %v533 = vpop.permute.xlu0 %532
      %vm534 = vcmp.lt.s32.totalorder %v482, 16
      %v535 = vsel %vm534, %v531, %v533
      %v536 = vsel %vm534, %v533, %v531
      %s537 = scalar_lea.vmem %s2, 2
      %v538 = vld [vmem:[%s537] sm:$0x3]
      %v539 = vpack.c.bf16 %v536, %v536
      %v540 = vpack.c.bf16 %v535, %v535
      %v542 = vsel %vm420, %v538, 0
      %v545 = vsel %vm424, %v539, 0
      %v548 = vsel %vm424, %v540, 0
      %550 = vmatpush.bf16.msra.mxu0 0
      %551 = vmatpush.bf16.msra.mxu0 0
      %552 = vmatpush.bf16.msra.mxu0 0
      %553 = vmatpush.bf16.msra.mxu0 0
      %554 = vmatpush.bf16.msra.mxu0 0
      %555 = vmatpush.bf16.msra.mxu0 0
      %556 = vmatpush.bf16.msra.mxu0 0
      %557 = vmatpush.bf16.msra.mxu0 %v545
      %558 = vmatmul.bf16.gmra.mxu0 %v542
      %v559 = vpop.f32.mrf.mxu0
      %v560 = vadd.f32 0.0, %v559
      %v561 = vpop.f32.mrf.mxu0
      %562 = vdwg.mxu0
      %563 = vmatpush.bf16.msra.mxu0 0
      %564 = vmatpush.bf16.msra.mxu0 0
      %565 = vmatpush.bf16.msra.mxu0 0
      %566 = vmatpush.bf16.msra.mxu0 0
      %567 = vmatpush.bf16.msra.mxu0 0
      %568 = vmatpush.bf16.msra.mxu0 0
      %569 = vmatpush.bf16.msra.mxu0 0
      %570 = vmatpush.bf16.msra.mxu0 %v548
      %571 = vmatmul.bf16.gmra.mxu0 %v542
      %v572 = vpop.f32.mrf.mxu0
      %v573 = vadd.f32 0.0, %v572
      %v574 = vpop.f32.mrf.mxu0
      %575 = vdwg.mxu0
      %v576 = vperm.slane %v473, 1
      %v577 = vperm.slane %v474, 1
      %v578 = vmul.f32 %v560, %v576
      %v579 = vmul.f32 %v573, %v577
      %v580 = vadd.f32 %v528, %v578
      %v581 = vadd.f32 %v529, %v579
      %582 = vrot.lane.b32.xlu0 %v471, 15
      %v583 = vpop.permute.xlu0 %582
      %584 = vrot.lane.b32.xlu0 %v472, 15
      %v585 = vpop.permute.xlu0 %584
      %vm586 = vcmp.lt.s32.totalorder %v482, 15
      %v587 = vsel %vm586, %v583, %v585
      %v588 = vsel %vm586, %v585, %v583
      %s589 = scalar_lea.vmem %s2, 4
      %v590 = vld [vmem:[%s589] sm:$0x3]
      %v591 = vpack.c.bf16 %v588, %v588
      %v592 = vpack.c.bf16 %v587, %v587
      %v594 = vsel %vm420, %v590, 0
      %v597 = vsel %vm424, %v591, 0
      %v600 = vsel %vm424, %v592, 0
      %602 = vmatpush.bf16.msra.mxu0 0
      %603 = vmatpush.bf16.msra.mxu0 0
      %604 = vmatpush.bf16.msra.mxu0 0
      %605 = vmatpush.bf16.msra.mxu0 0
      %606 = vmatpush.bf16.msra.mxu0 0
      %607 = vmatpush.bf16.msra.mxu0 0
      %608 = vmatpush.bf16.msra.mxu0 0
      %609 = vmatpush.bf16.msra.mxu0 %v597
      %610 = vmatmul.bf16.gmra.mxu0 %v594
      %v611 = vpop.f32.mrf.mxu0
      %v612 = vadd.f32 0.0, %v611
      %v613 = vpop.f32.mrf.mxu0
      %614 = vdwg.mxu0
      %615 = vmatpush.bf16.msra.mxu0 0
      %616 = vmatpush.bf16.msra.mxu0 0
      %617 = vmatpush.bf16.msra.mxu0 0
      %618 = vmatpush.bf16.msra.mxu0 0
      %619 = vmatpush.bf16.msra.mxu0 0
      %620 = vmatpush.bf16.msra.mxu0 0
      %621 = vmatpush.bf16.msra.mxu0 0
      %622 = vmatpush.bf16.msra.mxu0 %v600
      %623 = vmatmul.bf16.gmra.mxu0 %v594
      %v624 = vpop.f32.mrf.mxu0
      %v625 = vadd.f32 0.0, %v624
      %v626 = vpop.f32.mrf.mxu0
      %627 = vdwg.mxu0
      %v628 = vperm.slane %v473, 2
      %v629 = vperm.slane %v474, 2
      %v630 = vmul.f32 %v612, %v628
      %v631 = vmul.f32 %v625, %v629
      %v632 = vadd.f32 %v580, %v630
      %v633 = vadd.f32 %v581, %v631
      %634 = vrot.lane.b32.xlu0 %v471, 1
      %v635 = vpop.permute.xlu0 %634
      %636 = vrot.lane.b32.xlu0 %v472, 1
      %v637 = vpop.permute.xlu0 %636
      %vm638 = vcmp.lt.s32.totalorder %v482, 1
      %v639 = vsel %vm638, %v635, %v637
      %v640 = vsel %vm638, %v637, %v635
      %s641 = scalar_lea.vmem %s2, 6
      %v642 = vld [vmem:[%s641] sm:$0x3]
      %v643 = vpack.c.bf16 %v640, %v640
      %v644 = vpack.c.bf16 %v639, %v639
      %v646 = vsel %vm420, %v642, 0
      %v649 = vsel %vm424, %v643, 0
      %v652 = vsel %vm424, %v644, 0
      %654 = vmatpush.bf16.msra.mxu0 0
      %655 = vmatpush.bf16.msra.mxu0 0
      %656 = vmatpush.bf16.msra.mxu0 0
      %657 = vmatpush.bf16.msra.mxu0 0
      %658 = vmatpush.bf16.msra.mxu0 0
      %659 = vmatpush.bf16.msra.mxu0 0
      %660 = vmatpush.bf16.msra.mxu0 0
      %661 = vmatpush.bf16.msra.mxu0 %v649
      %662 = vmatmul.bf16.gmra.mxu0 %v646
      %v663 = vpop.f32.mrf.mxu0
      %v664 = vadd.f32 0.0, %v663
      %v665 = vpop.f32.mrf.mxu0
      %666 = vdwg.mxu0
      %667 = vmatpush.bf16.msra.mxu0 0
      %668 = vmatpush.bf16.msra.mxu0 0
      %669 = vmatpush.bf16.msra.mxu0 0
      %670 = vmatpush.bf16.msra.mxu0 0
      %671 = vmatpush.bf16.msra.mxu0 0
      %672 = vmatpush.bf16.msra.mxu0 0
      %673 = vmatpush.bf16.msra.mxu0 0
      %674 = vmatpush.bf16.msra.mxu0 %v652
      %675 = vmatmul.bf16.gmra.mxu0 %v646
      %v676 = vpop.f32.mrf.mxu0
      %v677 = vadd.f32 0.0, %v676
      %v678 = vpop.f32.mrf.mxu0
      %679 = vdwg.mxu0
      %v680 = vperm.slane %v473, 3
      %v681 = vperm.slane %v474, 3
      %v682 = vmul.f32 %v664, %v680
      %v683 = vmul.f32 %v677, %v681
      %v684 = vadd.f32 %v632, %v682
      %v685 = vadd.f32 %v633, %v683
      %s686 = scalar_lea.vmem %s2, 8
      %v687 = vld [vmem:[%s686] sm:$0x3]
      %v688 = vpack.c.bf16 %v471, %v471
      %v689 = vpack.c.bf16 %v472, %v472
      %v691 = vsel %vm420, %v687, 0
      %v694 = vsel %vm424, %v688, 0
      %v697 = vsel %vm424, %v689, 0
      %699 = vmatpush.bf16.msra.mxu0 0
      %700 = vmatpush.bf16.msra.mxu0 0
      %701 = vmatpush.bf16.msra.mxu0 0
      %702 = vmatpush.bf16.msra.mxu0 0
      %703 = vmatpush.bf16.msra.mxu0 0
      %704 = vmatpush.bf16.msra.mxu0 0
      %705 = vmatpush.bf16.msra.mxu0 0
      %706 = vmatpush.bf16.msra.mxu0 %v694
      %707 = vmatmul.bf16.gmra.mxu0 %v691
      %v708 = vpop.f32.mrf.mxu0
      %v709 = vadd.f32 0.0, %v708
      %v710 = vpop.f32.mrf.mxu0
      %711 = vdwg.mxu0
      %712 = vmatpush.bf16.msra.mxu0 0
      %713 = vmatpush.bf16.msra.mxu0 0
      %714 = vmatpush.bf16.msra.mxu0 0
      %715 = vmatpush.bf16.msra.mxu0 0
      %716 = vmatpush.bf16.msra.mxu0 0
      %717 = vmatpush.bf16.msra.mxu0 0
      %718 = vmatpush.bf16.msra.mxu0 0
      %719 = vmatpush.bf16.msra.mxu0 %v697
      %720 = vmatmul.bf16.gmra.mxu0 %v691
      %v721 = vpop.f32.mrf.mxu0
      %v722 = vadd.f32 0.0, %v721
      %v723 = vpop.f32.mrf.mxu0
      %724 = vdwg.mxu0
      %v725 = vperm.slane %v473, 4
      %v726 = vperm.slane %v474, 4
      %v727 = vmul.f32 %v709, %v725
      %v728 = vmul.f32 %v722, %v726
      %v729 = vadd.f32 %v684, %v727
      %v730 = vadd.f32 %v685, %v728
      %731 = vrot.lane.b32.xlu0 %v471, 127
      %v732 = vpop.permute.xlu0 %731
      %733 = vrot.lane.b32.xlu0 %v472, 127
      %v734 = vpop.permute.xlu0 %733
      %vm735 = vcmp.lt.s32.totalorder %v482, 127
      %v736 = vsel %vm735, %v732, %v734
      %v737 = vsel %vm735, %v734, %v732
      %s738 = scalar_lea.vmem %s2, 10
      %v739 = vld [vmem:[%s738] sm:$0x3]
      %v740 = vpack.c.bf16 %v736, %v736
      %v741 = vpack.c.bf16 %v737, %v737
      %v743 = vsel %vm420, %v739, 0
      %v746 = vsel %vm424, %v740, 0
      %v749 = vsel %vm424, %v741, 0
      %751 = vmatpush.bf16.msra.mxu0 0
      %752 = vmatpush.bf16.msra.mxu0 0
      %753 = vmatpush.bf16.msra.mxu0 0
      %754 = vmatpush.bf16.msra.mxu0 0
      %755 = vmatpush.bf16.msra.mxu0 0
      %756 = vmatpush.bf16.msra.mxu0 0
      %757 = vmatpush.bf16.msra.mxu0 0
      %758 = vmatpush.bf16.msra.mxu0 %v746
      %759 = vmatmul.bf16.gmra.mxu0 %v743
      %v760 = vpop.f32.mrf.mxu0
      %v761 = vadd.f32 0.0, %v760
      %v762 = vpop.f32.mrf.mxu0
      %763 = vdwg.mxu0
      %764 = vmatpush.bf16.msra.mxu0 0
      %765 = vmatpush.bf16.msra.mxu0 0
      %766 = vmatpush.bf16.msra.mxu0 0
      %767 = vmatpush.bf16.msra.mxu0 0
      %768 = vmatpush.bf16.msra.mxu0 0
      %769 = vmatpush.bf16.msra.mxu0 0
      %770 = vmatpush.bf16.msra.mxu0 0
      %771 = vmatpush.bf16.msra.mxu0 %v749
      %772 = vmatmul.bf16.gmra.mxu0 %v743
      %v773 = vpop.f32.mrf.mxu0
      %v774 = vadd.f32 0.0, %v773
      %v775 = vpop.f32.mrf.mxu0
      %776 = vdwg.mxu0
      %v777 = vperm.slane %v473, 5
      %v778 = vperm.slane %v474, 5
      %v779 = vmul.f32 %v761, %v777
      %v780 = vmul.f32 %v774, %v778
      %v781 = vadd.f32 %v729, %v779
      %v782 = vadd.f32 %v730, %v780
      %783 = vrot.lane.b32.xlu0 %v471, 113
      %v784 = vpop.permute.xlu0 %783
      %785 = vrot.lane.b32.xlu0 %v472, 113
      %v786 = vpop.permute.xlu0 %785
      %vm787 = vcmp.lt.s32.totalorder %v482, 113
      %v788 = vsel %vm787, %v784, %v786
      %v789 = vsel %vm787, %v786, %v784
      %s790 = scalar_lea.vmem %s2, 12
      %v791 = vld [vmem:[%s790] sm:$0x3]
      %v792 = vpack.c.bf16 %v788, %v788
      %v793 = vpack.c.bf16 %v789, %v789
      %v795 = vsel %vm420, %v791, 0
      %v798 = vsel %vm424, %v792, 0
      %v801 = vsel %vm424, %v793, 0
      %803 = vmatpush.bf16.msra.mxu0 0
      %804 = vmatpush.bf16.msra.mxu0 0
      %805 = vmatpush.bf16.msra.mxu0 0
      %806 = vmatpush.bf16.msra.mxu0 0
      %807 = vmatpush.bf16.msra.mxu0 0
      %808 = vmatpush.bf16.msra.mxu0 0
      %809 = vmatpush.bf16.msra.mxu0 0
      %810 = vmatpush.bf16.msra.mxu0 %v798
      %811 = vmatmul.bf16.gmra.mxu0 %v795
      %v812 = vpop.f32.mrf.mxu0
      %v813 = vadd.f32 0.0, %v812
      %v814 = vpop.f32.mrf.mxu0
      %815 = vdwg.mxu0
      %816 = vmatpush.bf16.msra.mxu0 0
      %817 = vmatpush.bf16.msra.mxu0 0
      %818 = vmatpush.bf16.msra.mxu0 0
      %819 = vmatpush.bf16.msra.mxu0 0
      %820 = vmatpush.bf16.msra.mxu0 0
      %821 = vmatpush.bf16.msra.mxu0 0
      %822 = vmatpush.bf16.msra.mxu0 0
      %823 = vmatpush.bf16.msra.mxu0 %v801
      %824 = vmatmul.bf16.gmra.mxu0 %v795
      %v825 = vpop.f32.mrf.mxu0
      %v826 = vadd.f32 0.0, %v825
      %v827 = vpop.f32.mrf.mxu0
      %828 = vdwg.mxu0
      %v829 = vperm.slane %v473, 6
      %v830 = vperm.slane %v474, 6
      %v831 = vmul.f32 %v813, %v829
      %v832 = vmul.f32 %v826, %v830
      %v833 = vadd.f32 %v781, %v831
      %v834 = vadd.f32 %v782, %v832
      %835 = vrot.lane.b32.xlu0 %v471, 112
      %v836 = vpop.permute.xlu0 %835
      %837 = vrot.lane.b32.xlu0 %v472, 112
      %v838 = vpop.permute.xlu0 %837
      %vm839 = vcmp.lt.s32.totalorder %v482, 112
      %v840 = vsel %vm839, %v836, %v838
      %v841 = vsel %vm839, %v838, %v836
      %s842 = scalar_lea.vmem %s2, 14
      %v843 = vld [vmem:[%s842] sm:$0x3]
      %v844 = vpack.c.bf16 %v840, %v840
      %v845 = vpack.c.bf16 %v841, %v841
      %v847 = vsel %vm420, %v843, 0
      %v850 = vsel %vm424, %v844, 0
      %v853 = vsel %vm424, %v845, 0
      %855 = vmatpush.bf16.msra.mxu0 0
      %856 = vmatpush.bf16.msra.mxu0 0
      %857 = vmatpush.bf16.msra.mxu0 0
      %858 = vmatpush.bf16.msra.mxu0 0
      %859 = vmatpush.bf16.msra.mxu0 0
      %860 = vmatpush.bf16.msra.mxu0 0
      %861 = vmatpush.bf16.msra.mxu0 0
      %862 = vmatpush.bf16.msra.mxu0 %v850
      %863 = vmatmul.bf16.gmra.mxu0 %v847
      %v864 = vpop.f32.mrf.mxu0
      %v865 = vadd.f32 0.0, %v864
      %v866 = vpop.f32.mrf.mxu0
      %867 = vdwg.mxu0
      %868 = vmatpush.bf16.msra.mxu0 0
      %869 = vmatpush.bf16.msra.mxu0 0
      %870 = vmatpush.bf16.msra.mxu0 0
      %871 = vmatpush.bf16.msra.mxu0 0
      %872 = vmatpush.bf16.msra.mxu0 0
      %873 = vmatpush.bf16.msra.mxu0 0
      %874 = vmatpush.bf16.msra.mxu0 0
      %875 = vmatpush.bf16.msra.mxu0 %v853
      %876 = vmatmul.bf16.gmra.mxu0 %v847
      %v877 = vpop.f32.mrf.mxu0
      %v878 = vadd.f32 0.0, %v877
      %v879 = vpop.f32.mrf.mxu0
      %880 = vdwg.mxu0
      %v881 = vperm.slane %v473, 7
      %v882 = vperm.slane %v474, 7
      %v883 = vmul.f32 %v865, %v881
      %v884 = vmul.f32 %v878, %v882
      %v885 = vadd.f32 %v833, %v883
      %v886 = vadd.f32 %v834, %v884
      %887 = vrot.lane.b32.xlu0 %v471, 111
      %v888 = vpop.permute.xlu0 %887
      %889 = vrot.lane.b32.xlu0 %v472, 111
      %v890 = vpop.permute.xlu0 %889
      %vm891 = vcmp.lt.s32.totalorder %v482, 111
      %v892 = vsel %vm891, %v888, %v890
      %v893 = vsel %vm891, %v890, %v888
      %s894 = scalar_lea.vmem %s2, 16
      %v895 = vld [vmem:[%s894] sm:$0x3]
      %v896 = vpack.c.bf16 %v892, %v892
      %v897 = vpack.c.bf16 %v893, %v893
      %v899 = vsel %vm420, %v895, 0
      %v902 = vsel %vm424, %v896, 0
      %v905 = vsel %vm424, %v897, 0
      %907 = vmatpush.bf16.msra.mxu0 0
      %908 = vmatpush.bf16.msra.mxu0 0
      %909 = vmatpush.bf16.msra.mxu0 0
      %910 = vmatpush.bf16.msra.mxu0 0
      %911 = vmatpush.bf16.msra.mxu0 0
      %912 = vmatpush.bf16.msra.mxu0 0
      %913 = vmatpush.bf16.msra.mxu0 0
      %914 = vmatpush.bf16.msra.mxu0 %v902
      %915 = vmatmul.bf16.gmra.mxu0 %v899
      %v916 = vpop.f32.mrf.mxu0
      %v917 = vadd.f32 0.0, %v916
      %v918 = vpop.f32.mrf.mxu0
      %919 = vdwg.mxu0
      %920 = vmatpush.bf16.msra.mxu0 0
      %921 = vmatpush.bf16.msra.mxu0 0
      %922 = vmatpush.bf16.msra.mxu0 0
      %923 = vmatpush.bf16.msra.mxu0 0
      %924 = vmatpush.bf16.msra.mxu0 0
      %925 = vmatpush.bf16.msra.mxu0 0
      %926 = vmatpush.bf16.msra.mxu0 0
      %927 = vmatpush.bf16.msra.mxu0 %v905
      %928 = vmatmul.bf16.gmra.mxu0 %v899
      %v929 = vpop.f32.mrf.mxu0
      %v930 = vadd.f32 0.0, %v929
      %v931 = vpop.f32.mrf.mxu0
      %932 = vdwg.mxu0
      %v933 = vperm.slane %v475, 0
      %v934 = vperm.slane %v476, 0
      %v935 = vmul.f32 %v917, %v933
      %v936 = vmul.f32 %v930, %v934
      %v937 = vadd.f32 %v885, %v935
      %v938 = vadd.f32 %v886, %v936
      %v939 = vld [vmem:[%s6] sm:$0xf]
      %941 = vset.pattern.permute.xlu0 0
      %942 = vperm.xlu0 %941, %v939
      %v943 = vpop.permute.xlu0 %942
      %v945 = vmul.f32 %v937, %v943
      %v946 = vmul.f32 %v938, %v943
      %947 = vset.pattern.permute.xlu0 1
      %948 = vperm.xlu0 %947, %v939
      %v949 = vpop.permute.xlu0 %948
      %v951 = vadd.f32 %v945, %v949
      %v952 = vadd.f32 %v946, %v949
      %v953 = vmax.f32 %v951, 0.0
      %v954 = vmax.f32 %v952, 0.0
      %v955 = vpack.c.bf16 %v953, %v953
      %v956 = vpack.c.bf16 %v954, %v954
      %v957 = vld [vmem:[%s3] sm:$0xf]
      %v958 = vld [vmem:[%s7] sm:$0xff]
      %960 = vset.pattern.permute.xlu0 0
      %961 = vperm.xlu0 %960, %v958
      %v962 = vpop.permute.xlu0 %961
      %v965 = vsel %vm420, %v957, 0
      %v968 = vsel %vm424, %v955, 0
      %v971 = vsel %vm424, %v956, 0
      %973 = vmatpush.bf16.msra.mxu0 0
      %974 = vmatpush.bf16.msra.mxu0 0
      %975 = vmatpush.bf16.msra.mxu0 0
      %976 = vmatpush.bf16.msra.mxu0 0
      %977 = vmatpush.bf16.msra.mxu0 0
      %978 = vmatpush.bf16.msra.mxu0 0
      %979 = vmatpush.bf16.msra.mxu0 0
      %980 = vmatpush.bf16.msra.mxu0 %v968
      %981 = vmatmul.bf16.gmra.mxu0 %v965
      %v982 = vpop.f32.mrf.mxu0
      %v983 = vadd.f32 %v962, %v982
      %v984 = vpop.f32.mrf.mxu0
      %985 = vdwg.mxu0
      %986 = vmatpush.bf16.msra.mxu0 0
      %987 = vmatpush.bf16.msra.mxu0 0
      %988 = vmatpush.bf16.msra.mxu0 0
      %989 = vmatpush.bf16.msra.mxu0 0
      %990 = vmatpush.bf16.msra.mxu0 0
      %991 = vmatpush.bf16.msra.mxu0 0
      %992 = vmatpush.bf16.msra.mxu0 0
      %993 = vmatpush.bf16.msra.mxu0 %v971
      %994 = vmatmul.bf16.gmra.mxu0 %v965
      %v995 = vpop.f32.mrf.mxu0
      %v996 = vadd.f32 %v962, %v995
      %v997 = vpop.f32.mrf.mxu0
      %998 = vdwg.mxu0
      %v999 = vld [vmem:[%s9] sm:$0xf]
      %v1000 = vld [vmem:[%s10] sm:$0xff]
      %1002 = vset.pattern.permute.xlu0 0
      %1003 = vperm.xlu0 %1002, %v1000
      %v1004 = vpop.permute.xlu0 %1003
      %1007 = vst [vmem:[#allocation1] ss:$4 sm:$0xff] %v388
      %v1008 = vld.sshfl [vmem:[#allocation1] sm:$0xff pattern:$0x73625140]
      %v1009 = vld.sshfl [vmem:[#allocation1 + $0x8] sm:$0xff pattern:$0x73625140]
      %v1011 = vsel %vm420, %v999, 0
      %v1013 = vsel %vm424, %v1008, 0
      %v1015 = vsel %vm424, %v1009, 0
      %1017 = vmatpush.bf16.msra.mxu0 0
      %1018 = vmatpush.bf16.msra.mxu0 0
      %1019 = vmatpush.bf16.msra.mxu0 0
      %1020 = vmatpush.bf16.msra.mxu0 0
      %1021 = vmatpush.bf16.msra.mxu0 0
      %1022 = vmatpush.bf16.msra.mxu0 0
      %1023 = vmatpush.bf16.msra.mxu0 0
      %1024 = vmatpush.bf16.msra.mxu0 %v1013
      %1025 = vmatmul.bf16.gmra.mxu0 %v1011
      %v1026 = vpop.f32.mrf.mxu0
      %v1027 = vadd.f32 %v1004, %v1026
      %v1028 = vpop.f32.mrf.mxu0
      %1029 = vdwg.mxu0
      %1030 = vmatpush.bf16.msra.mxu0 0
      %1031 = vmatpush.bf16.msra.mxu0 0
      %1032 = vmatpush.bf16.msra.mxu0 0
      %1033 = vmatpush.bf16.msra.mxu0 0
      %1034 = vmatpush.bf16.msra.mxu0 0
      %1035 = vmatpush.bf16.msra.mxu0 0
      %1036 = vmatpush.bf16.msra.mxu0 0
      %1037 = vmatpush.bf16.msra.mxu0 %v1015
      %1038 = vmatmul.bf16.gmra.mxu0 %v1011
      %v1039 = vpop.f32.mrf.mxu0
      %v1040 = vadd.f32 %v1004, %v1039
      %v1041 = vpop.f32.mrf.mxu0
      %1042 = vdwg.mxu0
      %v1043 = vadd.f32 %v983, %v1027
      %v1044 = vadd.f32 %v996, %v1040
      %v1045 = vpack.c.bf16 %v1044, %v1043
      %1046 = vst [vmem:[%s386] sm:$0xff] %v1045
      %p1047 = scmp.lt.s32.totalorder %s22, 1
      %s1048 = scalar_select %p1047, %s22, 1
      %s1049 = smul.addr %s1048, 2
      %s1050 = smul.addr %s1049, 4
      %s1051 = scalar_lea.vmem %s11, %s1050
      // Predicated region
      $region65: #{_lambda_.21} parent=63 // pred_check
        %p1052 = pneg %p276
      $region66: #{_lambda_.21} parent=63 // pred_check_branch
        %1054 = sbr.rel (%p1052) target = $region68
      $region67: #{_lambda_.21} parent=63 // pred_region
        _
      $region68: #{_lambda_.21} parent=63 // pred_fallthru
        _
    $region64: #{_lambda_.21} parent=5 // pred_fallthru
      _
    %p1055 = scmp.le.s32.totalorder 2, %s17
    // Predicated region
    $region69: #{_lambda_.21} parent=5 // pred_check
      %p1056 = pneg %p1055
    $region70: #{_lambda_.21} parent=5 // pred_check_branch
      %1058 = sbr.rel (%p1056) target = $region72
    $region71: #{_lambda_.21} parent=5 // pred_region
      %s1059 = ssub.s32 %s17, 2
      // Predicated region
      $region73: #{_lambda_.21} parent=71 // pred_check
        %p1060 = pneg %p282
      $region74: #{_lambda_.21} parent=71 // pred_check_branch
        %1062 = sbr.rel (%p1060) target = $region76
      $region75: #{_lambda_.21} parent=71 // pred_region
        %p1063 = scmp.lt.s32.totalorder %s23, 1
        %s1064 = scalar_select %p1063, %s23, 1
        %s1065 = smul.addr %s1064, 2
        %s1066 = smul.addr %s1065, 4
        %s1067 = scalar_lea.vmem %s11, %s1066
      $region76: #{_lambda_.21} parent=71 // pred_fallthru
        _
    $region72: #{_lambda_.21} parent=5 // pred_fallthru
      _
  $region6: #{_lambda_.21} parent=0 // loop_footer
    %s21 = sadd.s32 1, %s17
  $region7: #{_lambda_.21} parent=0 // loop_footer_branch
    %16 = sbr.rel target = $region3
  $region8: #{_lambda_.21} parent=0 // loop_exit
    _

// kernel: _lambda_.23
$region0: #{_lambda_.23}
  #allocation0 [shape = 'u32[]', space=smem, size = 0x4, offset = 0x4, fixed_abs, tag = 'smem constant byte address 0x4 - core index']
  #allocation1 [shape = 'u32[72,128]{1,0:T(1,128)}', space=vmem, size = 0x9000, scoped, tag = 'internal scratch']
  %s0 = inlined_call_operand.vmem [shape: bf16[2,16,128], index: 0, kind: input, shape index: {}]
  %s1 = inlined_call_operand.vmem [shape: bf16[8,16], index: 1, kind: input, shape index: {}]
  %s2 = inlined_call_operand.vmem [shape: bf16[9,8,8], index: 2, kind: input, shape index: {}]
  %s3 = inlined_call_operand.vmem [shape: bf16[16,8], index: 3, kind: input, shape index: {}]
  %s4 = inlined_call_operand.vmem [shape: f32[16,2], index: 4, kind: input, shape index: {}]
  %s5 = inlined_call_operand.vmem [shape: f32[8,2], index: 5, kind: input, shape index: {}]
  %s6 = inlined_call_operand.vmem [shape: f32[8,2], index: 6, kind: input, shape index: {}]
  %s7 = inlined_call_operand.vmem [shape: f32[16,1], index: 7, kind: input, shape index: {}]
  %s8 = inlined_call_operand.vmem [shape: f32[9,128], index: 8, kind: input, shape index: {}]
  %s9 = inlined_call_operand.vmem [shape: bf16[2,16,128], index: 9, kind: output, shape index: {}]
  %s10 = sld [smem:[#allocation0]]
  $region69: #{_lambda_.23} parent=0
    _
  %s12 = ssub.s32 1, %s10
  %s13 = scalar_select 0, %s12, %s10
  loop: start=0, step=1, limit=4
  $region2: #{_lambda_.23} parent=0 // loop_pre_header
    _
  $region3: #{_lambda_.23} parent=0 // loop_header
    %s15 = sphi 0, %s19
    %p16 = scmp.ge.s32.totalorder %s15, 4
    %s25 = sphi 0, %s27
    %s28 = sphi 0, %s25
    %s29 = sphi 0, %s28
    %s45 = sphi 0, %s29
    %s49 = sphi 0, %s49
    %s51 = sphi 0, %s49
    %s52 = sphi 0, %s51
    %s66 = sphi 0, %s52
    %s70 = sphi 0, %s70
    %s72 = sphi 0, %s70
    %s73 = sphi 0, %s72
    %s87 = sphi 0, %s73
    %s91 = sphi 0, %s91
    %s93 = sphi 0, %s91
    %s94 = sphi 0, %s93
    %s108 = sphi 0, %s94
    %s112 = sphi 0, %s112
    %s114 = sphi 0, %s112
    %s115 = sphi 0, %s114
    %s129 = sphi 0, %s115
    %s133 = sphi 0, %s133
    %s135 = sphi 0, %s133
    %s136 = sphi 0, %s135
    %s150 = sphi 0, %s136
    %s154 = sphi 0, %s154
    %s156 = sphi 0, %s154
    %s157 = sphi 0, %s156
    %s171 = sphi 0, %s157
    %s175 = sphi 0, %s175
    %s177 = sphi 0, %s175
    %s178 = sphi 0, %s177
    %s192 = sphi 0, %s178
    %s196 = sphi 0, %s196
    %s198 = sphi 0, %s196
    %s199 = sphi 0, %s198
    %s213 = sphi 0, %s199
    %s219 = sphi 0, %s221
    %s222 = sphi 0, %s219
    %s223 = sphi 0, %s222
    %s239 = sphi 0, %s223
  $region4: #{_lambda_.23} parent=0 // loop_header_branch
    %18 = sbr.rel (%p16) target = $region8
  $region5: #{_lambda_.23} parent=0 // loop_body
    %s20 = ssub.s32 %s15, 1
    %s21 = ssub.s32 %s15, 2
    %s22 = sadd.s32 %s15, 1
    %s23 = ssub.s32 %s15, %s22
    %p24 = scmp.eq.s32.totalorder %s23, 0
    %s26 = sadd.s32 %s25, 1
    %s27 = scalar_select %p24, %s25, %s26
    %p30 = pneg %p24
    %p31 = scmp.eq.s32.totalorder %s15, 1
    %p32 = por %p30, %p31
    %p33 = scmp.ne.s32.totalorder %s25, %s28
    %p34 = scmp.eq.s32.totalorder %s15, 0
    %p35 = por %p33, %p34
    %p36 = scmp.ne.s32.totalorder %s25, %s28
    %p37 = scmp.eq.s32.totalorder %s20, 1
    %p38 = por %p36, %p37
    %p39 = scmp.ne.s32.totalorder %s28, %s29
    %p40 = scmp.eq.s32.totalorder %s20, 0
    %p41 = por %p39, %p40
    %p42 = scmp.ne.s32.totalorder %s28, %s29
    %p43 = scmp.eq.s32.totalorder %s21, 1
    %p44 = por %p42, %p43
    %p46 = scmp.ne.s32.totalorder %s29, %s45
    %p47 = scmp.eq.s32.totalorder %s21, 0
    %p48 = por %p46, %p47
    %s50 = sadd.s32 %s49, 1
    %p53 = scmp.eq.s32.totalorder %s15, 1
    %p54 = scmp.ne.s32.totalorder %s49, %s51
    %p55 = scmp.eq.s32.totalorder %s15, 0
    %p56 = por %p54, %p55
    %p57 = scmp.ne.s32.totalorder %s49, %s51
    %p58 = scmp.eq.s32.totalorder %s20, 1
    %p59 = por %p57, %p58
    %p60 = scmp.ne.s32.totalorder %s51, %s52
    %p61 = scmp.eq.s32.totalorder %s20, 0
    %p62 = por %p60, %p61
    %p63 = scmp.ne.s32.totalorder %s51, %s52
    %p64 = scmp.eq.s32.totalorder %s21, 1
    %p65 = por %p63, %p64
    %p67 = scmp.ne.s32.totalorder %s52, %s66
    %p68 = scmp.eq.s32.totalorder %s21, 0
    %p69 = por %p67, %p68
    %s71 = sadd.s32 %s70, 1
    %p74 = scmp.eq.s32.totalorder %s15, 1
    %p75 = scmp.ne.s32.totalorder %s70, %s72
    %p76 = scmp.eq.s32.totalorder %s15, 0
    %p77 = por %p75, %p76
    %p78 = scmp.ne.s32.totalorder %s70, %s72
    %p79 = scmp.eq.s32.totalorder %s20, 1
    %p80 = por %p78, %p79
    %p81 = scmp.ne.s32.totalorder %s72, %s73
    %p82 = scmp.eq.s32.totalorder %s20, 0
    %p83 = por %p81, %p82
    %p84 = scmp.ne.s32.totalorder %s72, %s73
    %p85 = scmp.eq.s32.totalorder %s21, 1
    %p86 = por %p84, %p85
    %p88 = scmp.ne.s32.totalorder %s73, %s87
    %p89 = scmp.eq.s32.totalorder %s21, 0
    %p90 = por %p88, %p89
    %s92 = sadd.s32 %s91, 1
    %p95 = scmp.eq.s32.totalorder %s15, 1
    %p96 = scmp.ne.s32.totalorder %s91, %s93
    %p97 = scmp.eq.s32.totalorder %s15, 0
    %p98 = por %p96, %p97
    %p99 = scmp.ne.s32.totalorder %s91, %s93
    %p100 = scmp.eq.s32.totalorder %s20, 1
    %p101 = por %p99, %p100
    %p102 = scmp.ne.s32.totalorder %s93, %s94
    %p103 = scmp.eq.s32.totalorder %s20, 0
    %p104 = por %p102, %p103
    %p105 = scmp.ne.s32.totalorder %s93, %s94
    %p106 = scmp.eq.s32.totalorder %s21, 1
    %p107 = por %p105, %p106
    %p109 = scmp.ne.s32.totalorder %s94, %s108
    %p110 = scmp.eq.s32.totalorder %s21, 0
    %p111 = por %p109, %p110
    %s113 = sadd.s32 %s112, 1
    %p116 = scmp.eq.s32.totalorder %s15, 1
    %p117 = scmp.ne.s32.totalorder %s112, %s114
    %p118 = scmp.eq.s32.totalorder %s15, 0
    %p119 = por %p117, %p118
    %p120 = scmp.ne.s32.totalorder %s112, %s114
    %p121 = scmp.eq.s32.totalorder %s20, 1
    %p122 = por %p120, %p121
    %p123 = scmp.ne.s32.totalorder %s114, %s115
    %p124 = scmp.eq.s32.totalorder %s20, 0
    %p125 = por %p123, %p124
    %p126 = scmp.ne.s32.totalorder %s114, %s115
    %p127 = scmp.eq.s32.totalorder %s21, 1
    %p128 = por %p126, %p127
    %p130 = scmp.ne.s32.totalorder %s115, %s129
    %p131 = scmp.eq.s32.totalorder %s21, 0
    %p132 = por %p130, %p131
    %s134 = sadd.s32 %s133, 1
    %p137 = scmp.eq.s32.totalorder %s15, 1
    %p138 = scmp.ne.s32.totalorder %s133, %s135
    %p139 = scmp.eq.s32.totalorder %s15, 0
    %p140 = por %p138, %p139
    %p141 = scmp.ne.s32.totalorder %s133, %s135
    %p142 = scmp.eq.s32.totalorder %s20, 1
    %p143 = por %p141, %p142
    %p144 = scmp.ne.s32.totalorder %s135, %s136
    %p145 = scmp.eq.s32.totalorder %s20, 0
    %p146 = por %p144, %p145
    %p147 = scmp.ne.s32.totalorder %s135, %s136
    %p148 = scmp.eq.s32.totalorder %s21, 1
    %p149 = por %p147, %p148
    %p151 = scmp.ne.s32.totalorder %s136, %s150
    %p152 = scmp.eq.s32.totalorder %s21, 0
    %p153 = por %p151, %p152
    %s155 = sadd.s32 %s154, 1
    %p158 = scmp.eq.s32.totalorder %s15, 1
    %p159 = scmp.ne.s32.totalorder %s154, %s156
    %p160 = scmp.eq.s32.totalorder %s15, 0
    %p161 = por %p159, %p160
    %p162 = scmp.ne.s32.totalorder %s154, %s156
    %p163 = scmp.eq.s32.totalorder %s20, 1
    %p164 = por %p162, %p163
    %p165 = scmp.ne.s32.totalorder %s156, %s157
    %p166 = scmp.eq.s32.totalorder %s20, 0
    %p167 = por %p165, %p166
    %p168 = scmp.ne.s32.totalorder %s156, %s157
    %p169 = scmp.eq.s32.totalorder %s21, 1
    %p170 = por %p168, %p169
    %p172 = scmp.ne.s32.totalorder %s157, %s171
    %p173 = scmp.eq.s32.totalorder %s21, 0
    %p174 = por %p172, %p173
    %s176 = sadd.s32 %s175, 1
    %p179 = scmp.eq.s32.totalorder %s15, 1
    %p180 = scmp.ne.s32.totalorder %s175, %s177
    %p181 = scmp.eq.s32.totalorder %s15, 0
    %p182 = por %p180, %p181
    %p183 = scmp.ne.s32.totalorder %s175, %s177
    %p184 = scmp.eq.s32.totalorder %s20, 1
    %p185 = por %p183, %p184
    %p186 = scmp.ne.s32.totalorder %s177, %s178
    %p187 = scmp.eq.s32.totalorder %s20, 0
    %p188 = por %p186, %p187
    %p189 = scmp.ne.s32.totalorder %s177, %s178
    %p190 = scmp.eq.s32.totalorder %s21, 1
    %p191 = por %p189, %p190
    %p193 = scmp.ne.s32.totalorder %s178, %s192
    %p194 = scmp.eq.s32.totalorder %s21, 0
    %p195 = por %p193, %p194
    %s197 = sadd.s32 %s196, 1
    %p200 = scmp.eq.s32.totalorder %s15, 1
    %p201 = scmp.ne.s32.totalorder %s196, %s198
    %p202 = scmp.eq.s32.totalorder %s15, 0
    %p203 = por %p201, %p202
    %p204 = scmp.ne.s32.totalorder %s196, %s198
    %p205 = scmp.eq.s32.totalorder %s20, 1
    %p206 = por %p204, %p205
    %p207 = scmp.ne.s32.totalorder %s198, %s199
    %p208 = scmp.eq.s32.totalorder %s20, 0
    %p209 = por %p207, %p208
    %p210 = scmp.ne.s32.totalorder %s198, %s199
    %p211 = scmp.eq.s32.totalorder %s21, 1
    %p212 = por %p210, %p211
    %p214 = scmp.ne.s32.totalorder %s199, %s213
    %p215 = scmp.eq.s32.totalorder %s21, 0
    %p216 = por %p214, %p215
    %s217 = ssub.s32 %s15, %s22
    %p218 = scmp.eq.s32.totalorder %s217, 0
    %s220 = sadd.s32 %s219, 1
    %s221 = scalar_select %p218, %s219, %s220
    %p224 = pneg %p218
    %p225 = scmp.eq.s32.totalorder %s15, 1
    %p226 = por %p224, %p225
    %p227 = scmp.ne.s32.totalorder %s219, %s222
    %p228 = scmp.eq.s32.totalorder %s15, 0
    %p229 = por %p227, %p228
    %p230 = scmp.ne.s32.totalorder %s219, %s222
    %p231 = scmp.eq.s32.totalorder %s20, 1
    %p232 = por %p230, %p231
    %p233 = scmp.ne.s32.totalorder %s222, %s223
    %p234 = scmp.eq.s32.totalorder %s20, 0
    %p235 = por %p233, %p234
    %p236 = scmp.ne.s32.totalorder %s222, %s223
    %p237 = scmp.eq.s32.totalorder %s21, 1
    %p238 = por %p236, %p237
    %p240 = scmp.ne.s32.totalorder %s223, %s239
    %p241 = scmp.eq.s32.totalorder %s21, 0
    %p242 = por %p240, %p241
    %p243 = scmp.le.s32.totalorder 1, %s15
    %p244 = scmp.lt.s32.totalorder %s15, 3
    %p245 = pnand %p243, %p244
    %p246 = pneg %p245
    // Predicated region
    $region9: #{_lambda_.23} parent=5 // pred_check
      _
    $region10: #{_lambda_.23} parent=5 // pred_check_branch
      %248 = sbr.rel (%p245) target = $region12
    $region11: #{_lambda_.23} parent=5 // pred_region
      %s249 = ssub.s32 %s15, 1
      // Predicated region
      $region13: #{_lambda_.23} parent=11 // pred_check
        %p250 = pneg %p62
      $region14: #{_lambda_.23} parent=11 // pred_check_branch
        %252 = sbr.rel (%p250) target = $region16
      $region15: #{_lambda_.23} parent=11 // pred_region
        _
      $region16: #{_lambda_.23} parent=11 // pred_fallthru
        _
      // Predicated region
      $region17: #{_lambda_.23} parent=11 // pred_check
        %p253 = pneg %p83
      $region18: #{_lambda_.23} parent=11 // pred_check_branch
        %255 = sbr.rel (%p253) target = $region20
      $region19: #{_lambda_.23} parent=11 // pred_region
        _
      $region20: #{_lambda_.23} parent=11 // pred_fallthru
        _
      // Predicated region
      $region21: #{_lambda_.23} parent=11 // pred_check
        %p256 = pneg %p104
      $region22: #{_lambda_.23} parent=11 // pred_check_branch
        %258 = sbr.rel (%p256) target = $region24
      $region23: #{_lambda_.23} parent=11 // pred_region
        _
      $region24: #{_lambda_.23} parent=11 // pred_fallthru
        _
      // Predicated region
      $region25: #{_lambda_.23} parent=11 // pred_check
        %p259 = pneg %p125
      $region26: #{_lambda_.23} parent=11 // pred_check_branch
        %261 = sbr.rel (%p259) target = $region28
      $region27: #{_lambda_.23} parent=11 // pred_region
        _
      $region28: #{_lambda_.23} parent=11 // pred_fallthru
        _
      // Predicated region
      $region29: #{_lambda_.23} parent=11 // pred_check
        %p262 = pneg %p146
      $region30: #{_lambda_.23} parent=11 // pred_check_branch
        %264 = sbr.rel (%p262) target = $region32
      $region31: #{_lambda_.23} parent=11 // pred_region
        _
      $region32: #{_lambda_.23} parent=11 // pred_fallthru
        _
      // Predicated region
      $region33: #{_lambda_.23} parent=11 // pred_check
        %p265 = pneg %p167
      $region34: #{_lambda_.23} parent=11 // pred_check_branch
        %267 = sbr.rel (%p265) target = $region36
      $region35: #{_lambda_.23} parent=11 // pred_region
        _
      $region36: #{_lambda_.23} parent=11 // pred_fallthru
        _
      // Predicated region
      $region37: #{_lambda_.23} parent=11 // pred_check
        %p268 = pneg %p188
      $region38: #{_lambda_.23} parent=11 // pred_check_branch
        %270 = sbr.rel (%p268) target = $region40
      $region39: #{_lambda_.23} parent=11 // pred_region
        _
      $region40: #{_lambda_.23} parent=11 // pred_fallthru
        _
      // Predicated region
      $region41: #{_lambda_.23} parent=11 // pred_check
        %p271 = pneg %p209
      $region42: #{_lambda_.23} parent=11 // pred_check_branch
        %273 = sbr.rel (%p271) target = $region44
      $region43: #{_lambda_.23} parent=11 // pred_region
        _
      $region44: #{_lambda_.23} parent=11 // pred_fallthru
        _
    $region12: #{_lambda_.23} parent=5 // pred_fallthru
      _
    %p274 = scmp.lt.s32.totalorder %s15, 2
    // Predicated region
    $region45: #{_lambda_.23} parent=5 // pred_check
      %p275 = pneg %p274
    $region46: #{_lambda_.23} parent=5 // pred_check_branch
      %277 = sbr.rel (%p275) target = $region48
    $region47: #{_lambda_.23} parent=5 // pred_region
      // Predicated region
      $region49: #{_lambda_.23} parent=47 // pred_check
        %p278 = pneg %p35
      $region50: #{_lambda_.23} parent=47 // pred_check_branch
        %280 = sbr.rel (%p278) target = $region52
      $region51: #{_lambda_.23} parent=47 // pred_region
        %p281 = scmp.lt.s32.totalorder %s15, 1
        %s282 = scalar_select %p281, %s15, 1
        %s283 = smul.addr %s282, 2
        %s284 = smul.addr %s283, 4
        %s285 = scalar_lea.vmem %s0, %s284
      $region52: #{_lambda_.23} parent=47 // pred_fallthru
        _
    $region48: #{_lambda_.23} parent=5 // pred_fallthru
      _
    %p286 = scmp.le.s32.totalorder 1, %s15
    %p287 = scmp.lt.s32.totalorder %s15, 3
    %p288 = pnand %p286, %p287
    %p289 = pneg %p288
    // Predicated region
    $region53: #{_lambda_.23} parent=5 // pred_check
      _
    $region54: #{_lambda_.23} parent=5 // pred_check_branch
      %291 = sbr.rel (%p288) target = $region56
    $region55: #{_lambda_.23} parent=5 // pred_region
      %s292 = ssub.s32 %s15, 1
      %p293 = scmp.lt.s32.totalorder %s20, 1
      %s294 = scalar_select %p293, %s20, 1
      %s295 = smul.addr %s294, 2
      %s296 = smul.addr %s295, 4
      %s297 = scalar_lea.vmem %s0, %s296
      %p298 = pneg %p41
      %p299 = pneg %p38
      %p300 = pneg %p62
      %p301 = pneg %p59
      %p302 = pneg %p83
      %p303 = pneg %p80
      %p304 = pneg %p104
      %p305 = pneg %p101
      %p306 = pneg %p125
      %p307 = pneg %p122
      %p308 = pneg %p146
      %p309 = pneg %p143
      %p310 = pneg %p167
      %p311 = pneg %p164
      %p312 = pneg %p188
      %p313 = pneg %p185
      %p314 = pneg %p209
      %p315 = pneg %p206
      %p316 = pneg %p235
      %p317 = pneg %p232
      %p318 = scmp.lt.s32.totalorder %s20, 1
      %s319 = scalar_select %p318, %s20, 1
      %s320 = smul.addr %s319, 2
      %s321 = smul.addr %s320, 4
      %s322 = scalar_lea.vmem %s9, %s321
      %p323 = scmp.lt.s32.totalorder %s20, 1
      %s324 = scalar_select %p323, %s20, 1
      %s325 = smul.addr %s324, 2
      %s326 = smul.addr %s325, 4
      %s327 = scalar_lea.vmem %s0, %s326
      %p328 = scmp.lt.s32.totalorder %s20, 1
      %s329 = scalar_select %p328, %s20, 1
      %s330 = smul.addr %s329, 2
      %s331 = smul.addr %s330, 4
      %s332 = scalar_lea.vmem %s9, %s331
      %v334 = vld [vmem:[%s327] sm:$0xf]
      %v335 = vld [vmem:[%s327 + $0x4] sm:$0xf]
      %v336 = vld [vmem:[%s4] sm:$0xff]
      %v337 = vld [vmem:[%s4 + $0x8] sm:$0xff]
      %v338 = vunpack.c.l.bf16 %v334
      %v339 = vunpack.c.l.bf16 %v335
      %341 = vset.pattern.permute.xlu0 0
      %342 = vperm.xlu0 %341, %v336
      %v343 = vpop.permute.xlu0 %342
      %346 = vset.pattern.permute.xlu0 0
      %347 = vperm.xlu0 %346, %v337
      %v348 = vpop.permute.xlu0 %347
      %v350 = vmul.f32 %v338, %v343
      %v351 = vmul.f32 %v339, %v348
      %352 = vset.pattern.permute.xlu0 1
      %353 = vperm.xlu0 %352, %v336
      %v354 = vpop.permute.xlu0 %353
      %356 = vset.pattern.permute.xlu0 1
      %357 = vperm.xlu0 %356, %v337
      %v358 = vpop.permute.xlu0 %357
      %v360 = vadd.f32 %v350, %v354
      %v361 = vadd.f32 %v351, %v358
      %v362 = vmax.f32 %v360, 0.0
      %v363 = vmax.f32 %v361, 0.0
      %v364 = vpack.c.bf16 %v363, %v362
      %v365 = vld [vmem:[%s1] sm:$0xf]
      %vm366 = vcmask 130048
      %v368 = vsel %vm366, %v365, 0
      %370 = vmatpush.bf16.msra.mxu0 0
      %371 = vmatpush.bf16.msra.mxu0 0
      %372 = vmatpush.bf16.msra.mxu0 0
      %373 = vmatpush.bf16.msra.mxu0 0
      %374 = vmatpush.bf16.msra.mxu0 0
      %375 = vmatpush.bf16.msra.mxu0 0
      %376 = vmatpush.bf16.msra.mxu0 0
      %377 = vmatpush.bf16.msra.mxu0 %v364
      %378 = vmatmul.bf16.gmra.mxu0 %v368
      %v379 = vpop.f32.mrf.mxu0
      %v380 = vadd.f32 0.0, %v379
      %v381 = vpop.f32.mrf.mxu0
      %382 = vdwg.mxu0
      %v383 = vld [vmem:[%s5] sm:$0xff]
      %385 = vset.pattern.permute.xlu0 0
      %386 = vperm.xlu0 %385, %v383
      %v387 = vpop.permute.xlu0 %386
      %v389 = vmul.f32 %v380, %v387
      %390 = vset.pattern.permute.xlu0 1
      %391 = vperm.xlu0 %390, %v383
      %v392 = vpop.permute.xlu0 %391
      %v394 = vadd.f32 %v389, %v392
      %v395 = vmax.f32 %v394, 0.0
      %v396 = vld [vmem:[%s8] sm:$0xff]
      %v397 = vld [vmem:[%s8 + $0x8] sm:$0x1]
      %398 = vrot.lane.b32.xlu0 %v395, 9
      %v399 = vpop.permute.xlu0 %398
      %v400 = vld [vmem:[%s2] sm:$0xf]
      %v401 = vpack.c.bf16 %v399, %v399
      %vm402 = vcmask 64512
      %v404 = vsel %vm402, %v400, 0
      %vm406 = vcmask 1043456
      %v408 = vsel %vm406, %v401, 0
      %410 = vmatpush.bf16.msra.mxu0 0
      %411 = vmatpush.bf16.msra.mxu0 0
      %412 = vmatpush.bf16.msra.mxu0 0
      %413 = vmatpush.bf16.msra.mxu0 0
      %414 = vmatpush.bf16.msra.mxu0 0
      %415 = vmatpush.bf16.msra.mxu0 0
      %416 = vmatpush.bf16.msra.mxu0 0
      %417 = vmatpush.bf16.msra.mxu0 %v408
      %418 = vmatmul.bf16.gmra.mxu0 %v404
      %v419 = vpop.f32.mrf.mxu0
      %v420 = vadd.f32 0.0, %v419
      %v421 = vpop.f32.mrf.mxu0
      %422 = vdwg.mxu0
      %v423 = vperm.slane %v396, 0
      %v424 = vmul.f32 %v420, %v423
      %v425 = vadd.f32 %v424, 0.0
      %426 = vrot.lane.b32.xlu0 %v395, 8
      %v427 = vpop.permute.xlu0 %426
      %s428 = scalar_lea.vmem %s2, 4
      %v429 = vld [vmem:[%s428] sm:$0xf]
      %v430 = vpack.c.bf16 %v427, %v427
      %v432 = vsel %vm402, %v429, 0
      %v435 = vsel %vm406, %v430, 0
      %437 = vmatpush.bf16.msra.mxu0 0
      %438 = vmatpush.bf16.msra.mxu0 0
      %439 = vmatpush.bf16.msra.mxu0 0
      %440 = vmatpush.bf16.msra.mxu0 0
      %441 = vmatpush.bf16.msra.mxu0 0
      %442 = vmatpush.bf16.msra.mxu0 0
      %443 = vmatpush.bf16.msra.mxu0 0
      %444 = vmatpush.bf16.msra.mxu0 %v435
      %445 = vmatmul.bf16.gmra.mxu0 %v432
      %v446 = vpop.f32.mrf.mxu0
      %v447 = vadd.f32 0.0, %v446
      %v448 = vpop.f32.mrf.mxu0
      %449 = vdwg.mxu0
      %v450 = vperm.slane %v396, 1
      %v451 = vmul.f32 %v447, %v450
      %v452 = vadd.f32 %v425, %v451
      %453 = vrot.lane.b32.xlu0 %v395, 7
      %v454 = vpop.permute.xlu0 %453
      %s455 = scalar_lea.vmem %s2, 8
      %v456 = vld [vmem:[%s455] sm:$0xf]
      %v457 = vpack.c.bf16 %v454, %v454
      %v459 = vsel %vm402, %v456, 0
      %v462 = vsel %vm406, %v457, 0
      %464 = vmatpush.bf16.msra.mxu0 0
      %465 = vmatpush.bf16.msra.mxu0 0
      %466 = vmatpush.bf16.msra.mxu0 0
      %467 = vmatpush.bf16.msra.mxu0 0
      %468 = vmatpush.bf16.msra.mxu0 0
      %469 = vmatpush.bf16.msra.mxu0 0
      %470 = vmatpush.bf16.msra.mxu0 0
      %471 = vmatpush.bf16.msra.mxu0 %v462
      %472 = vmatmul.bf16.gmra.mxu0 %v459
      %v473 = vpop.f32.mrf.mxu0
      %v474 = vadd.f32 0.0, %v473
      %v475 = vpop.f32.mrf.mxu0
      %476 = vdwg.mxu0
      %v477 = vperm.slane %v396, 2
      %v478 = vmul.f32 %v474, %v477
      %v479 = vadd.f32 %v452, %v478
      %480 = vrot.lane.b32.xlu0 %v395, 1
      %v481 = vpop.permute.xlu0 %480
      %s482 = scalar_lea.vmem %s2, 12
      %v483 = vld [vmem:[%s482] sm:$0xf]
      %v484 = vpack.c.bf16 %v481, %v481
      %v486 = vsel %vm402, %v483, 0
      %v489 = vsel %vm406, %v484, 0
      %491 = vmatpush.bf16.msra.mxu0 0
      %492 = vmatpush.bf16.msra.mxu0 0
      %493 = vmatpush.bf16.msra.mxu0 0
      %494 = vmatpush.bf16.msra.mxu0 0
      %495 = vmatpush.bf16.msra.mxu0 0
      %496 = vmatpush.bf16.msra.mxu0 0
      %497 = vmatpush.bf16.msra.mxu0 0
      %498 = vmatpush.bf16.msra.mxu0 %v489
      %499 = vmatmul.bf16.gmra.mxu0 %v486
      %v500 = vpop.f32.mrf.mxu0
      %v501 = vadd.f32 0.0, %v500
      %v502 = vpop.f32.mrf.mxu0
      %503 = vdwg.mxu0
      %v504 = vperm.slane %v396, 3
      %v505 = vmul.f32 %v501, %v504
      %v506 = vadd.f32 %v479, %v505
      %s507 = scalar_lea.vmem %s2, 16
      %v508 = vld [vmem:[%s507] sm:$0xf]
      %v509 = vpack.c.bf16 %v395, %v395
      %v511 = vsel %vm402, %v508, 0
      %v514 = vsel %vm406, %v509, 0
      %516 = vmatpush.bf16.msra.mxu0 0
      %517 = vmatpush.bf16.msra.mxu0 0
      %518 = vmatpush.bf16.msra.mxu0 0
      %519 = vmatpush.bf16.msra.mxu0 0
      %520 = vmatpush.bf16.msra.mxu0 0
      %521 = vmatpush.bf16.msra.mxu0 0
      %522 = vmatpush.bf16.msra.mxu0 0
      %523 = vmatpush.bf16.msra.mxu0 %v514
      %524 = vmatmul.bf16.gmra.mxu0 %v511
      %v525 = vpop.f32.mrf.mxu0
      %v526 = vadd.f32 0.0, %v525
      %v527 = vpop.f32.mrf.mxu0
      %528 = vdwg.mxu0
      %v529 = vperm.slane %v396, 4
      %v530 = vmul.f32 %v526, %v529
      %v531 = vadd.f32 %v506, %v530
      %532 = vrot.lane.b32.xlu0 %v395, 127
      %v533 = vpop.permute.xlu0 %532
      %s534 = scalar_lea.vmem %s2, 20
      %v535 = vld [vmem:[%s534] sm:$0xf]
      %v536 = vpack.c.bf16 %v533, %v533
      %v538 = vsel %vm402, %v535, 0
      %v541 = vsel %vm406, %v536, 0
      %543 = vmatpush.bf16.msra.mxu0 0
      %544 = vmatpush.bf16.msra.mxu0 0
      %545 = vmatpush.bf16.msra.mxu0 0
      %546 = vmatpush.bf16.msra.mxu0 0
      %547 = vmatpush.bf16.msra.mxu0 0
      %548 = vmatpush.bf16.msra.mxu0 0
      %549 = vmatpush.bf16.msra.mxu0 0
      %550 = vmatpush.bf16.msra.mxu0 %v541
      %551 = vmatmul.bf16.gmra.mxu0 %v538
      %v552 = vpop.f32.mrf.mxu0
      %v553 = vadd.f32 0.0, %v552
      %v554 = vpop.f32.mrf.mxu0
      %555 = vdwg.mxu0
      %v556 = vperm.slane %v396, 5
      %v557 = vmul.f32 %v553, %v556
      %v558 = vadd.f32 %v531, %v557
      %559 = vrot.lane.b32.xlu0 %v395, 121
      %v560 = vpop.permute.xlu0 %559
      %s561 = scalar_lea.vmem %s2, 24
      %v562 = vld [vmem:[%s561] sm:$0xf]
      %v563 = vpack.c.bf16 %v560, %v560
      %v565 = vsel %vm402, %v562, 0
      %v568 = vsel %vm406, %v563, 0
      %570 = vmatpush.bf16.msra.mxu0 0
      %571 = vmatpush.bf16.msra.mxu0 0
      %572 = vmatpush.bf16.msra.mxu0 0
      %573 = vmatpush.bf16.msra.mxu0 0
      %574 = vmatpush.bf16.msra.mxu0 0
      %575 = vmatpush.bf16.msra.mxu0 0
      %576 = vmatpush.bf16.msra.mxu0 0
      %577 = vmatpush.bf16.msra.mxu0 %v568
      %578 = vmatmul.bf16.gmra.mxu0 %v565
      %v579 = vpop.f32.mrf.mxu0
      %v580 = vadd.f32 0.0, %v579
      %v581 = vpop.f32.mrf.mxu0
      %582 = vdwg.mxu0
      %v583 = vperm.slane %v396, 6
      %v584 = vmul.f32 %v580, %v583
      %v585 = vadd.f32 %v558, %v584
      %586 = vrot.lane.b32.xlu0 %v395, 120
      %v587 = vpop.permute.xlu0 %586
      %s588 = scalar_lea.vmem %s2, 28
      %v589 = vld [vmem:[%s588] sm:$0xf]
      %v590 = vpack.c.bf16 %v587, %v587
      %v592 = vsel %vm402, %v589, 0
      %v595 = vsel %vm406, %v590, 0
      %597 = vmatpush.bf16.msra.mxu0 0
      %598 = vmatpush.bf16.msra.mxu0 0
      %599 = vmatpush.bf16.msra.mxu0 0
      %600 = vmatpush.bf16.msra.mxu0 0
      %601 = vmatpush.bf16.msra.mxu0 0
      %602 = vmatpush.bf16.msra.mxu0 0
      %603 = vmatpush.bf16.msra.mxu0 0
      %604 = vmatpush.bf16.msra.mxu0 %v595
      %605 = vmatmul.bf16.gmra.mxu0 %v592
      %v606 = vpop.f32.mrf.mxu0
      %v607 = vadd.f32 0.0, %v606
      %v608 = vpop.f32.mrf.mxu0
      %609 = vdwg.mxu0
      %v610 = vperm.slane %v396, 7
      %v611 = vmul.f32 %v607, %v610
      %v612 = vadd.f32 %v585, %v611
      %613 = vrot.lane.b32.xlu0 %v395, 119
      %v614 = vpop.permute.xlu0 %613
      %s615 = scalar_lea.vmem %s2, 32
      %v616 = vld [vmem:[%s615] sm:$0xf]
      %v617 = vpack.c.bf16 %v614, %v614
      %v619 = vsel %vm402, %v616, 0
      %v622 = vsel %vm406, %v617, 0
      %624 = vmatpush.bf16.msra.mxu0 0
      %625 = vmatpush.bf16.msra.mxu0 0
      %626 = vmatpush.bf16.msra.mxu0 0
      %627 = vmatpush.bf16.msra.mxu0 0
      %628 = vmatpush.bf16.msra.mxu0 0
      %629 = vmatpush.bf16.msra.mxu0 0
      %630 = vmatpush.bf16.msra.mxu0 0
      %631 = vmatpush.bf16.msra.mxu0 %v622
      %632 = vmatmul.bf16.gmra.mxu0 %v619
      %v633 = vpop.f32.mrf.mxu0
      %v634 = vadd.f32 0.0, %v633
      %v635 = vpop.f32.mrf.mxu0
      %636 = vdwg.mxu0
      %v637 = vperm.slane %v397, 0
      %v638 = vmul.f32 %v634, %v637
      %v639 = vadd.f32 %v612, %v638
      %v640 = vld [vmem:[%s6] sm:$0xff]
      %642 = vset.pattern.permute.xlu0 0
      %643 = vperm.xlu0 %642, %v640
      %v644 = vpop.permute.xlu0 %643
      %v646 = vmul.f32 %v639, %v644
      %647 = vset.pattern.permute.xlu0 1
      %648 = vperm.xlu0 %647, %v640
      %v649 = vpop.permute.xlu0 %648
      %v651 = vadd.f32 %v646, %v649
      %v652 = vmax.f32 %v651, 0.0
      %v653 = vpack.c.bf16 %v652, %v652
      %v654 = vld [vmem:[%s3] sm:$0xf]
      %v655 = vld [vmem:[%s3 + $0x4] sm:$0xf]
      %v656 = vld [vmem:[%s7] sm:$0xff]
      %v657 = vld [vmem:[%s7 + $0x8] sm:$0xff]
      %659 = vset.pattern.permute.xlu0 0
      %660 = vperm.xlu0 %659, %v656
      %v661 = vpop.permute.xlu0 %660
      %664 = vset.pattern.permute.xlu0 0
      %665 = vperm.xlu0 %664, %v657
      %v666 = vpop.permute.xlu0 %665
      %v670 = vunpack.c.l.b16 %v654
      %v671 = vunpack.c.l.b16 %v655
      %v672 = vpack.c.b16 %v671, %v670
      %v674 = vsel %vm402, %v672, 0
      %v677 = vsel %vm406, %v653, 0
      %679 = vmatpush.bf16.msra.mxu0 0
      %680 = vmatpush.bf16.msra.mxu0 0
      %681 = vmatpush.bf16.msra.mxu0 0
      %682 = vmatpush.bf16.msra.mxu0 0
      %683 = vmatpush.bf16.msra.mxu0 0
      %684 = vmatpush.bf16.msra.mxu0 0
      %685 = vmatpush.bf16.msra.mxu0 0
      %686 = vmatpush.bf16.msra.mxu0 %v677
      %687 = vmatmul.bf16.gmra.mxu0 %v674
      %v688 = vpop.f32.mrf.mxu0
      %v689 = vadd.f32 %v661, %v688
      %v690 = vpop.f32.mrf.mxu0
      %v691 = vadd.f32 %v666, %v690
      %692 = vdwg.mxu0
      %v693 = vadd.f32 %v689, %v338
      %v694 = vadd.f32 %v691, %v339
      %v695 = vpack.c.bf16 %v693, %v693
      %v696 = vpack.c.bf16 %v694, %v694
      %697 = vst [vmem:[%s332] sm:$0xf] %v695
      %698 = vst [vmem:[%s332 + $0x4] sm:$0xf] %v696
      %p699 = scmp.lt.s32.totalorder %s20, 1
      %s700 = scalar_select %p699, %s20, 1
      %s701 = smul.addr %s700, 2
      %s702 = smul.addr %s701, 4
      %s703 = scalar_lea.vmem %s9, %s702
      // Predicated region
      $region57: #{_lambda_.23} parent=55 // pred_check
        %p704 = pneg %p232
      $region58: #{_lambda_.23} parent=55 // pred_check_branch
        %706 = sbr.rel (%p704) target = $region60
      $region59: #{_lambda_.23} parent=55 // pred_region
        _
      $region60: #{_lambda_.23} parent=55 // pred_fallthru
        _
    $region56: #{_lambda_.23} parent=5 // pred_fallthru
      _
    %p707 = scmp.le.s32.totalorder 2, %s15
    // Predicated region
    $region61: #{_lambda_.23} parent=5 // pred_check
      %p708 = pneg %p707
    $region62: #{_lambda_.23} parent=5 // pred_check_branch
      %710 = sbr.rel (%p708) target = $region64
    $region63: #{_lambda_.23} parent=5 // pred_region
      %s711 = ssub.s32 %s15, 2
      // Predicated region
      $region65: #{_lambda_.23} parent=63 // pred_check
        %p712 = pneg %p238
      $region66: #{_lambda_.23} parent=63 // pred_check_branch
        %714 = sbr.rel (%p712) target = $region68
      $region67: #{_lambda_.23} parent=63 // pred_region
        %p715 = scmp.lt.s32.totalorder %s21, 1
        %s716 = scalar_select %p715, %s21, 1
        %s717 = smul.addr %s716, 2
        %s718 = smul.addr %s717, 4
        %s719 = scalar_lea.vmem %s9, %s718
      $region68: #{_lambda_.23} parent=63 // pred_fallthru
        _
    $region64: #{_lambda_.23} parent=5 // pred_fallthru
      _
  $region6: #{_lambda_.23} parent=0 // loop_footer
    %s19 = sadd.s32 1, %s15
  $region7: #{_lambda_.23} parent=0 // loop_footer_branch
    %14 = sbr.rel target = $region3
  $region8: #{_lambda_.23} parent=0 // loop_exit
    _

// kernel: _lambda_.25
$region0: #{_lambda_.25}
  #allocation0 [shape = 'u32[]', space=smem, size = 0x4, offset = 0x4, fixed_abs, tag = 'smem constant byte address 0x4 - core index']
  #allocation1 [shape = 'u32[72,128]{1,0:T(1,128)}', space=vmem, size = 0x9000, scoped, tag = 'internal scratch']
  %s0 = inlined_call_operand.vmem [shape: bf16[2,16,128], index: 0, kind: input, shape index: {}]
  %s1 = inlined_call_operand.hbm [shape: bf16[8,16], index: 1, kind: input, shape index: {}]
  %s2 = inlined_call_operand.vmem [shape: bf16[9,8,8], index: 2, kind: input, shape index: {}]
  %s3 = inlined_call_operand.vmem [shape: bf16[16,8], index: 3, kind: input, shape index: {}]
  %s4 = inlined_call_operand.vmem [shape: f32[16,2], index: 4, kind: input, shape index: {}]
  %s5 = inlined_call_operand.vmem [shape: f32[8,2], index: 5, kind: input, shape index: {}]
  %s6 = inlined_call_operand.vmem [shape: f32[8,2], index: 6, kind: input, shape index: {}]
  %s7 = inlined_call_operand.vmem [shape: f32[16,1], index: 7, kind: input, shape index: {}]
  %s8 = inlined_call_operand.vmem [shape: f32[9,128], index: 8, kind: input, shape index: {}]
  %s9 = inlined_call_operand.vmem [shape: bf16[2,16,128], index: 9, kind: output, shape index: {}]
  %s10 = sld [smem:[#allocation0]]
  $region73: #{_lambda_.25} parent=0
    _
  %s12 = ssub.s32 1, %s10
  %s13 = scalar_select 0, %s12, %s10
  $region1: #{_lambda_.25} parent=0
    #allocation2 [shape = 'u8[2048]{0}', space=vmem, size = 0x800, scoped, tag = 'input window, operand 1, single buffered']
    #allocation3 [shape = 's32[2]{0}', space=sflag, size = 0x8, scoped, tag = 'scoped memory for _lambda_.25']
    %14 = vsyncpa [#allocation3], 0
    loop: start=0, step=1, limit=4
    $region2: #{_lambda_.25} parent=1 // loop_pre_header
      _
    $region3: #{_lambda_.25} parent=1 // loop_header
      %s16 = sphi 0, %s20
      %p17 = scmp.ge.s32.totalorder %s16, 4
      %s26 = sphi 0, %s28
      %s29 = sphi 0, %s26
      %s30 = sphi 0, %s29
      %s46 = sphi 0, %s30
      %s50 = sphi 0, %s50
      %s52 = sphi 0, %s50
      %s53 = sphi 0, %s52
      %s67 = sphi 0, %s53
      %s71 = sphi 0, %s71
      %s73 = sphi 0, %s71
      %s74 = sphi 0, %s73
      %s88 = sphi 0, %s74
      %s92 = sphi 0, %s92
      %s94 = sphi 0, %s92
      %s95 = sphi 0, %s94
      %s109 = sphi 0, %s95
      %s113 = sphi 0, %s113
      %s115 = sphi 0, %s113
      %s116 = sphi 0, %s115
      %s130 = sphi 0, %s116
      %s134 = sphi 0, %s134
      %s136 = sphi 0, %s134
      %s137 = sphi 0, %s136
      %s151 = sphi 0, %s137
      %s155 = sphi 0, %s155
      %s157 = sphi 0, %s155
      %s158 = sphi 0, %s157
      %s172 = sphi 0, %s158
      %s176 = sphi 0, %s176
      %s178 = sphi 0, %s176
      %s179 = sphi 0, %s178
      %s193 = sphi 0, %s179
      %s197 = sphi 0, %s197
      %s199 = sphi 0, %s197
      %s200 = sphi 0, %s199
      %s214 = sphi 0, %s200
      %s220 = sphi 0, %s222
      %s223 = sphi 0, %s220
      %s224 = sphi 0, %s223
      %s240 = sphi 0, %s224
    $region4: #{_lambda_.25} parent=1 // loop_header_branch
      %19 = sbr.rel (%p17) target = $region8
    $region5: #{_lambda_.25} parent=1 // loop_body
      %s21 = ssub.s32 %s16, 1
      %s22 = ssub.s32 %s16, 2
      %s23 = sadd.s32 %s16, 1
      %s24 = ssub.s32 %s16, %s23
      %p25 = scmp.eq.s32.totalorder %s24, 0
      %s27 = sadd.s32 %s26, 1
      %s28 = scalar_select %p25, %s26, %s27
      %p31 = pneg %p25
      %p32 = scmp.eq.s32.totalorder %s16, 1
      %p33 = por %p31, %p32
      %p34 = scmp.ne.s32.totalorder %s26, %s29
      %p35 = scmp.eq.s32.totalorder %s16, 0
      %p36 = por %p34, %p35
      %p37 = scmp.ne.s32.totalorder %s26, %s29
      %p38 = scmp.eq.s32.totalorder %s21, 1
      %p39 = por %p37, %p38
      %p40 = scmp.ne.s32.totalorder %s29, %s30
      %p41 = scmp.eq.s32.totalorder %s21, 0
      %p42 = por %p40, %p41
      %p43 = scmp.ne.s32.totalorder %s29, %s30
      %p44 = scmp.eq.s32.totalorder %s22, 1
      %p45 = por %p43, %p44
      %p47 = scmp.ne.s32.totalorder %s30, %s46
      %p48 = scmp.eq.s32.totalorder %s22, 0
      %p49 = por %p47, %p48
      %s51 = sadd.s32 %s50, 1
      %p54 = scmp.eq.s32.totalorder %s16, 1
      %p55 = scmp.ne.s32.totalorder %s50, %s52
      %p56 = scmp.eq.s32.totalorder %s16, 0
      %p57 = por %p55, %p56
      %p58 = scmp.ne.s32.totalorder %s50, %s52
      %p59 = scmp.eq.s32.totalorder %s21, 1
      %p60 = por %p58, %p59
      %p61 = scmp.ne.s32.totalorder %s52, %s53
      %p62 = scmp.eq.s32.totalorder %s21, 0
      %p63 = por %p61, %p62
      %p64 = scmp.ne.s32.totalorder %s52, %s53
      %p65 = scmp.eq.s32.totalorder %s22, 1
      %p66 = por %p64, %p65
      %p68 = scmp.ne.s32.totalorder %s53, %s67
      %p69 = scmp.eq.s32.totalorder %s22, 0
      %p70 = por %p68, %p69
      %s72 = sadd.s32 %s71, 1
      %p75 = scmp.eq.s32.totalorder %s16, 1
      %p76 = scmp.ne.s32.totalorder %s71, %s73
      %p77 = scmp.eq.s32.totalorder %s16, 0
      %p78 = por %p76, %p77
      %p79 = scmp.ne.s32.totalorder %s71, %s73
      %p80 = scmp.eq.s32.totalorder %s21, 1
      %p81 = por %p79, %p80
      %p82 = scmp.ne.s32.totalorder %s73, %s74
      %p83 = scmp.eq.s32.totalorder %s21, 0
      %p84 = por %p82, %p83
      %p85 = scmp.ne.s32.totalorder %s73, %s74
      %p86 = scmp.eq.s32.totalorder %s22, 1
      %p87 = por %p85, %p86
      %p89 = scmp.ne.s32.totalorder %s74, %s88
      %p90 = scmp.eq.s32.totalorder %s22, 0
      %p91 = por %p89, %p90
      %s93 = sadd.s32 %s92, 1
      %p96 = scmp.eq.s32.totalorder %s16, 1
      %p97 = scmp.ne.s32.totalorder %s92, %s94
      %p98 = scmp.eq.s32.totalorder %s16, 0
      %p99 = por %p97, %p98
      %p100 = scmp.ne.s32.totalorder %s92, %s94
      %p101 = scmp.eq.s32.totalorder %s21, 1
      %p102 = por %p100, %p101
      %p103 = scmp.ne.s32.totalorder %s94, %s95
      %p104 = scmp.eq.s32.totalorder %s21, 0
      %p105 = por %p103, %p104
      %p106 = scmp.ne.s32.totalorder %s94, %s95
      %p107 = scmp.eq.s32.totalorder %s22, 1
      %p108 = por %p106, %p107
      %p110 = scmp.ne.s32.totalorder %s95, %s109
      %p111 = scmp.eq.s32.totalorder %s22, 0
      %p112 = por %p110, %p111
      %s114 = sadd.s32 %s113, 1
      %p117 = scmp.eq.s32.totalorder %s16, 1
      %p118 = scmp.ne.s32.totalorder %s113, %s115
      %p119 = scmp.eq.s32.totalorder %s16, 0
      %p120 = por %p118, %p119
      %p121 = scmp.ne.s32.totalorder %s113, %s115
      %p122 = scmp.eq.s32.totalorder %s21, 1
      %p123 = por %p121, %p122
      %p124 = scmp.ne.s32.totalorder %s115, %s116
      %p125 = scmp.eq.s32.totalorder %s21, 0
      %p126 = por %p124, %p125
      %p127 = scmp.ne.s32.totalorder %s115, %s116
      %p128 = scmp.eq.s32.totalorder %s22, 1
      %p129 = por %p127, %p128
      %p131 = scmp.ne.s32.totalorder %s116, %s130
      %p132 = scmp.eq.s32.totalorder %s22, 0
      %p133 = por %p131, %p132
      %s135 = sadd.s32 %s134, 1
      %p138 = scmp.eq.s32.totalorder %s16, 1
      %p139 = scmp.ne.s32.totalorder %s134, %s136
      %p140 = scmp.eq.s32.totalorder %s16, 0
      %p141 = por %p139, %p140
      %p142 = scmp.ne.s32.totalorder %s134, %s136
      %p143 = scmp.eq.s32.totalorder %s21, 1
      %p144 = por %p142, %p143
      %p145 = scmp.ne.s32.totalorder %s136, %s137
      %p146 = scmp.eq.s32.totalorder %s21, 0
      %p147 = por %p145, %p146
      %p148 = scmp.ne.s32.totalorder %s136, %s137
      %p149 = scmp.eq.s32.totalorder %s22, 1
      %p150 = por %p148, %p149
      %p152 = scmp.ne.s32.totalorder %s137, %s151
      %p153 = scmp.eq.s32.totalorder %s22, 0
      %p154 = por %p152, %p153
      %s156 = sadd.s32 %s155, 1
      %p159 = scmp.eq.s32.totalorder %s16, 1
      %p160 = scmp.ne.s32.totalorder %s155, %s157
      %p161 = scmp.eq.s32.totalorder %s16, 0
      %p162 = por %p160, %p161
      %p163 = scmp.ne.s32.totalorder %s155, %s157
      %p164 = scmp.eq.s32.totalorder %s21, 1
      %p165 = por %p163, %p164
      %p166 = scmp.ne.s32.totalorder %s157, %s158
      %p167 = scmp.eq.s32.totalorder %s21, 0
      %p168 = por %p166, %p167
      %p169 = scmp.ne.s32.totalorder %s157, %s158
      %p170 = scmp.eq.s32.totalorder %s22, 1
      %p171 = por %p169, %p170
      %p173 = scmp.ne.s32.totalorder %s158, %s172
      %p174 = scmp.eq.s32.totalorder %s22, 0
      %p175 = por %p173, %p174
      %s177 = sadd.s32 %s176, 1
      %p180 = scmp.eq.s32.totalorder %s16, 1
      %p181 = scmp.ne.s32.totalorder %s176, %s178
      %p182 = scmp.eq.s32.totalorder %s16, 0
      %p183 = por %p181, %p182
      %p184 = scmp.ne.s32.totalorder %s176, %s178
      %p185 = scmp.eq.s32.totalorder %s21, 1
      %p186 = por %p184, %p185
      %p187 = scmp.ne.s32.totalorder %s178, %s179
      %p188 = scmp.eq.s32.totalorder %s21, 0
      %p189 = por %p187, %p188
      %p190 = scmp.ne.s32.totalorder %s178, %s179
      %p191 = scmp.eq.s32.totalorder %s22, 1
      %p192 = por %p190, %p191
      %p194 = scmp.ne.s32.totalorder %s179, %s193
      %p195 = scmp.eq.s32.totalorder %s22, 0
      %p196 = por %p194, %p195
      %s198 = sadd.s32 %s197, 1
      %p201 = scmp.eq.s32.totalorder %s16, 1
      %p202 = scmp.ne.s32.totalorder %s197, %s199
      %p203 = scmp.eq.s32.totalorder %s16, 0
      %p204 = por %p202, %p203
      %p205 = scmp.ne.s32.totalorder %s197, %s199
      %p206 = scmp.eq.s32.totalorder %s21, 1
      %p207 = por %p205, %p206
      %p208 = scmp.ne.s32.totalorder %s199, %s200
      %p209 = scmp.eq.s32.totalorder %s21, 0
      %p210 = por %p208, %p209
      %p211 = scmp.ne.s32.totalorder %s199, %s200
      %p212 = scmp.eq.s32.totalorder %s22, 1
      %p213 = por %p211, %p212
      %p215 = scmp.ne.s32.totalorder %s200, %s214
      %p216 = scmp.eq.s32.totalorder %s22, 0
      %p217 = por %p215, %p216
      %s218 = ssub.s32 %s16, %s23
      %p219 = scmp.eq.s32.totalorder %s218, 0
      %s221 = sadd.s32 %s220, 1
      %s222 = scalar_select %p219, %s220, %s221
      %p225 = pneg %p219
      %p226 = scmp.eq.s32.totalorder %s16, 1
      %p227 = por %p225, %p226
      %p228 = scmp.ne.s32.totalorder %s220, %s223
      %p229 = scmp.eq.s32.totalorder %s16, 0
      %p230 = por %p228, %p229
      %p231 = scmp.ne.s32.totalorder %s220, %s223
      %p232 = scmp.eq.s32.totalorder %s21, 1
      %p233 = por %p231, %p232
      %p234 = scmp.ne.s32.totalorder %s223, %s224
      %p235 = scmp.eq.s32.totalorder %s21, 0
      %p236 = por %p234, %p235
      %p237 = scmp.ne.s32.totalorder %s223, %s224
      %p238 = scmp.eq.s32.totalorder %s22, 1
      %p239 = por %p237, %p238
      %p241 = scmp.ne.s32.totalorder %s224, %s240
      %p242 = scmp.eq.s32.totalorder %s22, 0
      %p243 = por %p241, %p242
      %p244 = scmp.le.s32.totalorder 1, %s16
      %p245 = scmp.lt.s32.totalorder %s16, 3
      %p246 = pnand %p244, %p245
      %p247 = pneg %p246
      // Predicated region
      $region9: #{_lambda_.25} parent=5 // pred_check
        _
      $region10: #{_lambda_.25} parent=5 // pred_check_branch
        %249 = sbr.rel (%p246) target = $region12
      $region11: #{_lambda_.25} parent=5 // pred_region
        %s250 = ssub.s32 %s16, 1
        // Predicated region
        $region13: #{_lambda_.25} parent=11 // pred_check
          %p251 = pneg %p63
        $region14: #{_lambda_.25} parent=11 // pred_check_branch
          %253 = sbr.rel (%p251) target = $region16
        $region15: #{_lambda_.25} parent=11 // pred_region
          %255 = vsyncadd [#allocation3], 0
          %s257 = sshll.u32 %s1, 4
          %s258 = int_to_ptr.hbm [resolvable:$true] %s257
          %s259 = sshll.u32 [#allocation2], 4
          %s260 = int_to_ptr.vmem [resolvable:$true] %s259
          %262 = dma.hbm_to_vmem [thread:$0]  %s258, 64, %s260, [#allocation3]
        $region16: #{_lambda_.25} parent=11 // pred_fallthru
          _
        // Predicated region
        $region17: #{_lambda_.25} parent=11 // pred_check
          %p263 = pneg %p84
        $region18: #{_lambda_.25} parent=11 // pred_check_branch
          %265 = sbr.rel (%p263) target = $region20
        $region19: #{_lambda_.25} parent=11 // pred_region
          _
        $region20: #{_lambda_.25} parent=11 // pred_fallthru
          _
        // Predicated region
        $region21: #{_lambda_.25} parent=11 // pred_check
          %p266 = pneg %p105
        $region22: #{_lambda_.25} parent=11 // pred_check_branch
          %268 = sbr.rel (%p266) target = $region24
        $region23: #{_lambda_.25} parent=11 // pred_region
          _
        $region24: #{_lambda_.25} parent=11 // pred_fallthru
          _
        // Predicated region
        $region25: #{_lambda_.25} parent=11 // pred_check
          %p269 = pneg %p126
        $region26: #{_lambda_.25} parent=11 // pred_check_branch
          %271 = sbr.rel (%p269) target = $region28
        $region27: #{_lambda_.25} parent=11 // pred_region
          _
        $region28: #{_lambda_.25} parent=11 // pred_fallthru
          _
        // Predicated region
        $region29: #{_lambda_.25} parent=11 // pred_check
          %p272 = pneg %p147
        $region30: #{_lambda_.25} parent=11 // pred_check_branch
          %274 = sbr.rel (%p272) target = $region32
        $region31: #{_lambda_.25} parent=11 // pred_region
          _
        $region32: #{_lambda_.25} parent=11 // pred_fallthru
          _
        // Predicated region
        $region33: #{_lambda_.25} parent=11 // pred_check
          %p275 = pneg %p168
        $region34: #{_lambda_.25} parent=11 // pred_check_branch
          %277 = sbr.rel (%p275) target = $region36
        $region35: #{_lambda_.25} parent=11 // pred_region
          _
        $region36: #{_lambda_.25} parent=11 // pred_fallthru
          _
        // Predicated region
        $region37: #{_lambda_.25} parent=11 // pred_check
          %p278 = pneg %p189
        $region38: #{_lambda_.25} parent=11 // pred_check_branch
          %280 = sbr.rel (%p278) target = $region40
        $region39: #{_lambda_.25} parent=11 // pred_region
          _
        $region40: #{_lambda_.25} parent=11 // pred_fallthru
          _
        // Predicated region
        $region41: #{_lambda_.25} parent=11 // pred_check
          %p281 = pneg %p210
        $region42: #{_lambda_.25} parent=11 // pred_check_branch
          %283 = sbr.rel (%p281) target = $region44
        $region43: #{_lambda_.25} parent=11 // pred_region
          _
        $region44: #{_lambda_.25} parent=11 // pred_fallthru
          _
      $region12: #{_lambda_.25} parent=5 // pred_fallthru
        _
      %p284 = scmp.lt.s32.totalorder %s16, 2
      // Predicated region
      $region45: #{_lambda_.25} parent=5 // pred_check
        %p285 = pneg %p284
      $region46: #{_lambda_.25} parent=5 // pred_check_branch
        %287 = sbr.rel (%p285) target = $region48
      $region47: #{_lambda_.25} parent=5 // pred_region
        // Predicated region
        $region49: #{_lambda_.25} parent=47 // pred_check
          %p288 = pneg %p36
        $region50: #{_lambda_.25} parent=47 // pred_check_branch
          %290 = sbr.rel (%p288) target = $region52
        $region51: #{_lambda_.25} parent=47 // pred_region
          %p291 = scmp.lt.s32.totalorder %s16, 1
          %s292 = scalar_select %p291, %s16, 1
          %s293 = smul.addr %s292, 2
          %s294 = smul.addr %s293, 4
          %s295 = scalar_lea.vmem %s0, %s294
        $region52: #{_lambda_.25} parent=47 // pred_fallthru
          _
      $region48: #{_lambda_.25} parent=5 // pred_fallthru
        _
      %p296 = scmp.le.s32.totalorder 1, %s16
      %p297 = scmp.lt.s32.totalorder %s16, 3
      %p298 = pnand %p296, %p297
      %p299 = pneg %p298
      // Predicated region
      $region53: #{_lambda_.25} parent=5 // pred_check
        _
      $region54: #{_lambda_.25} parent=5 // pred_check_branch
        %301 = sbr.rel (%p298) target = $region56
      $region55: #{_lambda_.25} parent=5 // pred_region
        %s302 = ssub.s32 %s16, 1
        // Predicated region
        $region57: #{_lambda_.25} parent=55 // pred_check
          %p303 = pneg %p63
        $region58: #{_lambda_.25} parent=55 // pred_check_branch
          %305 = sbr.rel (%p303) target = $region60
        $region59: #{_lambda_.25} parent=55 // pred_region
          %307 = dma.done [#allocation3], 64
        $region60: #{_lambda_.25} parent=55 // pred_fallthru
          _
        %p308 = scmp.lt.s32.totalorder %s21, 1
        %s309 = scalar_select %p308, %s21, 1
        %s310 = smul.addr %s309, 2
        %s311 = smul.addr %s310, 4
        %s312 = scalar_lea.vmem %s0, %s311
        %p313 = pneg %p42
        %p314 = pneg %p39
        %p315 = pneg %p63
        %p316 = pneg %p60
        %p317 = pneg %p84
        %p318 = pneg %p81
        %p319 = pneg %p105
        %p320 = pneg %p102
        %p321 = pneg %p126
        %p322 = pneg %p123
        %p323 = pneg %p147
        %p324 = pneg %p144
        %p325 = pneg %p168
        %p326 = pneg %p165
        %p327 = pneg %p189
        %p328 = pneg %p186
        %p329 = pneg %p210
        %p330 = pneg %p207
        %p331 = pneg %p236
        %p332 = pneg %p233
        %p333 = scmp.lt.s32.totalorder %s21, 1
        %s334 = scalar_select %p333, %s21, 1
        %s335 = smul.addr %s334, 2
        %s336 = smul.addr %s335, 4
        %s337 = scalar_lea.vmem %s9, %s336
        %p338 = scmp.lt.s32.totalorder %s21, 1
        %s339 = scalar_select %p338, %s21, 1
        %s340 = smul.addr %s339, 2
        %s341 = smul.addr %s340, 4
        %s342 = scalar_lea.vmem %s0, %s341
        %p343 = scmp.lt.s32.totalorder %s21, 1
        %s344 = scalar_select %p343, %s21, 1
        %s345 = smul.addr %s344, 2
        %s346 = smul.addr %s345, 4
        %s347 = scalar_lea.vmem %s9, %s346
        %v349 = vld [vmem:[%s342] sm:$0xf]
        %v350 = vld [vmem:[%s342 + $0x4] sm:$0xf]
        %v351 = vld [vmem:[%s4] sm:$0xff]
        %v352 = vld [vmem:[%s4 + $0x8] sm:$0xff]
        %v353 = vunpack.c.l.bf16 %v349
        %v354 = vunpack.c.l.bf16 %v350
        %356 = vset.pattern.permute.xlu0 0
        %357 = vperm.xlu0 %356, %v351
        %v358 = vpop.permute.xlu0 %357
        %361 = vset.pattern.permute.xlu0 0
        %362 = vperm.xlu0 %361, %v352
        %v363 = vpop.permute.xlu0 %362
        %v365 = vmul.f32 %v353, %v358
        %v366 = vmul.f32 %v354, %v363
        %367 = vset.pattern.permute.xlu0 1
        %368 = vperm.xlu0 %367, %v351
        %v369 = vpop.permute.xlu0 %368
        %371 = vset.pattern.permute.xlu0 1
        %372 = vperm.xlu0 %371, %v352
        %v373 = vpop.permute.xlu0 %372
        %v375 = vadd.f32 %v365, %v369
        %v376 = vadd.f32 %v366, %v373
        %v377 = vmax.f32 %v375, 0.0
        %v378 = vmax.f32 %v376, 0.0
        %v379 = vpack.c.bf16 %v378, %v377
        %v380 = vld [vmem:[#allocation2] sm:$0xf]
        %vm381 = vcmask 130048
        %v383 = vsel %vm381, %v380, 0
        %385 = vmatpush.bf16.msra.mxu0 0
        %386 = vmatpush.bf16.msra.mxu0 0
        %387 = vmatpush.bf16.msra.mxu0 0
        %388 = vmatpush.bf16.msra.mxu0 0
        %389 = vmatpush.bf16.msra.mxu0 0
        %390 = vmatpush.bf16.msra.mxu0 0
        %391 = vmatpush.bf16.msra.mxu0 0
        %392 = vmatpush.bf16.msra.mxu0 %v379
        %393 = vmatmul.bf16.gmra.mxu0 %v383
        %v394 = vpop.f32.mrf.mxu0
        %v395 = vadd.f32 0.0, %v394
        %v396 = vpop.f32.mrf.mxu0
        %397 = vdwg.mxu0
        %v398 = vld [vmem:[%s5] sm:$0xff]
        %400 = vset.pattern.permute.xlu0 0
        %401 = vperm.xlu0 %400, %v398
        %v402 = vpop.permute.xlu0 %401
        %v404 = vmul.f32 %v395, %v402
        %405 = vset.pattern.permute.xlu0 1
        %406 = vperm.xlu0 %405, %v398
        %v407 = vpop.permute.xlu0 %406
        %v409 = vadd.f32 %v404, %v407
        %v410 = vmax.f32 %v409, 0.0
        %v411 = vld [vmem:[%s8] sm:$0xff]
        %v412 = vld [vmem:[%s8 + $0x8] sm:$0x1]
        %413 = vrot.lane.b32.xlu0 %v410, 5
        %v414 = vpop.permute.xlu0 %413
        %v415 = vld [vmem:[%s2] sm:$0xf]
        %v416 = vpack.c.bf16 %v414, %v414
        %vm417 = vcmask 64512
        %v419 = vsel %vm417, %v415, 0
        %vm421 = vcmask 1043456
        %v423 = vsel %vm421, %v416, 0
        %425 = vmatpush.bf16.msra.mxu0 0
        %426 = vmatpush.bf16.msra.mxu0 0
        %427 = vmatpush.bf16.msra.mxu0 0
        %428 = vmatpush.bf16.msra.mxu0 0
        %429 = vmatpush.bf16.msra.mxu0 0
        %430 = vmatpush.bf16.msra.mxu0 0
        %431 = vmatpush.bf16.msra.mxu0 0
        %432 = vmatpush.bf16.msra.mxu0 %v423
        %433 = vmatmul.bf16.gmra.mxu0 %v419
        %v434 = vpop.f32.mrf.mxu0
        %v435 = vadd.f32 0.0, %v434
        %v436 = vpop.f32.mrf.mxu0
        %437 = vdwg.mxu0
        %v438 = vperm.slane %v411, 0
        %v439 = vmul.f32 %v435, %v438
        %v440 = vadd.f32 %v439, 0.0
        %441 = vrot.lane.b32.xlu0 %v410, 4
        %v442 = vpop.permute.xlu0 %441
        %s443 = scalar_lea.vmem %s2, 4
        %v444 = vld [vmem:[%s443] sm:$0xf]
        %v445 = vpack.c.bf16 %v442, %v442
        %v447 = vsel %vm417, %v444, 0
        %v450 = vsel %vm421, %v445, 0
        %452 = vmatpush.bf16.msra.mxu0 0
        %453 = vmatpush.bf16.msra.mxu0 0
        %454 = vmatpush.bf16.msra.mxu0 0
        %455 = vmatpush.bf16.msra.mxu0 0
        %456 = vmatpush.bf16.msra.mxu0 0
        %457 = vmatpush.bf16.msra.mxu0 0
        %458 = vmatpush.bf16.msra.mxu0 0
        %459 = vmatpush.bf16.msra.mxu0 %v450
        %460 = vmatmul.bf16.gmra.mxu0 %v447
        %v461 = vpop.f32.mrf.mxu0
        %v462 = vadd.f32 0.0, %v461
        %v463 = vpop.f32.mrf.mxu0
        %464 = vdwg.mxu0
        %v465 = vperm.slane %v411, 1
        %v466 = vmul.f32 %v462, %v465
        %v467 = vadd.f32 %v440, %v466
        %468 = vrot.lane.b32.xlu0 %v410, 3
        %v469 = vpop.permute.xlu0 %468
        %s470 = scalar_lea.vmem %s2, 8
        %v471 = vld [vmem:[%s470] sm:$0xf]
        %v472 = vpack.c.bf16 %v469, %v469
        %v474 = vsel %vm417, %v471, 0
        %v477 = vsel %vm421, %v472, 0
        %479 = vmatpush.bf16.msra.mxu0 0
        %480 = vmatpush.bf16.msra.mxu0 0
        %481 = vmatpush.bf16.msra.mxu0 0
        %482 = vmatpush.bf16.msra.mxu0 0
        %483 = vmatpush.bf16.msra.mxu0 0
        %484 = vmatpush.bf16.msra.mxu0 0
        %485 = vmatpush.bf16.msra.mxu0 0
        %486 = vmatpush.bf16.msra.mxu0 %v477
        %487 = vmatmul.bf16.gmra.mxu0 %v474
        %v488 = vpop.f32.mrf.mxu0
        %v489 = vadd.f32 0.0, %v488
        %v490 = vpop.f32.mrf.mxu0
        %491 = vdwg.mxu0
        %v492 = vperm.slane %v411, 2
        %v493 = vmul.f32 %v489, %v492
        %v494 = vadd.f32 %v467, %v493
        %495 = vrot.lane.b32.xlu0 %v410, 1
        %v496 = vpop.permute.xlu0 %495
        %s497 = scalar_lea.vmem %s2, 12
        %v498 = vld [vmem:[%s497] sm:$0xf]
        %v499 = vpack.c.bf16 %v496, %v496
        %v501 = vsel %vm417, %v498, 0
        %v504 = vsel %vm421, %v499, 0
        %506 = vmatpush.bf16.msra.mxu0 0
        %507 = vmatpush.bf16.msra.mxu0 0
        %508 = vmatpush.bf16.msra.mxu0 0
        %509 = vmatpush.bf16.msra.mxu0 0
        %510 = vmatpush.bf16.msra.mxu0 0
        %511 = vmatpush.bf16.msra.mxu0 0
        %512 = vmatpush.bf16.msra.mxu0 0
        %513 = vmatpush.bf16.msra.mxu0 %v504
        %514 = vmatmul.bf16.gmra.mxu0 %v501
        %v515 = vpop.f32.mrf.mxu0
        %v516 = vadd.f32 0.0, %v515
        %v517 = vpop.f32.mrf.mxu0
        %518 = vdwg.mxu0
        %v519 = vperm.slane %v411, 3
        %v520 = vmul.f32 %v516, %v519
        %v521 = vadd.f32 %v494, %v520
        %s522 = scalar_lea.vmem %s2, 16
        %v523 = vld [vmem:[%s522] sm:$0xf]
        %v524 = vpack.c.bf16 %v410, %v410
        %v526 = vsel %vm417, %v523, 0
        %v529 = vsel %vm421, %v524, 0
        %531 = vmatpush.bf16.msra.mxu0 0
        %532 = vmatpush.bf16.msra.mxu0 0
        %533 = vmatpush.bf16.msra.mxu0 0
        %534 = vmatpush.bf16.msra.mxu0 0
        %535 = vmatpush.bf16.msra.mxu0 0
        %536 = vmatpush.bf16.msra.mxu0 0
        %537 = vmatpush.bf16.msra.mxu0 0
        %538 = vmatpush.bf16.msra.mxu0 %v529
        %539 = vmatmul.bf16.gmra.mxu0 %v526
        %v540 = vpop.f32.mrf.mxu0
        %v541 = vadd.f32 0.0, %v540
        %v542 = vpop.f32.mrf.mxu0
        %543 = vdwg.mxu0
        %v544 = vperm.slane %v411, 4
        %v545 = vmul.f32 %v541, %v544
        %v546 = vadd.f32 %v521, %v545
        %547 = vrot.lane.b32.xlu0 %v410, 127
        %v548 = vpop.permute.xlu0 %547
        %s549 = scalar_lea.vmem %s2, 20
        %v550 = vld [vmem:[%s549] sm:$0xf]
        %v551 = vpack.c.bf16 %v548, %v548
        %v553 = vsel %vm417, %v550, 0
        %v556 = vsel %vm421, %v551, 0
        %558 = vmatpush.bf16.msra.mxu0 0
        %559 = vmatpush.bf16.msra.mxu0 0
        %560 = vmatpush.bf16.msra.mxu0 0
        %561 = vmatpush.bf16.msra.mxu0 0
        %562 = vmatpush.bf16.msra.mxu0 0
        %563 = vmatpush.bf16.msra.mxu0 0
        %564 = vmatpush.bf16.msra.mxu0 0
        %565 = vmatpush.bf16.msra.mxu0 %v556
        %566 = vmatmul.bf16.gmra.mxu0 %v553
        %v567 = vpop.f32.mrf.mxu0
        %v568 = vadd.f32 0.0, %v567
        %v569 = vpop.f32.mrf.mxu0
        %570 = vdwg.mxu0
        %v571 = vperm.slane %v411, 5
        %v572 = vmul.f32 %v568, %v571
        %v573 = vadd.f32 %v546, %v572
        %574 = vrot.lane.b32.xlu0 %v410, 125
        %v575 = vpop.permute.xlu0 %574
        %s576 = scalar_lea.vmem %s2, 24
        %v577 = vld [vmem:[%s576] sm:$0xf]
        %v578 = vpack.c.bf16 %v575, %v575
        %v580 = vsel %vm417, %v577, 0
        %v583 = vsel %vm421, %v578, 0
        %585 = vmatpush.bf16.msra.mxu0 0
        %586 = vmatpush.bf16.msra.mxu0 0
        %587 = vmatpush.bf16.msra.mxu0 0
        %588 = vmatpush.bf16.msra.mxu0 0
        %589 = vmatpush.bf16.msra.mxu0 0
        %590 = vmatpush.bf16.msra.mxu0 0
        %591 = vmatpush.bf16.msra.mxu0 0
        %592 = vmatpush.bf16.msra.mxu0 %v583
        %593 = vmatmul.bf16.gmra.mxu0 %v580
        %v594 = vpop.f32.mrf.mxu0
        %v595 = vadd.f32 0.0, %v594
        %v596 = vpop.f32.mrf.mxu0
        %597 = vdwg.mxu0
        %v598 = vperm.slane %v411, 6
        %v599 = vmul.f32 %v595, %v598
        %v600 = vadd.f32 %v573, %v599
        %601 = vrot.lane.b32.xlu0 %v410, 124
        %v602 = vpop.permute.xlu0 %601
        %s603 = scalar_lea.vmem %s2, 28
        %v604 = vld [vmem:[%s603] sm:$0xf]
        %v605 = vpack.c.bf16 %v602, %v602
        %v607 = vsel %vm417, %v604, 0
        %v610 = vsel %vm421, %v605, 0
        %612 = vmatpush.bf16.msra.mxu0 0
        %613 = vmatpush.bf16.msra.mxu0 0
        %614 = vmatpush.bf16.msra.mxu0 0
        %615 = vmatpush.bf16.msra.mxu0 0
        %616 = vmatpush.bf16.msra.mxu0 0
        %617 = vmatpush.bf16.msra.mxu0 0
        %618 = vmatpush.bf16.msra.mxu0 0
        %619 = vmatpush.bf16.msra.mxu0 %v610
        %620 = vmatmul.bf16.gmra.mxu0 %v607
        %v621 = vpop.f32.mrf.mxu0
        %v622 = vadd.f32 0.0, %v621
        %v623 = vpop.f32.mrf.mxu0
        %624 = vdwg.mxu0
        %v625 = vperm.slane %v411, 7
        %v626 = vmul.f32 %v622, %v625
        %v627 = vadd.f32 %v600, %v626
        %628 = vrot.lane.b32.xlu0 %v410, 123
        %v629 = vpop.permute.xlu0 %628
        %s630 = scalar_lea.vmem %s2, 32
        %v631 = vld [vmem:[%s630] sm:$0xf]
        %v632 = vpack.c.bf16 %v629, %v629
        %v634 = vsel %vm417, %v631, 0
        %v637 = vsel %vm421, %v632, 0
        %639 = vmatpush.bf16.msra.mxu0 0
        %640 = vmatpush.bf16.msra.mxu0 0
        %641 = vmatpush.bf16.msra.mxu0 0
        %642 = vmatpush.bf16.msra.mxu0 0
        %643 = vmatpush.bf16.msra.mxu0 0
        %644 = vmatpush.bf16.msra.mxu0 0
        %645 = vmatpush.bf16.msra.mxu0 0
        %646 = vmatpush.bf16.msra.mxu0 %v637
        %647 = vmatmul.bf16.gmra.mxu0 %v634
        %v648 = vpop.f32.mrf.mxu0
        %v649 = vadd.f32 0.0, %v648
        %v650 = vpop.f32.mrf.mxu0
        %651 = vdwg.mxu0
        %v652 = vperm.slane %v412, 0
        %v653 = vmul.f32 %v649, %v652
        %v654 = vadd.f32 %v627, %v653
        %v655 = vld [vmem:[%s6] sm:$0xff]
        %657 = vset.pattern.permute.xlu0 0
        %658 = vperm.xlu0 %657, %v655
        %v659 = vpop.permute.xlu0 %658
        %v661 = vmul.f32 %v654, %v659
        %662 = vset.pattern.permute.xlu0 1
        %663 = vperm.xlu0 %662, %v655
        %v664 = vpop.permute.xlu0 %663
        %v666 = vadd.f32 %v661, %v664
        %v667 = vmax.f32 %v666, 0.0
        %v668 = vpack.c.bf16 %v667, %v667
        %v669 = vld [vmem:[%s3] sm:$0xf]
        %v670 = vld [vmem:[%s3 + $0x4] sm:$0xf]
        %v671 = vld [vmem:[%s7] sm:$0xff]
        %v672 = vld [vmem:[%s7 + $0x8] sm:$0xff]
        %674 = vset.pattern.permute.xlu0 0
        %675 = vperm.xlu0 %674, %v671
        %v676 = vpop.permute.xlu0 %675
        %679 = vset.pattern.permute.xlu0 0
        %680 = vperm.xlu0 %679, %v672
        %v681 = vpop.permute.xlu0 %680
        %v685 = vunpack.c.l.b16 %v669
        %v686 = vunpack.c.l.b16 %v670
        %v687 = vpack.c.b16 %v686, %v685
        %v689 = vsel %vm417, %v687, 0
        %v692 = vsel %vm421, %v668, 0
        %694 = vmatpush.bf16.msra.mxu0 0
        %695 = vmatpush.bf16.msra.mxu0 0
        %696 = vmatpush.bf16.msra.mxu0 0
        %697 = vmatpush.bf16.msra.mxu0 0
        %698 = vmatpush.bf16.msra.mxu0 0
        %699 = vmatpush.bf16.msra.mxu0 0
        %700 = vmatpush.bf16.msra.mxu0 0
        %701 = vmatpush.bf16.msra.mxu0 %v692
        %702 = vmatmul.bf16.gmra.mxu0 %v689
        %v703 = vpop.f32.mrf.mxu0
        %v704 = vadd.f32 %v676, %v703
        %v705 = vpop.f32.mrf.mxu0
        %v706 = vadd.f32 %v681, %v705
        %707 = vdwg.mxu0
        %v708 = vadd.f32 %v704, %v353
        %v709 = vadd.f32 %v706, %v354
        %v710 = vpack.c.bf16 %v708, %v708
        %v711 = vpack.c.bf16 %v709, %v709
        %712 = vst [vmem:[%s347] sm:$0xf] %v710
        %713 = vst [vmem:[%s347 + $0x4] sm:$0xf] %v711
        %p714 = scmp.lt.s32.totalorder %s21, 1
        %s715 = scalar_select %p714, %s21, 1
        %s716 = smul.addr %s715, 2
        %s717 = smul.addr %s716, 4
        %s718 = scalar_lea.vmem %s9, %s717
        // Predicated region
        $region61: #{_lambda_.25} parent=55 // pred_check
          %p719 = pneg %p233
        $region62: #{_lambda_.25} parent=55 // pred_check_branch
          %721 = sbr.rel (%p719) target = $region64
        $region63: #{_lambda_.25} parent=55 // pred_region
          _
        $region64: #{_lambda_.25} parent=55 // pred_fallthru
          _
      $region56: #{_lambda_.25} parent=5 // pred_fallthru
        _
      %p722 = scmp.le.s32.totalorder 2, %s16
      // Predicated region
      $region65: #{_lambda_.25} parent=5 // pred_check
        %p723 = pneg %p722
      $region66: #{_lambda_.25} parent=5 // pred_check_branch
        %725 = sbr.rel (%p723) target = $region68
      $region67: #{_lambda_.25} parent=5 // pred_region
        %s726 = ssub.s32 %s16, 2
        // Predicated region
        $region69: #{_lambda_.25} parent=67 // pred_check
          %p727 = pneg %p239
        $region70: #{_lambda_.25} parent=67 // pred_check_branch
          %729 = sbr.rel (%p727) target = $region72
        $region71: #{_lambda_.25} parent=67 // pred_region
          %p730 = scmp.lt.s32.totalorder %s22, 1
          %s731 = scalar_select %p730, %s22, 1
          %s732 = smul.addr %s731, 2
          %s733 = smul.addr %s732, 4
          %s734 = scalar_lea.vmem %s9, %s733
        $region72: #{_lambda_.25} parent=67 // pred_fallthru
          _
      $region68: #{_lambda_.25} parent=5 // pred_fallthru
        _
    $region6: #{_lambda_.25} parent=1 // loop_footer
      %s20 = sadd.s32 1, %s16
    $region7: #{_lambda_.25} parent=1 // loop_footer_branch
      %15 = sbr.rel target = $region3
    $region8: #{_lambda_.25} parent=1 // loop_exit
      _
    %735 = vsyncpa [#allocation3], 1
    %s736 = scalar_lea.sflag [#allocation3], 1
    %737 = vsyncpa %s736, 1

// kernel: _lambda_.27
$region0: #{_lambda_.27}
  #allocation0 [shape = 'u32[]', space=smem, size = 0x4, offset = 0x4, fixed_abs, tag = 'smem constant byte address 0x4 - core index']
  #allocation1 [shape = 'u32[72,128]{1,0:T(1,128)}', space=vmem, size = 0x9000, scoped, tag = 'internal scratch']
  %s0 = inlined_call_operand.vmem [shape: bf16[2,16,128], index: 0, kind: input, shape index: {}]
  %s1 = inlined_call_operand.hbm [shape: bf16[8,16], index: 1, kind: input, shape index: {}]
  %s2 = inlined_call_operand.vmem [shape: bf16[9,8,8], index: 2, kind: input, shape index: {}]
  %s3 = inlined_call_operand.vmem [shape: bf16[16,8], index: 3, kind: input, shape index: {}]
  %s4 = inlined_call_operand.vmem [shape: f32[16,2], index: 4, kind: input, shape index: {}]
  %s5 = inlined_call_operand.vmem [shape: f32[8,2], index: 5, kind: input, shape index: {}]
  %s6 = inlined_call_operand.vmem [shape: f32[8,2], index: 6, kind: input, shape index: {}]
  %s7 = inlined_call_operand.vmem [shape: f32[16,1], index: 7, kind: input, shape index: {}]
  %s8 = inlined_call_operand.vmem [shape: f32[9,128], index: 8, kind: input, shape index: {}]
  %s9 = inlined_call_operand.vmem [shape: bf16[2,16,128], index: 9, kind: output, shape index: {}]
  %s10 = sld [smem:[#allocation0]]
  $region73: #{_lambda_.27} parent=0
    _
  %s12 = ssub.s32 1, %s10
  %s13 = scalar_select 0, %s12, %s10
  $region1: #{_lambda_.27} parent=0
    #allocation2 [shape = 'u8[2048]{0}', space=vmem, size = 0x800, scoped, tag = 'input window, operand 1, single buffered']
    #allocation3 [shape = 's32[2]{0}', space=sflag, size = 0x8, scoped, tag = 'scoped memory for _lambda_.27']
    %14 = vsyncpa [#allocation3], 0
    loop: start=0, step=1, limit=4
    $region2: #{_lambda_.27} parent=1 // loop_pre_header
      _
    $region3: #{_lambda_.27} parent=1 // loop_header
      %s16 = sphi 0, %s20
      %p17 = scmp.ge.s32.totalorder %s16, 4
      %s26 = sphi 0, %s28
      %s29 = sphi 0, %s26
      %s30 = sphi 0, %s29
      %s46 = sphi 0, %s30
      %s50 = sphi 0, %s50
      %s52 = sphi 0, %s50
      %s53 = sphi 0, %s52
      %s67 = sphi 0, %s53
      %s71 = sphi 0, %s71
      %s73 = sphi 0, %s71
      %s74 = sphi 0, %s73
      %s88 = sphi 0, %s74
      %s92 = sphi 0, %s92
      %s94 = sphi 0, %s92
      %s95 = sphi 0, %s94
      %s109 = sphi 0, %s95
      %s113 = sphi 0, %s113
      %s115 = sphi 0, %s113
      %s116 = sphi 0, %s115
      %s130 = sphi 0, %s116
      %s134 = sphi 0, %s134
      %s136 = sphi 0, %s134
      %s137 = sphi 0, %s136
      %s151 = sphi 0, %s137
      %s155 = sphi 0, %s155
      %s157 = sphi 0, %s155
      %s158 = sphi 0, %s157
      %s172 = sphi 0, %s158
      %s176 = sphi 0, %s176
      %s178 = sphi 0, %s176
      %s179 = sphi 0, %s178
      %s193 = sphi 0, %s179
      %s197 = sphi 0, %s197
      %s199 = sphi 0, %s197
      %s200 = sphi 0, %s199
      %s214 = sphi 0, %s200
      %s220 = sphi 0, %s222
      %s223 = sphi 0, %s220
      %s224 = sphi 0, %s223
      %s240 = sphi 0, %s224
    $region4: #{_lambda_.27} parent=1 // loop_header_branch
      %19 = sbr.rel (%p17) target = $region8
    $region5: #{_lambda_.27} parent=1 // loop_body
      %s21 = ssub.s32 %s16, 1
      %s22 = ssub.s32 %s16, 2
      %s23 = sadd.s32 %s16, 1
      %s24 = ssub.s32 %s16, %s23
      %p25 = scmp.eq.s32.totalorder %s24, 0
      %s27 = sadd.s32 %s26, 1
      %s28 = scalar_select %p25, %s26, %s27
      %p31 = pneg %p25
      %p32 = scmp.eq.s32.totalorder %s16, 1
      %p33 = por %p31, %p32
      %p34 = scmp.ne.s32.totalorder %s26, %s29
      %p35 = scmp.eq.s32.totalorder %s16, 0
      %p36 = por %p34, %p35
      %p37 = scmp.ne.s32.totalorder %s26, %s29
      %p38 = scmp.eq.s32.totalorder %s21, 1
      %p39 = por %p37, %p38
      %p40 = scmp.ne.s32.totalorder %s29, %s30
      %p41 = scmp.eq.s32.totalorder %s21, 0
      %p42 = por %p40, %p41
      %p43 = scmp.ne.s32.totalorder %s29, %s30
      %p44 = scmp.eq.s32.totalorder %s22, 1
      %p45 = por %p43, %p44
      %p47 = scmp.ne.s32.totalorder %s30, %s46
      %p48 = scmp.eq.s32.totalorder %s22, 0
      %p49 = por %p47, %p48
      %s51 = sadd.s32 %s50, 1
      %p54 = scmp.eq.s32.totalorder %s16, 1
      %p55 = scmp.ne.s32.totalorder %s50, %s52
      %p56 = scmp.eq.s32.totalorder %s16, 0
      %p57 = por %p55, %p56
      %p58 = scmp.ne.s32.totalorder %s50, %s52
      %p59 = scmp.eq.s32.totalorder %s21, 1
      %p60 = por %p58, %p59
      %p61 = scmp.ne.s32.totalorder %s52, %s53
      %p62 = scmp.eq.s32.totalorder %s21, 0
      %p63 = por %p61, %p62
      %p64 = scmp.ne.s32.totalorder %s52, %s53
      %p65 = scmp.eq.s32.totalorder %s22, 1
      %p66 = por %p64, %p65
      %p68 = scmp.ne.s32.totalorder %s53, %s67
      %p69 = scmp.eq.s32.totalorder %s22, 0
      %p70 = por %p68, %p69
      %s72 = sadd.s32 %s71, 1
      %p75 = scmp.eq.s32.totalorder %s16, 1
      %p76 = scmp.ne.s32.totalorder %s71, %s73
      %p77 = scmp.eq.s32.totalorder %s16, 0
      %p78 = por %p76, %p77
      %p79 = scmp.ne.s32.totalorder %s71, %s73
      %p80 = scmp.eq.s32.totalorder %s21, 1
      %p81 = por %p79, %p80
      %p82 = scmp.ne.s32.totalorder %s73, %s74
      %p83 = scmp.eq.s32.totalorder %s21, 0
      %p84 = por %p82, %p83
      %p85 = scmp.ne.s32.totalorder %s73, %s74
      %p86 = scmp.eq.s32.totalorder %s22, 1
      %p87 = por %p85, %p86
      %p89 = scmp.ne.s32.totalorder %s74, %s88
      %p90 = scmp.eq.s32.totalorder %s22, 0
      %p91 = por %p89, %p90
      %s93 = sadd.s32 %s92, 1
      %p96 = scmp.eq.s32.totalorder %s16, 1
      %p97 = scmp.ne.s32.totalorder %s92, %s94
      %p98 = scmp.eq.s32.totalorder %s16, 0
      %p99 = por %p97, %p98
      %p100 = scmp.ne.s32.totalorder %s92, %s94
      %p101 = scmp.eq.s32.totalorder %s21, 1
      %p102 = por %p100, %p101
      %p103 = scmp.ne.s32.totalorder %s94, %s95
      %p104 = scmp.eq.s32.totalorder %s21, 0
      %p105 = por %p103, %p104
      %p106 = scmp.ne.s32.totalorder %s94, %s95
      %p107 = scmp.eq.s32.totalorder %s22, 1
      %p108 = por %p106, %p107
      %p110 = scmp.ne.s32.totalorder %s95, %s109
      %p111 = scmp.eq.s32.totalorder %s22, 0
      %p112 = por %p110, %p111
      %s114 = sadd.s32 %s113, 1
      %p117 = scmp.eq.s32.totalorder %s16, 1
      %p118 = scmp.ne.s32.totalorder %s113, %s115
      %p119 = scmp.eq.s32.totalorder %s16, 0
      %p120 = por %p118, %p119
      %p121 = scmp.ne.s32.totalorder %s113, %s115
      %p122 = scmp.eq.s32.totalorder %s21, 1
      %p123 = por %p121, %p122
      %p124 = scmp.ne.s32.totalorder %s115, %s116
      %p125 = scmp.eq.s32.totalorder %s21, 0
      %p126 = por %p124, %p125
      %p127 = scmp.ne.s32.totalorder %s115, %s116
      %p128 = scmp.eq.s32.totalorder %s22, 1
      %p129 = por %p127, %p128
      %p131 = scmp.ne.s32.totalorder %s116, %s130
      %p132 = scmp.eq.s32.totalorder %s22, 0
      %p133 = por %p131, %p132
      %s135 = sadd.s32 %s134, 1
      %p138 = scmp.eq.s32.totalorder %s16, 1
      %p139 = scmp.ne.s32.totalorder %s134, %s136
      %p140 = scmp.eq.s32.totalorder %s16, 0
      %p141 = por %p139, %p140
      %p142 = scmp.ne.s32.totalorder %s134, %s136
      %p143 = scmp.eq.s32.totalorder %s21, 1
      %p144 = por %p142, %p143
      %p145 = scmp.ne.s32.totalorder %s136, %s137
      %p146 = scmp.eq.s32.totalorder %s21, 0
      %p147 = por %p145, %p146
      %p148 = scmp.ne.s32.totalorder %s136, %s137
      %p149 = scmp.eq.s32.totalorder %s22, 1
      %p150 = por %p148, %p149
      %p152 = scmp.ne.s32.totalorder %s137, %s151
      %p153 = scmp.eq.s32.totalorder %s22, 0
      %p154 = por %p152, %p153
      %s156 = sadd.s32 %s155, 1
      %p159 = scmp.eq.s32.totalorder %s16, 1
      %p160 = scmp.ne.s32.totalorder %s155, %s157
      %p161 = scmp.eq.s32.totalorder %s16, 0
      %p162 = por %p160, %p161
      %p163 = scmp.ne.s32.totalorder %s155, %s157
      %p164 = scmp.eq.s32.totalorder %s21, 1
      %p165 = por %p163, %p164
      %p166 = scmp.ne.s32.totalorder %s157, %s158
      %p167 = scmp.eq.s32.totalorder %s21, 0
      %p168 = por %p166, %p167
      %p169 = scmp.ne.s32.totalorder %s157, %s158
      %p170 = scmp.eq.s32.totalorder %s22, 1
      %p171 = por %p169, %p170
      %p173 = scmp.ne.s32.totalorder %s158, %s172
      %p174 = scmp.eq.s32.totalorder %s22, 0
      %p175 = por %p173, %p174
      %s177 = sadd.s32 %s176, 1
      %p180 = scmp.eq.s32.totalorder %s16, 1
      %p181 = scmp.ne.s32.totalorder %s176, %s178
      %p182 = scmp.eq.s32.totalorder %s16, 0
      %p183 = por %p181, %p182
      %p184 = scmp.ne.s32.totalorder %s176, %s178
      %p185 = scmp.eq.s32.totalorder %s21, 1
      %p186 = por %p184, %p185
      %p187 = scmp.ne.s32.totalorder %s178, %s179
      %p188 = scmp.eq.s32.totalorder %s21, 0
      %p189 = por %p187, %p188
      %p190 = scmp.ne.s32.totalorder %s178, %s179
      %p191 = scmp.eq.s32.totalorder %s22, 1
      %p192 = por %p190, %p191
      %p194 = scmp.ne.s32.totalorder %s179, %s193
      %p195 = scmp.eq.s32.totalorder %s22, 0
      %p196 = por %p194, %p195
      %s198 = sadd.s32 %s197, 1
      %p201 = scmp.eq.s32.totalorder %s16, 1
      %p202 = scmp.ne.s32.totalorder %s197, %s199
      %p203 = scmp.eq.s32.totalorder %s16, 0
      %p204 = por %p202, %p203
      %p205 = scmp.ne.s32.totalorder %s197, %s199
      %p206 = scmp.eq.s32.totalorder %s21, 1
      %p207 = por %p205, %p206
      %p208 = scmp.ne.s32.totalorder %s199, %s200
      %p209 = scmp.eq.s32.totalorder %s21, 0
      %p210 = por %p208, %p209
      %p211 = scmp.ne.s32.totalorder %s199, %s200
      %p212 = scmp.eq.s32.totalorder %s22, 1
      %p213 = por %p211, %p212
      %p215 = scmp.ne.s32.totalorder %s200, %s214
      %p216 = scmp.eq.s32.totalorder %s22, 0
      %p217 = por %p215, %p216
      %s218 = ssub.s32 %s16, %s23
      %p219 = scmp.eq.s32.totalorder %s218, 0
      %s221 = sadd.s32 %s220, 1
      %s222 = scalar_select %p219, %s220, %s221
      %p225 = pneg %p219
      %p226 = scmp.eq.s32.totalorder %s16, 1
      %p227 = por %p225, %p226
      %p228 = scmp.ne.s32.totalorder %s220, %s223
      %p229 = scmp.eq.s32.totalorder %s16, 0
      %p230 = por %p228, %p229
      %p231 = scmp.ne.s32.totalorder %s220, %s223
      %p232 = scmp.eq.s32.totalorder %s21, 1
      %p233 = por %p231, %p232
      %p234 = scmp.ne.s32.totalorder %s223, %s224
      %p235 = scmp.eq.s32.totalorder %s21, 0
      %p236 = por %p234, %p235
      %p237 = scmp.ne.s32.totalorder %s223, %s224
      %p238 = scmp.eq.s32.totalorder %s22, 1
      %p239 = por %p237, %p238
      %p241 = scmp.ne.s32.totalorder %s224, %s240
      %p242 = scmp.eq.s32.totalorder %s22, 0
      %p243 = por %p241, %p242
      %p244 = scmp.le.s32.totalorder 1, %s16
      %p245 = scmp.lt.s32.totalorder %s16, 3
      %p246 = pnand %p244, %p245
      %p247 = pneg %p246
      // Predicated region
      $region9: #{_lambda_.27} parent=5 // pred_check
        _
      $region10: #{_lambda_.27} parent=5 // pred_check_branch
        %249 = sbr.rel (%p246) target = $region12
      $region11: #{_lambda_.27} parent=5 // pred_region
        %s250 = ssub.s32 %s16, 1
        // Predicated region
        $region13: #{_lambda_.27} parent=11 // pred_check
          %p251 = pneg %p63
        $region14: #{_lambda_.27} parent=11 // pred_check_branch
          %253 = sbr.rel (%p251) target = $region16
        $region15: #{_lambda_.27} parent=11 // pred_region
          %255 = vsyncadd [#allocation3], 0
          %s257 = sshll.u32 %s1, 4
          %s258 = int_to_ptr.hbm [resolvable:$true] %s257
          %s259 = sshll.u32 [#allocation2], 4
          %s260 = int_to_ptr.vmem [resolvable:$true] %s259
          %262 = dma.hbm_to_vmem [thread:$0]  %s258, 64, %s260, [#allocation3]
        $region16: #{_lambda_.27} parent=11 // pred_fallthru
          _
        // Predicated region
        $region17: #{_lambda_.27} parent=11 // pred_check
          %p263 = pneg %p84
        $region18: #{_lambda_.27} parent=11 // pred_check_branch
          %265 = sbr.rel (%p263) target = $region20
        $region19: #{_lambda_.27} parent=11 // pred_region
          _
        $region20: #{_lambda_.27} parent=11 // pred_fallthru
          _
        // Predicated region
        $region21: #{_lambda_.27} parent=11 // pred_check
          %p266 = pneg %p105
        $region22: #{_lambda_.27} parent=11 // pred_check_branch
          %268 = sbr.rel (%p266) target = $region24
        $region23: #{_lambda_.27} parent=11 // pred_region
          _
        $region24: #{_lambda_.27} parent=11 // pred_fallthru
          _
        // Predicated region
        $region25: #{_lambda_.27} parent=11 // pred_check
          %p269 = pneg %p126
        $region26: #{_lambda_.27} parent=11 // pred_check_branch
          %271 = sbr.rel (%p269) target = $region28
        $region27: #{_lambda_.27} parent=11 // pred_region
          _
        $region28: #{_lambda_.27} parent=11 // pred_fallthru
          _
        // Predicated region
        $region29: #{_lambda_.27} parent=11 // pred_check
          %p272 = pneg %p147
        $region30: #{_lambda_.27} parent=11 // pred_check_branch
          %274 = sbr.rel (%p272) target = $region32
        $region31: #{_lambda_.27} parent=11 // pred_region
          _
        $region32: #{_lambda_.27} parent=11 // pred_fallthru
          _
        // Predicated region
        $region33: #{_lambda_.27} parent=11 // pred_check
          %p275 = pneg %p168
        $region34: #{_lambda_.27} parent=11 // pred_check_branch
          %277 = sbr.rel (%p275) target = $region36
        $region35: #{_lambda_.27} parent=11 // pred_region
          _
        $region36: #{_lambda_.27} parent=11 // pred_fallthru
          _
        // Predicated region
        $region37: #{_lambda_.27} parent=11 // pred_check
          %p278 = pneg %p189
        $region38: #{_lambda_.27} parent=11 // pred_check_branch
          %280 = sbr.rel (%p278) target = $region40
        $region39: #{_lambda_.27} parent=11 // pred_region
          _
        $region40: #{_lambda_.27} parent=11 // pred_fallthru
          _
        // Predicated region
        $region41: #{_lambda_.27} parent=11 // pred_check
          %p281 = pneg %p210
        $region42: #{_lambda_.27} parent=11 // pred_check_branch
          %283 = sbr.rel (%p281) target = $region44
        $region43: #{_lambda_.27} parent=11 // pred_region
          _
        $region44: #{_lambda_.27} parent=11 // pred_fallthru
          _
      $region12: #{_lambda_.27} parent=5 // pred_fallthru
        _
      %p284 = scmp.lt.s32.totalorder %s16, 2
      // Predicated region
      $region45: #{_lambda_.27} parent=5 // pred_check
        %p285 = pneg %p284
      $region46: #{_lambda_.27} parent=5 // pred_check_branch
        %287 = sbr.rel (%p285) target = $region48
      $region47: #{_lambda_.27} parent=5 // pred_region
        // Predicated region
        $region49: #{_lambda_.27} parent=47 // pred_check
          %p288 = pneg %p36
        $region50: #{_lambda_.27} parent=47 // pred_check_branch
          %290 = sbr.rel (%p288) target = $region52
        $region51: #{_lambda_.27} parent=47 // pred_region
          %p291 = scmp.lt.s32.totalorder %s16, 1
          %s292 = scalar_select %p291, %s16, 1
          %s293 = smul.addr %s292, 2
          %s294 = smul.addr %s293, 4
          %s295 = scalar_lea.vmem %s0, %s294
        $region52: #{_lambda_.27} parent=47 // pred_fallthru
          _
      $region48: #{_lambda_.27} parent=5 // pred_fallthru
        _
      %p296 = scmp.le.s32.totalorder 1, %s16
      %p297 = scmp.lt.s32.totalorder %s16, 3
      %p298 = pnand %p296, %p297
      %p299 = pneg %p298
      // Predicated region
      $region53: #{_lambda_.27} parent=5 // pred_check
        _
      $region54: #{_lambda_.27} parent=5 // pred_check_branch
        %301 = sbr.rel (%p298) target = $region56
      $region55: #{_lambda_.27} parent=5 // pred_region
        %s302 = ssub.s32 %s16, 1
        // Predicated region
        $region57: #{_lambda_.27} parent=55 // pred_check
          %p303 = pneg %p63
        $region58: #{_lambda_.27} parent=55 // pred_check_branch
          %305 = sbr.rel (%p303) target = $region60
        $region59: #{_lambda_.27} parent=55 // pred_region
          %307 = dma.done [#allocation3], 64
        $region60: #{_lambda_.27} parent=55 // pred_fallthru
          _
        %p308 = scmp.lt.s32.totalorder %s21, 1
        %s309 = scalar_select %p308, %s21, 1
        %s310 = smul.addr %s309, 2
        %s311 = smul.addr %s310, 4
        %s312 = scalar_lea.vmem %s0, %s311
        %p313 = pneg %p42
        %p314 = pneg %p39
        %p315 = pneg %p63
        %p316 = pneg %p60
        %p317 = pneg %p84
        %p318 = pneg %p81
        %p319 = pneg %p105
        %p320 = pneg %p102
        %p321 = pneg %p126
        %p322 = pneg %p123
        %p323 = pneg %p147
        %p324 = pneg %p144
        %p325 = pneg %p168
        %p326 = pneg %p165
        %p327 = pneg %p189
        %p328 = pneg %p186
        %p329 = pneg %p210
        %p330 = pneg %p207
        %p331 = pneg %p236
        %p332 = pneg %p233
        %p333 = scmp.lt.s32.totalorder %s21, 1
        %s334 = scalar_select %p333, %s21, 1
        %s335 = smul.addr %s334, 2
        %s336 = smul.addr %s335, 4
        %s337 = scalar_lea.vmem %s9, %s336
        %p338 = scmp.lt.s32.totalorder %s21, 1
        %s339 = scalar_select %p338, %s21, 1
        %s340 = smul.addr %s339, 2
        %s341 = smul.addr %s340, 4
        %s342 = scalar_lea.vmem %s0, %s341
        %p343 = scmp.lt.s32.totalorder %s21, 1
        %s344 = scalar_select %p343, %s21, 1
        %s345 = smul.addr %s344, 2
        %s346 = smul.addr %s345, 4
        %s347 = scalar_lea.vmem %s9, %s346
        %v349 = vld [vmem:[%s342] sm:$0xf]
        %v350 = vld [vmem:[%s342 + $0x4] sm:$0xf]
        %v351 = vld [vmem:[%s4] sm:$0xff]
        %v352 = vld [vmem:[%s4 + $0x8] sm:$0xff]
        %v353 = vunpack.c.l.bf16 %v349
        %v354 = vunpack.c.l.bf16 %v350
        %356 = vset.pattern.permute.xlu0 0
        %357 = vperm.xlu0 %356, %v351
        %v358 = vpop.permute.xlu0 %357
        %361 = vset.pattern.permute.xlu0 0
        %362 = vperm.xlu0 %361, %v352
        %v363 = vpop.permute.xlu0 %362
        %v365 = vmul.f32 %v353, %v358
        %v366 = vmul.f32 %v354, %v363
        %367 = vset.pattern.permute.xlu0 1
        %368 = vperm.xlu0 %367, %v351
        %v369 = vpop.permute.xlu0 %368
        %371 = vset.pattern.permute.xlu0 1
        %372 = vperm.xlu0 %371, %v352
        %v373 = vpop.permute.xlu0 %372
        %v375 = vadd.f32 %v365, %v369
        %v376 = vadd.f32 %v366, %v373
        %v377 = vmax.f32 %v375, 0.0
        %v378 = vmax.f32 %v376, 0.0
        %v379 = vpack.c.bf16 %v378, %v377
        %v380 = vld [vmem:[#allocation2] sm:$0xf]
        %vm381 = vcmask 130048
        %v383 = vsel %vm381, %v380, 0
        %385 = vmatpush.bf16.msra.mxu0 0
        %386 = vmatpush.bf16.msra.mxu0 0
        %387 = vmatpush.bf16.msra.mxu0 0
        %388 = vmatpush.bf16.msra.mxu0 0
        %389 = vmatpush.bf16.msra.mxu0 0
        %390 = vmatpush.bf16.msra.mxu0 0
        %391 = vmatpush.bf16.msra.mxu0 0
        %392 = vmatpush.bf16.msra.mxu0 %v379
        %393 = vmatmul.bf16.gmra.mxu0 %v383
        %v394 = vpop.f32.mrf.mxu0
        %v395 = vadd.f32 0.0, %v394
        %v396 = vpop.f32.mrf.mxu0
        %397 = vdwg.mxu0
        %v398 = vld [vmem:[%s5] sm:$0xff]
        %400 = vset.pattern.permute.xlu0 0
        %401 = vperm.xlu0 %400, %v398
        %v402 = vpop.permute.xlu0 %401
        %v404 = vmul.f32 %v395, %v402
        %405 = vset.pattern.permute.xlu0 1
        %406 = vperm.xlu0 %405, %v398
        %v407 = vpop.permute.xlu0 %406
        %v409 = vadd.f32 %v404, %v407
        %v410 = vmax.f32 %v409, 0.0
        %v411 = vld [vmem:[%s8] sm:$0xff]
        %v412 = vld [vmem:[%s8 + $0x8] sm:$0x1]
        %413 = vrot.lane.b32.xlu0 %v410, 3
        %v414 = vpop.permute.xlu0 %413
        %v415 = vld [vmem:[%s2] sm:$0xf]
        %v416 = vpack.c.bf16 %v414, %v414
        %vm417 = vcmask 64512
        %v419 = vsel %vm417, %v415, 0
        %vm421 = vcmask 1043456
        %v423 = vsel %vm421, %v416, 0
        %425 = vmatpush.bf16.msra.mxu0 0
        %426 = vmatpush.bf16.msra.mxu0 0
        %427 = vmatpush.bf16.msra.mxu0 0
        %428 = vmatpush.bf16.msra.mxu0 0
        %429 = vmatpush.bf16.msra.mxu0 0
        %430 = vmatpush.bf16.msra.mxu0 0
        %431 = vmatpush.bf16.msra.mxu0 0
        %432 = vmatpush.bf16.msra.mxu0 %v423
        %433 = vmatmul.bf16.gmra.mxu0 %v419
        %v434 = vpop.f32.mrf.mxu0
        %v435 = vadd.f32 0.0, %v434
        %v436 = vpop.f32.mrf.mxu0
        %437 = vdwg.mxu0
        %v438 = vperm.slane %v411, 0
        %v439 = vmul.f32 %v435, %v438
        %v440 = vadd.f32 %v439, 0.0
        %441 = vrot.lane.b32.xlu0 %v410, 2
        %v442 = vpop.permute.xlu0 %441
        %s443 = scalar_lea.vmem %s2, 4
        %v444 = vld [vmem:[%s443] sm:$0xf]
        %v445 = vpack.c.bf16 %v442, %v442
        %v447 = vsel %vm417, %v444, 0
        %v450 = vsel %vm421, %v445, 0
        %452 = vmatpush.bf16.msra.mxu0 0
        %453 = vmatpush.bf16.msra.mxu0 0
        %454 = vmatpush.bf16.msra.mxu0 0
        %455 = vmatpush.bf16.msra.mxu0 0
        %456 = vmatpush.bf16.msra.mxu0 0
        %457 = vmatpush.bf16.msra.mxu0 0
        %458 = vmatpush.bf16.msra.mxu0 0
        %459 = vmatpush.bf16.msra.mxu0 %v450
        %460 = vmatmul.bf16.gmra.mxu0 %v447
        %v461 = vpop.f32.mrf.mxu0
        %v462 = vadd.f32 0.0, %v461
        %v463 = vpop.f32.mrf.mxu0
        %464 = vdwg.mxu0
        %v465 = vperm.slane %v411, 1
        %v466 = vmul.f32 %v462, %v465
        %v467 = vadd.f32 %v440, %v466
        %468 = vrot.lane.b32.xlu0 %v410, 1
        %v469 = vpop.permute.xlu0 %468
        %s470 = scalar_lea.vmem %s2, 8
        %v471 = vld [vmem:[%s470] sm:$0xf]
        %v472 = vpack.c.bf16 %v469, %v469
        %v474 = vsel %vm417, %v471, 0
        %v477 = vsel %vm421, %v472, 0
        %479 = vmatpush.bf16.msra.mxu0 0
        %480 = vmatpush.bf16.msra.mxu0 0
        %481 = vmatpush.bf16.msra.mxu0 0
        %482 = vmatpush.bf16.msra.mxu0 0
        %483 = vmatpush.bf16.msra.mxu0 0
        %484 = vmatpush.bf16.msra.mxu0 0
        %485 = vmatpush.bf16.msra.mxu0 0
        %486 = vmatpush.bf16.msra.mxu0 %v477
        %487 = vmatmul.bf16.gmra.mxu0 %v474
        %v488 = vpop.f32.mrf.mxu0
        %v489 = vadd.f32 0.0, %v488
        %v490 = vpop.f32.mrf.mxu0
        %491 = vdwg.mxu0
        %v492 = vperm.slane %v411, 2
        %v493 = vmul.f32 %v489, %v492
        %v494 = vadd.f32 %v467, %v493
        %s495 = scalar_lea.vmem %s2, 12
        %v496 = vld [vmem:[%s495] sm:$0xf]
        %v498 = vsel %vm417, %v496, 0
        %500 = vmatpush.bf16.msra.mxu0 0
        %501 = vmatpush.bf16.msra.mxu0 0
        %502 = vmatpush.bf16.msra.mxu0 0
        %503 = vmatpush.bf16.msra.mxu0 0
        %504 = vmatpush.bf16.msra.mxu0 0
        %505 = vmatpush.bf16.msra.mxu0 0
        %506 = vmatpush.bf16.msra.mxu0 0
        %507 = vmatpush.bf16.msra.mxu0 %v477
        %508 = vmatmul.bf16.gmra.mxu0 %v498
        %v509 = vpop.f32.mrf.mxu0
        %v510 = vadd.f32 0.0, %v509
        %v511 = vpop.f32.mrf.mxu0
        %512 = vdwg.mxu0
        %v513 = vperm.slane %v411, 3
        %v514 = vmul.f32 %v510, %v513
        %v515 = vadd.f32 %v494, %v514
        %s516 = scalar_lea.vmem %s2, 16
        %v517 = vld [vmem:[%s516] sm:$0xf]
        %v518 = vpack.c.bf16 %v410, %v410
        %v520 = vsel %vm417, %v517, 0
        %v523 = vsel %vm421, %v518, 0
        %525 = vmatpush.bf16.msra.mxu0 0
        %526 = vmatpush.bf16.msra.mxu0 0
        %527 = vmatpush.bf16.msra.mxu0 0
        %528 = vmatpush.bf16.msra.mxu0 0
        %529 = vmatpush.bf16.msra.mxu0 0
        %530 = vmatpush.bf16.msra.mxu0 0
        %531 = vmatpush.bf16.msra.mxu0 0
        %532 = vmatpush.bf16.msra.mxu0 %v523
        %533 = vmatmul.bf16.gmra.mxu0 %v520
        %v534 = vpop.f32.mrf.mxu0
        %v535 = vadd.f32 0.0, %v534
        %v536 = vpop.f32.mrf.mxu0
        %537 = vdwg.mxu0
        %v538 = vperm.slane %v411, 4
        %v539 = vmul.f32 %v535, %v538
        %v540 = vadd.f32 %v515, %v539
        %541 = vrot.lane.b32.xlu0 %v410, 127
        %v542 = vpop.permute.xlu0 %541
        %s543 = scalar_lea.vmem %s2, 20
        %v544 = vld [vmem:[%s543] sm:$0xf]
        %v545 = vpack.c.bf16 %v542, %v542
        %v547 = vsel %vm417, %v544, 0
        %v550 = vsel %vm421, %v545, 0
        %552 = vmatpush.bf16.msra.mxu0 0
        %553 = vmatpush.bf16.msra.mxu0 0
        %554 = vmatpush.bf16.msra.mxu0 0
        %555 = vmatpush.bf16.msra.mxu0 0
        %556 = vmatpush.bf16.msra.mxu0 0
        %557 = vmatpush.bf16.msra.mxu0 0
        %558 = vmatpush.bf16.msra.mxu0 0
        %559 = vmatpush.bf16.msra.mxu0 %v550
        %560 = vmatmul.bf16.gmra.mxu0 %v547
        %v561 = vpop.f32.mrf.mxu0
        %v562 = vadd.f32 0.0, %v561
        %v563 = vpop.f32.mrf.mxu0
        %564 = vdwg.mxu0
        %v565 = vperm.slane %v411, 5
        %v566 = vmul.f32 %v562, %v565
        %v567 = vadd.f32 %v540, %v566
        %s568 = scalar_lea.vmem %s2, 24
        %v569 = vld [vmem:[%s568] sm:$0xf]
        %v571 = vsel %vm417, %v569, 0
        %573 = vmatpush.bf16.msra.mxu0 0
        %574 = vmatpush.bf16.msra.mxu0 0
        %575 = vmatpush.bf16.msra.mxu0 0
        %576 = vmatpush.bf16.msra.mxu0 0
        %577 = vmatpush.bf16.msra.mxu0 0
        %578 = vmatpush.bf16.msra.mxu0 0
        %579 = vmatpush.bf16.msra.mxu0 0
        %580 = vmatpush.bf16.msra.mxu0 %v550
        %581 = vmatmul.bf16.gmra.mxu0 %v571
        %v582 = vpop.f32.mrf.mxu0
        %v583 = vadd.f32 0.0, %v582
        %v584 = vpop.f32.mrf.mxu0
        %585 = vdwg.mxu0
        %v586 = vperm.slane %v411, 6
        %v587 = vmul.f32 %v583, %v586
        %v588 = vadd.f32 %v567, %v587
        %589 = vrot.lane.b32.xlu0 %v410, 126
        %v590 = vpop.permute.xlu0 %589
        %s591 = scalar_lea.vmem %s2, 28
        %v592 = vld [vmem:[%s591] sm:$0xf]
        %v593 = vpack.c.bf16 %v590, %v590
        %v595 = vsel %vm417, %v592, 0
        %v598 = vsel %vm421, %v593, 0
        %600 = vmatpush.bf16.msra.mxu0 0
        %601 = vmatpush.bf16.msra.mxu0 0
        %602 = vmatpush.bf16.msra.mxu0 0
        %603 = vmatpush.bf16.msra.mxu0 0
        %604 = vmatpush.bf16.msra.mxu0 0
        %605 = vmatpush.bf16.msra.mxu0 0
        %606 = vmatpush.bf16.msra.mxu0 0
        %607 = vmatpush.bf16.msra.mxu0 %v598
        %608 = vmatmul.bf16.gmra.mxu0 %v595
        %v609 = vpop.f32.mrf.mxu0
        %v610 = vadd.f32 0.0, %v609
        %v611 = vpop.f32.mrf.mxu0
        %612 = vdwg.mxu0
        %v613 = vperm.slane %v411, 7
        %v614 = vmul.f32 %v610, %v613
        %v615 = vadd.f32 %v588, %v614
        %616 = vrot.lane.b32.xlu0 %v410, 125
        %v617 = vpop.permute.xlu0 %616
        %s618 = scalar_lea.vmem %s2, 32
        %v619 = vld [vmem:[%s618] sm:$0xf]
        %v620 = vpack.c.bf16 %v617, %v617
        %v622 = vsel %vm417, %v619, 0
        %v625 = vsel %vm421, %v620, 0
        %627 = vmatpush.bf16.msra.mxu0 0
        %628 = vmatpush.bf16.msra.mxu0 0
        %629 = vmatpush.bf16.msra.mxu0 0
        %630 = vmatpush.bf16.msra.mxu0 0
        %631 = vmatpush.bf16.msra.mxu0 0
        %632 = vmatpush.bf16.msra.mxu0 0
        %633 = vmatpush.bf16.msra.mxu0 0
        %634 = vmatpush.bf16.msra.mxu0 %v625
        %635 = vmatmul.bf16.gmra.mxu0 %v622
        %v636 = vpop.f32.mrf.mxu0
        %v637 = vadd.f32 0.0, %v636
        %v638 = vpop.f32.mrf.mxu0
        %639 = vdwg.mxu0
        %v640 = vperm.slane %v412, 0
        %v641 = vmul.f32 %v637, %v640
        %v642 = vadd.f32 %v615, %v641
        %v643 = vld [vmem:[%s6] sm:$0xff]
        %645 = vset.pattern.permute.xlu0 0
        %646 = vperm.xlu0 %645, %v643
        %v647 = vpop.permute.xlu0 %646
        %v649 = vmul.f32 %v642, %v647
        %650 = vset.pattern.permute.xlu0 1
        %651 = vperm.xlu0 %650, %v643
        %v652 = vpop.permute.xlu0 %651
        %v654 = vadd.f32 %v649, %v652
        %v655 = vmax.f32 %v654, 0.0
        %v656 = vpack.c.bf16 %v655, %v655
        %v657 = vld [vmem:[%s3] sm:$0xf]
        %v658 = vld [vmem:[%s3 + $0x4] sm:$0xf]
        %v659 = vld [vmem:[%s7] sm:$0xff]
        %v660 = vld [vmem:[%s7 + $0x8] sm:$0xff]
        %662 = vset.pattern.permute.xlu0 0
        %663 = vperm.xlu0 %662, %v659
        %v664 = vpop.permute.xlu0 %663
        %667 = vset.pattern.permute.xlu0 0
        %668 = vperm.xlu0 %667, %v660
        %v669 = vpop.permute.xlu0 %668
        %v673 = vunpack.c.l.b16 %v657
        %v674 = vunpack.c.l.b16 %v658
        %v675 = vpack.c.b16 %v674, %v673
        %v677 = vsel %vm417, %v675, 0
        %v680 = vsel %vm421, %v656, 0
        %682 = vmatpush.bf16.msra.mxu0 0
        %683 = vmatpush.bf16.msra.mxu0 0
        %684 = vmatpush.bf16.msra.mxu0 0
        %685 = vmatpush.bf16.msra.mxu0 0
        %686 = vmatpush.bf16.msra.mxu0 0
        %687 = vmatpush.bf16.msra.mxu0 0
        %688 = vmatpush.bf16.msra.mxu0 0
        %689 = vmatpush.bf16.msra.mxu0 %v680
        %690 = vmatmul.bf16.gmra.mxu0 %v677
        %v691 = vpop.f32.mrf.mxu0
        %v692 = vadd.f32 %v664, %v691
        %v693 = vpop.f32.mrf.mxu0
        %v694 = vadd.f32 %v669, %v693
        %695 = vdwg.mxu0
        %v696 = vadd.f32 %v692, %v353
        %v697 = vadd.f32 %v694, %v354
        %v698 = vpack.c.bf16 %v696, %v696
        %v699 = vpack.c.bf16 %v697, %v697
        %700 = vst [vmem:[%s347] sm:$0xf] %v698
        %701 = vst [vmem:[%s347 + $0x4] sm:$0xf] %v699
        %p702 = scmp.lt.s32.totalorder %s21, 1
        %s703 = scalar_select %p702, %s21, 1
        %s704 = smul.addr %s703, 2
        %s705 = smul.addr %s704, 4
        %s706 = scalar_lea.vmem %s9, %s705
        // Predicated region
        $region61: #{_lambda_.27} parent=55 // pred_check
          %p707 = pneg %p233
        $region62: #{_lambda_.27} parent=55 // pred_check_branch
          %709 = sbr.rel (%p707) target = $region64
        $region63: #{_lambda_.27} parent=55 // pred_region
          _
        $region64: #{_lambda_.27} parent=55 // pred_fallthru
          _
      $region56: #{_lambda_.27} parent=5 // pred_fallthru
        _
      %p710 = scmp.le.s32.totalorder 2, %s16
      // Predicated region
      $region65: #{_lambda_.27} parent=5 // pred_check
        %p711 = pneg %p710
      $region66: #{_lambda_.27} parent=5 // pred_check_branch
        %713 = sbr.rel (%p711) target = $region68
      $region67: #{_lambda_.27} parent=5 // pred_region
        %s714 = ssub.s32 %s16, 2
        // Predicated region
        $region69: #{_lambda_.27} parent=67 // pred_check
          %p715 = pneg %p239
        $region70: #{_lambda_.27} parent=67 // pred_check_branch
          %717 = sbr.rel (%p715) target = $region72
        $region71: #{_lambda_.27} parent=67 // pred_region
          %p718 = scmp.lt.s32.totalorder %s22, 1
          %s719 = scalar_select %p718, %s22, 1
          %s720 = smul.addr %s719, 2
          %s721 = smul.addr %s720, 4
          %s722 = scalar_lea.vmem %s9, %s721
        $region72: #{_lambda_.27} parent=67 // pred_fallthru
          _
      $region68: #{_lambda_.27} parent=5 // pred_fallthru
        _
    $region6: #{_lambda_.27} parent=1 // loop_footer
      %s20 = sadd.s32 1, %s16
    $region7: #{_lambda_.27} parent=1 // loop_footer_branch
      %15 = sbr.rel target = $region3
    $region8: #{_lambda_.27} parent=1 // loop_exit
      _
    %723 = vsyncpa [#allocation3], 1
    %s724 = scalar_lea.sflag [#allocation3], 1
    %725 = vsyncpa %s724, 1

// kernel: _lambda_.26
$region0: #{_lambda_.26}
  #allocation0 [shape = 'u32[]', space=smem, size = 0x4, offset = 0x4, fixed_abs, tag = 'smem constant byte address 0x4 - core index']
  #allocation1 [shape = 'u32[72,128]{1,0:T(1,128)}', space=vmem, size = 0x9000, scoped, tag = 'internal scratch']
  %s0 = inlined_call_operand.vmem [shape: bf16[2,16,128], index: 0, kind: input, shape index: {}]
  %s1 = inlined_call_operand.vmem [shape: bf16[8,16], index: 1, kind: input, shape index: {}]
  %s2 = inlined_call_operand.vmem [shape: bf16[9,8,8], index: 2, kind: input, shape index: {}]
  %s3 = inlined_call_operand.vmem [shape: bf16[16,8], index: 3, kind: input, shape index: {}]
  %s4 = inlined_call_operand.vmem [shape: f32[16,2], index: 4, kind: input, shape index: {}]
  %s5 = inlined_call_operand.vmem [shape: f32[8,2], index: 5, kind: input, shape index: {}]
  %s6 = inlined_call_operand.vmem [shape: f32[8,2], index: 6, kind: input, shape index: {}]
  %s7 = inlined_call_operand.vmem [shape: f32[16,1], index: 7, kind: input, shape index: {}]
  %s8 = inlined_call_operand.vmem [shape: f32[9,128], index: 8, kind: input, shape index: {}]
  %s9 = inlined_call_operand.vmem [shape: bf16[2,16,128], index: 9, kind: output, shape index: {}]
  %s10 = sld [smem:[#allocation0]]
  $region69: #{_lambda_.26} parent=0
    _
  %s12 = ssub.s32 1, %s10
  %s13 = scalar_select 0, %s12, %s10
  loop: start=0, step=1, limit=4
  $region2: #{_lambda_.26} parent=0 // loop_pre_header
    _
  $region3: #{_lambda_.26} parent=0 // loop_header
    %s15 = sphi 0, %s19
    %p16 = scmp.ge.s32.totalorder %s15, 4
    %s25 = sphi 0, %s27
    %s28 = sphi 0, %s25
    %s29 = sphi 0, %s28
    %s45 = sphi 0, %s29
    %s49 = sphi 0, %s49
    %s51 = sphi 0, %s49
    %s52 = sphi 0, %s51
    %s66 = sphi 0, %s52
    %s70 = sphi 0, %s70
    %s72 = sphi 0, %s70
    %s73 = sphi 0, %s72
    %s87 = sphi 0, %s73
    %s91 = sphi 0, %s91
    %s93 = sphi 0, %s91
    %s94 = sphi 0, %s93
    %s108 = sphi 0, %s94
    %s112 = sphi 0, %s112
    %s114 = sphi 0, %s112
    %s115 = sphi 0, %s114
    %s129 = sphi 0, %s115
    %s133 = sphi 0, %s133
    %s135 = sphi 0, %s133
    %s136 = sphi 0, %s135
    %s150 = sphi 0, %s136
    %s154 = sphi 0, %s154
    %s156 = sphi 0, %s154
    %s157 = sphi 0, %s156
    %s171 = sphi 0, %s157
    %s175 = sphi 0, %s175
    %s177 = sphi 0, %s175
    %s178 = sphi 0, %s177
    %s192 = sphi 0, %s178
    %s196 = sphi 0, %s196
    %s198 = sphi 0, %s196
    %s199 = sphi 0, %s198
    %s213 = sphi 0, %s199
    %s219 = sphi 0, %s221
    %s222 = sphi 0, %s219
    %s223 = sphi 0, %s222
    %s239 = sphi 0, %s223
  $region4: #{_lambda_.26} parent=0 // loop_header_branch
    %18 = sbr.rel (%p16) target = $region8
  $region5: #{_lambda_.26} parent=0 // loop_body
    %s20 = ssub.s32 %s15, 1
    %s21 = ssub.s32 %s15, 2
    %s22 = sadd.s32 %s15, 1
    %s23 = ssub.s32 %s15, %s22
    %p24 = scmp.eq.s32.totalorder %s23, 0
    %s26 = sadd.s32 %s25, 1
    %s27 = scalar_select %p24, %s25, %s26
    %p30 = pneg %p24
    %p31 = scmp.eq.s32.totalorder %s15, 1
    %p32 = por %p30, %p31
    %p33 = scmp.ne.s32.totalorder %s25, %s28
    %p34 = scmp.eq.s32.totalorder %s15, 0
    %p35 = por %p33, %p34
    %p36 = scmp.ne.s32.totalorder %s25, %s28
    %p37 = scmp.eq.s32.totalorder %s20, 1
    %p38 = por %p36, %p37
    %p39 = scmp.ne.s32.totalorder %s28, %s29
    %p40 = scmp.eq.s32.totalorder %s20, 0
    %p41 = por %p39, %p40
    %p42 = scmp.ne.s32.totalorder %s28, %s29
    %p43 = scmp.eq.s32.totalorder %s21, 1
    %p44 = por %p42, %p43
    %p46 = scmp.ne.s32.totalorder %s29, %s45
    %p47 = scmp.eq.s32.totalorder %s21, 0
    %p48 = por %p46, %p47
    %s50 = sadd.s32 %s49, 1
    %p53 = scmp.eq.s32.totalorder %s15, 1
    %p54 = scmp.ne.s32.totalorder %s49, %s51
    %p55 = scmp.eq.s32.totalorder %s15, 0
    %p56 = por %p54, %p55
    %p57 = scmp.ne.s32.totalorder %s49, %s51
    %p58 = scmp.eq.s32.totalorder %s20, 1
    %p59 = por %p57, %p58
    %p60 = scmp.ne.s32.totalorder %s51, %s52
    %p61 = scmp.eq.s32.totalorder %s20, 0
    %p62 = por %p60, %p61
    %p63 = scmp.ne.s32.totalorder %s51, %s52
    %p64 = scmp.eq.s32.totalorder %s21, 1
    %p65 = por %p63, %p64
    %p67 = scmp.ne.s32.totalorder %s52, %s66
    %p68 = scmp.eq.s32.totalorder %s21, 0
    %p69 = por %p67, %p68
    %s71 = sadd.s32 %s70, 1
    %p74 = scmp.eq.s32.totalorder %s15, 1
    %p75 = scmp.ne.s32.totalorder %s70, %s72
    %p76 = scmp.eq.s32.totalorder %s15, 0
    %p77 = por %p75, %p76
    %p78 = scmp.ne.s32.totalorder %s70, %s72
    %p79 = scmp.eq.s32.totalorder %s20, 1
    %p80 = por %p78, %p79
    %p81 = scmp.ne.s32.totalorder %s72, %s73
    %p82 = scmp.eq.s32.totalorder %s20, 0
    %p83 = por %p81, %p82
    %p84 = scmp.ne.s32.totalorder %s72, %s73
    %p85 = scmp.eq.s32.totalorder %s21, 1
    %p86 = por %p84, %p85
    %p88 = scmp.ne.s32.totalorder %s73, %s87
    %p89 = scmp.eq.s32.totalorder %s21, 0
    %p90 = por %p88, %p89
    %s92 = sadd.s32 %s91, 1
    %p95 = scmp.eq.s32.totalorder %s15, 1
    %p96 = scmp.ne.s32.totalorder %s91, %s93
    %p97 = scmp.eq.s32.totalorder %s15, 0
    %p98 = por %p96, %p97
    %p99 = scmp.ne.s32.totalorder %s91, %s93
    %p100 = scmp.eq.s32.totalorder %s20, 1
    %p101 = por %p99, %p100
    %p102 = scmp.ne.s32.totalorder %s93, %s94
    %p103 = scmp.eq.s32.totalorder %s20, 0
    %p104 = por %p102, %p103
    %p105 = scmp.ne.s32.totalorder %s93, %s94
    %p106 = scmp.eq.s32.totalorder %s21, 1
    %p107 = por %p105, %p106
    %p109 = scmp.ne.s32.totalorder %s94, %s108
    %p110 = scmp.eq.s32.totalorder %s21, 0
    %p111 = por %p109, %p110
    %s113 = sadd.s32 %s112, 1
    %p116 = scmp.eq.s32.totalorder %s15, 1
    %p117 = scmp.ne.s32.totalorder %s112, %s114
    %p118 = scmp.eq.s32.totalorder %s15, 0
    %p119 = por %p117, %p118
    %p120 = scmp.ne.s32.totalorder %s112, %s114
    %p121 = scmp.eq.s32.totalorder %s20, 1
    %p122 = por %p120, %p121
    %p123 = scmp.ne.s32.totalorder %s114, %s115
    %p124 = scmp.eq.s32.totalorder %s20, 0
    %p125 = por %p123, %p124
    %p126 = scmp.ne.s32.totalorder %s114, %s115
    %p127 = scmp.eq.s32.totalorder %s21, 1
    %p128 = por %p126, %p127
    %p130 = scmp.ne.s32.totalorder %s115, %s129
    %p131 = scmp.eq.s32.totalorder %s21, 0
    %p132 = por %p130, %p131
    %s134 = sadd.s32 %s133, 1
    %p137 = scmp.eq.s32.totalorder %s15, 1
    %p138 = scmp.ne.s32.totalorder %s133, %s135
    %p139 = scmp.eq.s32.totalorder %s15, 0
    %p140 = por %p138, %p139
    %p141 = scmp.ne.s32.totalorder %s133, %s135
    %p142 = scmp.eq.s32.totalorder %s20, 1
    %p143 = por %p141, %p142
    %p144 = scmp.ne.s32.totalorder %s135, %s136
    %p145 = scmp.eq.s32.totalorder %s20, 0
    %p146 = por %p144, %p145
    %p147 = scmp.ne.s32.totalorder %s135, %s136
    %p148 = scmp.eq.s32.totalorder %s21, 1
    %p149 = por %p147, %p148
    %p151 = scmp.ne.s32.totalorder %s136, %s150
    %p152 = scmp.eq.s32.totalorder %s21, 0
    %p153 = por %p151, %p152
    %s155 = sadd.s32 %s154, 1
    %p158 = scmp.eq.s32.totalorder %s15, 1
    %p159 = scmp.ne.s32.totalorder %s154, %s156
    %p160 = scmp.eq.s32.totalorder %s15, 0
    %p161 = por %p159, %p160
    %p162 = scmp.ne.s32.totalorder %s154, %s156
    %p163 = scmp.eq.s32.totalorder %s20, 1
    %p164 = por %p162, %p163
    %p165 = scmp.ne.s32.totalorder %s156, %s157
    %p166 = scmp.eq.s32.totalorder %s20, 0
    %p167 = por %p165, %p166
    %p168 = scmp.ne.s32.totalorder %s156, %s157
    %p169 = scmp.eq.s32.totalorder %s21, 1
    %p170 = por %p168, %p169
    %p172 = scmp.ne.s32.totalorder %s157, %s171
    %p173 = scmp.eq.s32.totalorder %s21, 0
    %p174 = por %p172, %p173
    %s176 = sadd.s32 %s175, 1
    %p179 = scmp.eq.s32.totalorder %s15, 1
    %p180 = scmp.ne.s32.totalorder %s175, %s177
    %p181 = scmp.eq.s32.totalorder %s15, 0
    %p182 = por %p180, %p181
    %p183 = scmp.ne.s32.totalorder %s175, %s177
    %p184 = scmp.eq.s32.totalorder %s20, 1
    %p185 = por %p183, %p184
    %p186 = scmp.ne.s32.totalorder %s177, %s178
    %p187 = scmp.eq.s32.totalorder %s20, 0
    %p188 = por %p186, %p187
    %p189 = scmp.ne.s32.totalorder %s177, %s178
    %p190 = scmp.eq.s32.totalorder %s21, 1
    %p191 = por %p189, %p190
    %p193 = scmp.ne.s32.totalorder %s178, %s192
    %p194 = scmp.eq.s32.totalorder %s21, 0
    %p195 = por %p193, %p194
    %s197 = sadd.s32 %s196, 1
    %p200 = scmp.eq.s32.totalorder %s15, 1
    %p201 = scmp.ne.s32.totalorder %s196, %s198
    %p202 = scmp.eq.s32.totalorder %s15, 0
    %p203 = por %p201, %p202
    %p204 = scmp.ne.s32.totalorder %s196, %s198
    %p205 = scmp.eq.s32.totalorder %s20, 1
    %p206 = por %p204, %p205
    %p207 = scmp.ne.s32.totalorder %s198, %s199
    %p208 = scmp.eq.s32.totalorder %s20, 0
    %p209 = por %p207, %p208
    %p210 = scmp.ne.s32.totalorder %s198, %s199
    %p211 = scmp.eq.s32.totalorder %s21, 1
    %p212 = por %p210, %p211
    %p214 = scmp.ne.s32.totalorder %s199, %s213
    %p215 = scmp.eq.s32.totalorder %s21, 0
    %p216 = por %p214, %p215
    %s217 = ssub.s32 %s15, %s22
    %p218 = scmp.eq.s32.totalorder %s217, 0
    %s220 = sadd.s32 %s219, 1
    %s221 = scalar_select %p218, %s219, %s220
    %p224 = pneg %p218
    %p225 = scmp.eq.s32.totalorder %s15, 1
    %p226 = por %p224, %p225
    %p227 = scmp.ne.s32.totalorder %s219, %s222
    %p228 = scmp.eq.s32.totalorder %s15, 0
    %p229 = por %p227, %p228
    %p230 = scmp.ne.s32.totalorder %s219, %s222
    %p231 = scmp.eq.s32.totalorder %s20, 1
    %p232 = por %p230, %p231
    %p233 = scmp.ne.s32.totalorder %s222, %s223
    %p234 = scmp.eq.s32.totalorder %s20, 0
    %p235 = por %p233, %p234
    %p236 = scmp.ne.s32.totalorder %s222, %s223
    %p237 = scmp.eq.s32.totalorder %s21, 1
    %p238 = por %p236, %p237
    %p240 = scmp.ne.s32.totalorder %s223, %s239
    %p241 = scmp.eq.s32.totalorder %s21, 0
    %p242 = por %p240, %p241
    %p243 = scmp.le.s32.totalorder 1, %s15
    %p244 = scmp.lt.s32.totalorder %s15, 3
    %p245 = pnand %p243, %p244
    %p246 = pneg %p245
    // Predicated region
    $region9: #{_lambda_.26} parent=5 // pred_check
      _
    $region10: #{_lambda_.26} parent=5 // pred_check_branch
      %248 = sbr.rel (%p245) target = $region12
    $region11: #{_lambda_.26} parent=5 // pred_region
      %s249 = ssub.s32 %s15, 1
      // Predicated region
      $region13: #{_lambda_.26} parent=11 // pred_check
        %p250 = pneg %p62
      $region14: #{_lambda_.26} parent=11 // pred_check_branch
        %252 = sbr.rel (%p250) target = $region16
      $region15: #{_lambda_.26} parent=11 // pred_region
        _
      $region16: #{_lambda_.26} parent=11 // pred_fallthru
        _
      // Predicated region
      $region17: #{_lambda_.26} parent=11 // pred_check
        %p253 = pneg %p83
      $region18: #{_lambda_.26} parent=11 // pred_check_branch
        %255 = sbr.rel (%p253) target = $region20
      $region19: #{_lambda_.26} parent=11 // pred_region
        _
      $region20: #{_lambda_.26} parent=11 // pred_fallthru
        _
      // Predicated region
      $region21: #{_lambda_.26} parent=11 // pred_check
        %p256 = pneg %p104
      $region22: #{_lambda_.26} parent=11 // pred_check_branch
        %258 = sbr.rel (%p256) target = $region24
      $region23: #{_lambda_.26} parent=11 // pred_region
        _
      $region24: #{_lambda_.26} parent=11 // pred_fallthru
        _
      // Predicated region
      $region25: #{_lambda_.26} parent=11 // pred_check
        %p259 = pneg %p125
      $region26: #{_lambda_.26} parent=11 // pred_check_branch
        %261 = sbr.rel (%p259) target = $region28
      $region27: #{_lambda_.26} parent=11 // pred_region
        _
      $region28: #{_lambda_.26} parent=11 // pred_fallthru
        _
      // Predicated region
      $region29: #{_lambda_.26} parent=11 // pred_check
        %p262 = pneg %p146
      $region30: #{_lambda_.26} parent=11 // pred_check_branch
        %264 = sbr.rel (%p262) target = $region32
      $region31: #{_lambda_.26} parent=11 // pred_region
        _
      $region32: #{_lambda_.26} parent=11 // pred_fallthru
        _
      // Predicated region
      $region33: #{_lambda_.26} parent=11 // pred_check
        %p265 = pneg %p167
      $region34: #{_lambda_.26} parent=11 // pred_check_branch
        %267 = sbr.rel (%p265) target = $region36
      $region35: #{_lambda_.26} parent=11 // pred_region
        _
      $region36: #{_lambda_.26} parent=11 // pred_fallthru
        _
      // Predicated region
      $region37: #{_lambda_.26} parent=11 // pred_check
        %p268 = pneg %p188
      $region38: #{_lambda_.26} parent=11 // pred_check_branch
        %270 = sbr.rel (%p268) target = $region40
      $region39: #{_lambda_.26} parent=11 // pred_region
        _
      $region40: #{_lambda_.26} parent=11 // pred_fallthru
        _
      // Predicated region
      $region41: #{_lambda_.26} parent=11 // pred_check
        %p271 = pneg %p209
      $region42: #{_lambda_.26} parent=11 // pred_check_branch
        %273 = sbr.rel (%p271) target = $region44
      $region43: #{_lambda_.26} parent=11 // pred_region
        _
      $region44: #{_lambda_.26} parent=11 // pred_fallthru
        _
    $region12: #{_lambda_.26} parent=5 // pred_fallthru
      _
    %p274 = scmp.lt.s32.totalorder %s15, 2
    // Predicated region
    $region45: #{_lambda_.26} parent=5 // pred_check
      %p275 = pneg %p274
    $region46: #{_lambda_.26} parent=5 // pred_check_branch
      %277 = sbr.rel (%p275) target = $region48
    $region47: #{_lambda_.26} parent=5 // pred_region
      // Predicated region
      $region49: #{_lambda_.26} parent=47 // pred_check
        %p278 = pneg %p35
      $region50: #{_lambda_.26} parent=47 // pred_check_branch
        %280 = sbr.rel (%p278) target = $region52
      $region51: #{_lambda_.26} parent=47 // pred_region
        %p281 = scmp.lt.s32.totalorder %s15, 1
        %s282 = scalar_select %p281, %s15, 1
        %s283 = smul.addr %s282, 2
        %s284 = smul.addr %s283, 4
        %s285 = scalar_lea.vmem %s0, %s284
      $region52: #{_lambda_.26} parent=47 // pred_fallthru
        _
    $region48: #{_lambda_.26} parent=5 // pred_fallthru
      _
    %p286 = scmp.le.s32.totalorder 1, %s15
    %p287 = scmp.lt.s32.totalorder %s15, 3
    %p288 = pnand %p286, %p287
    %p289 = pneg %p288
    // Predicated region
    $region53: #{_lambda_.26} parent=5 // pred_check
      _
    $region54: #{_lambda_.26} parent=5 // pred_check_branch
      %291 = sbr.rel (%p288) target = $region56
    $region55: #{_lambda_.26} parent=5 // pred_region
      %s292 = ssub.s32 %s15, 1
      %p293 = scmp.lt.s32.totalorder %s20, 1
      %s294 = scalar_select %p293, %s20, 1
      %s295 = smul.addr %s294, 2
      %s296 = smul.addr %s295, 4
      %s297 = scalar_lea.vmem %s0, %s296
      %p298 = pneg %p41
      %p299 = pneg %p38
      %p300 = pneg %p62
      %p301 = pneg %p59
      %p302 = pneg %p83
      %p303 = pneg %p80
      %p304 = pneg %p104
      %p305 = pneg %p101
      %p306 = pneg %p125
      %p307 = pneg %p122
      %p308 = pneg %p146
      %p309 = pneg %p143
      %p310 = pneg %p167
      %p311 = pneg %p164
      %p312 = pneg %p188
      %p313 = pneg %p185
      %p314 = pneg %p209
      %p315 = pneg %p206
      %p316 = pneg %p235
      %p317 = pneg %p232
      %p318 = scmp.lt.s32.totalorder %s20, 1
      %s319 = scalar_select %p318, %s20, 1
      %s320 = smul.addr %s319, 2
      %s321 = smul.addr %s320, 4
      %s322 = scalar_lea.vmem %s9, %s321
      %p323 = scmp.lt.s32.totalorder %s20, 1
      %s324 = scalar_select %p323, %s20, 1
      %s325 = smul.addr %s324, 2
      %s326 = smul.addr %s325, 4
      %s327 = scalar_lea.vmem %s0, %s326
      %p328 = scmp.lt.s32.totalorder %s20, 1
      %s329 = scalar_select %p328, %s20, 1
      %s330 = smul.addr %s329, 2
      %s331 = smul.addr %s330, 4
      %s332 = scalar_lea.vmem %s9, %s331
      %v334 = vld [vmem:[%s327] sm:$0xf]
      %v335 = vld [vmem:[%s327 + $0x4] sm:$0xf]
      %v336 = vld [vmem:[%s4] sm:$0xff]
      %v337 = vld [vmem:[%s4 + $0x8] sm:$0xff]
      %v338 = vunpack.c.l.bf16 %v334
      %v339 = vunpack.c.l.bf16 %v335
      %341 = vset.pattern.permute.xlu0 0
      %342 = vperm.xlu0 %341, %v336
      %v343 = vpop.permute.xlu0 %342
      %346 = vset.pattern.permute.xlu0 0
      %347 = vperm.xlu0 %346, %v337
      %v348 = vpop.permute.xlu0 %347
      %v350 = vmul.f32 %v338, %v343
      %v351 = vmul.f32 %v339, %v348
      %352 = vset.pattern.permute.xlu0 1
      %353 = vperm.xlu0 %352, %v336
      %v354 = vpop.permute.xlu0 %353
      %356 = vset.pattern.permute.xlu0 1
      %357 = vperm.xlu0 %356, %v337
      %v358 = vpop.permute.xlu0 %357
      %v360 = vadd.f32 %v350, %v354
      %v361 = vadd.f32 %v351, %v358
      %v362 = vmax.f32 %v360, 0.0
      %v363 = vmax.f32 %v361, 0.0
      %v364 = vpack.c.bf16 %v363, %v362
      %v365 = vld [vmem:[%s1] sm:$0xf]
      %vm366 = vcmask 130048
      %v368 = vsel %vm366, %v365, 0
      %370 = vmatpush.bf16.msra.mxu0 0
      %371 = vmatpush.bf16.msra.mxu0 0
      %372 = vmatpush.bf16.msra.mxu0 0
      %373 = vmatpush.bf16.msra.mxu0 0
      %374 = vmatpush.bf16.msra.mxu0 0
      %375 = vmatpush.bf16.msra.mxu0 0
      %376 = vmatpush.bf16.msra.mxu0 0
      %377 = vmatpush.bf16.msra.mxu0 %v364
      %378 = vmatmul.bf16.gmra.mxu0 %v368
      %v379 = vpop.f32.mrf.mxu0
      %v380 = vadd.f32 0.0, %v379
      %v381 = vpop.f32.mrf.mxu0
      %382 = vdwg.mxu0
      %v383 = vld [vmem:[%s5] sm:$0xff]
      %385 = vset.pattern.permute.xlu0 0
      %386 = vperm.xlu0 %385, %v383
      %v387 = vpop.permute.xlu0 %386
      %v389 = vmul.f32 %v380, %v387
      %390 = vset.pattern.permute.xlu0 1
      %391 = vperm.xlu0 %390, %v383
      %v392 = vpop.permute.xlu0 %391
      %v394 = vadd.f32 %v389, %v392
      %v395 = vmax.f32 %v394, 0.0
      %v396 = vld [vmem:[%s8] sm:$0xff]
      %v397 = vld [vmem:[%s8 + $0x8] sm:$0x1]
      %398 = vrot.lane.b32.xlu0 %v395, 5
      %v399 = vpop.permute.xlu0 %398
      %v400 = vld [vmem:[%s2] sm:$0xf]
      %v401 = vpack.c.bf16 %v399, %v399
      %vm402 = vcmask 64512
      %v404 = vsel %vm402, %v400, 0
      %vm406 = vcmask 1043456
      %v408 = vsel %vm406, %v401, 0
      %410 = vmatpush.bf16.msra.mxu0 0
      %411 = vmatpush.bf16.msra.mxu0 0
      %412 = vmatpush.bf16.msra.mxu0 0
      %413 = vmatpush.bf16.msra.mxu0 0
      %414 = vmatpush.bf16.msra.mxu0 0
      %415 = vmatpush.bf16.msra.mxu0 0
      %416 = vmatpush.bf16.msra.mxu0 0
      %417 = vmatpush.bf16.msra.mxu0 %v408
      %418 = vmatmul.bf16.gmra.mxu0 %v404
      %v419 = vpop.f32.mrf.mxu0
      %v420 = vadd.f32 0.0, %v419
      %v421 = vpop.f32.mrf.mxu0
      %422 = vdwg.mxu0
      %v423 = vperm.slane %v396, 0
      %v424 = vmul.f32 %v420, %v423
      %v425 = vadd.f32 %v424, 0.0
      %426 = vrot.lane.b32.xlu0 %v395, 4
      %v427 = vpop.permute.xlu0 %426
      %s428 = scalar_lea.vmem %s2, 4
      %v429 = vld [vmem:[%s428] sm:$0xf]
      %v430 = vpack.c.bf16 %v427, %v427
      %v432 = vsel %vm402, %v429, 0
      %v435 = vsel %vm406, %v430, 0
      %437 = vmatpush.bf16.msra.mxu0 0
      %438 = vmatpush.bf16.msra.mxu0 0
      %439 = vmatpush.bf16.msra.mxu0 0
      %440 = vmatpush.bf16.msra.mxu0 0
      %441 = vmatpush.bf16.msra.mxu0 0
      %442 = vmatpush.bf16.msra.mxu0 0
      %443 = vmatpush.bf16.msra.mxu0 0
      %444 = vmatpush.bf16.msra.mxu0 %v435
      %445 = vmatmul.bf16.gmra.mxu0 %v432
      %v446 = vpop.f32.mrf.mxu0
      %v447 = vadd.f32 0.0, %v446
      %v448 = vpop.f32.mrf.mxu0
      %449 = vdwg.mxu0
      %v450 = vperm.slane %v396, 1
      %v451 = vmul.f32 %v447, %v450
      %v452 = vadd.f32 %v425, %v451
      %453 = vrot.lane.b32.xlu0 %v395, 3
      %v454 = vpop.permute.xlu0 %453
      %s455 = scalar_lea.vmem %s2, 8
      %v456 = vld [vmem:[%s455] sm:$0xf]
      %v457 = vpack.c.bf16 %v454, %v454
      %v459 = vsel %vm402, %v456, 0
      %v462 = vsel %vm406, %v457, 0
      %464 = vmatpush.bf16.msra.mxu0 0
      %465 = vmatpush.bf16.msra.mxu0 0
      %466 = vmatpush.bf16.msra.mxu0 0
      %467 = vmatpush.bf16.msra.mxu0 0
      %468 = vmatpush.bf16.msra.mxu0 0
      %469 = vmatpush.bf16.msra.mxu0 0
      %470 = vmatpush.bf16.msra.mxu0 0
      %471 = vmatpush.bf16.msra.mxu0 %v462
      %472 = vmatmul.bf16.gmra.mxu0 %v459
      %v473 = vpop.f32.mrf.mxu0
      %v474 = vadd.f32 0.0, %v473
      %v475 = vpop.f32.mrf.mxu0
      %476 = vdwg.mxu0
      %v477 = vperm.slane %v396, 2
      %v478 = vmul.f32 %v474, %v477
      %v479 = vadd.f32 %v452, %v478
      %480 = vrot.lane.b32.xlu0 %v395, 1
      %v481 = vpop.permute.xlu0 %480
      %s482 = scalar_lea.vmem %s2, 12
      %v483 = vld [vmem:[%s482] sm:$0xf]
      %v484 = vpack.c.bf16 %v481, %v481
      %v486 = vsel %vm402, %v483, 0
      %v489 = vsel %vm406, %v484, 0
      %491 = vmatpush.bf16.msra.mxu0 0
      %492 = vmatpush.bf16.msra.mxu0 0
      %493 = vmatpush.bf16.msra.mxu0 0
      %494 = vmatpush.bf16.msra.mxu0 0
      %495 = vmatpush.bf16.msra.mxu0 0
      %496 = vmatpush.bf16.msra.mxu0 0
      %497 = vmatpush.bf16.msra.mxu0 0
      %498 = vmatpush.bf16.msra.mxu0 %v489
      %499 = vmatmul.bf16.gmra.mxu0 %v486
      %v500 = vpop.f32.mrf.mxu0
      %v501 = vadd.f32 0.0, %v500
      %v502 = vpop.f32.mrf.mxu0
      %503 = vdwg.mxu0
      %v504 = vperm.slane %v396, 3
      %v505 = vmul.f32 %v501, %v504
      %v506 = vadd.f32 %v479, %v505
      %s507 = scalar_lea.vmem %s2, 16
      %v508 = vld [vmem:[%s507] sm:$0xf]
      %v509 = vpack.c.bf16 %v395, %v395
      %v511 = vsel %vm402, %v508, 0
      %v514 = vsel %vm406, %v509, 0
      %516 = vmatpush.bf16.msra.mxu0 0
      %517 = vmatpush.bf16.msra.mxu0 0
      %518 = vmatpush.bf16.msra.mxu0 0
      %519 = vmatpush.bf16.msra.mxu0 0
      %520 = vmatpush.bf16.msra.mxu0 0
      %521 = vmatpush.bf16.msra.mxu0 0
      %522 = vmatpush.bf16.msra.mxu0 0
      %523 = vmatpush.bf16.msra.mxu0 %v514
      %524 = vmatmul.bf16.gmra.mxu0 %v511
      %v525 = vpop.f32.mrf.mxu0
      %v526 = vadd.f32 0.0, %v525
      %v527 = vpop.f32.mrf.mxu0
      %528 = vdwg.mxu0
      %v529 = vperm.slane %v396, 4
      %v530 = vmul.f32 %v526, %v529
      %v531 = vadd.f32 %v506, %v530
      %532 = vrot.lane.b32.xlu0 %v395, 127
      %v533 = vpop.permute.xlu0 %532
      %s534 = scalar_lea.vmem %s2, 20
      %v535 = vld [vmem:[%s534] sm:$0xf]
      %v536 = vpack.c.bf16 %v533, %v533
      %v538 = vsel %vm402, %v535, 0
      %v541 = vsel %vm406, %v536, 0
      %543 = vmatpush.bf16.msra.mxu0 0
      %544 = vmatpush.bf16.msra.mxu0 0
      %545 = vmatpush.bf16.msra.mxu0 0
      %546 = vmatpush.bf16.msra.mxu0 0
      %547 = vmatpush.bf16.msra.mxu0 0
      %548 = vmatpush.bf16.msra.mxu0 0
      %549 = vmatpush.bf16.msra.mxu0 0
      %550 = vmatpush.bf16.msra.mxu0 %v541
      %551 = vmatmul.bf16.gmra.mxu0 %v538
      %v552 = vpop.f32.mrf.mxu0
      %v553 = vadd.f32 0.0, %v552
      %v554 = vpop.f32.mrf.mxu0
      %555 = vdwg.mxu0
      %v556 = vperm.slane %v396, 5
      %v557 = vmul.f32 %v553, %v556
      %v558 = vadd.f32 %v531, %v557
      %559 = vrot.lane.b32.xlu0 %v395, 125
      %v560 = vpop.permute.xlu0 %559
      %s561 = scalar_lea.vmem %s2, 24
      %v562 = vld [vmem:[%s561] sm:$0xf]
      %v563 = vpack.c.bf16 %v560, %v560
      %v565 = vsel %vm402, %v562, 0
      %v568 = vsel %vm406, %v563, 0
      %570 = vmatpush.bf16.msra.mxu0 0
      %571 = vmatpush.bf16.msra.mxu0 0
      %572 = vmatpush.bf16.msra.mxu0 0
      %573 = vmatpush.bf16.msra.mxu0 0
      %574 = vmatpush.bf16.msra.mxu0 0
      %575 = vmatpush.bf16.msra.mxu0 0
      %576 = vmatpush.bf16.msra.mxu0 0
      %577 = vmatpush.bf16.msra.mxu0 %v568
      %578 = vmatmul.bf16.gmra.mxu0 %v565
      %v579 = vpop.f32.mrf.mxu0
      %v580 = vadd.f32 0.0, %v579
      %v581 = vpop.f32.mrf.mxu0
      %582 = vdwg.mxu0
      %v583 = vperm.slane %v396, 6
      %v584 = vmul.f32 %v580, %v583
      %v585 = vadd.f32 %v558, %v584
      %586 = vrot.lane.b32.xlu0 %v395, 124
      %v587 = vpop.permute.xlu0 %586
      %s588 = scalar_lea.vmem %s2, 28
      %v589 = vld [vmem:[%s588] sm:$0xf]
      %v590 = vpack.c.bf16 %v587, %v587
      %v592 = vsel %vm402, %v589, 0
      %v595 = vsel %vm406, %v590, 0
      %597 = vmatpush.bf16.msra.mxu0 0
      %598 = vmatpush.bf16.msra.mxu0 0
      %599 = vmatpush.bf16.msra.mxu0 0
      %600 = vmatpush.bf16.msra.mxu0 0
      %601 = vmatpush.bf16.msra.mxu0 0
      %602 = vmatpush.bf16.msra.mxu0 0
      %603 = vmatpush.bf16.msra.mxu0 0
      %604 = vmatpush.bf16.msra.mxu0 %v595
      %605 = vmatmul.bf16.gmra.mxu0 %v592
      %v606 = vpop.f32.mrf.mxu0
      %v607 = vadd.f32 0.0, %v606
      %v608 = vpop.f32.mrf.mxu0
      %609 = vdwg.mxu0
      %v610 = vperm.slane %v396, 7
      %v611 = vmul.f32 %v607, %v610
      %v612 = vadd.f32 %v585, %v611
      %613 = vrot.lane.b32.xlu0 %v395, 123
      %v614 = vpop.permute.xlu0 %613
      %s615 = scalar_lea.vmem %s2, 32
      %v616 = vld [vmem:[%s615] sm:$0xf]
      %v617 = vpack.c.bf16 %v614, %v614
      %v619 = vsel %vm402, %v616, 0
      %v622 = vsel %vm406, %v617, 0
      %624 = vmatpush.bf16.msra.mxu0 0
      %625 = vmatpush.bf16.msra.mxu0 0
      %626 = vmatpush.bf16.msra.mxu0 0
      %627 = vmatpush.bf16.msra.mxu0 0
      %628 = vmatpush.bf16.msra.mxu0 0
      %629 = vmatpush.bf16.msra.mxu0 0
      %630 = vmatpush.bf16.msra.mxu0 0
      %631 = vmatpush.bf16.msra.mxu0 %v622
      %632 = vmatmul.bf16.gmra.mxu0 %v619
      %v633 = vpop.f32.mrf.mxu0
      %v634 = vadd.f32 0.0, %v633
      %v635 = vpop.f32.mrf.mxu0
      %636 = vdwg.mxu0
      %v637 = vperm.slane %v397, 0
      %v638 = vmul.f32 %v634, %v637
      %v639 = vadd.f32 %v612, %v638
      %v640 = vld [vmem:[%s6] sm:$0xff]
      %642 = vset.pattern.permute.xlu0 0
      %643 = vperm.xlu0 %642, %v640
      %v644 = vpop.permute.xlu0 %643
      %v646 = vmul.f32 %v639, %v644
      %647 = vset.pattern.permute.xlu0 1
      %648 = vperm.xlu0 %647, %v640
      %v649 = vpop.permute.xlu0 %648
      %v651 = vadd.f32 %v646, %v649
      %v652 = vmax.f32 %v651, 0.0
      %v653 = vpack.c.bf16 %v652, %v652
      %v654 = vld [vmem:[%s3] sm:$0xf]
      %v655 = vld [vmem:[%s3 + $0x4] sm:$0xf]
      %v656 = vld [vmem:[%s7] sm:$0xff]
      %v657 = vld [vmem:[%s7 + $0x8] sm:$0xff]
      %659 = vset.pattern.permute.xlu0 0
      %660 = vperm.xlu0 %659, %v656
      %v661 = vpop.permute.xlu0 %660
      %664 = vset.pattern.permute.xlu0 0
      %665 = vperm.xlu0 %664, %v657
      %v666 = vpop.permute.xlu0 %665
      %v670 = vunpack.c.l.b16 %v654
      %v671 = vunpack.c.l.b16 %v655
      %v672 = vpack.c.b16 %v671, %v670
      %v674 = vsel %vm402, %v672, 0
      %v677 = vsel %vm406, %v653, 0
      %679 = vmatpush.bf16.msra.mxu0 0
      %680 = vmatpush.bf16.msra.mxu0 0
      %681 = vmatpush.bf16.msra.mxu0 0
      %682 = vmatpush.bf16.msra.mxu0 0
      %683 = vmatpush.bf16.msra.mxu0 0
      %684 = vmatpush.bf16.msra.mxu0 0
      %685 = vmatpush.bf16.msra.mxu0 0
      %686 = vmatpush.bf16.msra.mxu0 %v677
      %687 = vmatmul.bf16.gmra.mxu0 %v674
      %v688 = vpop.f32.mrf.mxu0
      %v689 = vadd.f32 %v661, %v688
      %v690 = vpop.f32.mrf.mxu0
      %v691 = vadd.f32 %v666, %v690
      %692 = vdwg.mxu0
      %v693 = vadd.f32 %v689, %v338
      %v694 = vadd.f32 %v691, %v339
      %v695 = vpack.c.bf16 %v693, %v693
      %v696 = vpack.c.bf16 %v694, %v694
      %697 = vst [vmem:[%s332] sm:$0xf] %v695
      %698 = vst [vmem:[%s332 + $0x4] sm:$0xf] %v696
      %p699 = scmp.lt.s32.totalorder %s20, 1
      %s700 = scalar_select %p699, %s20, 1
      %s701 = smul.addr %s700, 2
      %s702 = smul.addr %s701, 4
      %s703 = scalar_lea.vmem %s9, %s702
      // Predicated region
      $region57: #{_lambda_.26} parent=55 // pred_check
        %p704 = pneg %p232
      $region58: #{_lambda_.26} parent=55 // pred_check_branch
        %706 = sbr.rel (%p704) target = $region60
      $region59: #{_lambda_.26} parent=55 // pred_region
        _
      $region60: #{_lambda_.26} parent=55 // pred_fallthru
        _
    $region56: #{_lambda_.26} parent=5 // pred_fallthru
      _
    %p707 = scmp.le.s32.totalorder 2, %s15
    // Predicated region
    $region61: #{_lambda_.26} parent=5 // pred_check
      %p708 = pneg %p707
    $region62: #{_lambda_.26} parent=5 // pred_check_branch
      %710 = sbr.rel (%p708) target = $region64
    $region63: #{_lambda_.26} parent=5 // pred_region
      %s711 = ssub.s32 %s15, 2
      // Predicated region
      $region65: #{_lambda_.26} parent=63 // pred_check
        %p712 = pneg %p238
      $region66: #{_lambda_.26} parent=63 // pred_check_branch
        %714 = sbr.rel (%p712) target = $region68
      $region67: #{_lambda_.26} parent=63 // pred_region
        %p715 = scmp.lt.s32.totalorder %s21, 1
        %s716 = scalar_select %p715, %s21, 1
        %s717 = smul.addr %s716, 2
        %s718 = smul.addr %s717, 4
        %s719 = scalar_lea.vmem %s9, %s718
      $region68: #{_lambda_.26} parent=63 // pred_fallthru
        _
    $region64: #{_lambda_.26} parent=5 // pred_fallthru
      _
  $region6: #{_lambda_.26} parent=0 // loop_footer
    %s19 = sadd.s32 1, %s15
  $region7: #{_lambda_.26} parent=0 // loop_footer_branch
    %14 = sbr.rel target = $region3
  $region8: #{_lambda_.26} parent=0 // loop_exit
    _

// kernel: _lambda_.32
$region0: #{_lambda_.32}
  #allocation0 [shape = 'u32[]', space=smem, size = 0x4, offset = 0x4, fixed_abs, tag = 'smem constant byte address 0x4 - core index']
  #allocation1 [shape = 'u32[72,128]{1,0:T(1,128)}', space=vmem, size = 0x9000, scoped, tag = 'internal scratch']
  %s0 = inlined_call_operand.vmem [shape: bf16[2,16,64], index: 0, kind: input, shape index: {}]
  %s1 = inlined_call_operand.vmem [shape: bf16[2,16,64], index: 1, kind: input, shape index: {}]
  %s2 = inlined_call_operand.vmem [shape: bf16[16,16], index: 2, kind: input, shape index: {}]
  %s3 = inlined_call_operand.vmem [shape: f32[16,2], index: 3, kind: input, shape index: {}]
  %s4 = inlined_call_operand.vmem [shape: bf16[5,16], index: 4, kind: input, shape index: {}]
  %s5 = inlined_call_operand.vmem [shape: f32[5,1], index: 5, kind: input, shape index: {}]
  %s6 = inlined_call_operand.vmem [shape: bf16[16,16], index: 6, kind: input, shape index: {}]
  %s7 = inlined_call_operand.vmem [shape: f32[16,1], index: 7, kind: input, shape index: {}]
  %s8 = inlined_call_operand.vmem [shape: bf16[16,5], index: 8, kind: input, shape index: {}]
  %s9 = inlined_call_operand.vmem [shape: f32[16,1], index: 9, kind: input, shape index: {}]
  %s10 = inlined_call_operand.vmem [shape: f32[2,5,64], index: 10, kind: output, shape index: {0}]
  %s11 = inlined_call_operand.vmem [shape: bf16[2,16,64], index: 11, kind: output, shape index: {1}]
  %12 = xla_tuple %s10, %s11
  %s13 = sld [smem:[#allocation0]]
  $region81: #{_lambda_.32} parent=0
    _
  %s15 = ssub.s32 1, %s13
  %s16 = scalar_select 0, %s15, %s13
  loop: start=0, step=1, limit=4
  $region2: #{_lambda_.32} parent=0 // loop_pre_header
    _
  $region3: #{_lambda_.32} parent=0 // loop_header
    %s18 = sphi 0, %s22
    %p19 = scmp.ge.s32.totalorder %s18, 4
    %s28 = sphi 0, %s30
    %s31 = sphi 0, %s28
    %s32 = sphi 0, %s31
    %s48 = sphi 0, %s32
    %s54 = sphi 0, %s56
    %s57 = sphi 0, %s54
    %s58 = sphi 0, %s57
    %s74 = sphi 0, %s58
    %s78 = sphi 0, %s78
    %s80 = sphi 0, %s78
    %s81 = sphi 0, %s80
    %s95 = sphi 0, %s81
    %s99 = sphi 0, %s99
    %s101 = sphi 0, %s99
    %s102 = sphi 0, %s101
    %s116 = sphi 0, %s102
    %s120 = sphi 0, %s120
    %s122 = sphi 0, %s120
    %s123 = sphi 0, %s122
    %s137 = sphi 0, %s123
    %s141 = sphi 0, %s141
    %s143 = sphi 0, %s141
    %s144 = sphi 0, %s143
    %s158 = sphi 0, %s144
    %s162 = sphi 0, %s162
    %s164 = sphi 0, %s162
    %s165 = sphi 0, %s164
    %s179 = sphi 0, %s165
    %s183 = sphi 0, %s183
    %s185 = sphi 0, %s183
    %s186 = sphi 0, %s185
    %s200 = sphi 0, %s186
    %s204 = sphi 0, %s204
    %s206 = sphi 0, %s204
    %s207 = sphi 0, %s206
    %s221 = sphi 0, %s207
    %s225 = sphi 0, %s225
    %s227 = sphi 0, %s225
    %s228 = sphi 0, %s227
    %s242 = sphi 0, %s228
    %s248 = sphi 0, %s250
    %s251 = sphi 0, %s248
    %s252 = sphi 0, %s251
    %s268 = sphi 0, %s252
    %s274 = sphi 0, %s276
    %s277 = sphi 0, %s274
    %s278 = sphi 0, %s277
    %s294 = sphi 0, %s278
  $region4: #{_lambda_.32} parent=0 // loop_header_branch
    %21 = sbr.rel (%p19) target = $region8
  $region5: #{_lambda_.32} parent=0 // loop_body
    %s23 = ssub.s32 %s18, 1
    %s24 = ssub.s32 %s18, 2
    %s25 = sadd.s32 %s18, 1
    %s26 = ssub.s32 %s18, %s25
    %p27 = scmp.eq.s32.totalorder %s26, 0
    %s29 = sadd.s32 %s28, 1
    %s30 = scalar_select %p27, %s28, %s29
    %p33 = pneg %p27
    %p34 = scmp.eq.s32.totalorder %s18, 1
    %p35 = por %p33, %p34
    %p36 = scmp.ne.s32.totalorder %s28, %s31
    %p37 = scmp.eq.s32.totalorder %s18, 0
    %p38 = por %p36, %p37
    %p39 = scmp.ne.s32.totalorder %s28, %s31
    %p40 = scmp.eq.s32.totalorder %s23, 1
    %p41 = por %p39, %p40
    %p42 = scmp.ne.s32.totalorder %s31, %s32
    %p43 = scmp.eq.s32.totalorder %s23, 0
    %p44 = por %p42, %p43
    %p45 = scmp.ne.s32.totalorder %s31, %s32
    %p46 = scmp.eq.s32.totalorder %s24, 1
    %p47 = por %p45, %p46
    %p49 = scmp.ne.s32.totalorder %s32, %s48
    %p50 = scmp.eq.s32.totalorder %s24, 0
    %p51 = por %p49, %p50
    %s52 = ssub.s32 %s18, %s25
    %p53 = scmp.eq.s32.totalorder %s52, 0
    %s55 = sadd.s32 %s54, 1
    %s56 = scalar_select %p53, %s54, %s55
    %p59 = pneg %p53
    %p60 = scmp.eq.s32.totalorder %s18, 1
    %p61 = por %p59, %p60
    %p62 = scmp.ne.s32.totalorder %s54, %s57
    %p63 = scmp.eq.s32.totalorder %s18, 0
    %p64 = por %p62, %p63
    %p65 = scmp.ne.s32.totalorder %s54, %s57
    %p66 = scmp.eq.s32.totalorder %s23, 1
    %p67 = por %p65, %p66
    %p68 = scmp.ne.s32.totalorder %s57, %s58
    %p69 = scmp.eq.s32.totalorder %s23, 0
    %p70 = por %p68, %p69
    %p71 = scmp.ne.s32.totalorder %s57, %s58
    %p72 = scmp.eq.s32.totalorder %s24, 1
    %p73 = por %p71, %p72
    %p75 = scmp.ne.s32.totalorder %s58, %s74
    %p76 = scmp.eq.s32.totalorder %s24, 0
    %p77 = por %p75, %p76
    %s79 = sadd.s32 %s78, 1
    %p82 = scmp.eq.s32.totalorder %s18, 1
    %p83 = scmp.ne.s32.totalorder %s78, %s80
    %p84 = scmp.eq.s32.totalorder %s18, 0
    %p85 = por %p83, %p84
    %p86 = scmp.ne.s32.totalorder %s78, %s80
    %p87 = scmp.eq.s32.totalorder %s23, 1
    %p88 = por %p86, %p87
    %p89 = scmp.ne.s32.totalorder %s80, %s81
    %p90 = scmp.eq.s32.totalorder %s23, 0
    %p91 = por %p89, %p90
    %p92 = scmp.ne.s32.totalorder %s80, %s81
    %p93 = scmp.eq.s32.totalorder %s24, 1
    %p94 = por %p92, %p93
    %p96 = scmp.ne.s32.totalorder %s81, %s95
    %p97 = scmp.eq.s32.totalorder %s24, 0
    %p98 = por %p96, %p97
    %s100 = sadd.s32 %s99, 1
    %p103 = scmp.eq.s32.totalorder %s18, 1
    %p104 = scmp.ne.s32.totalorder %s99, %s101
    %p105 = scmp.eq.s32.totalorder %s18, 0
    %p106 = por %p104, %p105
    %p107 = scmp.ne.s32.totalorder %s99, %s101
    %p108 = scmp.eq.s32.totalorder %s23, 1
    %p109 = por %p107, %p108
    %p110 = scmp.ne.s32.totalorder %s101, %s102
    %p111 = scmp.eq.s32.totalorder %s23, 0
    %p112 = por %p110, %p111
    %p113 = scmp.ne.s32.totalorder %s101, %s102
    %p114 = scmp.eq.s32.totalorder %s24, 1
    %p115 = por %p113, %p114
    %p117 = scmp.ne.s32.totalorder %s102, %s116
    %p118 = scmp.eq.s32.totalorder %s24, 0
    %p119 = por %p117, %p118
    %s121 = sadd.s32 %s120, 1
    %p124 = scmp.eq.s32.totalorder %s18, 1
    %p125 = scmp.ne.s32.totalorder %s120, %s122
    %p126 = scmp.eq.s32.totalorder %s18, 0
    %p127 = por %p125, %p126
    %p128 = scmp.ne.s32.totalorder %s120, %s122
    %p129 = scmp.eq.s32.totalorder %s23, 1
    %p130 = por %p128, %p129
    %p131 = scmp.ne.s32.totalorder %s122, %s123
    %p132 = scmp.eq.s32.totalorder %s23, 0
    %p133 = por %p131, %p132
    %p134 = scmp.ne.s32.totalorder %s122, %s123
    %p135 = scmp.eq.s32.totalorder %s24, 1
    %p136 = por %p134, %p135
    %p138 = scmp.ne.s32.totalorder %s123, %s137
    %p139 = scmp.eq.s32.totalorder %s24, 0
    %p140 = por %p138, %p139
    %s142 = sadd.s32 %s141, 1
    %p145 = scmp.eq.s32.totalorder %s18, 1
    %p146 = scmp.ne.s32.totalorder %s141, %s143
    %p147 = scmp.eq.s32.totalorder %s18, 0
    %p148 = por %p146, %p147
    %p149 = scmp.ne.s32.totalorder %s141, %s143
    %p150 = scmp.eq.s32.totalorder %s23, 1
    %p151 = por %p149, %p150
    %p152 = scmp.ne.s32.totalorder %s143, %s144
    %p153 = scmp.eq.s32.totalorder %s23, 0
    %p154 = por %p152, %p153
    %p155 = scmp.ne.s32.totalorder %s143, %s144
    %p156 = scmp.eq.s32.totalorder %s24, 1
    %p157 = por %p155, %p156
    %p159 = scmp.ne.s32.totalorder %s144, %s158
    %p160 = scmp.eq.s32.totalorder %s24, 0
    %p161 = por %p159, %p160
    %s163 = sadd.s32 %s162, 1
    %p166 = scmp.eq.s32.totalorder %s18, 1
    %p167 = scmp.ne.s32.totalorder %s162, %s164
    %p168 = scmp.eq.s32.totalorder %s18, 0
    %p169 = por %p167, %p168
    %p170 = scmp.ne.s32.totalorder %s162, %s164
    %p171 = scmp.eq.s32.totalorder %s23, 1
    %p172 = por %p170, %p171
    %p173 = scmp.ne.s32.totalorder %s164, %s165
    %p174 = scmp.eq.s32.totalorder %s23, 0
    %p175 = por %p173, %p174
    %p176 = scmp.ne.s32.totalorder %s164, %s165
    %p177 = scmp.eq.s32.totalorder %s24, 1
    %p178 = por %p176, %p177
    %p180 = scmp.ne.s32.totalorder %s165, %s179
    %p181 = scmp.eq.s32.totalorder %s24, 0
    %p182 = por %p180, %p181
    %s184 = sadd.s32 %s183, 1
    %p187 = scmp.eq.s32.totalorder %s18, 1
    %p188 = scmp.ne.s32.totalorder %s183, %s185
    %p189 = scmp.eq.s32.totalorder %s18, 0
    %p190 = por %p188, %p189
    %p191 = scmp.ne.s32.totalorder %s183, %s185
    %p192 = scmp.eq.s32.totalorder %s23, 1
    %p193 = por %p191, %p192
    %p194 = scmp.ne.s32.totalorder %s185, %s186
    %p195 = scmp.eq.s32.totalorder %s23, 0
    %p196 = por %p194, %p195
    %p197 = scmp.ne.s32.totalorder %s185, %s186
    %p198 = scmp.eq.s32.totalorder %s24, 1
    %p199 = por %p197, %p198
    %p201 = scmp.ne.s32.totalorder %s186, %s200
    %p202 = scmp.eq.s32.totalorder %s24, 0
    %p203 = por %p201, %p202
    %s205 = sadd.s32 %s204, 1
    %p208 = scmp.eq.s32.totalorder %s18, 1
    %p209 = scmp.ne.s32.totalorder %s204, %s206
    %p210 = scmp.eq.s32.totalorder %s18, 0
    %p211 = por %p209, %p210
    %p212 = scmp.ne.s32.totalorder %s204, %s206
    %p213 = scmp.eq.s32.totalorder %s23, 1
    %p214 = por %p212, %p213
    %p215 = scmp.ne.s32.totalorder %s206, %s207
    %p216 = scmp.eq.s32.totalorder %s23, 0
    %p217 = por %p215, %p216
    %p218 = scmp.ne.s32.totalorder %s206, %s207
    %p219 = scmp.eq.s32.totalorder %s24, 1
    %p220 = por %p218, %p219
    %p222 = scmp.ne.s32.totalorder %s207, %s221
    %p223 = scmp.eq.s32.totalorder %s24, 0
    %p224 = por %p222, %p223
    %s226 = sadd.s32 %s225, 1
    %p229 = scmp.eq.s32.totalorder %s18, 1
    %p230 = scmp.ne.s32.totalorder %s225, %s227
    %p231 = scmp.eq.s32.totalorder %s18, 0
    %p232 = por %p230, %p231
    %p233 = scmp.ne.s32.totalorder %s225, %s227
    %p234 = scmp.eq.s32.totalorder %s23, 1
    %p235 = por %p233, %p234
    %p236 = scmp.ne.s32.totalorder %s227, %s228
    %p237 = scmp.eq.s32.totalorder %s23, 0
    %p238 = por %p236, %p237
    %p239 = scmp.ne.s32.totalorder %s227, %s228
    %p240 = scmp.eq.s32.totalorder %s24, 1
    %p241 = por %p239, %p240
    %p243 = scmp.ne.s32.totalorder %s228, %s242
    %p244 = scmp.eq.s32.totalorder %s24, 0
    %p245 = por %p243, %p244
    %s246 = ssub.s32 %s18, %s25
    %p247 = scmp.eq.s32.totalorder %s246, 0
    %s249 = sadd.s32 %s248, 1
    %s250 = scalar_select %p247, %s248, %s249
    %p253 = pneg %p247
    %p254 = scmp.eq.s32.totalorder %s18, 1
    %p255 = por %p253, %p254
    %p256 = scmp.ne.s32.totalorder %s248, %s251
    %p257 = scmp.eq.s32.totalorder %s18, 0
    %p258 = por %p256, %p257
    %p259 = scmp.ne.s32.totalorder %s248, %s251
    %p260 = scmp.eq.s32.totalorder %s23, 1
    %p261 = por %p259, %p260
    %p262 = scmp.ne.s32.totalorder %s251, %s252
    %p263 = scmp.eq.s32.totalorder %s23, 0
    %p264 = por %p262, %p263
    %p265 = scmp.ne.s32.totalorder %s251, %s252
    %p266 = scmp.eq.s32.totalorder %s24, 1
    %p267 = por %p265, %p266
    %p269 = scmp.ne.s32.totalorder %s252, %s268
    %p270 = scmp.eq.s32.totalorder %s24, 0
    %p271 = por %p269, %p270
    %s272 = ssub.s32 %s18, %s25
    %p273 = scmp.eq.s32.totalorder %s272, 0
    %s275 = sadd.s32 %s274, 1
    %s276 = scalar_select %p273, %s274, %s275
    %p279 = pneg %p273
    %p280 = scmp.eq.s32.totalorder %s18, 1
    %p281 = por %p279, %p280
    %p282 = scmp.ne.s32.totalorder %s274, %s277
    %p283 = scmp.eq.s32.totalorder %s18, 0
    %p284 = por %p282, %p283
    %p285 = scmp.ne.s32.totalorder %s274, %s277
    %p286 = scmp.eq.s32.totalorder %s23, 1
    %p287 = por %p285, %p286
    %p288 = scmp.ne.s32.totalorder %s277, %s278
    %p289 = scmp.eq.s32.totalorder %s23, 0
    %p290 = por %p288, %p289
    %p291 = scmp.ne.s32.totalorder %s277, %s278
    %p292 = scmp.eq.s32.totalorder %s24, 1
    %p293 = por %p291, %p292
    %p295 = scmp.ne.s32.totalorder %s278, %s294
    %p296 = scmp.eq.s32.totalorder %s24, 0
    %p297 = por %p295, %p296
    %p298 = scmp.le.s32.totalorder 1, %s18
    %p299 = scmp.lt.s32.totalorder %s18, 3
    %p300 = pnand %p298, %p299
    %p301 = pneg %p300
    // Predicated region
    $region9: #{_lambda_.32} parent=5 // pred_check
      _
    $region10: #{_lambda_.32} parent=5 // pred_check_branch
      %303 = sbr.rel (%p300) target = $region12
    $region11: #{_lambda_.32} parent=5 // pred_region
      %s304 = ssub.s32 %s18, 1
      // Predicated region
      $region13: #{_lambda_.32} parent=11 // pred_check
        %p305 = pneg %p91
      $region14: #{_lambda_.32} parent=11 // pred_check_branch
        %307 = sbr.rel (%p305) target = $region16
      $region15: #{_lambda_.32} parent=11 // pred_region
        _
      $region16: #{_lambda_.32} parent=11 // pred_fallthru
        _
      // Predicated region
      $region17: #{_lambda_.32} parent=11 // pred_check
        %p308 = pneg %p112
      $region18: #{_lambda_.32} parent=11 // pred_check_branch
        %310 = sbr.rel (%p308) target = $region20
      $region19: #{_lambda_.32} parent=11 // pred_region
        _
      $region20: #{_lambda_.32} parent=11 // pred_fallthru
        _
      // Predicated region
      $region21: #{_lambda_.32} parent=11 // pred_check
        %p311 = pneg %p133
      $region22: #{_lambda_.32} parent=11 // pred_check_branch
        %313 = sbr.rel (%p311) target = $region24
      $region23: #{_lambda_.32} parent=11 // pred_region
        _
      $region24: #{_lambda_.32} parent=11 // pred_fallthru
        _
      // Predicated region
      $region25: #{_lambda_.32} parent=11 // pred_check
        %p314 = pneg %p154
      $region26: #{_lambda_.32} parent=11 // pred_check_branch
        %316 = sbr.rel (%p314) target = $region28
      $region27: #{_lambda_.32} parent=11 // pred_region
        _
      $region28: #{_lambda_.32} parent=11 // pred_fallthru
        _
      // Predicated region
      $region29: #{_lambda_.32} parent=11 // pred_check
        %p317 = pneg %p175
      $region30: #{_lambda_.32} parent=11 // pred_check_branch
        %319 = sbr.rel (%p317) target = $region32
      $region31: #{_lambda_.32} parent=11 // pred_region
        _
      $region32: #{_lambda_.32} parent=11 // pred_fallthru
        _
      // Predicated region
      $region33: #{_lambda_.32} parent=11 // pred_check
        %p320 = pneg %p196
      $region34: #{_lambda_.32} parent=11 // pred_check_branch
        %322 = sbr.rel (%p320) target = $region36
      $region35: #{_lambda_.32} parent=11 // pred_region
        _
      $region36: #{_lambda_.32} parent=11 // pred_fallthru
        _
      // Predicated region
      $region37: #{_lambda_.32} parent=11 // pred_check
        %p323 = pneg %p217
      $region38: #{_lambda_.32} parent=11 // pred_check_branch
        %325 = sbr.rel (%p323) target = $region40
      $region39: #{_lambda_.32} parent=11 // pred_region
        _
      $region40: #{_lambda_.32} parent=11 // pred_fallthru
        _
      // Predicated region
      $region41: #{_lambda_.32} parent=11 // pred_check
        %p326 = pneg %p238
      $region42: #{_lambda_.32} parent=11 // pred_check_branch
        %328 = sbr.rel (%p326) target = $region44
      $region43: #{_lambda_.32} parent=11 // pred_region
        _
      $region44: #{_lambda_.32} parent=11 // pred_fallthru
        _
    $region12: #{_lambda_.32} parent=5 // pred_fallthru
      _
    %p329 = scmp.lt.s32.totalorder %s18, 2
    // Predicated region
    $region45: #{_lambda_.32} parent=5 // pred_check
      %p330 = pneg %p329
    $region46: #{_lambda_.32} parent=5 // pred_check_branch
      %332 = sbr.rel (%p330) target = $region48
    $region47: #{_lambda_.32} parent=5 // pred_region
      // Predicated region
      $region49: #{_lambda_.32} parent=47 // pred_check
        %p333 = pneg %p38
      $region50: #{_lambda_.32} parent=47 // pred_check_branch
        %335 = sbr.rel (%p333) target = $region52
      $region51: #{_lambda_.32} parent=47 // pred_region
        %p336 = scmp.lt.s32.totalorder %s18, 1
        %s337 = scalar_select %p336, %s18, 1
        %s338 = smul.addr %s337, 2
        %s339 = smul.addr %s338, 4
        %s340 = scalar_lea.vmem %s0, %s339
      $region52: #{_lambda_.32} parent=47 // pred_fallthru
        _
      // Predicated region
      $region53: #{_lambda_.32} parent=47 // pred_check
        %p341 = pneg %p64
      $region54: #{_lambda_.32} parent=47 // pred_check_branch
        %343 = sbr.rel (%p341) target = $region56
      $region55: #{_lambda_.32} parent=47 // pred_region
        %p344 = scmp.lt.s32.totalorder %s18, 1
        %s345 = scalar_select %p344, %s18, 1
        %s346 = smul.addr %s345, 2
        %s347 = smul.addr %s346, 4
        %s348 = scalar_lea.vmem %s1, %s347
      $region56: #{_lambda_.32} parent=47 // pred_fallthru
        _
    $region48: #{_lambda_.32} parent=5 // pred_fallthru
      _
    %p349 = scmp.le.s32.totalorder 1, %s18
    %p350 = scmp.lt.s32.totalorder %s18, 3
    %p351 = pnand %p349, %p350
    %p352 = pneg %p351
    // Predicated region
    $region57: #{_lambda_.32} parent=5 // pred_check
      _
    $region58: #{_lambda_.32} parent=5 // pred_check_branch
      %354 = sbr.rel (%p351) target = $region60
    $region59: #{_lambda_.32} parent=5 // pred_region
      %s355 = ssub.s32 %s18, 1
      %p356 = scmp.lt.s32.totalorder %s23, 1
      %s357 = scalar_select %p356, %s23, 1
      %s358 = smul.addr %s357, 2
      %s359 = smul.addr %s358, 4
      %s360 = scalar_lea.vmem %s0, %s359
      %p361 = pneg %p44
      %p362 = pneg %p41
      %p363 = scmp.lt.s32.totalorder %s23, 1
      %s364 = scalar_select %p363, %s23, 1
      %s365 = smul.addr %s364, 2
      %s366 = smul.addr %s365, 4
      %s367 = scalar_lea.vmem %s1, %s366
      %p368 = pneg %p70
      %p369 = pneg %p67
      %p370 = pneg %p91
      %p371 = pneg %p88
      %p372 = pneg %p112
      %p373 = pneg %p109
      %p374 = pneg %p133
      %p375 = pneg %p130
      %p376 = pneg %p154
      %p377 = pneg %p151
      %p378 = pneg %p175
      %p379 = pneg %p172
      %p380 = pneg %p196
      %p381 = pneg %p193
      %p382 = pneg %p217
      %p383 = pneg %p214
      %p384 = pneg %p238
      %p385 = pneg %p235
      %p386 = pneg %p264
      %p387 = pneg %p261
      %p388 = scmp.lt.s32.totalorder %s23, 1
      %s389 = scalar_select %p388, %s23, 1
      %s390 = smul.addr %s389, 8
      %s391 = scalar_lea.vmem %s10, %s390
      %p392 = pneg %p290
      %p393 = pneg %p287
      %p394 = scmp.lt.s32.totalorder %s23, 1
      %s395 = scalar_select %p394, %s23, 1
      %s396 = smul.addr %s395, 2
      %s397 = smul.addr %s396, 4
      %s398 = scalar_lea.vmem %s11, %s397
      %p399 = scmp.lt.s32.totalorder %s23, 1
      %s400 = scalar_select %p399, %s23, 1
      %s401 = smul.addr %s400, 2
      %s402 = smul.addr %s401, 4
      %s403 = scalar_lea.vmem %s0, %s402
      %p404 = scmp.lt.s32.totalorder %s23, 1
      %s405 = scalar_select %p404, %s23, 1
      %s406 = smul.addr %s405, 2
      %s407 = smul.addr %s406, 4
      %s408 = scalar_lea.vmem %s1, %s407
      %p409 = scmp.lt.s32.totalorder %s23, 1
      %s410 = scalar_select %p409, %s23, 1
      %s411 = smul.addr %s410, 8
      %s412 = scalar_lea.vmem %s10, %s411
      %p413 = scmp.lt.s32.totalorder %s23, 1
      %s414 = scalar_select %p413, %s23, 1
      %s415 = smul.addr %s414, 2
      %s416 = smul.addr %s415, 4
      %s417 = scalar_lea.vmem %s11, %s416
      %v419 = vld [vmem:[%s403] sm:$0xf]
      %v420 = vld [vmem:[%s403 + $0x4] sm:$0xf]
      %v421 = vld [vmem:[%s2] sm:$0xf]
      %v422 = vld [vmem:[%s2 + $0x4] sm:$0xf]
      %v425 = vunpack.c.l.b16 %v421
      %v426 = vunpack.c.l.b16 %v422
      %v427 = vpack.c.b16 %v426, %v425
      %v430 = vunpack.c.l.b16 %v419
      %v431 = vunpack.c.l.b16 %v420
      %v432 = vpack.c.b16 %v431, %v430
      %vm434 = vcmask 130048
      %v436 = vsel %vm434, %v427, 0
      %438 = vmatpush.bf16.msra.mxu0 0
      %439 = vmatpush.bf16.msra.mxu0 0
      %440 = vmatpush.bf16.msra.mxu0 0
      %441 = vmatpush.bf16.msra.mxu0 0
      %442 = vmatpush.bf16.msra.mxu0 0
      %443 = vmatpush.bf16.msra.mxu0 0
      %444 = vmatpush.bf16.msra.mxu0 0
      %445 = vmatpush.bf16.msra.mxu0 %v432
      %446 = vmatmul.bf16.gmra.mxu0 %v436
      %v447 = vpop.f32.mrf.mxu0
      %v448 = vadd.f32 0.0, %v447
      %v449 = vpop.f32.mrf.mxu0
      %v450 = vadd.f32 0.0, %v449
      %451 = vdwg.mxu0
      %v452 = vld [vmem:[%s3] sm:$0xff]
      %v453 = vld [vmem:[%s3 + $0x8] sm:$0xff]
      %455 = vset.pattern.permute.xlu0 0
      %456 = vperm.xlu0 %455, %v452
      %v457 = vpop.permute.xlu0 %456
      %460 = vset.pattern.permute.xlu0 0
      %461 = vperm.xlu0 %460, %v453
      %v462 = vpop.permute.xlu0 %461
      %v464 = vmul.f32 %v448, %v457
      %v465 = vmul.f32 %v450, %v462
      %466 = vset.pattern.permute.xlu0 1
      %467 = vperm.xlu0 %466, %v452
      %v468 = vpop.permute.xlu0 %467
      %470 = vset.pattern.permute.xlu0 1
      %471 = vperm.xlu0 %470, %v453
      %v472 = vpop.permute.xlu0 %471
      %v474 = vadd.f32 %v464, %v468
      %v475 = vadd.f32 %v465, %v472
      %v476 = vmax.f32 %v474, 0.0
      %v477 = vmax.f32 %v475, 0.0
      %v478 = vpack.c.bf16 %v477, %v476
      %v479 = vld [vmem:[%s4] sm:$0x7]
      %v480 = vld [vmem:[%s5] sm:$0x1f]
      %482 = vset.pattern.permute.xlu0 0
      %483 = vperm.xlu0 %482, %v480
      %v484 = vpop.permute.xlu0 %483
      %v487 = vsel %vm434, %v479, 0
      %489 = vmatpush.bf16.msra.mxu0 0
      %490 = vmatpush.bf16.msra.mxu0 0
      %491 = vmatpush.bf16.msra.mxu0 0
      %492 = vmatpush.bf16.msra.mxu0 0
      %493 = vmatpush.bf16.msra.mxu0 0
      %494 = vmatpush.bf16.msra.mxu0 0
      %495 = vmatpush.bf16.msra.mxu0 0
      %496 = vmatpush.bf16.msra.mxu0 %v478
      %497 = vmatmul.bf16.gmra.mxu0 %v487
      %v498 = vpop.f32.mrf.mxu0
      %v499 = vadd.f32 %v484, %v498
      %v500 = vpop.f32.mrf.mxu0
      %501 = vdwg.mxu0
      %vm502 = vcmask 520192
      %503 = vst.msk [vmem:[%s412] sm:$0x1f] %vm502, %v499
      %v504 = vld [vmem:[%s6] sm:$0xf]
      %v505 = vld [vmem:[%s6 + $0x4] sm:$0xf]
      %v506 = vld [vmem:[%s7] sm:$0xff]
      %v507 = vld [vmem:[%s7 + $0x8] sm:$0xff]
      %509 = vset.pattern.permute.xlu0 0
      %510 = vperm.xlu0 %509, %v506
      %v511 = vpop.permute.xlu0 %510
      %514 = vset.pattern.permute.xlu0 0
      %515 = vperm.xlu0 %514, %v507
      %v516 = vpop.permute.xlu0 %515
      %v520 = vunpack.c.l.b16 %v504
      %v521 = vunpack.c.l.b16 %v505
      %v522 = vpack.c.b16 %v521, %v520
      %v524 = vsel %vm434, %v522, 0
      %526 = vmatpush.bf16.msra.mxu0 0
      %527 = vmatpush.bf16.msra.mxu0 0
      %528 = vmatpush.bf16.msra.mxu0 0
      %529 = vmatpush.bf16.msra.mxu0 0
      %530 = vmatpush.bf16.msra.mxu0 0
      %531 = vmatpush.bf16.msra.mxu0 0
      %532 = vmatpush.bf16.msra.mxu0 0
      %533 = vmatpush.bf16.msra.mxu0 %v478
      %534 = vmatmul.bf16.gmra.mxu0 %v524
      %v535 = vpop.f32.mrf.mxu0
      %v536 = vadd.f32 %v511, %v535
      %v537 = vpop.f32.mrf.mxu0
      %v538 = vadd.f32 %v516, %v537
      %539 = vdwg.mxu0
      %v540 = vld [vmem:[%s8] sm:$0xf]
      %v541 = vld [vmem:[%s8 + $0x4] sm:$0xf]
      %v542 = vpack.c.bf16 %v499, %v499
      %v543 = vld [vmem:[%s9] sm:$0xff]
      %v544 = vld [vmem:[%s9 + $0x8] sm:$0xff]
      %546 = vset.pattern.permute.xlu0 0
      %547 = vperm.xlu0 %546, %v543
      %v548 = vpop.permute.xlu0 %547
      %551 = vset.pattern.permute.xlu0 0
      %552 = vperm.xlu0 %551, %v544
      %v553 = vpop.permute.xlu0 %552
      %v557 = vunpack.c.l.b16 %v540
      %v558 = vunpack.c.l.b16 %v541
      %v559 = vpack.c.b16 %v558, %v557
      %vm560 = vcmask 39936
      %v562 = vsel %vm560, %v559, 0
      %vm564 = vcmask 1041408
      %vm565 = vcmask 1042432
      %v566 = vsel %vm564, 4294967295, 65535
      %v567 = vsel %vm565, %v566, 0
      %v569 = vand.u32 %v542, %v567
      %571 = vmatpush.bf16.msra.mxu0 0
      %572 = vmatpush.bf16.msra.mxu0 0
      %573 = vmatpush.bf16.msra.mxu0 0
      %574 = vmatpush.bf16.msra.mxu0 0
      %575 = vmatpush.bf16.msra.mxu0 0
      %576 = vmatpush.bf16.msra.mxu0 0
      %577 = vmatpush.bf16.msra.mxu0 0
      %578 = vmatpush.bf16.msra.mxu0 %v569
      %579 = vmatmul.bf16.gmra.mxu0 %v562
      %v580 = vpop.f32.mrf.mxu0
      %v581 = vadd.f32 %v548, %v580
      %v582 = vpop.f32.mrf.mxu0
      %v583 = vadd.f32 %v553, %v582
      %584 = vdwg.mxu0
      %v585 = vld [vmem:[%s408] sm:$0xf]
      %v586 = vld [vmem:[%s408 + $0x4] sm:$0xf]
      %v587 = vunpack.c.l.bf16 %v585
      %v588 = vunpack.c.l.bf16 %v586
      %v589 = vadd.f32 %v587, %v536
      %v590 = vadd.f32 %v588, %v538
      %v591 = vadd.f32 %v589, %v581
      %v592 = vadd.f32 %v590, %v583
      %v593 = vpack.c.bf16 %v591, %v591
      %v594 = vpack.c.bf16 %v592, %v592
      %vm595 = vcmask 519168
      %596 = vst.msk [vmem:[%s417] sm:$0xf] %vm595, %v593
      %597 = vst.msk [vmem:[%s417 + $0x4] sm:$0xf] %vm595, %v594
      %p598 = scmp.lt.s32.totalorder %s23, 1
      %s599 = scalar_select %p598, %s23, 1
      %s600 = smul.addr %s599, 8
      %s601 = scalar_lea.vmem %s10, %s600
      %p602 = scmp.lt.s32.totalorder %s23, 1
      %s603 = scalar_select %p602, %s23, 1
      %s604 = smul.addr %s603, 2
      %s605 = smul.addr %s604, 4
      %s606 = scalar_lea.vmem %s11, %s605
      // Predicated region
      $region61: #{_lambda_.32} parent=59 // pred_check
        %p607 = pneg %p261
      $region62: #{_lambda_.32} parent=59 // pred_check_branch
        %609 = sbr.rel (%p607) target = $region64
      $region63: #{_lambda_.32} parent=59 // pred_region
        _
      $region64: #{_lambda_.32} parent=59 // pred_fallthru
        _
      // Predicated region
      $region65: #{_lambda_.32} parent=59 // pred_check
        %p610 = pneg %p287
      $region66: #{_lambda_.32} parent=59 // pred_check_branch
        %612 = sbr.rel (%p610) target = $region68
      $region67: #{_lambda_.32} parent=59 // pred_region
        _
      $region68: #{_lambda_.32} parent=59 // pred_fallthru
        _
    $region60: #{_lambda_.32} parent=5 // pred_fallthru
      _
    %p613 = scmp.le.s32.totalorder 2, %s18
    // Predicated region
    $region69: #{_lambda_.32} parent=5 // pred_check
      %p614 = pneg %p613
    $region70: #{_lambda_.32} parent=5 // pred_check_branch
      %616 = sbr.rel (%p614) target = $region72
    $region71: #{_lambda_.32} parent=5 // pred_region
      %s617 = ssub.s32 %s18, 2
      // Predicated region
      $region73: #{_lambda_.32} parent=71 // pred_check
        %p618 = pneg %p267
      $region74: #{_lambda_.32} parent=71 // pred_check_branch
        %620 = sbr.rel (%p618) target = $region76
      $region75: #{_lambda_.32} parent=71 // pred_region
        %p621 = scmp.lt.s32.totalorder %s24, 1
        %s622 = scalar_select %p621, %s24, 1
        %s623 = smul.addr %s622, 8
        %s624 = scalar_lea.vmem %s10, %s623
      $region76: #{_lambda_.32} parent=71 // pred_fallthru
        _
      // Predicated region
      $region77: #{_lambda_.32} parent=71 // pred_check
        %p625 = pneg %p293
      $region78: #{_lambda_.32} parent=71 // pred_check_branch
        %627 = sbr.rel (%p625) target = $region80
      $region79: #{_lambda_.32} parent=71 // pred_region
        %p628 = scmp.lt.s32.totalorder %s24, 1
        %s629 = scalar_select %p628, %s24, 1
        %s630 = smul.addr %s629, 2
        %s631 = smul.addr %s630, 4
        %s632 = scalar_lea.vmem %s11, %s631
      $region80: #{_lambda_.32} parent=71 // pred_fallthru
        _
    $region72: #{_lambda_.32} parent=5 // pred_fallthru
      _
  $region6: #{_lambda_.32} parent=0 // loop_footer
    %s22 = sadd.s32 1, %s18
  $region7: #{_lambda_.32} parent=0 // loop_footer_branch
    %17 = sbr.rel target = $region3
  $region8: #{_lambda_.32} parent=0 // loop_exit
    _

// kernel: _lambda_.36
$region0: #{_lambda_.36}
  #allocation0 [shape = 'u32[]', space=smem, size = 0x4, offset = 0x4, fixed_abs, tag = 'smem constant byte address 0x4 - core index']
  #allocation1 [shape = 'u32[72,128]{1,0:T(1,128)}', space=vmem, size = 0x9000, scoped, tag = 'internal scratch']
  %s0 = inlined_call_operand.vmem [shape: bf16[2,16,128], index: 0, kind: input, shape index: {}]
  %s1 = inlined_call_operand.vmem [shape: bf16[8,16], index: 1, kind: input, shape index: {}]
  %s2 = inlined_call_operand.vmem [shape: bf16[9,8,8], index: 2, kind: input, shape index: {}]
  %s3 = inlined_call_operand.vmem [shape: bf16[16,8], index: 3, kind: input, shape index: {}]
  %s4 = inlined_call_operand.vmem [shape: f32[16,2], index: 4, kind: input, shape index: {}]
  %s5 = inlined_call_operand.vmem [shape: f32[8,2], index: 5, kind: input, shape index: {}]
  %s6 = inlined_call_operand.vmem [shape: f32[8,2], index: 6, kind: input, shape index: {}]
  %s7 = inlined_call_operand.vmem [shape: f32[16,1], index: 7, kind: input, shape index: {}]
  %s8 = inlined_call_operand.vmem [shape: f32[9,128], index: 8, kind: input, shape index: {}]
  %s9 = inlined_call_operand.vmem [shape: bf16[2,16,128], index: 9, kind: output, shape index: {}]
  %s10 = sld [smem:[#allocation0]]
  $region69: #{_lambda_.36} parent=0
    _
  %s12 = ssub.s32 1, %s10
  %s13 = scalar_select 0, %s12, %s10
  loop: start=0, step=1, limit=4
  $region2: #{_lambda_.36} parent=0 // loop_pre_header
    _
  $region3: #{_lambda_.36} parent=0 // loop_header
    %s15 = sphi 0, %s19
    %p16 = scmp.ge.s32.totalorder %s15, 4
    %s25 = sphi 0, %s27
    %s28 = sphi 0, %s25
    %s29 = sphi 0, %s28
    %s45 = sphi 0, %s29
    %s49 = sphi 0, %s49
    %s51 = sphi 0, %s49
    %s52 = sphi 0, %s51
    %s66 = sphi 0, %s52
    %s70 = sphi 0, %s70
    %s72 = sphi 0, %s70
    %s73 = sphi 0, %s72
    %s87 = sphi 0, %s73
    %s91 = sphi 0, %s91
    %s93 = sphi 0, %s91
    %s94 = sphi 0, %s93
    %s108 = sphi 0, %s94
    %s112 = sphi 0, %s112
    %s114 = sphi 0, %s112
    %s115 = sphi 0, %s114
    %s129 = sphi 0, %s115
    %s133 = sphi 0, %s133
    %s135 = sphi 0, %s133
    %s136 = sphi 0, %s135
    %s150 = sphi 0, %s136
    %s154 = sphi 0, %s154
    %s156 = sphi 0, %s154
    %s157 = sphi 0, %s156
    %s171 = sphi 0, %s157
    %s175 = sphi 0, %s175
    %s177 = sphi 0, %s175
    %s178 = sphi 0, %s177
    %s192 = sphi 0, %s178
    %s196 = sphi 0, %s196
    %s198 = sphi 0, %s196
    %s199 = sphi 0, %s198
    %s213 = sphi 0, %s199
    %s219 = sphi 0, %s221
    %s222 = sphi 0, %s219
    %s223 = sphi 0, %s222
    %s239 = sphi 0, %s223
  $region4: #{_lambda_.36} parent=0 // loop_header_branch
    %18 = sbr.rel (%p16) target = $region8
  $region5: #{_lambda_.36} parent=0 // loop_body
    %s20 = ssub.s32 %s15, 1
    %s21 = ssub.s32 %s15, 2
    %s22 = sadd.s32 %s15, 1
    %s23 = ssub.s32 %s15, %s22
    %p24 = scmp.eq.s32.totalorder %s23, 0
    %s26 = sadd.s32 %s25, 1
    %s27 = scalar_select %p24, %s25, %s26
    %p30 = pneg %p24
    %p31 = scmp.eq.s32.totalorder %s15, 1
    %p32 = por %p30, %p31
    %p33 = scmp.ne.s32.totalorder %s25, %s28
    %p34 = scmp.eq.s32.totalorder %s15, 0
    %p35 = por %p33, %p34
    %p36 = scmp.ne.s32.totalorder %s25, %s28
    %p37 = scmp.eq.s32.totalorder %s20, 1
    %p38 = por %p36, %p37
    %p39 = scmp.ne.s32.totalorder %s28, %s29
    %p40 = scmp.eq.s32.totalorder %s20, 0
    %p41 = por %p39, %p40
    %p42 = scmp.ne.s32.totalorder %s28, %s29
    %p43 = scmp.eq.s32.totalorder %s21, 1
    %p44 = por %p42, %p43
    %p46 = scmp.ne.s32.totalorder %s29, %s45
    %p47 = scmp.eq.s32.totalorder %s21, 0
    %p48 = por %p46, %p47
    %s50 = sadd.s32 %s49, 1
    %p53 = scmp.eq.s32.totalorder %s15, 1
    %p54 = scmp.ne.s32.totalorder %s49, %s51
    %p55 = scmp.eq.s32.totalorder %s15, 0
    %p56 = por %p54, %p55
    %p57 = scmp.ne.s32.totalorder %s49, %s51
    %p58 = scmp.eq.s32.totalorder %s20, 1
    %p59 = por %p57, %p58
    %p60 = scmp.ne.s32.totalorder %s51, %s52
    %p61 = scmp.eq.s32.totalorder %s20, 0
    %p62 = por %p60, %p61
    %p63 = scmp.ne.s32.totalorder %s51, %s52
    %p64 = scmp.eq.s32.totalorder %s21, 1
    %p65 = por %p63, %p64
    %p67 = scmp.ne.s32.totalorder %s52, %s66
    %p68 = scmp.eq.s32.totalorder %s21, 0
    %p69 = por %p67, %p68
    %s71 = sadd.s32 %s70, 1
    %p74 = scmp.eq.s32.totalorder %s15, 1
    %p75 = scmp.ne.s32.totalorder %s70, %s72
    %p76 = scmp.eq.s32.totalorder %s15, 0
    %p77 = por %p75, %p76
    %p78 = scmp.ne.s32.totalorder %s70, %s72
    %p79 = scmp.eq.s32.totalorder %s20, 1
    %p80 = por %p78, %p79
    %p81 = scmp.ne.s32.totalorder %s72, %s73
    %p82 = scmp.eq.s32.totalorder %s20, 0
    %p83 = por %p81, %p82
    %p84 = scmp.ne.s32.totalorder %s72, %s73
    %p85 = scmp.eq.s32.totalorder %s21, 1
    %p86 = por %p84, %p85
    %p88 = scmp.ne.s32.totalorder %s73, %s87
    %p89 = scmp.eq.s32.totalorder %s21, 0
    %p90 = por %p88, %p89
    %s92 = sadd.s32 %s91, 1
    %p95 = scmp.eq.s32.totalorder %s15, 1
    %p96 = scmp.ne.s32.totalorder %s91, %s93
    %p97 = scmp.eq.s32.totalorder %s15, 0
    %p98 = por %p96, %p97
    %p99 = scmp.ne.s32.totalorder %s91, %s93
    %p100 = scmp.eq.s32.totalorder %s20, 1
    %p101 = por %p99, %p100
    %p102 = scmp.ne.s32.totalorder %s93, %s94
    %p103 = scmp.eq.s32.totalorder %s20, 0
    %p104 = por %p102, %p103
    %p105 = scmp.ne.s32.totalorder %s93, %s94
    %p106 = scmp.eq.s32.totalorder %s21, 1
    %p107 = por %p105, %p106
    %p109 = scmp.ne.s32.totalorder %s94, %s108
    %p110 = scmp.eq.s32.totalorder %s21, 0
    %p111 = por %p109, %p110
    %s113 = sadd.s32 %s112, 1
    %p116 = scmp.eq.s32.totalorder %s15, 1
    %p117 = scmp.ne.s32.totalorder %s112, %s114
    %p118 = scmp.eq.s32.totalorder %s15, 0
    %p119 = por %p117, %p118
    %p120 = scmp.ne.s32.totalorder %s112, %s114
    %p121 = scmp.eq.s32.totalorder %s20, 1
    %p122 = por %p120, %p121
    %p123 = scmp.ne.s32.totalorder %s114, %s115
    %p124 = scmp.eq.s32.totalorder %s20, 0
    %p125 = por %p123, %p124
    %p126 = scmp.ne.s32.totalorder %s114, %s115
    %p127 = scmp.eq.s32.totalorder %s21, 1
    %p128 = por %p126, %p127
    %p130 = scmp.ne.s32.totalorder %s115, %s129
    %p131 = scmp.eq.s32.totalorder %s21, 0
    %p132 = por %p130, %p131
    %s134 = sadd.s32 %s133, 1
    %p137 = scmp.eq.s32.totalorder %s15, 1
    %p138 = scmp.ne.s32.totalorder %s133, %s135
    %p139 = scmp.eq.s32.totalorder %s15, 0
    %p140 = por %p138, %p139
    %p141 = scmp.ne.s32.totalorder %s133, %s135
    %p142 = scmp.eq.s32.totalorder %s20, 1
    %p143 = por %p141, %p142
    %p144 = scmp.ne.s32.totalorder %s135, %s136
    %p145 = scmp.eq.s32.totalorder %s20, 0
    %p146 = por %p144, %p145
    %p147 = scmp.ne.s32.totalorder %s135, %s136
    %p148 = scmp.eq.s32.totalorder %s21, 1
    %p149 = por %p147, %p148
    %p151 = scmp.ne.s32.totalorder %s136, %s150
    %p152 = scmp.eq.s32.totalorder %s21, 0
    %p153 = por %p151, %p152
    %s155 = sadd.s32 %s154, 1
    %p158 = scmp.eq.s32.totalorder %s15, 1
    %p159 = scmp.ne.s32.totalorder %s154, %s156
    %p160 = scmp.eq.s32.totalorder %s15, 0
    %p161 = por %p159, %p160
    %p162 = scmp.ne.s32.totalorder %s154, %s156
    %p163 = scmp.eq.s32.totalorder %s20, 1
    %p164 = por %p162, %p163
    %p165 = scmp.ne.s32.totalorder %s156, %s157
    %p166 = scmp.eq.s32.totalorder %s20, 0
    %p167 = por %p165, %p166
    %p168 = scmp.ne.s32.totalorder %s156, %s157
    %p169 = scmp.eq.s32.totalorder %s21, 1
    %p170 = por %p168, %p169
    %p172 = scmp.ne.s32.totalorder %s157, %s171
    %p173 = scmp.eq.s32.totalorder %s21, 0
    %p174 = por %p172, %p173
    %s176 = sadd.s32 %s175, 1
    %p179 = scmp.eq.s32.totalorder %s15, 1
    %p180 = scmp.ne.s32.totalorder %s175, %s177
    %p181 = scmp.eq.s32.totalorder %s15, 0
    %p182 = por %p180, %p181
    %p183 = scmp.ne.s32.totalorder %s175, %s177
    %p184 = scmp.eq.s32.totalorder %s20, 1
    %p185 = por %p183, %p184
    %p186 = scmp.ne.s32.totalorder %s177, %s178
    %p187 = scmp.eq.s32.totalorder %s20, 0
    %p188 = por %p186, %p187
    %p189 = scmp.ne.s32.totalorder %s177, %s178
    %p190 = scmp.eq.s32.totalorder %s21, 1
    %p191 = por %p189, %p190
    %p193 = scmp.ne.s32.totalorder %s178, %s192
    %p194 = scmp.eq.s32.totalorder %s21, 0
    %p195 = por %p193, %p194
    %s197 = sadd.s32 %s196, 1
    %p200 = scmp.eq.s32.totalorder %s15, 1
    %p201 = scmp.ne.s32.totalorder %s196, %s198
    %p202 = scmp.eq.s32.totalorder %s15, 0
    %p203 = por %p201, %p202
    %p204 = scmp.ne.s32.totalorder %s196, %s198
    %p205 = scmp.eq.s32.totalorder %s20, 1
    %p206 = por %p204, %p205
    %p207 = scmp.ne.s32.totalorder %s198, %s199
    %p208 = scmp.eq.s32.totalorder %s20, 0
    %p209 = por %p207, %p208
    %p210 = scmp.ne.s32.totalorder %s198, %s199
    %p211 = scmp.eq.s32.totalorder %s21, 1
    %p212 = por %p210, %p211
    %p214 = scmp.ne.s32.totalorder %s199, %s213
    %p215 = scmp.eq.s32.totalorder %s21, 0
    %p216 = por %p214, %p215
    %s217 = ssub.s32 %s15, %s22
    %p218 = scmp.eq.s32.totalorder %s217, 0
    %s220 = sadd.s32 %s219, 1
    %s221 = scalar_select %p218, %s219, %s220
    %p224 = pneg %p218
    %p225 = scmp.eq.s32.totalorder %s15, 1
    %p226 = por %p224, %p225
    %p227 = scmp.ne.s32.totalorder %s219, %s222
    %p228 = scmp.eq.s32.totalorder %s15, 0
    %p229 = por %p227, %p228
    %p230 = scmp.ne.s32.totalorder %s219, %s222
    %p231 = scmp.eq.s32.totalorder %s20, 1
    %p232 = por %p230, %p231
    %p233 = scmp.ne.s32.totalorder %s222, %s223
    %p234 = scmp.eq.s32.totalorder %s20, 0
    %p235 = por %p233, %p234
    %p236 = scmp.ne.s32.totalorder %s222, %s223
    %p237 = scmp.eq.s32.totalorder %s21, 1
    %p238 = por %p236, %p237
    %p240 = scmp.ne.s32.totalorder %s223, %s239
    %p241 = scmp.eq.s32.totalorder %s21, 0
    %p242 = por %p240, %p241
    %p243 = scmp.le.s32.totalorder 1, %s15
    %p244 = scmp.lt.s32.totalorder %s15, 3
    %p245 = pnand %p243, %p244
    %p246 = pneg %p245
    // Predicated region
    $region9: #{_lambda_.36} parent=5 // pred_check
      _
    $region10: #{_lambda_.36} parent=5 // pred_check_branch
      %248 = sbr.rel (%p245) target = $region12
    $region11: #{_lambda_.36} parent=5 // pred_region
      %s249 = ssub.s32 %s15, 1
      // Predicated region
      $region13: #{_lambda_.36} parent=11 // pred_check
        %p250 = pneg %p62
      $region14: #{_lambda_.36} parent=11 // pred_check_branch
        %252 = sbr.rel (%p250) target = $region16
      $region15: #{_lambda_.36} parent=11 // pred_region
        _
      $region16: #{_lambda_.36} parent=11 // pred_fallthru
        _
      // Predicated region
      $region17: #{_lambda_.36} parent=11 // pred_check
        %p253 = pneg %p83
      $region18: #{_lambda_.36} parent=11 // pred_check_branch
        %255 = sbr.rel (%p253) target = $region20
      $region19: #{_lambda_.36} parent=11 // pred_region
        _
      $region20: #{_lambda_.36} parent=11 // pred_fallthru
        _
      // Predicated region
      $region21: #{_lambda_.36} parent=11 // pred_check
        %p256 = pneg %p104
      $region22: #{_lambda_.36} parent=11 // pred_check_branch
        %258 = sbr.rel (%p256) target = $region24
      $region23: #{_lambda_.36} parent=11 // pred_region
        _
      $region24: #{_lambda_.36} parent=11 // pred_fallthru
        _
      // Predicated region
      $region25: #{_lambda_.36} parent=11 // pred_check
        %p259 = pneg %p125
      $region26: #{_lambda_.36} parent=11 // pred_check_branch
        %261 = sbr.rel (%p259) target = $region28
      $region27: #{_lambda_.36} parent=11 // pred_region
        _
      $region28: #{_lambda_.36} parent=11 // pred_fallthru
        _
      // Predicated region
      $region29: #{_lambda_.36} parent=11 // pred_check
        %p262 = pneg %p146
      $region30: #{_lambda_.36} parent=11 // pred_check_branch
        %264 = sbr.rel (%p262) target = $region32
      $region31: #{_lambda_.36} parent=11 // pred_region
        _
      $region32: #{_lambda_.36} parent=11 // pred_fallthru
        _
      // Predicated region
      $region33: #{_lambda_.36} parent=11 // pred_check
        %p265 = pneg %p167
      $region34: #{_lambda_.36} parent=11 // pred_check_branch
        %267 = sbr.rel (%p265) target = $region36
      $region35: #{_lambda_.36} parent=11 // pred_region
        _
      $region36: #{_lambda_.36} parent=11 // pred_fallthru
        _
      // Predicated region
      $region37: #{_lambda_.36} parent=11 // pred_check
        %p268 = pneg %p188
      $region38: #{_lambda_.36} parent=11 // pred_check_branch
        %270 = sbr.rel (%p268) target = $region40
      $region39: #{_lambda_.36} parent=11 // pred_region
        _
      $region40: #{_lambda_.36} parent=11 // pred_fallthru
        _
      // Predicated region
      $region41: #{_lambda_.36} parent=11 // pred_check
        %p271 = pneg %p209
      $region42: #{_lambda_.36} parent=11 // pred_check_branch
        %273 = sbr.rel (%p271) target = $region44
      $region43: #{_lambda_.36} parent=11 // pred_region
        _
      $region44: #{_lambda_.36} parent=11 // pred_fallthru
        _
    $region12: #{_lambda_.36} parent=5 // pred_fallthru
      _
    %p274 = scmp.lt.s32.totalorder %s15, 2
    // Predicated region
    $region45: #{_lambda_.36} parent=5 // pred_check
      %p275 = pneg %p274
    $region46: #{_lambda_.36} parent=5 // pred_check_branch
      %277 = sbr.rel (%p275) target = $region48
    $region47: #{_lambda_.36} parent=5 // pred_region
      // Predicated region
      $region49: #{_lambda_.36} parent=47 // pred_check
        %p278 = pneg %p35
      $region50: #{_lambda_.36} parent=47 // pred_check_branch
        %280 = sbr.rel (%p278) target = $region52
      $region51: #{_lambda_.36} parent=47 // pred_region
        %p281 = scmp.lt.s32.totalorder %s15, 1
        %s282 = scalar_select %p281, %s15, 1
        %s283 = smul.addr %s282, 2
        %s284 = smul.addr %s283, 4
        %s285 = scalar_lea.vmem %s0, %s284
      $region52: #{_lambda_.36} parent=47 // pred_fallthru
        _
    $region48: #{_lambda_.36} parent=5 // pred_fallthru
      _
    %p286 = scmp.le.s32.totalorder 1, %s15
    %p287 = scmp.lt.s32.totalorder %s15, 3
    %p288 = pnand %p286, %p287
    %p289 = pneg %p288
    // Predicated region
    $region53: #{_lambda_.36} parent=5 // pred_check
      _
    $region54: #{_lambda_.36} parent=5 // pred_check_branch
      %291 = sbr.rel (%p288) target = $region56
    $region55: #{_lambda_.36} parent=5 // pred_region
      %s292 = ssub.s32 %s15, 1
      %p293 = scmp.lt.s32.totalorder %s20, 1
      %s294 = scalar_select %p293, %s20, 1
      %s295 = smul.addr %s294, 2
      %s296 = smul.addr %s295, 4
      %s297 = scalar_lea.vmem %s0, %s296
      %p298 = pneg %p41
      %p299 = pneg %p38
      %p300 = pneg %p62
      %p301 = pneg %p59
      %p302 = pneg %p83
      %p303 = pneg %p80
      %p304 = pneg %p104
      %p305 = pneg %p101
      %p306 = pneg %p125
      %p307 = pneg %p122
      %p308 = pneg %p146
      %p309 = pneg %p143
      %p310 = pneg %p167
      %p311 = pneg %p164
      %p312 = pneg %p188
      %p313 = pneg %p185
      %p314 = pneg %p209
      %p315 = pneg %p206
      %p316 = pneg %p235
      %p317 = pneg %p232
      %p318 = scmp.lt.s32.totalorder %s20, 1
      %s319 = scalar_select %p318, %s20, 1
      %s320 = smul.addr %s319, 2
      %s321 = smul.addr %s320, 4
      %s322 = scalar_lea.vmem %s9, %s321
      %p323 = scmp.lt.s32.totalorder %s20, 1
      %s324 = scalar_select %p323, %s20, 1
      %s325 = smul.addr %s324, 2
      %s326 = smul.addr %s325, 4
      %s327 = scalar_lea.vmem %s0, %s326
      %p328 = scmp.lt.s32.totalorder %s20, 1
      %s329 = scalar_select %p328, %s20, 1
      %s330 = smul.addr %s329, 2
      %s331 = smul.addr %s330, 4
      %s332 = scalar_lea.vmem %s9, %s331
      %v334 = vld [vmem:[%s327] sm:$0xf]
      %v335 = vld [vmem:[%s327 + $0x4] sm:$0xf]
      %v336 = vld [vmem:[%s4] sm:$0xff]
      %v337 = vld [vmem:[%s4 + $0x8] sm:$0xff]
      %v338 = vunpack.c.l.bf16 %v334
      %v339 = vunpack.c.l.bf16 %v335
      %341 = vset.pattern.permute.xlu0 0
      %342 = vperm.xlu0 %341, %v336
      %v343 = vpop.permute.xlu0 %342
      %346 = vset.pattern.permute.xlu0 0
      %347 = vperm.xlu0 %346, %v337
      %v348 = vpop.permute.xlu0 %347
      %v350 = vmul.f32 %v338, %v343
      %v351 = vmul.f32 %v339, %v348
      %352 = vset.pattern.permute.xlu0 1
      %353 = vperm.xlu0 %352, %v336
      %v354 = vpop.permute.xlu0 %353
      %356 = vset.pattern.permute.xlu0 1
      %357 = vperm.xlu0 %356, %v337
      %v358 = vpop.permute.xlu0 %357
      %v360 = vadd.f32 %v350, %v354
      %v361 = vadd.f32 %v351, %v358
      %v362 = vmax.f32 %v360, 0.0
      %v363 = vmax.f32 %v361, 0.0
      %v364 = vpack.c.bf16 %v363, %v362
      %v365 = vld [vmem:[%s1] sm:$0xf]
      %vm366 = vcmask 130048
      %v368 = vsel %vm366, %v365, 0
      %370 = vmatpush.bf16.msra.mxu0 0
      %371 = vmatpush.bf16.msra.mxu0 0
      %372 = vmatpush.bf16.msra.mxu0 0
      %373 = vmatpush.bf16.msra.mxu0 0
      %374 = vmatpush.bf16.msra.mxu0 0
      %375 = vmatpush.bf16.msra.mxu0 0
      %376 = vmatpush.bf16.msra.mxu0 0
      %377 = vmatpush.bf16.msra.mxu0 %v364
      %378 = vmatmul.bf16.gmra.mxu0 %v368
      %v379 = vpop.f32.mrf.mxu0
      %v380 = vadd.f32 0.0, %v379
      %v381 = vpop.f32.mrf.mxu0
      %382 = vdwg.mxu0
      %v383 = vld [vmem:[%s5] sm:$0xff]
      %385 = vset.pattern.permute.xlu0 0
      %386 = vperm.xlu0 %385, %v383
      %v387 = vpop.permute.xlu0 %386
      %v389 = vmul.f32 %v380, %v387
      %390 = vset.pattern.permute.xlu0 1
      %391 = vperm.xlu0 %390, %v383
      %v392 = vpop.permute.xlu0 %391
      %v394 = vadd.f32 %v389, %v392
      %v395 = vmax.f32 %v394, 0.0
      %v396 = vld [vmem:[%s8] sm:$0xff]
      %v397 = vld [vmem:[%s8 + $0x8] sm:$0x1]
      %398 = vrot.lane.b32.xlu0 %v395, 3
      %v399 = vpop.permute.xlu0 %398
      %v400 = vld [vmem:[%s2] sm:$0xf]
      %v401 = vpack.c.bf16 %v399, %v399
      %vm402 = vcmask 64512
      %v404 = vsel %vm402, %v400, 0
      %vm406 = vcmask 1043456
      %v408 = vsel %vm406, %v401, 0
      %410 = vmatpush.bf16.msra.mxu0 0
      %411 = vmatpush.bf16.msra.mxu0 0
      %412 = vmatpush.bf16.msra.mxu0 0
      %413 = vmatpush.bf16.msra.mxu0 0
      %414 = vmatpush.bf16.msra.mxu0 0
      %415 = vmatpush.bf16.msra.mxu0 0
      %416 = vmatpush.bf16.msra.mxu0 0
      %417 = vmatpush.bf16.msra.mxu0 %v408
      %418 = vmatmul.bf16.gmra.mxu0 %v404
      %v419 = vpop.f32.mrf.mxu0
      %v420 = vadd.f32 0.0, %v419
      %v421 = vpop.f32.mrf.mxu0
      %422 = vdwg.mxu0
      %v423 = vperm.slane %v396, 0
      %v424 = vmul.f32 %v420, %v423
      %v425 = vadd.f32 %v424, 0.0
      %426 = vrot.lane.b32.xlu0 %v395, 2
      %v427 = vpop.permute.xlu0 %426
      %s428 = scalar_lea.vmem %s2, 4
      %v429 = vld [vmem:[%s428] sm:$0xf]
      %v430 = vpack.c.bf16 %v427, %v427
      %v432 = vsel %vm402, %v429, 0
      %v435 = vsel %vm406, %v430, 0
      %437 = vmatpush.bf16.msra.mxu0 0
      %438 = vmatpush.bf16.msra.mxu0 0
      %439 = vmatpush.bf16.msra.mxu0 0
      %440 = vmatpush.bf16.msra.mxu0 0
      %441 = vmatpush.bf16.msra.mxu0 0
      %442 = vmatpush.bf16.msra.mxu0 0
      %443 = vmatpush.bf16.msra.mxu0 0
      %444 = vmatpush.bf16.msra.mxu0 %v435
      %445 = vmatmul.bf16.gmra.mxu0 %v432
      %v446 = vpop.f32.mrf.mxu0
      %v447 = vadd.f32 0.0, %v446
      %v448 = vpop.f32.mrf.mxu0
      %449 = vdwg.mxu0
      %v450 = vperm.slane %v396, 1
      %v451 = vmul.f32 %v447, %v450
      %v452 = vadd.f32 %v425, %v451
      %453 = vrot.lane.b32.xlu0 %v395, 1
      %v454 = vpop.permute.xlu0 %453
      %s455 = scalar_lea.vmem %s2, 8
      %v456 = vld [vmem:[%s455] sm:$0xf]
      %v457 = vpack.c.bf16 %v454, %v454
      %v459 = vsel %vm402, %v456, 0
      %v462 = vsel %vm406, %v457, 0
      %464 = vmatpush.bf16.msra.mxu0 0
      %465 = vmatpush.bf16.msra.mxu0 0
      %466 = vmatpush.bf16.msra.mxu0 0
      %467 = vmatpush.bf16.msra.mxu0 0
      %468 = vmatpush.bf16.msra.mxu0 0
      %469 = vmatpush.bf16.msra.mxu0 0
      %470 = vmatpush.bf16.msra.mxu0 0
      %471 = vmatpush.bf16.msra.mxu0 %v462
      %472 = vmatmul.bf16.gmra.mxu0 %v459
      %v473 = vpop.f32.mrf.mxu0
      %v474 = vadd.f32 0.0, %v473
      %v475 = vpop.f32.mrf.mxu0
      %476 = vdwg.mxu0
      %v477 = vperm.slane %v396, 2
      %v478 = vmul.f32 %v474, %v477
      %v479 = vadd.f32 %v452, %v478
      %s480 = scalar_lea.vmem %s2, 12
      %v481 = vld [vmem:[%s480] sm:$0xf]
      %v483 = vsel %vm402, %v481, 0
      %485 = vmatpush.bf16.msra.mxu0 0
      %486 = vmatpush.bf16.msra.mxu0 0
      %487 = vmatpush.bf16.msra.mxu0 0
      %488 = vmatpush.bf16.msra.mxu0 0
      %489 = vmatpush.bf16.msra.mxu0 0
      %490 = vmatpush.bf16.msra.mxu0 0
      %491 = vmatpush.bf16.msra.mxu0 0
      %492 = vmatpush.bf16.msra.mxu0 %v462
      %493 = vmatmul.bf16.gmra.mxu0 %v483
      %v494 = vpop.f32.mrf.mxu0
      %v495 = vadd.f32 0.0, %v494
      %v496 = vpop.f32.mrf.mxu0
      %497 = vdwg.mxu0
      %v498 = vperm.slane %v396, 3
      %v499 = vmul.f32 %v495, %v498
      %v500 = vadd.f32 %v479, %v499
      %s501 = scalar_lea.vmem %s2, 16
      %v502 = vld [vmem:[%s501] sm:$0xf]
      %v503 = vpack.c.bf16 %v395, %v395
      %v505 = vsel %vm402, %v502, 0
      %v508 = vsel %vm406, %v503, 0
      %510 = vmatpush.bf16.msra.mxu0 0
      %511 = vmatpush.bf16.msra.mxu0 0
      %512 = vmatpush.bf16.msra.mxu0 0
      %513 = vmatpush.bf16.msra.mxu0 0
      %514 = vmatpush.bf16.msra.mxu0 0
      %515 = vmatpush.bf16.msra.mxu0 0
      %516 = vmatpush.bf16.msra.mxu0 0
      %517 = vmatpush.bf16.msra.mxu0 %v508
      %518 = vmatmul.bf16.gmra.mxu0 %v505
      %v519 = vpop.f32.mrf.mxu0
      %v520 = vadd.f32 0.0, %v519
      %v521 = vpop.f32.mrf.mxu0
      %522 = vdwg.mxu0
      %v523 = vperm.slane %v396, 4
      %v524 = vmul.f32 %v520, %v523
      %v525 = vadd.f32 %v500, %v524
      %526 = vrot.lane.b32.xlu0 %v395, 127
      %v527 = vpop.permute.xlu0 %526
      %s528 = scalar_lea.vmem %s2, 20
      %v529 = vld [vmem:[%s528] sm:$0xf]
      %v530 = vpack.c.bf16 %v527, %v527
      %v532 = vsel %vm402, %v529, 0
      %v535 = vsel %vm406, %v530, 0
      %537 = vmatpush.bf16.msra.mxu0 0
      %538 = vmatpush.bf16.msra.mxu0 0
      %539 = vmatpush.bf16.msra.mxu0 0
      %540 = vmatpush.bf16.msra.mxu0 0
      %541 = vmatpush.bf16.msra.mxu0 0
      %542 = vmatpush.bf16.msra.mxu0 0
      %543 = vmatpush.bf16.msra.mxu0 0
      %544 = vmatpush.bf16.msra.mxu0 %v535
      %545 = vmatmul.bf16.gmra.mxu0 %v532
      %v546 = vpop.f32.mrf.mxu0
      %v547 = vadd.f32 0.0, %v546
      %v548 = vpop.f32.mrf.mxu0
      %549 = vdwg.mxu0
      %v550 = vperm.slane %v396, 5
      %v551 = vmul.f32 %v547, %v550
      %v552 = vadd.f32 %v525, %v551
      %s553 = scalar_lea.vmem %s2, 24
      %v554 = vld [vmem:[%s553] sm:$0xf]
      %v556 = vsel %vm402, %v554, 0
      %558 = vmatpush.bf16.msra.mxu0 0
      %559 = vmatpush.bf16.msra.mxu0 0
      %560 = vmatpush.bf16.msra.mxu0 0
      %561 = vmatpush.bf16.msra.mxu0 0
      %562 = vmatpush.bf16.msra.mxu0 0
      %563 = vmatpush.bf16.msra.mxu0 0
      %564 = vmatpush.bf16.msra.mxu0 0
      %565 = vmatpush.bf16.msra.mxu0 %v535
      %566 = vmatmul.bf16.gmra.mxu0 %v556
      %v567 = vpop.f32.mrf.mxu0
      %v568 = vadd.f32 0.0, %v567
      %v569 = vpop.f32.mrf.mxu0
      %570 = vdwg.mxu0
      %v571 = vperm.slane %v396, 6
      %v572 = vmul.f32 %v568, %v571
      %v573 = vadd.f32 %v552, %v572
      %574 = vrot.lane.b32.xlu0 %v395, 126
      %v575 = vpop.permute.xlu0 %574
      %s576 = scalar_lea.vmem %s2, 28
      %v577 = vld [vmem:[%s576] sm:$0xf]
      %v578 = vpack.c.bf16 %v575, %v575
      %v580 = vsel %vm402, %v577, 0
      %v583 = vsel %vm406, %v578, 0
      %585 = vmatpush.bf16.msra.mxu0 0
      %586 = vmatpush.bf16.msra.mxu0 0
      %587 = vmatpush.bf16.msra.mxu0 0
      %588 = vmatpush.bf16.msra.mxu0 0
      %589 = vmatpush.bf16.msra.mxu0 0
      %590 = vmatpush.bf16.msra.mxu0 0
      %591 = vmatpush.bf16.msra.mxu0 0
      %592 = vmatpush.bf16.msra.mxu0 %v583
      %593 = vmatmul.bf16.gmra.mxu0 %v580
      %v594 = vpop.f32.mrf.mxu0
      %v595 = vadd.f32 0.0, %v594
      %v596 = vpop.f32.mrf.mxu0
      %597 = vdwg.mxu0
      %v598 = vperm.slane %v396, 7
      %v599 = vmul.f32 %v595, %v598
      %v600 = vadd.f32 %v573, %v599
      %601 = vrot.lane.b32.xlu0 %v395, 125
      %v602 = vpop.permute.xlu0 %601
      %s603 = scalar_lea.vmem %s2, 32
      %v604 = vld [vmem:[%s603] sm:$0xf]
      %v605 = vpack.c.bf16 %v602, %v602
      %v607 = vsel %vm402, %v604, 0
      %v610 = vsel %vm406, %v605, 0
      %612 = vmatpush.bf16.msra.mxu0 0
      %613 = vmatpush.bf16.msra.mxu0 0
      %614 = vmatpush.bf16.msra.mxu0 0
      %615 = vmatpush.bf16.msra.mxu0 0
      %616 = vmatpush.bf16.msra.mxu0 0
      %617 = vmatpush.bf16.msra.mxu0 0
      %618 = vmatpush.bf16.msra.mxu0 0
      %619 = vmatpush.bf16.msra.mxu0 %v610
      %620 = vmatmul.bf16.gmra.mxu0 %v607
      %v621 = vpop.f32.mrf.mxu0
      %v622 = vadd.f32 0.0, %v621
      %v623 = vpop.f32.mrf.mxu0
      %624 = vdwg.mxu0
      %v625 = vperm.slane %v397, 0
      %v626 = vmul.f32 %v622, %v625
      %v627 = vadd.f32 %v600, %v626
      %v628 = vld [vmem:[%s6] sm:$0xff]
      %630 = vset.pattern.permute.xlu0 0
      %631 = vperm.xlu0 %630, %v628
      %v632 = vpop.permute.xlu0 %631
      %v634 = vmul.f32 %v627, %v632
      %635 = vset.pattern.permute.xlu0 1
      %636 = vperm.xlu0 %635, %v628
      %v637 = vpop.permute.xlu0 %636
      %v639 = vadd.f32 %v634, %v637
      %v640 = vmax.f32 %v639, 0.0
      %v641 = vpack.c.bf16 %v640, %v640
      %v642 = vld [vmem:[%s3] sm:$0xf]
      %v643 = vld [vmem:[%s3 + $0x4] sm:$0xf]
      %v644 = vld [vmem:[%s7] sm:$0xff]
      %v645 = vld [vmem:[%s7 + $0x8] sm:$0xff]
      %647 = vset.pattern.permute.xlu0 0
      %648 = vperm.xlu0 %647, %v644
      %v649 = vpop.permute.xlu0 %648
      %652 = vset.pattern.permute.xlu0 0
      %653 = vperm.xlu0 %652, %v645
      %v654 = vpop.permute.xlu0 %653
      %v658 = vunpack.c.l.b16 %v642
      %v659 = vunpack.c.l.b16 %v643
      %v660 = vpack.c.b16 %v659, %v658
      %v662 = vsel %vm402, %v660, 0
      %v665 = vsel %vm406, %v641, 0
      %667 = vmatpush.bf16.msra.mxu0 0
      %668 = vmatpush.bf16.msra.mxu0 0
      %669 = vmatpush.bf16.msra.mxu0 0
      %670 = vmatpush.bf16.msra.mxu0 0
      %671 = vmatpush.bf16.msra.mxu0 0
      %672 = vmatpush.bf16.msra.mxu0 0
      %673 = vmatpush.bf16.msra.mxu0 0
      %674 = vmatpush.bf16.msra.mxu0 %v665
      %675 = vmatmul.bf16.gmra.mxu0 %v662
      %v676 = vpop.f32.mrf.mxu0
      %v677 = vadd.f32 %v649, %v676
      %v678 = vpop.f32.mrf.mxu0
      %v679 = vadd.f32 %v654, %v678
      %680 = vdwg.mxu0
      %v681 = vadd.f32 %v677, %v338
      %v682 = vadd.f32 %v679, %v339
      %v683 = vpack.c.bf16 %v681, %v681
      %v684 = vpack.c.bf16 %v682, %v682
      %685 = vst [vmem:[%s332] sm:$0xf] %v683
      %686 = vst [vmem:[%s332 + $0x4] sm:$0xf] %v684
      %p687 = scmp.lt.s32.totalorder %s20, 1
      %s688 = scalar_select %p687, %s20, 1
      %s689 = smul.addr %s688, 2
      %s690 = smul.addr %s689, 4
      %s691 = scalar_lea.vmem %s9, %s690
      // Predicated region
      $region57: #{_lambda_.36} parent=55 // pred_check
        %p692 = pneg %p232
      $region58: #{_lambda_.36} parent=55 // pred_check_branch
        %694 = sbr.rel (%p692) target = $region60
      $region59: #{_lambda_.36} parent=55 // pred_region
        _
      $region60: #{_lambda_.36} parent=55 // pred_fallthru
        _
    $region56: #{_lambda_.36} parent=5 // pred_fallthru
      _
    %p695 = scmp.le.s32.totalorder 2, %s15
    // Predicated region
    $region61: #{_lambda_.36} parent=5 // pred_check
      %p696 = pneg %p695
    $region62: #{_lambda_.36} parent=5 // pred_check_branch
      %698 = sbr.rel (%p696) target = $region64
    $region63: #{_lambda_.36} parent=5 // pred_region
      %s699 = ssub.s32 %s15, 2
      // Predicated region
      $region65: #{_lambda_.36} parent=63 // pred_check
        %p700 = pneg %p238
      $region66: #{_lambda_.36} parent=63 // pred_check_branch
        %702 = sbr.rel (%p700) target = $region68
      $region67: #{_lambda_.36} parent=63 // pred_region
        %p703 = scmp.lt.s32.totalorder %s21, 1
        %s704 = scalar_select %p703, %s21, 1
        %s705 = smul.addr %s704, 2
        %s706 = smul.addr %s705, 4
        %s707 = scalar_lea.vmem %s9, %s706
      $region68: #{_lambda_.36} parent=63 // pred_fallthru
        _
    $region64: #{_lambda_.36} parent=5 // pred_fallthru
      _
  $region6: #{_lambda_.36} parent=0 // loop_footer
    %s19 = sadd.s32 1, %s15
  $region7: #{_lambda_.36} parent=0 // loop_footer_branch
    %14 = sbr.rel target = $region3
  $region8: #{_lambda_.36} parent=0 // loop_exit
    _

// kernel: _lambda_.41
$region0: #{_lambda_.41}
  #allocation0 [shape = 'u32[]', space=smem, size = 0x4, offset = 0x4, fixed_abs, tag = 'smem constant byte address 0x4 - core index']
  #allocation1 [shape = 'u32[72,128]{1,0:T(1,128)}', space=vmem, size = 0x9000, scoped, tag = 'internal scratch']
  %s0 = inlined_call_operand.vmem [shape: bf16[2,16,64], index: 0, kind: input, shape index: {}]
  %s1 = inlined_call_operand.vmem [shape: bf16[16,16], index: 1, kind: input, shape index: {}]
  %s2 = inlined_call_operand.vmem [shape: f32[16,2], index: 2, kind: input, shape index: {}]
  %s3 = inlined_call_operand.vmem [shape: bf16[5,16], index: 3, kind: input, shape index: {}]
  %s4 = inlined_call_operand.vmem [shape: f32[5,1], index: 4, kind: input, shape index: {}]
  %s5 = inlined_call_operand.vmem [shape: f32[2,5,64], index: 5, kind: output, shape index: {0}]
  %s6 = inlined_call_operand.vmem [shape: f32[2,16,64], index: 6, kind: output, shape index: {1}]
  %7 = xla_tuple %s5, %s6
  %s8 = sld [smem:[#allocation0]]
  $region61: #{_lambda_.41} parent=0
    _
  %s10 = ssub.s32 1, %s8
  %s11 = scalar_select 0, %s10, %s8
  loop: start=0, step=1, limit=4
  $region2: #{_lambda_.41} parent=0 // loop_pre_header
    _
  $region3: #{_lambda_.41} parent=0 // loop_header
    %s13 = sphi 0, %s17
    %p14 = scmp.ge.s32.totalorder %s13, 4
    %s23 = sphi 0, %s25
    %s26 = sphi 0, %s23
    %s27 = sphi 0, %s26
    %s43 = sphi 0, %s27
    %s47 = sphi 0, %s47
    %s49 = sphi 0, %s47
    %s50 = sphi 0, %s49
    %s64 = sphi 0, %s50
    %s68 = sphi 0, %s68
    %s70 = sphi 0, %s68
    %s71 = sphi 0, %s70
    %s85 = sphi 0, %s71
    %s89 = sphi 0, %s89
    %s91 = sphi 0, %s89
    %s92 = sphi 0, %s91
    %s106 = sphi 0, %s92
    %s110 = sphi 0, %s110
    %s112 = sphi 0, %s110
    %s113 = sphi 0, %s112
    %s127 = sphi 0, %s113
    %s133 = sphi 0, %s135
    %s136 = sphi 0, %s133
    %s137 = sphi 0, %s136
    %s153 = sphi 0, %s137
    %s159 = sphi 0, %s161
    %s162 = sphi 0, %s159
    %s163 = sphi 0, %s162
    %s179 = sphi 0, %s163
  $region4: #{_lambda_.41} parent=0 // loop_header_branch
    %16 = sbr.rel (%p14) target = $region8
  $region5: #{_lambda_.41} parent=0 // loop_body
    %s18 = ssub.s32 %s13, 1
    %s19 = ssub.s32 %s13, 2
    %s20 = sadd.s32 %s13, 1
    %s21 = ssub.s32 %s13, %s20
    %p22 = scmp.eq.s32.totalorder %s21, 0
    %s24 = sadd.s32 %s23, 1
    %s25 = scalar_select %p22, %s23, %s24
    %p28 = pneg %p22
    %p29 = scmp.eq.s32.totalorder %s13, 1
    %p30 = por %p28, %p29
    %p31 = scmp.ne.s32.totalorder %s23, %s26
    %p32 = scmp.eq.s32.totalorder %s13, 0
    %p33 = por %p31, %p32
    %p34 = scmp.ne.s32.totalorder %s23, %s26
    %p35 = scmp.eq.s32.totalorder %s18, 1
    %p36 = por %p34, %p35
    %p37 = scmp.ne.s32.totalorder %s26, %s27
    %p38 = scmp.eq.s32.totalorder %s18, 0
    %p39 = por %p37, %p38
    %p40 = scmp.ne.s32.totalorder %s26, %s27
    %p41 = scmp.eq.s32.totalorder %s19, 1
    %p42 = por %p40, %p41
    %p44 = scmp.ne.s32.totalorder %s27, %s43
    %p45 = scmp.eq.s32.totalorder %s19, 0
    %p46 = por %p44, %p45
    %s48 = sadd.s32 %s47, 1
    %p51 = scmp.eq.s32.totalorder %s13, 1
    %p52 = scmp.ne.s32.totalorder %s47, %s49
    %p53 = scmp.eq.s32.totalorder %s13, 0
    %p54 = por %p52, %p53
    %p55 = scmp.ne.s32.totalorder %s47, %s49
    %p56 = scmp.eq.s32.totalorder %s18, 1
    %p57 = por %p55, %p56
    %p58 = scmp.ne.s32.totalorder %s49, %s50
    %p59 = scmp.eq.s32.totalorder %s18, 0
    %p60 = por %p58, %p59
    %p61 = scmp.ne.s32.totalorder %s49, %s50
    %p62 = scmp.eq.s32.totalorder %s19, 1
    %p63 = por %p61, %p62
    %p65 = scmp.ne.s32.totalorder %s50, %s64
    %p66 = scmp.eq.s32.totalorder %s19, 0
    %p67 = por %p65, %p66
    %s69 = sadd.s32 %s68, 1
    %p72 = scmp.eq.s32.totalorder %s13, 1
    %p73 = scmp.ne.s32.totalorder %s68, %s70
    %p74 = scmp.eq.s32.totalorder %s13, 0
    %p75 = por %p73, %p74
    %p76 = scmp.ne.s32.totalorder %s68, %s70
    %p77 = scmp.eq.s32.totalorder %s18, 1
    %p78 = por %p76, %p77
    %p79 = scmp.ne.s32.totalorder %s70, %s71
    %p80 = scmp.eq.s32.totalorder %s18, 0
    %p81 = por %p79, %p80
    %p82 = scmp.ne.s32.totalorder %s70, %s71
    %p83 = scmp.eq.s32.totalorder %s19, 1
    %p84 = por %p82, %p83
    %p86 = scmp.ne.s32.totalorder %s71, %s85
    %p87 = scmp.eq.s32.totalorder %s19, 0
    %p88 = por %p86, %p87
    %s90 = sadd.s32 %s89, 1
    %p93 = scmp.eq.s32.totalorder %s13, 1
    %p94 = scmp.ne.s32.totalorder %s89, %s91
    %p95 = scmp.eq.s32.totalorder %s13, 0
    %p96 = por %p94, %p95
    %p97 = scmp.ne.s32.totalorder %s89, %s91
    %p98 = scmp.eq.s32.totalorder %s18, 1
    %p99 = por %p97, %p98
    %p100 = scmp.ne.s32.totalorder %s91, %s92
    %p101 = scmp.eq.s32.totalorder %s18, 0
    %p102 = por %p100, %p101
    %p103 = scmp.ne.s32.totalorder %s91, %s92
    %p104 = scmp.eq.s32.totalorder %s19, 1
    %p105 = por %p103, %p104
    %p107 = scmp.ne.s32.totalorder %s92, %s106
    %p108 = scmp.eq.s32.totalorder %s19, 0
    %p109 = por %p107, %p108
    %s111 = sadd.s32 %s110, 1
    %p114 = scmp.eq.s32.totalorder %s13, 1
    %p115 = scmp.ne.s32.totalorder %s110, %s112
    %p116 = scmp.eq.s32.totalorder %s13, 0
    %p117 = por %p115, %p116
    %p118 = scmp.ne.s32.totalorder %s110, %s112
    %p119 = scmp.eq.s32.totalorder %s18, 1
    %p120 = por %p118, %p119
    %p121 = scmp.ne.s32.totalorder %s112, %s113
    %p122 = scmp.eq.s32.totalorder %s18, 0
    %p123 = por %p121, %p122
    %p124 = scmp.ne.s32.totalorder %s112, %s113
    %p125 = scmp.eq.s32.totalorder %s19, 1
    %p126 = por %p124, %p125
    %p128 = scmp.ne.s32.totalorder %s113, %s127
    %p129 = scmp.eq.s32.totalorder %s19, 0
    %p130 = por %p128, %p129
    %s131 = ssub.s32 %s13, %s20
    %p132 = scmp.eq.s32.totalorder %s131, 0
    %s134 = sadd.s32 %s133, 1
    %s135 = scalar_select %p132, %s133, %s134
    %p138 = pneg %p132
    %p139 = scmp.eq.s32.totalorder %s13, 1
    %p140 = por %p138, %p139
    %p141 = scmp.ne.s32.totalorder %s133, %s136
    %p142 = scmp.eq.s32.totalorder %s13, 0
    %p143 = por %p141, %p142
    %p144 = scmp.ne.s32.totalorder %s133, %s136
    %p145 = scmp.eq.s32.totalorder %s18, 1
    %p146 = por %p144, %p145
    %p147 = scmp.ne.s32.totalorder %s136, %s137
    %p148 = scmp.eq.s32.totalorder %s18, 0
    %p149 = por %p147, %p148
    %p150 = scmp.ne.s32.totalorder %s136, %s137
    %p151 = scmp.eq.s32.totalorder %s19, 1
    %p152 = por %p150, %p151
    %p154 = scmp.ne.s32.totalorder %s137, %s153
    %p155 = scmp.eq.s32.totalorder %s19, 0
    %p156 = por %p154, %p155
    %s157 = ssub.s32 %s13, %s20
    %p158 = scmp.eq.s32.totalorder %s157, 0
    %s160 = sadd.s32 %s159, 1
    %s161 = scalar_select %p158, %s159, %s160
    %p164 = pneg %p158
    %p165 = scmp.eq.s32.totalorder %s13, 1
    %p166 = por %p164, %p165
    %p167 = scmp.ne.s32.totalorder %s159, %s162
    %p168 = scmp.eq.s32.totalorder %s13, 0
    %p169 = por %p167, %p168
    %p170 = scmp.ne.s32.totalorder %s159, %s162
    %p171 = scmp.eq.s32.totalorder %s18, 1
    %p172 = por %p170, %p171
    %p173 = scmp.ne.s32.totalorder %s162, %s163
    %p174 = scmp.eq.s32.totalorder %s18, 0
    %p175 = por %p173, %p174
    %p176 = scmp.ne.s32.totalorder %s162, %s163
    %p177 = scmp.eq.s32.totalorder %s19, 1
    %p178 = por %p176, %p177
    %p180 = scmp.ne.s32.totalorder %s163, %s179
    %p181 = scmp.eq.s32.totalorder %s19, 0
    %p182 = por %p180, %p181
    %p183 = scmp.le.s32.totalorder 1, %s13
    %p184 = scmp.lt.s32.totalorder %s13, 3
    %p185 = pnand %p183, %p184
    %p186 = pneg %p185
    // Predicated region
    $region9: #{_lambda_.41} parent=5 // pred_check
      _
    $region10: #{_lambda_.41} parent=5 // pred_check_branch
      %188 = sbr.rel (%p185) target = $region12
    $region11: #{_lambda_.41} parent=5 // pred_region
      %s189 = ssub.s32 %s13, 1
      // Predicated region
      $region13: #{_lambda_.41} parent=11 // pred_check
        %p190 = pneg %p60
      $region14: #{_lambda_.41} parent=11 // pred_check_branch
        %192 = sbr.rel (%p190) target = $region16
      $region15: #{_lambda_.41} parent=11 // pred_region
        _
      $region16: #{_lambda_.41} parent=11 // pred_fallthru
        _
      // Predicated region
      $region17: #{_lambda_.41} parent=11 // pred_check
        %p193 = pneg %p81
      $region18: #{_lambda_.41} parent=11 // pred_check_branch
        %195 = sbr.rel (%p193) target = $region20
      $region19: #{_lambda_.41} parent=11 // pred_region
        _
      $region20: #{_lambda_.41} parent=11 // pred_fallthru
        _
      // Predicated region
      $region21: #{_lambda_.41} parent=11 // pred_check
        %p196 = pneg %p102
      $region22: #{_lambda_.41} parent=11 // pred_check_branch
        %198 = sbr.rel (%p196) target = $region24
      $region23: #{_lambda_.41} parent=11 // pred_region
        _
      $region24: #{_lambda_.41} parent=11 // pred_fallthru
        _
      // Predicated region
      $region25: #{_lambda_.41} parent=11 // pred_check
        %p199 = pneg %p123
      $region26: #{_lambda_.41} parent=11 // pred_check_branch
        %201 = sbr.rel (%p199) target = $region28
      $region27: #{_lambda_.41} parent=11 // pred_region
        _
      $region28: #{_lambda_.41} parent=11 // pred_fallthru
        _
    $region12: #{_lambda_.41} parent=5 // pred_fallthru
      _
    %p202 = scmp.lt.s32.totalorder %s13, 2
    // Predicated region
    $region29: #{_lambda_.41} parent=5 // pred_check
      %p203 = pneg %p202
    $region30: #{_lambda_.41} parent=5 // pred_check_branch
      %205 = sbr.rel (%p203) target = $region32
    $region31: #{_lambda_.41} parent=5 // pred_region
      // Predicated region
      $region33: #{_lambda_.41} parent=31 // pred_check
        %p206 = pneg %p33
      $region34: #{_lambda_.41} parent=31 // pred_check_branch
        %208 = sbr.rel (%p206) target = $region36
      $region35: #{_lambda_.41} parent=31 // pred_region
        %p209 = scmp.lt.s32.totalorder %s13, 1
        %s210 = scalar_select %p209, %s13, 1
        %s211 = smul.addr %s210, 2
        %s212 = smul.addr %s211, 4
        %s213 = scalar_lea.vmem %s0, %s212
      $region36: #{_lambda_.41} parent=31 // pred_fallthru
        _
    $region32: #{_lambda_.41} parent=5 // pred_fallthru
      _
    %p214 = scmp.le.s32.totalorder 1, %s13
    %p215 = scmp.lt.s32.totalorder %s13, 3
    %p216 = pnand %p214, %p215
    %p217 = pneg %p216
    // Predicated region
    $region37: #{_lambda_.41} parent=5 // pred_check
      _
    $region38: #{_lambda_.41} parent=5 // pred_check_branch
      %219 = sbr.rel (%p216) target = $region40
    $region39: #{_lambda_.41} parent=5 // pred_region
      %s220 = ssub.s32 %s13, 1
      %p221 = scmp.lt.s32.totalorder %s18, 1
      %s222 = scalar_select %p221, %s18, 1
      %s223 = smul.addr %s222, 2
      %s224 = smul.addr %s223, 4
      %s225 = scalar_lea.vmem %s0, %s224
      %p226 = pneg %p39
      %p227 = pneg %p36
      %p228 = pneg %p60
      %p229 = pneg %p57
      %p230 = pneg %p81
      %p231 = pneg %p78
      %p232 = pneg %p102
      %p233 = pneg %p99
      %p234 = pneg %p123
      %p235 = pneg %p120
      %p236 = pneg %p149
      %p237 = pneg %p146
      %p238 = scmp.lt.s32.totalorder %s18, 1
      %s239 = scalar_select %p238, %s18, 1
      %s240 = smul.addr %s239, 8
      %s241 = scalar_lea.vmem %s5, %s240
      %p242 = pneg %p175
      %p243 = pneg %p172
      %p244 = scmp.lt.s32.totalorder %s18, 1
      %s245 = scalar_select %p244, %s18, 1
      %s246 = smul.addr %s245, 2
      %s247 = smul.addr %s246, 8
      %s248 = scalar_lea.vmem %s6, %s247
      %p249 = scmp.lt.s32.totalorder %s18, 1
      %s250 = scalar_select %p249, %s18, 1
      %s251 = smul.addr %s250, 2
      %s252 = smul.addr %s251, 4
      %s253 = scalar_lea.vmem %s0, %s252
      %p254 = scmp.lt.s32.totalorder %s18, 1
      %s255 = scalar_select %p254, %s18, 1
      %s256 = smul.addr %s255, 8
      %s257 = scalar_lea.vmem %s5, %s256
      %p258 = scmp.lt.s32.totalorder %s18, 1
      %s259 = scalar_select %p258, %s18, 1
      %s260 = smul.addr %s259, 2
      %s261 = smul.addr %s260, 8
      %s262 = scalar_lea.vmem %s6, %s261
      %v264 = vld [vmem:[%s253] sm:$0xf]
      %v265 = vld [vmem:[%s253 + $0x4] sm:$0xf]
      %v266 = vld [vmem:[%s1] sm:$0xf]
      %v267 = vld [vmem:[%s1 + $0x4] sm:$0xf]
      %v270 = vunpack.c.l.b16 %v266
      %v271 = vunpack.c.l.b16 %v267
      %v272 = vpack.c.b16 %v271, %v270
      %v275 = vunpack.c.l.b16 %v264
      %v276 = vunpack.c.l.b16 %v265
      %v277 = vpack.c.b16 %v276, %v275
      %vm279 = vcmask 130048
      %v281 = vsel %vm279, %v272, 0
      %283 = vmatpush.bf16.msra.mxu0 0
      %284 = vmatpush.bf16.msra.mxu0 0
      %285 = vmatpush.bf16.msra.mxu0 0
      %286 = vmatpush.bf16.msra.mxu0 0
      %287 = vmatpush.bf16.msra.mxu0 0
      %288 = vmatpush.bf16.msra.mxu0 0
      %289 = vmatpush.bf16.msra.mxu0 0
      %290 = vmatpush.bf16.msra.mxu0 %v277
      %291 = vmatmul.bf16.gmra.mxu0 %v281
      %v292 = vpop.f32.mrf.mxu0
      %v293 = vadd.f32 0.0, %v292
      %v294 = vpop.f32.mrf.mxu0
      %v295 = vadd.f32 0.0, %v294
      %296 = vdwg.mxu0
      %v297 = vld [vmem:[%s2] sm:$0xff]
      %v298 = vld [vmem:[%s2 + $0x8] sm:$0xff]
      %300 = vset.pattern.permute.xlu0 0
      %301 = vperm.xlu0 %300, %v297
      %v302 = vpop.permute.xlu0 %301
      %305 = vset.pattern.permute.xlu0 0
      %306 = vperm.xlu0 %305, %v298
      %v307 = vpop.permute.xlu0 %306
      %v309 = vmul.f32 %v293, %v302
      %v310 = vmul.f32 %v295, %v307
      %311 = vset.pattern.permute.xlu0 1
      %312 = vperm.xlu0 %311, %v297
      %v313 = vpop.permute.xlu0 %312
      %315 = vset.pattern.permute.xlu0 1
      %316 = vperm.xlu0 %315, %v298
      %v317 = vpop.permute.xlu0 %316
      %v319 = vadd.f32 %v309, %v313
      %v320 = vadd.f32 %v310, %v317
      %v321 = vmax.f32 %v319, 0.0
      %v322 = vmax.f32 %v320, 0.0
      %v323 = vpack.c.bf16 %v322, %v321
      %v324 = vld [vmem:[%s3] sm:$0x7]
      %v325 = vld [vmem:[%s4] sm:$0x1f]
      %327 = vset.pattern.permute.xlu0 0
      %328 = vperm.xlu0 %327, %v325
      %v329 = vpop.permute.xlu0 %328
      %v332 = vsel %vm279, %v324, 0
      %334 = vmatpush.bf16.msra.mxu0 0
      %335 = vmatpush.bf16.msra.mxu0 0
      %336 = vmatpush.bf16.msra.mxu0 0
      %337 = vmatpush.bf16.msra.mxu0 0
      %338 = vmatpush.bf16.msra.mxu0 0
      %339 = vmatpush.bf16.msra.mxu0 0
      %340 = vmatpush.bf16.msra.mxu0 0
      %341 = vmatpush.bf16.msra.mxu0 %v323
      %342 = vmatmul.bf16.gmra.mxu0 %v332
      %v343 = vpop.f32.mrf.mxu0
      %v344 = vadd.f32 %v329, %v343
      %v345 = vpop.f32.mrf.mxu0
      %346 = vdwg.mxu0
      %vm347 = vcmask 520192
      %348 = vst.msk [vmem:[%s257] sm:$0x1f] %vm347, %v344
      %vm349 = vcmask 523264
      %350 = vst.msk [vmem:[%s262] sm:$0xff] %vm349, %v321
      %351 = vst.msk [vmem:[%s262 + $0x8] sm:$0xff] %vm349, %v322
      %p352 = scmp.lt.s32.totalorder %s18, 1
      %s353 = scalar_select %p352, %s18, 1
      %s354 = smul.addr %s353, 8
      %s355 = scalar_lea.vmem %s5, %s354
      %p356 = scmp.lt.s32.totalorder %s18, 1
      %s357 = scalar_select %p356, %s18, 1
      %s358 = smul.addr %s357, 2
      %s359 = smul.addr %s358, 8
      %s360 = scalar_lea.vmem %s6, %s359
      // Predicated region
      $region41: #{_lambda_.41} parent=39 // pred_check
        %p361 = pneg %p146
      $region42: #{_lambda_.41} parent=39 // pred_check_branch
        %363 = sbr.rel (%p361) target = $region44
      $region43: #{_lambda_.41} parent=39 // pred_region
        _
      $region44: #{_lambda_.41} parent=39 // pred_fallthru
        _
      // Predicated region
      $region45: #{_lambda_.41} parent=39 // pred_check
        %p364 = pneg %p172
      $region46: #{_lambda_.41} parent=39 // pred_check_branch
        %366 = sbr.rel (%p364) target = $region48
      $region47: #{_lambda_.41} parent=39 // pred_region
        _
      $region48: #{_lambda_.41} parent=39 // pred_fallthru
        _
    $region40: #{_lambda_.41} parent=5 // pred_fallthru
      _
    %p367 = scmp.le.s32.totalorder 2, %s13
    // Predicated region
    $region49: #{_lambda_.41} parent=5 // pred_check
      %p368 = pneg %p367
    $region50: #{_lambda_.41} parent=5 // pred_check_branch
      %370 = sbr.rel (%p368) target = $region52
    $region51: #{_lambda_.41} parent=5 // pred_region
      %s371 = ssub.s32 %s13, 2
      // Predicated region
      $region53: #{_lambda_.41} parent=51 // pred_check
        %p372 = pneg %p152
      $region54: #{_lambda_.41} parent=51 // pred_check_branch
        %374 = sbr.rel (%p372) target = $region56
      $region55: #{_lambda_.41} parent=51 // pred_region
        %p375 = scmp.lt.s32.totalorder %s19, 1
        %s376 = scalar_select %p375, %s19, 1
        %s377 = smul.addr %s376, 8
        %s378 = scalar_lea.vmem %s5, %s377
      $region56: #{_lambda_.41} parent=51 // pred_fallthru
        _
      // Predicated region
      $region57: #{_lambda_.41} parent=51 // pred_check
        %p379 = pneg %p178
      $region58: #{_lambda_.41} parent=51 // pred_check_branch
        %381 = sbr.rel (%p379) target = $region60
      $region59: #{_lambda_.41} parent=51 // pred_region
        %p382 = scmp.lt.s32.totalorder %s19, 1
        %s383 = scalar_select %p382, %s19, 1
        %s384 = smul.addr %s383, 2
        %s385 = smul.addr %s384, 8
        %s386 = scalar_lea.vmem %s6, %s385
      $region60: #{_lambda_.41} parent=51 // pred_fallthru
        _
    $region52: #{_lambda_.41} parent=5 // pred_fallthru
      _
  $region6: #{_lambda_.41} parent=0 // loop_footer
    %s17 = sadd.s32 1, %s13
  $region7: #{_lambda_.41} parent=0 // loop_footer_branch
    %12 = sbr.rel target = $region3
  $region8: #{_lambda_.41} parent=0 // loop_exit
    _

</llo_original>
